<compile_context>
chip_gen: v5e
topology: v5e:2x2
jax: 0.10.0
libtpu: 0.0.40
codegen_flags: <defaults>
</compile_context>

<pallas_src>
import numpy as np

import jax
import jax.numpy as jnp
from jax.experimental import pallas as pl
from jax.experimental.pallas import tpu as pltpu


# ---------------------------------------------------------------------------
# Static layer geometry (FashionMNIST 28x28 input).
# ---------------------------------------------------------------------------
L1_IN_W = 32                    # padded image row width (1 left + 28 + 3 right)
L1_IN_S = 32 * 32               # padded image flattened row-major (1024 lanes)
L1_CONV_N = 28                  # conv1 output spatial size (28x28, pad=1)
L1_P = L1_CONV_N * L1_IN_W      # 896: conv1 "same-row-width" flat extent
L1_CO = 32
L1_MO = 14                      # HartleyPool2d(14) -> 14x14
L1_OUT_W = 256                  # 14*14 = 196 columns, zero-padded to 2 lane tiles

L2_IN_W = L1_MO                 # 14: row width of layer1's pooled map
L2_CONV_N = 12                  # conv2 (valid) output spatial size
L2_P = L2_CONV_N * L2_IN_W      # 168
L2_CI = 32
L2_CO = 64
L2_MO = 6                       # HartleyPool2d(7) keeps 2*(7//2) = 6 bins/axis
L2_OUT_W = L2_MO * L2_MO        # 36

FC_IN = L2_CO * L2_OUT_W        # 2304 = 64*6*6, NCHW flatten order
N1, N2, N3, N3_PAD = 600, 120, 10, 128


# ---------------------------------------------------------------------------
# Pallas kernels
# ---------------------------------------------------------------------------
def _layer1_kernel(x_ref, w_ref, scale_ref, shift_ref, pool_ref, o_ref):
    """Per image: conv1 as 9 shifted VPU FMAs + BN/ReLU + Hartley pool (MXU)."""
    x = x_ref[...]                                        # (1, 1024) f32
    acc = jnp.zeros((L1_CO, L1_P), jnp.float32)
    for t in range(9):
        di, dj = divmod(t, 3)
        s = di * L1_IN_W + dj
        # (32, 1) tap weights * (1, 896) shifted image row window.
        acc = acc + w_ref[:, t:t + 1] * x[:, s:s + L1_P]
    h = jnp.maximum(acc * scale_ref[...] + shift_ref[...], 0.0)
    o_ref[...] = jnp.dot(h.astype(jnp.bfloat16), pool_ref[...],
                         preferred_element_type=jnp.float32
                         ).astype(o_ref.dtype)


def _layer2_kernel(x_ref, w_ref, scale_ref, shift_ref, pool_ref, o_ref):
    """Per image: conv2 as 9 accumulating MXU matmuls + BN/ReLU + Hartley pool."""
    x = x_ref[...]                                        # (32, 256) bf16
    acc = jnp.zeros((L2_CO, L2_P), jnp.float32)
    for t in range(9):
        di, dj = divmod(t, 3)
        s = di * L2_IN_W + dj
        acc = acc + jnp.dot(w_ref[t], x[:, s:s + L2_P],
                            preferred_element_type=jnp.float32)
    h = jnp.maximum(acc * scale_ref[...] + shift_ref[...], 0.0)
    o_ref[...] = jnp.dot(h.astype(jnp.bfloat16), pool_ref[...],
                         preferred_element_type=jnp.float32
                         ).astype(o_ref.dtype)


def _fc_stack_kernel(x_ref, w1_ref, b1_ref, w2_ref, b2_ref, w3_ref, b3_ref,
                     o_ref):
    h = jnp.dot(x_ref[...], w1_ref[...],
                preferred_element_type=jnp.float32) + b1_ref[...]
    # TODO(synk): Dropout2d(0.25) after fc1 is eval-mode identity (no training
    # channel-dropout mask implemented).
    h = jnp.dot(h.astype(jnp.bfloat16), w2_ref[...],
                preferred_element_type=jnp.float32) + b2_ref[...]
    h = jnp.dot(h.astype(jnp.bfloat16), w3_ref[...],
                preferred_element_type=jnp.float32) + b3_ref[...]
    o_ref[...] = h


# ---------------------------------------------------------------------------
# Pallas wrappers
# ---------------------------------------------------------------------------
def _full_spec(shape):
    """Grid-invariant operand: one full-extent block, identical for every step."""
    return pl.BlockSpec(tuple(shape), lambda b, _n=len(shape): (0,) * _n)


def fused_layer(kernel, x, w, scale, shift, pool_op, out_c, out_w, *, flops):
    """One pallas_call per layer: conv + BN + ReLU + Hartley pool, grid over B."""
    B = x.shape[0]
    cost = pl.CostEstimate(
        flops=int(flops), transcendentals=0,
        bytes_accessed=int(x.size * x.dtype.itemsize
                           + w.size * w.dtype.itemsize
                           + pool_op.size * 2 + B * out_c * out_w * 2))
    return pl.pallas_call(
        kernel,
        out_shape=jax.ShapeDtypeStruct((B, out_c, out_w), jnp.bfloat16),
        grid=(B,),
        in_specs=[
            pl.BlockSpec((None,) + tuple(x.shape[1:]), lambda b: (b, 0, 0)),
            _full_spec(w.shape),
            _full_spec(scale.shape),
            _full_spec(shift.shape),
            _full_spec(pool_op.shape),
        ],
        out_specs=pl.BlockSpec((None, out_c, out_w), lambda b: (b, 0, 0)),
        compiler_params=pltpu.CompilerParams(
            dimension_semantics=("parallel",)),
        cost_estimate=cost,
    )(x, w, scale, shift, pool_op)


def fc_stack(x, w1, b1, w2, b2, w3, b3, *, max_tile_b=512):
    """Fused fc1 -> fc2 -> fc3 (padded to 128 lanes): one pallas_call,
    all weights VMEM-resident, no batch padding / slicing copies."""
    B, D = x.shape
    x = x.astype(jnp.bfloat16)
    tile_b = B if B <= max_tile_b else max_tile_b
    grid = (pl.cdiv(B, tile_b),)          # ragged last block handled by Pallas
    n1, n2, n3 = w1.shape[1], w2.shape[1], w3.shape[1]
    cost = pl.CostEstimate(
        flops=2 * B * (D * n1 + n1 * n2 + n2 * n3), transcendentals=0,
        bytes_accessed=2 * (B * D + D * n1 + n1 * n2 + n2 * n3) + 4 * B * n3)
    return pl.pallas_call(
        _fc_stack_kernel,
        out_shape=jax.ShapeDtypeStruct((B, n3), jnp.float32),
        grid=grid,
        in_specs=[
            pl.BlockSpec((tile_b, D), lambda i: (i, 0)),
            _full_spec(w1.shape), _full_spec(b1.shape),
            _full_spec(w2.shape), _full_spec(b2.shape),
            _full_spec(w3.shape), _full_spec(b3.shape),
        ],
        out_specs=pl.BlockSpec((tile_b, n3), lambda i: (i, 0)),
        compiler_params=pltpu.CompilerParams(
            dimension_semantics=("parallel",)),
        cost_estimate=cost,
    )(x, w1, b1, w2, b2, w3, b3)


# ---------------------------------------------------------------------------
# Hartley pooling operators (built once, with numpy, outside jit)
# ---------------------------------------------------------------------------
def hartley_pool_operator(n, out):
    """1D operator A (Mo, n): DHT_n -> keep out//2 low + out//2 high bins ->
    inverse DHT_Mo."""
    m = out // 2
    Mo = 2 * m
    kn = np.arange(n)
    ang_n = 2 * np.pi * np.outer(kn, kn) / n
    cas_n = np.cos(ang_n) + np.sin(ang_n)
    km = np.arange(Mo)
    ang_m = 2 * np.pi * np.outer(km, km) / Mo
    cas_m = np.cos(ang_m) + np.sin(ang_m)
    idx = np.concatenate([np.arange(m), np.arange(n - m, n)])
    # TODO(synk): verify the 1/Mo inverse-DHT normalization matches the
    # reference HartleyPool2d convention (shape semantics match; scale may differ).
    return (cas_m @ cas_n[idx, :]) / Mo                   # (Mo, n)


def fused_pool_matrix(n, out, row_w, out_w):
    """2D Hartley pool as one operator P (n*row_w, out_w), consumed in-kernel as
    pooled = conv_relu(C, n*row_w) @ P.

    The conv is evaluated "same row width": flat column q1*row_w + q2 is valid
    only for q2 < n.  Rows with q2 >= n (garbage columns) and output columns
    beyond Mo*Mo (lane padding) are zero, so the pool matmul absorbs the
    garbage and emits a lane-dense, zero-padded pooled map."""
    A = hartley_pool_operator(n, out)                     # (Mo, n)
    Mo = A.shape[0]
    K = np.kron(A, A)                                     # (Mo*Mo, n*n)
    P = np.zeros((n * row_w, out_w), np.float32)
    for q1 in range(n):
        P[q1 * row_w: q1 * row_w + n, :Mo * Mo] = K[:, q1 * n:(q1 + 1) * n].T
    return jnp.asarray(P, jnp.bfloat16)


# ---------------------------------------------------------------------------
# Parameters
# ---------------------------------------------------------------------------
def init_params(key):
    ks = jax.random.split(key, 20)
    p = {}
    p["conv1_w"] = 0.1 * jax.random.normal(ks[0], (32, 1, 3, 3), jnp.float32)
    p["conv1_b"] = 0.1 * jax.random.normal(ks[1], (32,), jnp.float32)
    p["bn1_gamma"] = 1.0 + 0.1 * jax.random.normal(ks[2], (32,), jnp.float32)
    p["bn1_beta"] = 0.1 * jax.random.normal(ks[3], (32,), jnp.float32)
    p["bn1_mean"] = 0.1 * jax.random.normal(ks[4], (32,), jnp.float32)
    p["bn1_var"] = 1.0 + 0.1 * jnp.abs(jax.random.normal(ks[5], (32,), jnp.float32))
    p["conv2_w"] = 0.05 * jax.random.normal(ks[6], (64, 32, 3, 3), jnp.float32)
    p["conv2_b"] = 0.1 * jax.random.normal(ks[7], (64,), jnp.float32)
    p["bn2_gamma"] = 1.0 + 0.1 * jax.random.normal(ks[8], (64,), jnp.float32)
    p["bn2_beta"] = 0.1 * jax.random.normal(ks[9], (64,), jnp.float32)
    p["bn2_mean"] = 0.1 * jax.random.normal(ks[10], (64,), jnp.float32)
    p["bn2_var"] = 1.0 + 0.1 * jnp.abs(jax.random.normal(ks[11], (64,), jnp.float32))
    p["fc1_w"] = 0.02 * jax.random.normal(ks[12], (FC_IN, N1), jnp.float32)
    p["fc1_b"] = 0.02 * jax.random.normal(ks[13], (N1,), jnp.float32)
    p["fc2_w"] = 0.05 * jax.random.normal(ks[14], (N1, N2), jnp.float32)
    p["fc2_b"] = 0.05 * jax.random.normal(ks[15], (N2,), jnp.float32)
    p["fc3_w"] = 0.1 * jax.random.normal(ks[16], (N2, N3), jnp.float32)
    p["fc3_b"] = 0.1 * jax.random.normal(ks[17], (N3,), jnp.float32)
    return p


def prepare_params(p):
    """One-time weight reshapes, eval-BN folding, bf16 casts, pool operators."""
    eps = 1e-5

    def bn_fold(gamma, beta, mean, var, conv_bias):
        scale = gamma / jnp.sqrt(var + eps)
        shift = beta - mean * scale + conv_bias * scale
        return (scale.reshape(-1, 1).astype(jnp.float32),
                shift.reshape(-1, 1).astype(jnp.float32))

    s1, sh1 = bn_fold(p["bn1_gamma"], p["bn1_beta"], p["bn1_mean"],
                      p["bn1_var"], p["conv1_b"])
    s2, sh2 = bn_fold(p["bn2_gamma"], p["bn2_beta"], p["bn2_mean"],
                      p["bn2_var"], p["conv2_b"])
    # fc3 zero-padded to 128 output lanes (lane-dense stores); logits sliced
    # outside the kernel.
    w3p = jnp.zeros((N2, N3_PAD), jnp.float32).at[:, :N3].set(p["fc3_w"])
    b3p = jnp.zeros((1, N3_PAD), jnp.float32).at[0, :N3].set(p["fc3_b"])
    return {
        # conv1 taps (Cout, 9) in f32 for the VPU FMA path.
        "conv1_w": p["conv1_w"].reshape(L1_CO, 9).astype(jnp.float32),
        "conv1_scale": s1, "conv1_shift": sh1,
        "pool1_op": fused_pool_matrix(L1_CONV_N, 14, L1_IN_W, L1_OUT_W),
        # conv2 taps (9, Cout, Cin) in bf16 for the MXU.
        "conv2_w": jnp.transpose(p["conv2_w"], (2, 3, 0, 1))
                      .reshape(9, L2_CO, L2_CI).astype(jnp.bfloat16),
        "conv2_scale": s2, "conv2_shift": sh2,
        "pool2_op": fused_pool_matrix(L2_CONV_N, 7, L2_IN_W, L2_OUT_W),
        "fc1_w": p["fc1_w"].astype(jnp.bfloat16),
        "fc1_b": p["fc1_b"].reshape(1, N1).astype(jnp.float32),
        "fc2_w": p["fc2_w"].astype(jnp.bfloat16),
        "fc2_b": p["fc2_b"].reshape(1, N2).astype(jnp.float32),
        "fc3_w": w3p.astype(jnp.bfloat16),
        "fc3_b": b3p,
    }


# ---------------------------------------------------------------------------
# Forward pass
# ---------------------------------------------------------------------------
def forward(x, prep):
    B = x.shape[0]
    # Layer1 input: zero-pad the 28x28 image to 32x32 (conv pad=1 plus slice
    # headroom) and flatten row-major -> (B, 1, 1024) lanes.  This is the only
    # XLA glue op before the three fused kernels.
    xf = jnp.pad(x.astype(jnp.float32),
                 ((0, 0), (0, 0), (1, 3), (1, 3))).reshape(B, 1, L1_IN_S)
    h1 = fused_layer(_layer1_kernel, xf, prep["conv1_w"], prep["conv1_scale"],
                     prep["conv1_shift"], prep["pool1_op"], L1_CO, L1_OUT_W,
                     flops=B * (2 * 9 * L1_CO * L1_P
                                + 2 * L1_CO * L1_P * L1_OUT_W))
    # h1: (B, 32, 256) = 32 channels x (flattened 14x14 map, zero lane pad)
    h2 = fused_layer(_layer2_kernel, h1, prep["conv2_w"], prep["conv2_scale"],
                     prep["conv2_shift"], prep["pool2_op"], L2_CO, L2_OUT_W,
                     flops=B * (2 * 9 * L2_CO * L2_CI * L2_P
                                + 2 * L2_CO * L2_P * L2_OUT_W))
    # h2: (B, 64, 36) -> contiguous NCHW flatten == PyTorch .view(B, -1).
    logits = fc_stack(h2.reshape(B, FC_IN),
                      prep["fc1_w"], prep["fc1_b"],
                      prep["fc2_w"], prep["fc2_b"],
                      prep["fc3_w"], prep["fc3_b"])
    return logits[:, :N3]


if __name__ == "__main__":
    key = jax.random.PRNGKey(0)
    k_x, k_p = jax.random.split(key)
    x = jax.random.normal(k_x, (2, 1, 28, 28), jnp.float32)   # FashionMNIST size
    params = init_params(k_p)
    prep = prepare_params(params)                             # hoisted out of jit

    out = jax.jit(forward)(x, prep)
    out = jax.block_until_ready(out)
    assert out.shape == (2, 10) and out.dtype == jnp.float32
    assert bool(jnp.all(jnp.isfinite(out)))
    print("KERNEL_OK")
</pallas_src>

<mosaic_0001>
module attributes {stable_mosaic.version = 11 : i64} {
  func.func @_layer2_kernel(%arg0: i32, %arg1: memref<1x32x256xbf16, #tpu.memory_space<vmem>>, %arg2: memref<9x64x32xbf16, #tpu.memory_space<vmem>>, %arg3: memref<64x1xf32, #tpu.memory_space<vmem>>, %arg4: memref<64x1xf32, #tpu.memory_space<vmem>>, %arg5: memref<168x36xbf16, #tpu.memory_space<vmem>>, %arg6: memref<1x64x36xbf16, #tpu.memory_space<vmem>>) attributes {dimension_semantics = [#tpu.dimension_semantics<parallel>], iteration_bounds = array<i64: 2>, scalar_prefetch = 0 : i64, scratch_operands = 0 : i64, tpu.core_type = #tpu.core_type<tc>, window_params = [{transform_indices = @transform_0, window_bounds = array<i64: 1, 32, 256>}, {pipeline_mode = #tpu.pipeline_mode<synchronous>, transform_indices = @transform_1, window_bounds = array<i64: 9, 64, 32>}, {pipeline_mode = #tpu.pipeline_mode<synchronous>, transform_indices = @transform_2, window_bounds = array<i64: 64, 1>}, {pipeline_mode = #tpu.pipeline_mode<synchronous>, transform_indices = @transform_3, window_bounds = array<i64: 64, 1>}, {pipeline_mode = #tpu.pipeline_mode<synchronous>, transform_indices = @transform_4, window_bounds = array<i64: 168, 36>}, {transform_indices = @transform_5, window_bounds = array<i64: 1, 64, 36>}]} {
    %c0 = arith.constant 0 : index
    %c0_0 = arith.constant 0 : index
    %c0_1 = arith.constant 0 : index
    %0 = vector.load %arg1[%c0, %c0_0, %c0_1] : memref<1x32x256xbf16, #tpu.memory_space<vmem>>, vector<1x32x256xbf16>
    %1 = vector.shape_cast %0 : vector<1x32x256xbf16> to vector<32x256xbf16>
    %cst = arith.constant 0.000000e+00 : f32
    %2 = vector.broadcast %cst : f32 to vector<64x168xf32>
    %c0_2 = arith.constant 0 : index
    %c0_3 = arith.constant 0 : index
    %c0_4 = arith.constant 0 : index
    %3 = vector.load %arg2[%c0_2, %c0_3, %c0_4] : memref<9x64x32xbf16, #tpu.memory_space<vmem>>, vector<1x64x32xbf16>
    %4 = vector.shape_cast %3 : vector<1x64x32xbf16> to vector<64x32xbf16>
    %5 = vector.extract_strided_slice %1 {offsets = [0, 0], sizes = [32, 168], strides = [1, 1]} : vector<32x256xbf16> to vector<32x168xbf16>
    %cst_5 = arith.constant dense<0.000000e+00> : vector<64x168xf32>
    %6 = tpu.matmul %4, %5, %cst_5 {dimension_numbers = #tpu.dot_dimension_numbers<[1], [0], [0], [1], [0, 0, 1, 1], [], []>} : vector<64x32xbf16>, vector<32x168xbf16>, vector<64x168xf32> -> vector<64x168xf32>
    %7 = arith.addf %2, %6 : vector<64x168xf32>
    %c1 = arith.constant 1 : index
    %c0_6 = arith.constant 0 : index
    %c0_7 = arith.constant 0 : index
    %8 = vector.load %arg2[%c1, %c0_6, %c0_7] : memref<9x64x32xbf16, #tpu.memory_space<vmem>>, vector<1x64x32xbf16>
    %9 = vector.shape_cast %8 : vector<1x64x32xbf16> to vector<64x32xbf16>
    %10 = vector.extract_strided_slice %1 {offsets = [0, 1], sizes = [32, 168], strides = [1, 1]} : vector<32x256xbf16> to vector<32x168xbf16>
    %cst_8 = arith.constant dense<0.000000e+00> : vector<64x168xf32>
    %11 = tpu.matmul %9, %10, %cst_8 {dimension_numbers = #tpu.dot_dimension_numbers<[1], [0], [0], [1], [0, 0, 1, 1], [], []>} : vector<64x32xbf16>, vector<32x168xbf16>, vector<64x168xf32> -> vector<64x168xf32>
    %12 = arith.addf %7, %11 : vector<64x168xf32>
    %c2 = arith.constant 2 : index
    %c0_9 = arith.constant 0 : index
    %c0_10 = arith.constant 0 : index
    %13 = vector.load %arg2[%c2, %c0_9, %c0_10] : memref<9x64x32xbf16, #tpu.memory_space<vmem>>, vector<1x64x32xbf16>
    %14 = vector.shape_cast %13 : vector<1x64x32xbf16> to vector<64x32xbf16>
    %15 = vector.extract_strided_slice %1 {offsets = [0, 2], sizes = [32, 168], strides = [1, 1]} : vector<32x256xbf16> to vector<32x168xbf16>
    %cst_11 = arith.constant dense<0.000000e+00> : vector<64x168xf32>
    %16 = tpu.matmul %14, %15, %cst_11 {dimension_numbers = #tpu.dot_dimension_numbers<[1], [0], [0], [1], [0, 0, 1, 1], [], []>} : vector<64x32xbf16>, vector<32x168xbf16>, vector<64x168xf32> -> vector<64x168xf32>
    %17 = arith.addf %12, %16 : vector<64x168xf32>
    %c3 = arith.constant 3 : index
    %c0_12 = arith.constant 0 : index
    %c0_13 = arith.constant 0 : index
    %18 = vector.load %arg2[%c3, %c0_12, %c0_13] : memref<9x64x32xbf16, #tpu.memory_space<vmem>>, vector<1x64x32xbf16>
    %19 = vector.shape_cast %18 : vector<1x64x32xbf16> to vector<64x32xbf16>
    %20 = vector.extract_strided_slice %1 {offsets = [0, 14], sizes = [32, 168], strides = [1, 1]} : vector<32x256xbf16> to vector<32x168xbf16>
    %cst_14 = arith.constant dense<0.000000e+00> : vector<64x168xf32>
    %21 = tpu.matmul %19, %20, %cst_14 {dimension_numbers = #tpu.dot_dimension_numbers<[1], [0], [0], [1], [0, 0, 1, 1], [], []>} : vector<64x32xbf16>, vector<32x168xbf16>, vector<64x168xf32> -> vector<64x168xf32>
    %22 = arith.addf %17, %21 : vector<64x168xf32>
    %c4 = arith.constant 4 : index
    %c0_15 = arith.constant 0 : index
    %c0_16 = arith.constant 0 : index
    %23 = vector.load %arg2[%c4, %c0_15, %c0_16] : memref<9x64x32xbf16, #tpu.memory_space<vmem>>, vector<1x64x32xbf16>
    %24 = vector.shape_cast %23 : vector<1x64x32xbf16> to vector<64x32xbf16>
    %25 = vector.extract_strided_slice %1 {offsets = [0, 15], sizes = [32, 168], strides = [1, 1]} : vector<32x256xbf16> to vector<32x168xbf16>
    %cst_17 = arith.constant dense<0.000000e+00> : vector<64x168xf32>
    %26 = tpu.matmul %24, %25, %cst_17 {dimension_numbers = #tpu.dot_dimension_numbers<[1], [0], [0], [1], [0, 0, 1, 1], [], []>} : vector<64x32xbf16>, vector<32x168xbf16>, vector<64x168xf32> -> vector<64x168xf32>
    %27 = arith.addf %22, %26 : vector<64x168xf32>
    %c5 = arith.constant 5 : index
    %c0_18 = arith.constant 0 : index
    %c0_19 = arith.constant 0 : index
    %28 = vector.load %arg2[%c5, %c0_18, %c0_19] : memref<9x64x32xbf16, #tpu.memory_space<vmem>>, vector<1x64x32xbf16>
    %29 = vector.shape_cast %28 : vector<1x64x32xbf16> to vector<64x32xbf16>
    %30 = vector.extract_strided_slice %1 {offsets = [0, 16], sizes = [32, 168], strides = [1, 1]} : vector<32x256xbf16> to vector<32x168xbf16>
    %cst_20 = arith.constant dense<0.000000e+00> : vector<64x168xf32>
    %31 = tpu.matmul %29, %30, %cst_20 {dimension_numbers = #tpu.dot_dimension_numbers<[1], [0], [0], [1], [0, 0, 1, 1], [], []>} : vector<64x32xbf16>, vector<32x168xbf16>, vector<64x168xf32> -> vector<64x168xf32>
    %32 = arith.addf %27, %31 : vector<64x168xf32>
    %c6 = arith.constant 6 : index
    %c0_21 = arith.constant 0 : index
    %c0_22 = arith.constant 0 : index
    %33 = vector.load %arg2[%c6, %c0_21, %c0_22] : memref<9x64x32xbf16, #tpu.memory_space<vmem>>, vector<1x64x32xbf16>
    %34 = vector.shape_cast %33 : vector<1x64x32xbf16> to vector<64x32xbf16>
    %35 = vector.extract_strided_slice %1 {offsets = [0, 28], sizes = [32, 168], strides = [1, 1]} : vector<32x256xbf16> to vector<32x168xbf16>
    %cst_23 = arith.constant dense<0.000000e+00> : vector<64x168xf32>
    %36 = tpu.matmul %34, %35, %cst_23 {dimension_numbers = #tpu.dot_dimension_numbers<[1], [0], [0], [1], [0, 0, 1, 1], [], []>} : vector<64x32xbf16>, vector<32x168xbf16>, vector<64x168xf32> -> vector<64x168xf32>
    %37 = arith.addf %32, %36 : vector<64x168xf32>
    %c7 = arith.constant 7 : index
    %c0_24 = arith.constant 0 : index
    %c0_25 = arith.constant 0 : index
    %38 = vector.load %arg2[%c7, %c0_24, %c0_25] : memref<9x64x32xbf16, #tpu.memory_space<vmem>>, vector<1x64x32xbf16>
    %39 = vector.shape_cast %38 : vector<1x64x32xbf16> to vector<64x32xbf16>
    %40 = vector.extract_strided_slice %1 {offsets = [0, 29], sizes = [32, 168], strides = [1, 1]} : vector<32x256xbf16> to vector<32x168xbf16>
    %cst_26 = arith.constant dense<0.000000e+00> : vector<64x168xf32>
    %41 = tpu.matmul %39, %40, %cst_26 {dimension_numbers = #tpu.dot_dimension_numbers<[1], [0], [0], [1], [0, 0, 1, 1], [], []>} : vector<64x32xbf16>, vector<32x168xbf16>, vector<64x168xf32> -> vector<64x168xf32>
    %42 = arith.addf %37, %41 : vector<64x168xf32>
    %c8 = arith.constant 8 : index
    %c0_27 = arith.constant 0 : index
    %c0_28 = arith.constant 0 : index
    %43 = vector.load %arg2[%c8, %c0_27, %c0_28] : memref<9x64x32xbf16, #tpu.memory_space<vmem>>, vector<1x64x32xbf16>
    %44 = vector.shape_cast %43 : vector<1x64x32xbf16> to vector<64x32xbf16>
    %45 = vector.extract_strided_slice %1 {offsets = [0, 30], sizes = [32, 168], strides = [1, 1]} : vector<32x256xbf16> to vector<32x168xbf16>
    %cst_29 = arith.constant dense<0.000000e+00> : vector<64x168xf32>
    %46 = tpu.matmul %44, %45, %cst_29 {dimension_numbers = #tpu.dot_dimension_numbers<[1], [0], [0], [1], [0, 0, 1, 1], [], []>} : vector<64x32xbf16>, vector<32x168xbf16>, vector<64x168xf32> -> vector<64x168xf32>
    %47 = arith.addf %42, %46 : vector<64x168xf32>
    %c0_30 = arith.constant 0 : index
    %c0_31 = arith.constant 0 : index
    %48 = vector.load %arg3[%c0_30, %c0_31] : memref<64x1xf32, #tpu.memory_space<vmem>>, vector<64x1xf32>
    %49 = vector.broadcast %48 : vector<64x1xf32> to vector<64x168xf32>
    %50 = arith.mulf %47, %49 : vector<64x168xf32>
    %c0_32 = arith.constant 0 : index
    %c0_33 = arith.constant 0 : index
    %51 = vector.load %arg4[%c0_32, %c0_33] : memref<64x1xf32, #tpu.memory_space<vmem>>, vector<64x1xf32>
    %52 = vector.broadcast %51 : vector<64x1xf32> to vector<64x168xf32>
    %53 = arith.addf %50, %52 : vector<64x168xf32>
    %cst_34 = arith.constant 0.000000e+00 : f32
    %54 = vector.broadcast %cst_34 : f32 to vector<64x168xf32>
    %55 = arith.maximumf %53, %54 : vector<64x168xf32>
    %56 = arith.truncf %55 : vector<64x168xf32> to vector<64x168xbf16>
    %c0_35 = arith.constant 0 : index
    %c0_36 = arith.constant 0 : index
    %57 = vector.load %arg5[%c0_35, %c0_36] : memref<168x36xbf16, #tpu.memory_space<vmem>>, vector<168x36xbf16>
    %cst_37 = arith.constant dense<0.000000e+00> : vector<64x36xf32>
    %58 = tpu.matmul %56, %57, %cst_37 {dimension_numbers = #tpu.dot_dimension_numbers<[1], [0], [0], [1], [0, 0, 1, 1], [], []>} : vector<64x168xbf16>, vector<168x36xbf16>, vector<64x36xf32> -> vector<64x36xf32>
    %59 = arith.truncf %58 : vector<64x36xf32> to vector<64x36xbf16>
    %c0_38 = arith.constant 0 : index
    %c0_39 = arith.constant 0 : index
    %c0_40 = arith.constant 0 : index
    %60 = vector.load %arg6[%c0_38, %c0_39, %c0_40] : memref<1x64x36xbf16, #tpu.memory_space<vmem>>, vector<1x64x36xbf16>
    %61 = vector.shape_cast %60 : vector<1x64x36xbf16> to vector<64x36xbf16>
    %62 = vector.shape_cast %59 : vector<64x36xbf16> to vector<1x64x36xbf16>
    tpu.vector_store %arg6[%c0_38, %c0_39, %c0_40], %62 {strides = array<i32>} : memref<1x64x36xbf16, #tpu.memory_space<vmem>>, vector<1x64x36xbf16>,
    return
  }
  func.func @transform_0(%arg0: i32) -> (i32, i32, i32) {
    %c0_i32 = arith.constant 0 : i32
    %c0_i32_0 = arith.constant 0 : i32
    %c0_i32_1 = arith.constant 0 : i32
    return %arg0, %c0_i32, %c0_i32_0 : i32, i32, i32
  }
  func.func @transform_1(%arg0: i32) -> (i32, i32, i32) {
    %c0_i32 = arith.constant 0 : i32
    %c0_i32_0 = arith.constant 0 : i32
    %c0_i32_1 = arith.constant 0 : i32
    %c0_i32_2 = arith.constant 0 : i32
    return %c0_i32, %c0_i32_0, %c0_i32_1 : i32, i32, i32
  }
  func.func @transform_2(%arg0: i32) -> (i32, i32) {
    %c0_i32 = arith.constant 0 : i32
    %c0_i32_0 = arith.constant 0 : i32
    %c0_i32_1 = arith.constant 0 : i32
    return %c0_i32, %c0_i32_0 : i32, i32
  }
  func.func @transform_3(%arg0: i32) -> (i32, i32) {
    %c0_i32 = arith.constant 0 : i32
    %c0_i32_0 = arith.constant 0 : i32
    %c0_i32_1 = arith.constant 0 : i32
    return %c0_i32, %c0_i32_0 : i32, i32
  }
  func.func @transform_4(%arg0: i32) -> (i32, i32) {
    %c0_i32 = arith.constant 0 : i32
    %c0_i32_0 = arith.constant 0 : i32
    %c0_i32_1 = arith.constant 0 : i32
    return %c0_i32, %c0_i32_0 : i32, i32
  }
  func.func @transform_5(%arg0: i32) -> (i32, i32, i32) {
    %c0_i32 = arith.constant 0 : i32
    %c0_i32_0 = arith.constant 0 : i32
    %c0_i32_1 = arith.constant 0 : i32
    return %arg0, %c0_i32, %c0_i32_0 : i32, i32, i32
  }
}

module attributes {stable_mosaic.version = 11 : i64} {
  func.func @_layer1_kernel(%arg0: i32, %arg1: memref<1x1x1024xf32, #tpu.memory_space<vmem>>, %arg2: memref<32x9xf32, #tpu.memory_space<vmem>>, %arg3: memref<32x1xf32, #tpu.memory_space<vmem>>, %arg4: memref<32x1xf32, #tpu.memory_space<vmem>>, %arg5: memref<896x256xbf16, #tpu.memory_space<vmem>>, %arg6: memref<1x32x256xbf16, #tpu.memory_space<vmem>>) attributes {dimension_semantics = [#tpu.dimension_semantics<parallel>], iteration_bounds = array<i64: 2>, scalar_prefetch = 0 : i64, scratch_operands = 0 : i64, tpu.core_type = #tpu.core_type<tc>, window_params = [{transform_indices = @transform_0, window_bounds = array<i64: 1, 1, 1024>}, {pipeline_mode = #tpu.pipeline_mode<synchronous>, transform_indices = @transform_1, window_bounds = array<i64: 32, 9>}, {pipeline_mode = #tpu.pipeline_mode<synchronous>, transform_indices = @transform_2, window_bounds = array<i64: 32, 1>}, {pipeline_mode = #tpu.pipeline_mode<synchronous>, transform_indices = @transform_3, window_bounds = array<i64: 32, 1>}, {pipeline_mode = #tpu.pipeline_mode<synchronous>, transform_indices = @transform_4, window_bounds = array<i64: 896, 256>}, {transform_indices = @transform_5, window_bounds = array<i64: 1, 32, 256>}]} {
    %c0 = arith.constant 0 : index
    %c0_0 = arith.constant 0 : index
    %c0_1 = arith.constant 0 : index
    %0 = vector.load %arg1[%c0, %c0_0, %c0_1] : memref<1x1x1024xf32, #tpu.memory_space<vmem>>, vector<1x1x1024xf32>
    %1 = vector.shape_cast %0 : vector<1x1x1024xf32> to vector<1x1024xf32>
    %cst = arith.constant 0.000000e+00 : f32
    %2 = vector.broadcast %cst : f32 to vector<32x896xf32>
    %c0_2 = arith.constant 0 : index
    %c0_3 = arith.constant 0 : index
    %3 = vector.load %arg2[%c0_2, %c0_3] : memref<32x9xf32, #tpu.memory_space<vmem>>, vector<32x1xf32>
    %4 = vector.extract_strided_slice %1 {offsets = [0, 0], sizes = [1, 896], strides = [1, 1]} : vector<1x1024xf32> to vector<1x896xf32>
    %5 = vector.broadcast %3 : vector<32x1xf32> to vector<32x896xf32>
    %6 = vector.broadcast %4 : vector<1x896xf32> to vector<32x896xf32>
    %7 = arith.mulf %5, %6 : vector<32x896xf32>
    %8 = arith.addf %2, %7 : vector<32x896xf32>
    %c0_4 = arith.constant 0 : index
    %c1 = arith.constant 1 : index
    %9 = vector.load %arg2[%c0_4, %c1] : memref<32x9xf32, #tpu.memory_space<vmem>>, vector<32x1xf32>
    %10 = vector.extract_strided_slice %1 {offsets = [0, 1], sizes = [1, 896], strides = [1, 1]} : vector<1x1024xf32> to vector<1x896xf32>
    %11 = vector.broadcast %9 : vector<32x1xf32> to vector<32x896xf32>
    %12 = vector.broadcast %10 : vector<1x896xf32> to vector<32x896xf32>
    %13 = arith.mulf %11, %12 : vector<32x896xf32>
    %14 = arith.addf %8, %13 : vector<32x896xf32>
    %c0_5 = arith.constant 0 : index
    %c2 = arith.constant 2 : index
    %15 = vector.load %arg2[%c0_5, %c2] : memref<32x9xf32, #tpu.memory_space<vmem>>, vector<32x1xf32>
    %16 = vector.extract_strided_slice %1 {offsets = [0, 2], sizes = [1, 896], strides = [1, 1]} : vector<1x1024xf32> to vector<1x896xf32>
    %17 = vector.broadcast %15 : vector<32x1xf32> to vector<32x896xf32>
    %18 = vector.broadcast %16 : vector<1x896xf32> to vector<32x896xf32>
    %19 = arith.mulf %17, %18 : vector<32x896xf32>
    %20 = arith.addf %14, %19 : vector<32x896xf32>
    %c0_6 = arith.constant 0 : index
    %c3 = arith.constant 3 : index
    %21 = vector.load %arg2[%c0_6, %c3] : memref<32x9xf32, #tpu.memory_space<vmem>>, vector<32x1xf32>
    %22 = vector.extract_strided_slice %1 {offsets = [0, 32], sizes = [1, 896], strides = [1, 1]} : vector<1x1024xf32> to vector<1x896xf32>
    %23 = vector.broadcast %21 : vector<32x1xf32> to vector<32x896xf32>
    %24 = vector.broadcast %22 : vector<1x896xf32> to vector<32x896xf32>
    %25 = arith.mulf %23, %24 : vector<32x896xf32>
    %26 = arith.addf %20, %25 : vector<32x896xf32>
    %c0_7 = arith.constant 0 : index
    %c4 = arith.constant 4 : index
    %27 = vector.load %arg2[%c0_7, %c4] : memref<32x9xf32, #tpu.memory_space<vmem>>, vector<32x1xf32>
    %28 = vector.extract_strided_slice %1 {offsets = [0, 33], sizes = [1, 896], strides = [1, 1]} : vector<1x1024xf32> to vector<1x896xf32>
    %29 = vector.broadcast %27 : vector<32x1xf32> to vector<32x896xf32>
    %30 = vector.broadcast %28 : vector<1x896xf32> to vector<32x896xf32>
    %31 = arith.mulf %29, %30 : vector<32x896xf32>
    %32 = arith.addf %26, %31 : vector<32x896xf32>
    %c0_8 = arith.constant 0 : index
    %c5 = arith.constant 5 : index
    %33 = vector.load %arg2[%c0_8, %c5] : memref<32x9xf32, #tpu.memory_space<vmem>>, vector<32x1xf32>
    %34 = vector.extract_strided_slice %1 {offsets = [0, 34], sizes = [1, 896], strides = [1, 1]} : vector<1x1024xf32> to vector<1x896xf32>
    %35 = vector.broadcast %33 : vector<32x1xf32> to vector<32x896xf32>
    %36 = vector.broadcast %34 : vector<1x896xf32> to vector<32x896xf32>
    %37 = arith.mulf %35, %36 : vector<32x896xf32>
    %38 = arith.addf %32, %37 : vector<32x896xf32>
    %c0_9 = arith.constant 0 : index
    %c6 = arith.constant 6 : index
    %39 = vector.load %arg2[%c0_9, %c6] : memref<32x9xf32, #tpu.memory_space<vmem>>, vector<32x1xf32>
    %40 = vector.extract_strided_slice %1 {offsets = [0, 64], sizes = [1, 896], strides = [1, 1]} : vector<1x1024xf32> to vector<1x896xf32>
    %41 = vector.broadcast %39 : vector<32x1xf32> to vector<32x896xf32>
    %42 = vector.broadcast %40 : vector<1x896xf32> to vector<32x896xf32>
    %43 = arith.mulf %41, %42 : vector<32x896xf32>
    %44 = arith.addf %38, %43 : vector<32x896xf32>
    %c0_10 = arith.constant 0 : index
    %c7 = arith.constant 7 : index
    %45 = vector.load %arg2[%c0_10, %c7] : memref<32x9xf32, #tpu.memory_space<vmem>>, vector<32x1xf32>
    %46 = vector.extract_strided_slice %1 {offsets = [0, 65], sizes = [1, 896], strides = [1, 1]} : vector<1x1024xf32> to vector<1x896xf32>
    %47 = vector.broadcast %45 : vector<32x1xf32> to vector<32x896xf32>
    %48 = vector.broadcast %46 : vector<1x896xf32> to vector<32x896xf32>
    %49 = arith.mulf %47, %48 : vector<32x896xf32>
    %50 = arith.addf %44, %49 : vector<32x896xf32>
    %c0_11 = arith.constant 0 : index
    %c8 = arith.constant 8 : index
    %51 = vector.load %arg2[%c0_11, %c8] : memref<32x9xf32, #tpu.memory_space<vmem>>, vector<32x1xf32>
    %52 = vector.extract_strided_slice %1 {offsets = [0, 66], sizes = [1, 896], strides = [1, 1]} : vector<1x1024xf32> to vector<1x896xf32>
    %53 = vector.broadcast %51 : vector<32x1xf32> to vector<32x896xf32>
    %54 = vector.broadcast %52 : vector<1x896xf32> to vector<32x896xf32>
    %55 = arith.mulf %53, %54 : vector<32x896xf32>
    %56 = arith.addf %50, %55 : vector<32x896xf32>
    %c0_12 = arith.constant 0 : index
    %c0_13 = arith.constant 0 : index
    %57 = vector.load %arg3[%c0_12, %c0_13] : memref<32x1xf32, #tpu.memory_space<vmem>>, vector<32x1xf32>
    %58 = vector.broadcast %57 : vector<32x1xf32> to vector<32x896xf32>
    %59 = arith.mulf %56, %58 : vector<32x896xf32>
    %c0_14 = arith.constant 0 : index
    %c0_15 = arith.constant 0 : index
    %60 = vector.load %arg4[%c0_14, %c0_15] : memref<32x1xf32, #tpu.memory_space<vmem>>, vector<32x1xf32>
    %61 = vector.broadcast %60 : vector<32x1xf32> to vector<32x896xf32>
    %62 = arith.addf %59, %61 : vector<32x896xf32>
    %cst_16 = arith.constant 0.000000e+00 : f32
    %63 = vector.broadcast %cst_16 : f32 to vector<32x896xf32>
    %64 = arith.maximumf %62, %63 : vector<32x896xf32>
    %65 = arith.truncf %64 : vector<32x896xf32> to vector<32x896xbf16>
    %c0_17 = arith.constant 0 : index
    %c0_18 = arith.constant 0 : index
    %66 = vector.load %arg5[%c0_17, %c0_18] : memref<896x256xbf16, #tpu.memory_space<vmem>>, vector<896x256xbf16>
    %cst_19 = arith.constant dense<0.000000e+00> : vector<32x256xf32>
    %67 = tpu.matmul %65, %66, %cst_19 {dimension_numbers = #tpu.dot_dimension_numbers<[1], [0], [0], [1], [0, 0, 1, 1], [], []>} : vector<32x896xbf16>, vector<896x256xbf16>, vector<32x256xf32> -> vector<32x256xf32>
    %68 = arith.truncf %67 : vector<32x256xf32> to vector<32x256xbf16>
    %c0_20 = arith.constant 0 : index
    %c0_21 = arith.constant 0 : index
    %c0_22 = arith.constant 0 : index
    %69 = vector.load %arg6[%c0_20, %c0_21, %c0_22] : memref<1x32x256xbf16, #tpu.memory_space<vmem>>, vector<1x32x256xbf16>
    %70 = vector.shape_cast %69 : vector<1x32x256xbf16> to vector<32x256xbf16>
    %71 = vector.shape_cast %68 : vector<32x256xbf16> to vector<1x32x256xbf16>
    tpu.vector_store %arg6[%c0_20, %c0_21, %c0_22], %71 {strides = array<i32>} : memref<1x32x256xbf16, #tpu.memory_space<vmem>>, vector<1x32x256xbf16>,
    return
  }
  func.func @transform_0(%arg0: i32) -> (i32, i32, i32) {
    %c0_i32 = arith.constant 0 : i32
    %c0_i32_0 = arith.constant 0 : i32
    %c0_i32_1 = arith.constant 0 : i32
    return %arg0, %c0_i32, %c0_i32_0 : i32, i32, i32
  }
  func.func @transform_1(%arg0: i32) -> (i32, i32) {
    %c0_i32 = arith.constant 0 : i32
    %c0_i32_0 = arith.constant 0 : i32
    %c0_i32_1 = arith.constant 0 : i32
    return %c0_i32, %c0_i32_0 : i32, i32
  }
  func.func @transform_2(%arg0: i32) -> (i32, i32) {
    %c0_i32 = arith.constant 0 : i32
    %c0_i32_0 = arith.constant 0 : i32
    %c0_i32_1 = arith.constant 0 : i32
    return %c0_i32, %c0_i32_0 : i32, i32
  }
  func.func @transform_3(%arg0: i32) -> (i32, i32) {
    %c0_i32 = arith.constant 0 : i32
    %c0_i32_0 = arith.constant 0 : i32
    %c0_i32_1 = arith.constant 0 : i32
    return %c0_i32, %c0_i32_0 : i32, i32
  }
  func.func @transform_4(%arg0: i32) -> (i32, i32) {
    %c0_i32 = arith.constant 0 : i32
    %c0_i32_0 = arith.constant 0 : i32
    %c0_i32_1 = arith.constant 0 : i32
    return %c0_i32, %c0_i32_0 : i32, i32
  }
  func.func @transform_5(%arg0: i32) -> (i32, i32, i32) {
    %c0_i32 = arith.constant 0 : i32
    %c0_i32_0 = arith.constant 0 : i32
    %c0_i32_1 = arith.constant 0 : i32
    return %arg0, %c0_i32, %c0_i32_0 : i32, i32, i32
  }
}

module attributes {stable_mosaic.version = 11 : i64} {
  func.func @_fc_stack_kernel(%arg0: i32, %arg1: memref<2x2304xbf16, #tpu.memory_space<vmem>>, %arg2: memref<2304x600xbf16, #tpu.memory_space<vmem>>, %arg3: memref<1x600xf32, #tpu.memory_space<vmem>>, %arg4: memref<600x120xbf16, #tpu.memory_space<vmem>>, %arg5: memref<1x120xf32, #tpu.memory_space<vmem>>, %arg6: memref<120x128xbf16, #tpu.memory_space<vmem>>, %arg7: memref<1x128xf32, #tpu.memory_space<vmem>>, %arg8: memref<2x128xf32, #tpu.memory_space<vmem>>) attributes {dimension_semantics = [#tpu.dimension_semantics<parallel>], iteration_bounds = array<i64: 1>, scalar_prefetch = 0 : i64, scratch_operands = 0 : i64, tpu.core_type = #tpu.core_type<tc>, window_params = [{transform_indices = @transform_0, window_bounds = array<i64: 2, 2304>}, {pipeline_mode = #tpu.pipeline_mode<synchronous>, transform_indices = @transform_1, window_bounds = array<i64: 2304, 600>}, {pipeline_mode = #tpu.pipeline_mode<synchronous>, transform_indices = @transform_2, window_bounds = array<i64: 1, 600>}, {pipeline_mode = #tpu.pipeline_mode<synchronous>, transform_indices = @transform_3, window_bounds = array<i64: 600, 120>}, {pipeline_mode = #tpu.pipeline_mode<synchronous>, transform_indices = @transform_4, window_bounds = array<i64: 1, 120>}, {pipeline_mode = #tpu.pipeline_mode<synchronous>, transform_indices = @transform_5, window_bounds = array<i64: 120, 128>}, {pipeline_mode = #tpu.pipeline_mode<synchronous>, transform_indices = @transform_6, window_bounds = array<i64: 1, 128>}, {transform_indices = @transform_7, window_bounds = array<i64: 2, 128>}]} {
    %c0 = arith.constant 0 : index
    %c0_0 = arith.constant 0 : index
    %0 = vector.load %arg1[%c0, %c0_0] : memref<2x2304xbf16, #tpu.memory_space<vmem>>, vector<2x2304xbf16>
    %c0_1 = arith.constant 0 : index
    %c0_2 = arith.constant 0 : index
    %1 = vector.load %arg2[%c0_1, %c0_2] : memref<2304x600xbf16, #tpu.memory_space<vmem>>, vector<2304x600xbf16>
    %cst = arith.constant dense<0.000000e+00> : vector<2x600xf32>
    %2 = tpu.matmul %0, %1, %cst {dimension_numbers = #tpu.dot_dimension_numbers<[1], [0], [0], [1], [0, 0, 1, 1], [], []>} : vector<2x2304xbf16>, vector<2304x600xbf16>, vector<2x600xf32> -> vector<2x600xf32>
    %c0_3 = arith.constant 0 : index
    %c0_4 = arith.constant 0 : index
    %3 = vector.load %arg3[%c0_3, %c0_4] : memref<1x600xf32, #tpu.memory_space<vmem>>, vector<1x600xf32>
    %4 = vector.broadcast %3 : vector<1x600xf32> to vector<2x600xf32>
    %5 = arith.addf %2, %4 : vector<2x600xf32>
    %6 = arith.truncf %5 : vector<2x600xf32> to vector<2x600xbf16>
    %c0_5 = arith.constant 0 : index
    %c0_6 = arith.constant 0 : index
    %7 = vector.load %arg4[%c0_5, %c0_6] : memref<600x120xbf16, #tpu.memory_space<vmem>>, vector<600x120xbf16>
    %cst_7 = arith.constant dense<0.000000e+00> : vector<2x120xf32>
    %8 = tpu.matmul %6, %7, %cst_7 {dimension_numbers = #tpu.dot_dimension_numbers<[1], [0], [0], [1], [0, 0, 1, 1], [], []>} : vector<2x600xbf16>, vector<600x120xbf16>, vector<2x120xf32> -> vector<2x120xf32>
    %c0_8 = arith.constant 0 : index
    %c0_9 = arith.constant 0 : index
    %9 = vector.load %arg5[%c0_8, %c0_9] : memref<1x120xf32, #tpu.memory_space<vmem>>, vector<1x120xf32>
    %10 = vector.broadcast %9 : vector<1x120xf32> to vector<2x120xf32>
    %11 = arith.addf %8, %10 : vector<2x120xf32>
    %12 = arith.truncf %11 : vector<2x120xf32> to vector<2x120xbf16>
    %c0_10 = arith.constant 0 : index
    %c0_11 = arith.constant 0 : index
    %13 = vector.load %arg6[%c0_10, %c0_11] : memref<120x128xbf16, #tpu.memory_space<vmem>>, vector<120x128xbf16>
    %cst_12 = arith.constant dense<0.000000e+00> : vector<2x128xf32>
    %14 = tpu.matmul %12, %13, %cst_12 {dimension_numbers = #tpu.dot_dimension_numbers<[1], [0], [0], [1], [0, 0, 1, 1], [], []>} : vector<2x120xbf16>, vector<120x128xbf16>, vector<2x128xf32> -> vector<2x128xf32>
    %c0_13 = arith.constant 0 : index
    %c0_14 = arith.constant 0 : index
    %15 = vector.load %arg7[%c0_13, %c0_14] : memref<1x128xf32, #tpu.memory_space<vmem>>, vector<1x128xf32>
    %16 = vector.broadcast %15 : vector<1x128xf32> to vector<2x128xf32>
    %17 = arith.addf %14, %16 : vector<2x128xf32>
    %c0_15 = arith.constant 0 : index
    %c0_16 = arith.constant 0 : index
    %18 = vector.load %arg8[%c0_15, %c0_16] : memref<2x128xf32, #tpu.memory_space<vmem>>, vector<2x128xf32>
    tpu.vector_store %arg8[%c0_15, %c0_16], %17 {strides = array<i32>} : memref<2x128xf32, #tpu.memory_space<vmem>>, vector<2x128xf32>,
    return
  }
  func.func @transform_0(%arg0: i32) -> (i32, i32) {
    %c0_i32 = arith.constant 0 : i32
    %c0_i32_0 = arith.constant 0 : i32
    return %arg0, %c0_i32 : i32, i32
  }
  func.func @transform_1(%arg0: i32) -> (i32, i32) {
    %c0_i32 = arith.constant 0 : i32
    %c0_i32_0 = arith.constant 0 : i32
    %c0_i32_1 = arith.constant 0 : i32
    return %c0_i32, %c0_i32_0 : i32, i32
  }
  func.func @transform_2(%arg0: i32) -> (i32, i32) {
    %c0_i32 = arith.constant 0 : i32
    %c0_i32_0 = arith.constant 0 : i32
    %c0_i32_1 = arith.constant 0 : i32
    return %c0_i32, %c0_i32_0 : i32, i32
  }
  func.func @transform_3(%arg0: i32) -> (i32, i32) {
    %c0_i32 = arith.constant 0 : i32
    %c0_i32_0 = arith.constant 0 : i32
    %c0_i32_1 = arith.constant 0 : i32
    return %c0_i32, %c0_i32_0 : i32, i32
  }
  func.func @transform_4(%arg0: i32) -> (i32, i32) {
    %c0_i32 = arith.constant 0 : i32
    %c0_i32_0 = arith.constant 0 : i32
    %c0_i32_1 = arith.constant 0 : i32
    return %c0_i32, %c0_i32_0 : i32, i32
  }
  func.func @transform_5(%arg0: i32) -> (i32, i32) {
    %c0_i32 = arith.constant 0 : i32
    %c0_i32_0 = arith.constant 0 : i32
    %c0_i32_1 = arith.constant 0 : i32
    return %c0_i32, %c0_i32_0 : i32, i32
  }
  func.func @transform_6(%arg0: i32) -> (i32, i32) {
    %c0_i32 = arith.constant 0 : i32
    %c0_i32_0 = arith.constant 0 : i32
    %c0_i32_1 = arith.constant 0 : i32
    return %c0_i32, %c0_i32_0 : i32, i32
  }
  func.func @transform_7(%arg0: i32) -> (i32, i32) {
    %c0_i32 = arith.constant 0 : i32
    %c0_i32_0 = arith.constant 0 : i32
    return %arg0, %c0_i32 : i32, i32
  }
}

</mosaic_0001>

<llo_original>
// kernel: forward.4
$region0: #{forward.4}
  #allocation0 [shape = 'u32[]', space=smem, size = 0x4, offset = 0x4, fixed_abs, tag = 'smem constant byte address 0x4 - core index']
  #allocation1 [shape = 'u32[72,128]{1,0:T(1,128)}', space=vmem, size = 0x9000, scoped, tag = 'internal scratch']
  %s0 = inlined_call_operand.vmem [shape: bf16[2,32,256], index: 0, kind: input, shape index: {}]
  %s1 = inlined_call_operand.vmem [shape: bf16[9,64,32], index: 1, kind: input, shape index: {}]
  %s2 = inlined_call_operand.vmem [shape: f32[64,1], index: 2, kind: input, shape index: {}]
  %s3 = inlined_call_operand.vmem [shape: f32[64,1], index: 3, kind: input, shape index: {}]
  %s4 = inlined_call_operand.vmem [shape: bf16[168,36], index: 4, kind: input, shape index: {}]
  %s5 = inlined_call_operand.vmem [shape: bf16[2,64,36], index: 5, kind: output, shape index: {}]
  %s6 = sld [smem:[#allocation0]]
  $region53: #{forward.4} parent=0
    _
  %s8 = ssub.s32 1, %s6
  %s9 = scalar_select 0, %s8, %s6
  loop: start=0, step=1, limit=4
  $region2: #{forward.4} parent=0 // loop_pre_header
    _
  $region3: #{forward.4} parent=0 // loop_header
    %s11 = sphi 0, %s15
    %p12 = scmp.ge.s32.totalorder %s11, 4
    %s21 = sphi 0, %s23
    %s24 = sphi 0, %s21
    %s25 = sphi 0, %s24
    %s41 = sphi 0, %s25
    %s45 = sphi 0, %s45
    %s47 = sphi 0, %s45
    %s48 = sphi 0, %s47
    %s62 = sphi 0, %s48
    %s66 = sphi 0, %s66
    %s68 = sphi 0, %s66
    %s69 = sphi 0, %s68
    %s83 = sphi 0, %s69
    %s87 = sphi 0, %s87
    %s89 = sphi 0, %s87
    %s90 = sphi 0, %s89
    %s104 = sphi 0, %s90
    %s108 = sphi 0, %s108
    %s110 = sphi 0, %s108
    %s111 = sphi 0, %s110
    %s125 = sphi 0, %s111
    %s131 = sphi 0, %s133
    %s134 = sphi 0, %s131
    %s135 = sphi 0, %s134
    %s151 = sphi 0, %s135
  $region4: #{forward.4} parent=0 // loop_header_branch
    %14 = sbr.rel (%p12) target = $region8
  $region5: #{forward.4} parent=0 // loop_body
    %s16 = ssub.s32 %s11, 1
    %s17 = ssub.s32 %s11, 2
    %s18 = sadd.s32 %s11, 1
    %s19 = ssub.s32 %s11, %s18
    %p20 = scmp.eq.s32.totalorder %s19, 0
    %s22 = sadd.s32 %s21, 1
    %s23 = scalar_select %p20, %s21, %s22
    %p26 = pneg %p20
    %p27 = scmp.eq.s32.totalorder %s11, 1
    %p28 = por %p26, %p27
    %p29 = scmp.ne.s32.totalorder %s21, %s24
    %p30 = scmp.eq.s32.totalorder %s11, 0
    %p31 = por %p29, %p30
    %p32 = scmp.ne.s32.totalorder %s21, %s24
    %p33 = scmp.eq.s32.totalorder %s16, 1
    %p34 = por %p32, %p33
    %p35 = scmp.ne.s32.totalorder %s24, %s25
    %p36 = scmp.eq.s32.totalorder %s16, 0
    %p37 = por %p35, %p36
    %p38 = scmp.ne.s32.totalorder %s24, %s25
    %p39 = scmp.eq.s32.totalorder %s17, 1
    %p40 = por %p38, %p39
    %p42 = scmp.ne.s32.totalorder %s25, %s41
    %p43 = scmp.eq.s32.totalorder %s17, 0
    %p44 = por %p42, %p43
    %s46 = sadd.s32 %s45, 1
    %p49 = scmp.eq.s32.totalorder %s11, 1
    %p50 = scmp.ne.s32.totalorder %s45, %s47
    %p51 = scmp.eq.s32.totalorder %s11, 0
    %p52 = por %p50, %p51
    %p53 = scmp.ne.s32.totalorder %s45, %s47
    %p54 = scmp.eq.s32.totalorder %s16, 1
    %p55 = por %p53, %p54
    %p56 = scmp.ne.s32.totalorder %s47, %s48
    %p57 = scmp.eq.s32.totalorder %s16, 0
    %p58 = por %p56, %p57
    %p59 = scmp.ne.s32.totalorder %s47, %s48
    %p60 = scmp.eq.s32.totalorder %s17, 1
    %p61 = por %p59, %p60
    %p63 = scmp.ne.s32.totalorder %s48, %s62
    %p64 = scmp.eq.s32.totalorder %s17, 0
    %p65 = por %p63, %p64
    %s67 = sadd.s32 %s66, 1
    %p70 = scmp.eq.s32.totalorder %s11, 1
    %p71 = scmp.ne.s32.totalorder %s66, %s68
    %p72 = scmp.eq.s32.totalorder %s11, 0
    %p73 = por %p71, %p72
    %p74 = scmp.ne.s32.totalorder %s66, %s68
    %p75 = scmp.eq.s32.totalorder %s16, 1
    %p76 = por %p74, %p75
    %p77 = scmp.ne.s32.totalorder %s68, %s69
    %p78 = scmp.eq.s32.totalorder %s16, 0
    %p79 = por %p77, %p78
    %p80 = scmp.ne.s32.totalorder %s68, %s69
    %p81 = scmp.eq.s32.totalorder %s17, 1
    %p82 = por %p80, %p81
    %p84 = scmp.ne.s32.totalorder %s69, %s83
    %p85 = scmp.eq.s32.totalorder %s17, 0
    %p86 = por %p84, %p85
    %s88 = sadd.s32 %s87, 1
    %p91 = scmp.eq.s32.totalorder %s11, 1
    %p92 = scmp.ne.s32.totalorder %s87, %s89
    %p93 = scmp.eq.s32.totalorder %s11, 0
    %p94 = por %p92, %p93
    %p95 = scmp.ne.s32.totalorder %s87, %s89
    %p96 = scmp.eq.s32.totalorder %s16, 1
    %p97 = por %p95, %p96
    %p98 = scmp.ne.s32.totalorder %s89, %s90
    %p99 = scmp.eq.s32.totalorder %s16, 0
    %p100 = por %p98, %p99
    %p101 = scmp.ne.s32.totalorder %s89, %s90
    %p102 = scmp.eq.s32.totalorder %s17, 1
    %p103 = por %p101, %p102
    %p105 = scmp.ne.s32.totalorder %s90, %s104
    %p106 = scmp.eq.s32.totalorder %s17, 0
    %p107 = por %p105, %p106
    %s109 = sadd.s32 %s108, 1
    %p112 = scmp.eq.s32.totalorder %s11, 1
    %p113 = scmp.ne.s32.totalorder %s108, %s110
    %p114 = scmp.eq.s32.totalorder %s11, 0
    %p115 = por %p113, %p114
    %p116 = scmp.ne.s32.totalorder %s108, %s110
    %p117 = scmp.eq.s32.totalorder %s16, 1
    %p118 = por %p116, %p117
    %p119 = scmp.ne.s32.totalorder %s110, %s111
    %p120 = scmp.eq.s32.totalorder %s16, 0
    %p121 = por %p119, %p120
    %p122 = scmp.ne.s32.totalorder %s110, %s111
    %p123 = scmp.eq.s32.totalorder %s17, 1
    %p124 = por %p122, %p123
    %p126 = scmp.ne.s32.totalorder %s111, %s125
    %p127 = scmp.eq.s32.totalorder %s17, 0
    %p128 = por %p126, %p127
    %s129 = ssub.s32 %s11, %s18
    %p130 = scmp.eq.s32.totalorder %s129, 0
    %s132 = sadd.s32 %s131, 1
    %s133 = scalar_select %p130, %s131, %s132
    %p136 = pneg %p130
    %p137 = scmp.eq.s32.totalorder %s11, 1
    %p138 = por %p136, %p137
    %p139 = scmp.ne.s32.totalorder %s131, %s134
    %p140 = scmp.eq.s32.totalorder %s11, 0
    %p141 = por %p139, %p140
    %p142 = scmp.ne.s32.totalorder %s131, %s134
    %p143 = scmp.eq.s32.totalorder %s16, 1
    %p144 = por %p142, %p143
    %p145 = scmp.ne.s32.totalorder %s134, %s135
    %p146 = scmp.eq.s32.totalorder %s16, 0
    %p147 = por %p145, %p146
    %p148 = scmp.ne.s32.totalorder %s134, %s135
    %p149 = scmp.eq.s32.totalorder %s17, 1
    %p150 = por %p148, %p149
    %p152 = scmp.ne.s32.totalorder %s135, %s151
    %p153 = scmp.eq.s32.totalorder %s17, 0
    %p154 = por %p152, %p153
    %p155 = scmp.le.s32.totalorder 1, %s11
    %p156 = scmp.lt.s32.totalorder %s11, 3
    %p157 = pnand %p155, %p156
    %p158 = pneg %p157
    // Predicated region
    $region9: #{forward.4} parent=5 // pred_check
      _
    $region10: #{forward.4} parent=5 // pred_check_branch
      %160 = sbr.rel (%p157) target = $region12
    $region11: #{forward.4} parent=5 // pred_region
      %s161 = ssub.s32 %s11, 1
      // Predicated region
      $region13: #{forward.4} parent=11 // pred_check
        %p162 = pneg %p58
      $region14: #{forward.4} parent=11 // pred_check_branch
        %164 = sbr.rel (%p162) target = $region16
      $region15: #{forward.4} parent=11 // pred_region
        _
      $region16: #{forward.4} parent=11 // pred_fallthru
        _
      // Predicated region
      $region17: #{forward.4} parent=11 // pred_check
        %p165 = pneg %p79
      $region18: #{forward.4} parent=11 // pred_check_branch
        %167 = sbr.rel (%p165) target = $region20
      $region19: #{forward.4} parent=11 // pred_region
        _
      $region20: #{forward.4} parent=11 // pred_fallthru
        _
      // Predicated region
      $region21: #{forward.4} parent=11 // pred_check
        %p168 = pneg %p100
      $region22: #{forward.4} parent=11 // pred_check_branch
        %170 = sbr.rel (%p168) target = $region24
      $region23: #{forward.4} parent=11 // pred_region
        _
      $region24: #{forward.4} parent=11 // pred_fallthru
        _
      // Predicated region
      $region25: #{forward.4} parent=11 // pred_check
        %p171 = pneg %p121
      $region26: #{forward.4} parent=11 // pred_check_branch
        %173 = sbr.rel (%p171) target = $region28
      $region27: #{forward.4} parent=11 // pred_region
        _
      $region28: #{forward.4} parent=11 // pred_fallthru
        _
    $region12: #{forward.4} parent=5 // pred_fallthru
      _
    %p174 = scmp.lt.s32.totalorder %s11, 2
    // Predicated region
    $region29: #{forward.4} parent=5 // pred_check
      %p175 = pneg %p174
    $region30: #{forward.4} parent=5 // pred_check_branch
      %177 = sbr.rel (%p175) target = $region32
    $region31: #{forward.4} parent=5 // pred_region
      // Predicated region
      $region33: #{forward.4} parent=31 // pred_check
        %p178 = pneg %p31
      $region34: #{forward.4} parent=31 // pred_check_branch
        %180 = sbr.rel (%p178) target = $region36
      $region35: #{forward.4} parent=31 // pred_region
        %p181 = scmp.lt.s32.totalorder %s11, 1
        %s182 = scalar_select %p181, %s11, 1
        %s183 = smul.addr %s182, 8
        %s184 = smul.addr %s183, 4
        %s185 = scalar_lea.vmem %s0, %s184
      $region36: #{forward.4} parent=31 // pred_fallthru
        _
    $region32: #{forward.4} parent=5 // pred_fallthru
      _
    %p186 = scmp.le.s32.totalorder 1, %s11
    %p187 = scmp.lt.s32.totalorder %s11, 3
    %p188 = pnand %p186, %p187
    %p189 = pneg %p188
    // Predicated region
    $region37: #{forward.4} parent=5 // pred_check
      _
    $region38: #{forward.4} parent=5 // pred_check_branch
      %191 = sbr.rel (%p188) target = $region40
    $region39: #{forward.4} parent=5 // pred_region
      %s192 = ssub.s32 %s11, 1
      %p193 = scmp.lt.s32.totalorder %s16, 1
      %s194 = scalar_select %p193, %s16, 1
      %s195 = smul.addr %s194, 8
      %s196 = smul.addr %s195, 4
      %s197 = scalar_lea.vmem %s0, %s196
      %p198 = pneg %p37
      %p199 = pneg %p34
      %p200 = pneg %p58
      %p201 = pneg %p55
      %p202 = pneg %p79
      %p203 = pneg %p76
      %p204 = pneg %p100
      %p205 = pneg %p97
      %p206 = pneg %p121
      %p207 = pneg %p118
      %p208 = pneg %p147
      %p209 = pneg %p144
      %p210 = scmp.lt.s32.totalorder %s16, 1
      %s211 = scalar_select %p210, %s16, 1
      %s212 = smul.addr %s211, 8
      %s213 = smul.addr %s212, 4
      %s214 = scalar_lea.vmem %s5, %s213
      %p215 = scmp.lt.s32.totalorder %s16, 1
      %s216 = scalar_select %p215, %s16, 1
      %s217 = smul.addr %s216, 8
      %s218 = smul.addr %s217, 4
      %s219 = scalar_lea.vmem %s0, %s218
      %p220 = scmp.lt.s32.totalorder %s16, 1
      %s221 = scalar_select %p220, %s16, 1
      %s222 = smul.addr %s221, 8
      %s223 = smul.addr %s222, 4
      %s224 = scalar_lea.vmem %s5, %s223
      %v226 = vld [vmem:[%s219] sm:$0xff]
      %v227 = vld [vmem:[%s219 + $0x8] sm:$0xff]
      %v228 = vld [vmem:[%s219 + $0x10] sm:$0xff]
      %v229 = vld [vmem:[%s219 + $0x18] sm:$0xff]
      %v230 = vld [vmem:[%s1] sm:$0xf]
      %v231 = vld [vmem:[%s1 + $0x4] sm:$0xf]
      %v232 = vld [vmem:[%s1 + $0x8] sm:$0xf]
      %v233 = vld [vmem:[%s1 + $0xc] sm:$0xf]
      %v234 = vld [vmem:[%s1 + $0x10] sm:$0xf]
      %v235 = vld [vmem:[%s1 + $0x14] sm:$0xf]
      %v236 = vld [vmem:[%s1 + $0x18] sm:$0xf]
      %v237 = vld [vmem:[%s1 + $0x1c] sm:$0xf]
      %s238 = scalar_lea.vmem %s1, 32
      %v239 = vld [vmem:[%s238] sm:$0xf]
      %v240 = vld [vmem:[%s238 + $0x4] sm:$0xf]
      %v241 = vld [vmem:[%s238 + $0x8] sm:$0xf]
      %v242 = vld [vmem:[%s238 + $0xc] sm:$0xf]
      %v243 = vld [vmem:[%s238 + $0x10] sm:$0xf]
      %v244 = vld [vmem:[%s238 + $0x14] sm:$0xf]
      %v245 = vld [vmem:[%s238 + $0x18] sm:$0xf]
      %v246 = vld [vmem:[%s238 + $0x1c] sm:$0xf]
      %v255 = vunpack.c.l.b16 %v239
      %v256 = vunpack.c.l.b16 %v240
      %v257 = vunpack.c.l.b16 %v241
      %v258 = vunpack.c.l.b16 %v242
      %v259 = vunpack.c.l.b16 %v243
      %v260 = vunpack.c.l.b16 %v244
      %v261 = vunpack.c.l.b16 %v245
      %v262 = vunpack.c.l.b16 %v246
      %v263 = vpack.c.b16 %v256, %v255
      %v264 = vpack.c.b16 %v258, %v257
      %v265 = vpack.c.b16 %v260, %v259
      %v266 = vpack.c.b16 %v262, %v261
      %v271 = vunpack.c.l.b16 %v226
      %v272 = vunpack.c.h.b16 %v226
      %v273 = vunpack.c.l.b16 %v227
      %v274 = vunpack.c.h.b16 %v227
      %v275 = vunpack.c.l.b16 %v228
      %v276 = vunpack.c.h.b16 %v228
      %v277 = vunpack.c.l.b16 %v229
      %v278 = vunpack.c.h.b16 %v229
      %v279 = vpack.c.b16 %v273, %v271
      %v280 = vpack.c.b16 %v274, %v272
      %v281 = vpack.c.b16 %v277, %v275
      %v282 = vpack.c.b16 %v278, %v276
      %283 = vrot.lane.b32.xlu0 %v279, 127
      %v284 = vpop.permute.xlu0 %283
      %285 = vrot.lane.b32.xlu0 %v280, 127
      %v286 = vpop.permute.xlu0 %285
      %287 = vrot.lane.b32.xlu0 %v281, 127
      %v288 = vpop.permute.xlu0 %287
      %289 = vrot.lane.b32.xlu0 %v282, 127
      %v290 = vpop.permute.xlu0 %289
      %vm291 = vcmask 1039360
      %v292 = vsel %vm291, %v284, %v286
      %v293 = vsel %vm291, %v288, %v290
      %vm298 = vcmask 261120
      %v300 = vsel %vm298, %v263, 0
      %v303 = vsel %vm298, %v264, 0
      %v306 = vsel %vm298, %v265, 0
      %v309 = vsel %vm298, %v266, 0
      %311 = vmatpush.bf16.msra.mxu0 0
      %312 = vmatpush.bf16.msra.mxu0 0
      %313 = vmatpush.bf16.msra.mxu0 0
      %314 = vmatpush.bf16.msra.mxu0 0
      %315 = vmatpush.bf16.msra.mxu0 0
      %316 = vmatpush.bf16.msra.mxu0 0
      %317 = vmatpush.bf16.msra.mxu0 %v293
      %318 = vmatpush.bf16.msra.mxu0 %v292
      %319 = vmatmul.bf16.gmra.mxu0 %v300
      %v320 = vpop.f32.mrf.mxu0
      %v321 = vadd.f32 0.0, %v320
      %v322 = vpop.f32.mrf.mxu0
      %v323 = vadd.f32 0.0, %v322
      %324 = vmatmul.bf16.gmra.mxu0 %v303
      %v325 = vpop.f32.mrf.mxu0
      %v326 = vadd.f32 0.0, %v325
      %v327 = vpop.f32.mrf.mxu0
      %v328 = vadd.f32 0.0, %v327
      %329 = vmatmul.bf16.gmra.mxu0 %v306
      %v330 = vpop.f32.mrf.mxu0
      %v331 = vadd.f32 0.0, %v330
      %v332 = vpop.f32.mrf.mxu0
      %v333 = vadd.f32 0.0, %v332
      %334 = vmatmul.bf16.gmra.mxu0 %v309
      %v335 = vpop.f32.mrf.mxu0
      %v336 = vadd.f32 0.0, %v335
      %v337 = vpop.f32.mrf.mxu0
      %v338 = vadd.f32 0.0, %v337
      %339 = vdwg.mxu0
      %340 = vmatpush.bf16.msra.mxu0 0
      %341 = vmatpush.bf16.msra.mxu0 0
      %342 = vmatpush.bf16.msra.mxu0 0
      %343 = vmatpush.bf16.msra.mxu0 0
      %344 = vmatpush.bf16.msra.mxu0 0
      %345 = vmatpush.bf16.msra.mxu0 0
      %346 = vmatpush.bf16.msra.mxu0 %v290
      %347 = vmatpush.bf16.msra.mxu0 %v286
      %348 = vmatmul.bf16.gmra.mxu0 %v300
      %v349 = vpop.f32.mrf.mxu0
      %v350 = vadd.f32 0.0, %v349
      %v351 = vpop.f32.mrf.mxu0
      %v352 = vadd.f32 0.0, %v351
      %353 = vmatmul.bf16.gmra.mxu0 %v303
      %v354 = vpop.f32.mrf.mxu0
      %v355 = vadd.f32 0.0, %v354
      %v356 = vpop.f32.mrf.mxu0
      %v357 = vadd.f32 0.0, %v356
      %358 = vmatmul.bf16.gmra.mxu0 %v306
      %v359 = vpop.f32.mrf.mxu0
      %v360 = vadd.f32 0.0, %v359
      %v361 = vpop.f32.mrf.mxu0
      %v362 = vadd.f32 0.0, %v361
      %363 = vmatmul.bf16.gmra.mxu0 %v309
      %v364 = vpop.f32.mrf.mxu0
      %v365 = vadd.f32 0.0, %v364
      %v366 = vpop.f32.mrf.mxu0
      %v367 = vadd.f32 0.0, %v366
      %368 = vdwg.mxu0
      %v377 = vunpack.c.l.b16 %v230
      %v378 = vunpack.c.l.b16 %v231
      %v379 = vunpack.c.l.b16 %v232
      %v380 = vunpack.c.l.b16 %v233
      %v381 = vunpack.c.l.b16 %v234
      %v382 = vunpack.c.l.b16 %v235
      %v383 = vunpack.c.l.b16 %v236
      %v384 = vunpack.c.l.b16 %v237
      %v385 = vpack.c.b16 %v378, %v377
      %v386 = vpack.c.b16 %v380, %v379
      %v387 = vpack.c.b16 %v382, %v381
      %v388 = vpack.c.b16 %v384, %v383
      %v394 = vsel %vm298, %v385, 0
      %v397 = vsel %vm298, %v386, 0
      %v400 = vsel %vm298, %v387, 0
      %v403 = vsel %vm298, %v388, 0
      %405 = vmatpush.bf16.msra.mxu0 0
      %406 = vmatpush.bf16.msra.mxu0 0
      %407 = vmatpush.bf16.msra.mxu0 0
      %408 = vmatpush.bf16.msra.mxu0 0
      %409 = vmatpush.bf16.msra.mxu0 0
      %410 = vmatpush.bf16.msra.mxu0 0
      %411 = vmatpush.bf16.msra.mxu0 %v281
      %412 = vmatpush.bf16.msra.mxu0 %v279
      %413 = vmatmul.bf16.gmra.mxu0 %v394
      %v414 = vpop.f32.mrf.mxu0
      %v415 = vadd.f32 %v321, %v414
      %v416 = vpop.f32.mrf.mxu0
      %v417 = vadd.f32 %v323, %v416
      %418 = vmatmul.bf16.gmra.mxu0 %v397
      %v419 = vpop.f32.mrf.mxu0
      %v420 = vadd.f32 %v326, %v419
      %v421 = vpop.f32.mrf.mxu0
      %v422 = vadd.f32 %v328, %v421
      %423 = vmatmul.bf16.gmra.mxu0 %v400
      %v424 = vpop.f32.mrf.mxu0
      %v425 = vadd.f32 %v331, %v424
      %v426 = vpop.f32.mrf.mxu0
      %v427 = vadd.f32 %v333, %v426
      %428 = vmatmul.bf16.gmra.mxu0 %v403
      %v429 = vpop.f32.mrf.mxu0
      %v430 = vadd.f32 %v336, %v429
      %v431 = vpop.f32.mrf.mxu0
      %v432 = vadd.f32 %v338, %v431
      %433 = vdwg.mxu0
      %434 = vmatpush.bf16.msra.mxu0 0
      %435 = vmatpush.bf16.msra.mxu0 0
      %436 = vmatpush.bf16.msra.mxu0 0
      %437 = vmatpush.bf16.msra.mxu0 0
      %438 = vmatpush.bf16.msra.mxu0 0
      %439 = vmatpush.bf16.msra.mxu0 0
      %440 = vmatpush.bf16.msra.mxu0 %v282
      %441 = vmatpush.bf16.msra.mxu0 %v280
      %442 = vmatmul.bf16.gmra.mxu0 %v394
      %v443 = vpop.f32.mrf.mxu0
      %v444 = vadd.f32 %v350, %v443
      %v445 = vpop.f32.mrf.mxu0
      %v446 = vadd.f32 %v352, %v445
      %447 = vmatmul.bf16.gmra.mxu0 %v397
      %v448 = vpop.f32.mrf.mxu0
      %v449 = vadd.f32 %v355, %v448
      %v450 = vpop.f32.mrf.mxu0
      %v451 = vadd.f32 %v357, %v450
      %452 = vmatmul.bf16.gmra.mxu0 %v400
      %v453 = vpop.f32.mrf.mxu0
      %v454 = vadd.f32 %v360, %v453
      %v455 = vpop.f32.mrf.mxu0
      %v456 = vadd.f32 %v362, %v455
      %457 = vmatmul.bf16.gmra.mxu0 %v403
      %v458 = vpop.f32.mrf.mxu0
      %v459 = vadd.f32 %v365, %v458
      %v460 = vpop.f32.mrf.mxu0
      %v461 = vadd.f32 %v367, %v460
      %462 = vdwg.mxu0
      %s463 = scalar_lea.vmem %s1, 64
      %v464 = vld [vmem:[%s463] sm:$0xf]
      %v465 = vld [vmem:[%s463 + $0x4] sm:$0xf]
      %v466 = vld [vmem:[%s463 + $0x8] sm:$0xf]
      %v467 = vld [vmem:[%s463 + $0xc] sm:$0xf]
      %v468 = vld [vmem:[%s463 + $0x10] sm:$0xf]
      %v469 = vld [vmem:[%s463 + $0x14] sm:$0xf]
      %v470 = vld [vmem:[%s463 + $0x18] sm:$0xf]
      %v471 = vld [vmem:[%s463 + $0x1c] sm:$0xf]
      %v480 = vunpack.c.l.b16 %v464
      %v481 = vunpack.c.l.b16 %v465
      %v482 = vunpack.c.l.b16 %v466
      %v483 = vunpack.c.l.b16 %v467
      %v484 = vunpack.c.l.b16 %v468
      %v485 = vunpack.c.l.b16 %v469
      %v486 = vunpack.c.l.b16 %v470
      %v487 = vunpack.c.l.b16 %v471
      %v488 = vpack.c.b16 %v481, %v480
      %v489 = vpack.c.b16 %v483, %v482
      %v490 = vpack.c.b16 %v485, %v484
      %v491 = vpack.c.b16 %v487, %v486
      %492 = vrot.lane.b32.xlu0 %v279, 126
      %v493 = vpop.permute.xlu0 %492
      %494 = vrot.lane.b32.xlu0 %v280, 126
      %v495 = vpop.permute.xlu0 %494
      %496 = vrot.lane.b32.xlu0 %v281, 126
      %v497 = vpop.permute.xlu0 %496
      %498 = vrot.lane.b32.xlu0 %v282, 126
      %v499 = vpop.permute.xlu0 %498
      %vm500 = vcmask 1031168
      %v501 = vsel %vm500, %v493, %v495
      %v502 = vsel %vm500, %v497, %v499
      %v508 = vsel %vm298, %v488, 0
      %v511 = vsel %vm298, %v489, 0
      %v514 = vsel %vm298, %v490, 0
      %v517 = vsel %vm298, %v491, 0
      %519 = vmatpush.bf16.msra.mxu0 0
      %520 = vmatpush.bf16.msra.mxu0 0
      %521 = vmatpush.bf16.msra.mxu0 0
      %522 = vmatpush.bf16.msra.mxu0 0
      %523 = vmatpush.bf16.msra.mxu0 0
      %524 = vmatpush.bf16.msra.mxu0 0
      %525 = vmatpush.bf16.msra.mxu0 %v502
      %526 = vmatpush.bf16.msra.mxu0 %v501
      %527 = vmatmul.bf16.gmra.mxu0 %v508
      %v528 = vpop.f32.mrf.mxu0
      %v529 = vadd.f32 0.0, %v528
      %v530 = vpop.f32.mrf.mxu0
      %v531 = vadd.f32 0.0, %v530
      %532 = vmatmul.bf16.gmra.mxu0 %v511
      %v533 = vpop.f32.mrf.mxu0
      %v534 = vadd.f32 0.0, %v533
      %v535 = vpop.f32.mrf.mxu0
      %v536 = vadd.f32 0.0, %v535
      %537 = vmatmul.bf16.gmra.mxu0 %v514
      %v538 = vpop.f32.mrf.mxu0
      %v539 = vadd.f32 0.0, %v538
      %v540 = vpop.f32.mrf.mxu0
      %v541 = vadd.f32 0.0, %v540
      %542 = vmatmul.bf16.gmra.mxu0 %v517
      %v543 = vpop.f32.mrf.mxu0
      %v544 = vadd.f32 0.0, %v543
      %v545 = vpop.f32.mrf.mxu0
      %v546 = vadd.f32 0.0, %v545
      %547 = vdwg.mxu0
      %548 = vmatpush.bf16.msra.mxu0 0
      %549 = vmatpush.bf16.msra.mxu0 0
      %550 = vmatpush.bf16.msra.mxu0 0
      %551 = vmatpush.bf16.msra.mxu0 0
      %552 = vmatpush.bf16.msra.mxu0 0
      %553 = vmatpush.bf16.msra.mxu0 0
      %554 = vmatpush.bf16.msra.mxu0 %v499
      %555 = vmatpush.bf16.msra.mxu0 %v495
      %556 = vmatmul.bf16.gmra.mxu0 %v508
      %v557 = vpop.f32.mrf.mxu0
      %v558 = vadd.f32 0.0, %v557
      %v559 = vpop.f32.mrf.mxu0
      %v560 = vadd.f32 0.0, %v559
      %561 = vmatmul.bf16.gmra.mxu0 %v511
      %v562 = vpop.f32.mrf.mxu0
      %v563 = vadd.f32 0.0, %v562
      %v564 = vpop.f32.mrf.mxu0
      %v565 = vadd.f32 0.0, %v564
      %566 = vmatmul.bf16.gmra.mxu0 %v514
      %v567 = vpop.f32.mrf.mxu0
      %v568 = vadd.f32 0.0, %v567
      %v569 = vpop.f32.mrf.mxu0
      %v570 = vadd.f32 0.0, %v569
      %571 = vmatmul.bf16.gmra.mxu0 %v517
      %v572 = vpop.f32.mrf.mxu0
      %v573 = vadd.f32 0.0, %v572
      %v574 = vpop.f32.mrf.mxu0
      %v575 = vadd.f32 0.0, %v574
      %576 = vdwg.mxu0
      %v577 = vadd.f32 %v415, %v529
      %v578 = vadd.f32 %v444, %v558
      %v579 = vadd.f32 %v417, %v531
      %v580 = vadd.f32 %v446, %v560
      %v581 = vadd.f32 %v420, %v534
      %v582 = vadd.f32 %v449, %v563
      %v583 = vadd.f32 %v422, %v536
      %v584 = vadd.f32 %v451, %v565
      %v585 = vadd.f32 %v425, %v539
      %v586 = vadd.f32 %v454, %v568
      %v587 = vadd.f32 %v427, %v541
      %v588 = vadd.f32 %v456, %v570
      %v589 = vadd.f32 %v430, %v544
      %v590 = vadd.f32 %v459, %v573
      %v591 = vadd.f32 %v432, %v546
      %v592 = vadd.f32 %v461, %v575
      %s593 = scalar_lea.vmem %s1, 96
      %v594 = vld [vmem:[%s593] sm:$0xf]
      %v595 = vld [vmem:[%s593 + $0x4] sm:$0xf]
      %v596 = vld [vmem:[%s593 + $0x8] sm:$0xf]
      %v597 = vld [vmem:[%s593 + $0xc] sm:$0xf]
      %v598 = vld [vmem:[%s593 + $0x10] sm:$0xf]
      %v599 = vld [vmem:[%s593 + $0x14] sm:$0xf]
      %v600 = vld [vmem:[%s593 + $0x18] sm:$0xf]
      %v601 = vld [vmem:[%s593 + $0x1c] sm:$0xf]
      %v610 = vunpack.c.l.b16 %v594
      %v611 = vunpack.c.l.b16 %v595
      %v612 = vunpack.c.l.b16 %v596
      %v613 = vunpack.c.l.b16 %v597
      %v614 = vunpack.c.l.b16 %v598
      %v615 = vunpack.c.l.b16 %v599
      %v616 = vunpack.c.l.b16 %v600
      %v617 = vunpack.c.l.b16 %v601
      %v618 = vpack.c.b16 %v611, %v610
      %v619 = vpack.c.b16 %v613, %v612
      %v620 = vpack.c.b16 %v615, %v614
      %v621 = vpack.c.b16 %v617, %v616
      %622 = vrot.lane.b32.xlu0 %v279, 114
      %v623 = vpop.permute.xlu0 %622
      %624 = vrot.lane.b32.xlu0 %v280, 114
      %v625 = vpop.permute.xlu0 %624
      %626 = vrot.lane.b32.xlu0 %v281, 114
      %v627 = vpop.permute.xlu0 %626
      %628 = vrot.lane.b32.xlu0 %v282, 114
      %v629 = vpop.permute.xlu0 %628
      %vm630 = vcmask 932864
      %v631 = vsel %vm630, %v623, %v625
      %v632 = vsel %vm630, %v627, %v629
      %v638 = vsel %vm298, %v618, 0
      %v641 = vsel %vm298, %v619, 0
      %v644 = vsel %vm298, %v620, 0
      %v647 = vsel %vm298, %v621, 0
      %649 = vmatpush.bf16.msra.mxu0 0
      %650 = vmatpush.bf16.msra.mxu0 0
      %651 = vmatpush.bf16.msra.mxu0 0
      %652 = vmatpush.bf16.msra.mxu0 0
      %653 = vmatpush.bf16.msra.mxu0 0
      %654 = vmatpush.bf16.msra.mxu0 0
      %655 = vmatpush.bf16.msra.mxu0 %v632
      %656 = vmatpush.bf16.msra.mxu0 %v631
      %657 = vmatmul.bf16.gmra.mxu0 %v638
      %v658 = vpop.f32.mrf.mxu0
      %v659 = vadd.f32 0.0, %v658
      %v660 = vpop.f32.mrf.mxu0
      %v661 = vadd.f32 0.0, %v660
      %662 = vmatmul.bf16.gmra.mxu0 %v641
      %v663 = vpop.f32.mrf.mxu0
      %v664 = vadd.f32 0.0, %v663
      %v665 = vpop.f32.mrf.mxu0
      %v666 = vadd.f32 0.0, %v665
      %667 = vmatmul.bf16.gmra.mxu0 %v644
      %v668 = vpop.f32.mrf.mxu0
      %v669 = vadd.f32 0.0, %v668
      %v670 = vpop.f32.mrf.mxu0
      %v671 = vadd.f32 0.0, %v670
      %672 = vmatmul.bf16.gmra.mxu0 %v647
      %v673 = vpop.f32.mrf.mxu0
      %v674 = vadd.f32 0.0, %v673
      %v675 = vpop.f32.mrf.mxu0
      %v676 = vadd.f32 0.0, %v675
      %677 = vdwg.mxu0
      %678 = vmatpush.bf16.msra.mxu0 0
      %679 = vmatpush.bf16.msra.mxu0 0
      %680 = vmatpush.bf16.msra.mxu0 0
      %681 = vmatpush.bf16.msra.mxu0 0
      %682 = vmatpush.bf16.msra.mxu0 0
      %683 = vmatpush.bf16.msra.mxu0 0
      %684 = vmatpush.bf16.msra.mxu0 %v629
      %685 = vmatpush.bf16.msra.mxu0 %v625
      %686 = vmatmul.bf16.gmra.mxu0 %v638
      %v687 = vpop.f32.mrf.mxu0
      %v688 = vadd.f32 0.0, %v687
      %v689 = vpop.f32.mrf.mxu0
      %v690 = vadd.f32 0.0, %v689
      %691 = vmatmul.bf16.gmra.mxu0 %v641
      %v692 = vpop.f32.mrf.mxu0
      %v693 = vadd.f32 0.0, %v692
      %v694 = vpop.f32.mrf.mxu0
      %v695 = vadd.f32 0.0, %v694
      %696 = vmatmul.bf16.gmra.mxu0 %v644
      %v697 = vpop.f32.mrf.mxu0
      %v698 = vadd.f32 0.0, %v697
      %v699 = vpop.f32.mrf.mxu0
      %v700 = vadd.f32 0.0, %v699
      %701 = vmatmul.bf16.gmra.mxu0 %v647
      %v702 = vpop.f32.mrf.mxu0
      %v703 = vadd.f32 0.0, %v702
      %v704 = vpop.f32.mrf.mxu0
      %v705 = vadd.f32 0.0, %v704
      %706 = vdwg.mxu0
      %v707 = vadd.f32 %v577, %v659
      %v708 = vadd.f32 %v578, %v688
      %v709 = vadd.f32 %v579, %v661
      %v710 = vadd.f32 %v580, %v690
      %v711 = vadd.f32 %v581, %v664
      %v712 = vadd.f32 %v582, %v693
      %v713 = vadd.f32 %v583, %v666
      %v714 = vadd.f32 %v584, %v695
      %v715 = vadd.f32 %v585, %v669
      %v716 = vadd.f32 %v586, %v698
      %v717 = vadd.f32 %v587, %v671
      %v718 = vadd.f32 %v588, %v700
      %v719 = vadd.f32 %v589, %v674
      %v720 = vadd.f32 %v590, %v703
      %v721 = vadd.f32 %v591, %v676
      %v722 = vadd.f32 %v592, %v705
      %s723 = scalar_lea.vmem %s1, 128
      %v724 = vld [vmem:[%s723] sm:$0xf]
      %v725 = vld [vmem:[%s723 + $0x4] sm:$0xf]
      %v726 = vld [vmem:[%s723 + $0x8] sm:$0xf]
      %v727 = vld [vmem:[%s723 + $0xc] sm:$0xf]
      %v728 = vld [vmem:[%s723 + $0x10] sm:$0xf]
      %v729 = vld [vmem:[%s723 + $0x14] sm:$0xf]
      %v730 = vld [vmem:[%s723 + $0x18] sm:$0xf]
      %v731 = vld [vmem:[%s723 + $0x1c] sm:$0xf]
      %v740 = vunpack.c.l.b16 %v724
      %v741 = vunpack.c.l.b16 %v725
      %v742 = vunpack.c.l.b16 %v726
      %v743 = vunpack.c.l.b16 %v727
      %v744 = vunpack.c.l.b16 %v728
      %v745 = vunpack.c.l.b16 %v729
      %v746 = vunpack.c.l.b16 %v730
      %v747 = vunpack.c.l.b16 %v731
      %v748 = vpack.c.b16 %v741, %v740
      %v749 = vpack.c.b16 %v743, %v742
      %v750 = vpack.c.b16 %v745, %v744
      %v751 = vpack.c.b16 %v747, %v746
      %752 = vrot.lane.b32.xlu0 %v279, 113
      %v753 = vpop.permute.xlu0 %752
      %754 = vrot.lane.b32.xlu0 %v280, 113
      %v755 = vpop.permute.xlu0 %754
      %756 = vrot.lane.b32.xlu0 %v281, 113
      %v757 = vpop.permute.xlu0 %756
      %758 = vrot.lane.b32.xlu0 %v282, 113
      %v759 = vpop.permute.xlu0 %758
      %vm760 = vcmask 924672
      %v761 = vsel %vm760, %v753, %v755
      %v762 = vsel %vm760, %v757, %v759
      %v768 = vsel %vm298, %v748, 0
      %v771 = vsel %vm298, %v749, 0
      %v774 = vsel %vm298, %v750, 0
      %v777 = vsel %vm298, %v751, 0
      %779 = vmatpush.bf16.msra.mxu0 0
      %780 = vmatpush.bf16.msra.mxu0 0
      %781 = vmatpush.bf16.msra.mxu0 0
      %782 = vmatpush.bf16.msra.mxu0 0
      %783 = vmatpush.bf16.msra.mxu0 0
      %784 = vmatpush.bf16.msra.mxu0 0
      %785 = vmatpush.bf16.msra.mxu0 %v762
      %786 = vmatpush.bf16.msra.mxu0 %v761
      %787 = vmatmul.bf16.gmra.mxu0 %v768
      %v788 = vpop.f32.mrf.mxu0
      %v789 = vadd.f32 0.0, %v788
      %v790 = vpop.f32.mrf.mxu0
      %v791 = vadd.f32 0.0, %v790
      %792 = vmatmul.bf16.gmra.mxu0 %v771
      %v793 = vpop.f32.mrf.mxu0
      %v794 = vadd.f32 0.0, %v793
      %v795 = vpop.f32.mrf.mxu0
      %v796 = vadd.f32 0.0, %v795
      %797 = vmatmul.bf16.gmra.mxu0 %v774
      %v798 = vpop.f32.mrf.mxu0
      %v799 = vadd.f32 0.0, %v798
      %v800 = vpop.f32.mrf.mxu0
      %v801 = vadd.f32 0.0, %v800
      %802 = vmatmul.bf16.gmra.mxu0 %v777
      %v803 = vpop.f32.mrf.mxu0
      %v804 = vadd.f32 0.0, %v803
      %v805 = vpop.f32.mrf.mxu0
      %v806 = vadd.f32 0.0, %v805
      %807 = vdwg.mxu0
      %808 = vmatpush.bf16.msra.mxu0 0
      %809 = vmatpush.bf16.msra.mxu0 0
      %810 = vmatpush.bf16.msra.mxu0 0
      %811 = vmatpush.bf16.msra.mxu0 0
      %812 = vmatpush.bf16.msra.mxu0 0
      %813 = vmatpush.bf16.msra.mxu0 0
      %814 = vmatpush.bf16.msra.mxu0 %v759
      %815 = vmatpush.bf16.msra.mxu0 %v755
      %816 = vmatmul.bf16.gmra.mxu0 %v768
      %v817 = vpop.f32.mrf.mxu0
      %v818 = vadd.f32 0.0, %v817
      %v819 = vpop.f32.mrf.mxu0
      %v820 = vadd.f32 0.0, %v819
      %821 = vmatmul.bf16.gmra.mxu0 %v771
      %v822 = vpop.f32.mrf.mxu0
      %v823 = vadd.f32 0.0, %v822
      %v824 = vpop.f32.mrf.mxu0
      %v825 = vadd.f32 0.0, %v824
      %826 = vmatmul.bf16.gmra.mxu0 %v774
      %v827 = vpop.f32.mrf.mxu0
      %v828 = vadd.f32 0.0, %v827
      %v829 = vpop.f32.mrf.mxu0
      %v830 = vadd.f32 0.0, %v829
      %831 = vmatmul.bf16.gmra.mxu0 %v777
      %v832 = vpop.f32.mrf.mxu0
      %v833 = vadd.f32 0.0, %v832
      %v834 = vpop.f32.mrf.mxu0
      %v835 = vadd.f32 0.0, %v834
      %836 = vdwg.mxu0
      %v837 = vadd.f32 %v707, %v789
      %v838 = vadd.f32 %v708, %v818
      %v839 = vadd.f32 %v709, %v791
      %v840 = vadd.f32 %v710, %v820
      %v841 = vadd.f32 %v711, %v794
      %v842 = vadd.f32 %v712, %v823
      %v843 = vadd.f32 %v713, %v796
      %v844 = vadd.f32 %v714, %v825
      %v845 = vadd.f32 %v715, %v799
      %v846 = vadd.f32 %v716, %v828
      %v847 = vadd.f32 %v717, %v801
      %v848 = vadd.f32 %v718, %v830
      %v849 = vadd.f32 %v719, %v804
      %v850 = vadd.f32 %v720, %v833
      %v851 = vadd.f32 %v721, %v806
      %v852 = vadd.f32 %v722, %v835
      %s853 = scalar_lea.vmem %s1, 160
      %v854 = vld [vmem:[%s853] sm:$0xf]
      %v855 = vld [vmem:[%s853 + $0x4] sm:$0xf]
      %v856 = vld [vmem:[%s853 + $0x8] sm:$0xf]
      %v857 = vld [vmem:[%s853 + $0xc] sm:$0xf]
      %v858 = vld [vmem:[%s853 + $0x10] sm:$0xf]
      %v859 = vld [vmem:[%s853 + $0x14] sm:$0xf]
      %v860 = vld [vmem:[%s853 + $0x18] sm:$0xf]
      %v861 = vld [vmem:[%s853 + $0x1c] sm:$0xf]
      %v870 = vunpack.c.l.b16 %v854
      %v871 = vunpack.c.l.b16 %v855
      %v872 = vunpack.c.l.b16 %v856
      %v873 = vunpack.c.l.b16 %v857
      %v874 = vunpack.c.l.b16 %v858
      %v875 = vunpack.c.l.b16 %v859
      %v876 = vunpack.c.l.b16 %v860
      %v877 = vunpack.c.l.b16 %v861
      %v878 = vpack.c.b16 %v871, %v870
      %v879 = vpack.c.b16 %v873, %v872
      %v880 = vpack.c.b16 %v875, %v874
      %v881 = vpack.c.b16 %v877, %v876
      %882 = vrot.lane.b32.xlu0 %v279, 112
      %v883 = vpop.permute.xlu0 %882
      %884 = vrot.lane.b32.xlu0 %v280, 112
      %v885 = vpop.permute.xlu0 %884
      %886 = vrot.lane.b32.xlu0 %v281, 112
      %v887 = vpop.permute.xlu0 %886
      %888 = vrot.lane.b32.xlu0 %v282, 112
      %v889 = vpop.permute.xlu0 %888
      %vm890 = vcmask 916480
      %v891 = vsel %vm890, %v883, %v885
      %v892 = vsel %vm890, %v887, %v889
      %v898 = vsel %vm298, %v878, 0
      %v901 = vsel %vm298, %v879, 0
      %v904 = vsel %vm298, %v880, 0
      %v907 = vsel %vm298, %v881, 0
      %909 = vmatpush.bf16.msra.mxu0 0
      %910 = vmatpush.bf16.msra.mxu0 0
      %911 = vmatpush.bf16.msra.mxu0 0
      %912 = vmatpush.bf16.msra.mxu0 0
      %913 = vmatpush.bf16.msra.mxu0 0
      %914 = vmatpush.bf16.msra.mxu0 0
      %915 = vmatpush.bf16.msra.mxu0 %v892
      %916 = vmatpush.bf16.msra.mxu0 %v891
      %917 = vmatmul.bf16.gmra.mxu0 %v898
      %v918 = vpop.f32.mrf.mxu0
      %v919 = vadd.f32 0.0, %v918
      %v920 = vpop.f32.mrf.mxu0
      %v921 = vadd.f32 0.0, %v920
      %922 = vmatmul.bf16.gmra.mxu0 %v901
      %v923 = vpop.f32.mrf.mxu0
      %v924 = vadd.f32 0.0, %v923
      %v925 = vpop.f32.mrf.mxu0
      %v926 = vadd.f32 0.0, %v925
      %927 = vmatmul.bf16.gmra.mxu0 %v904
      %v928 = vpop.f32.mrf.mxu0
      %v929 = vadd.f32 0.0, %v928
      %v930 = vpop.f32.mrf.mxu0
      %v931 = vadd.f32 0.0, %v930
      %932 = vmatmul.bf16.gmra.mxu0 %v907
      %v933 = vpop.f32.mrf.mxu0
      %v934 = vadd.f32 0.0, %v933
      %v935 = vpop.f32.mrf.mxu0
      %v936 = vadd.f32 0.0, %v935
      %937 = vdwg.mxu0
      %938 = vmatpush.bf16.msra.mxu0 0
      %939 = vmatpush.bf16.msra.mxu0 0
      %940 = vmatpush.bf16.msra.mxu0 0
      %941 = vmatpush.bf16.msra.mxu0 0
      %942 = vmatpush.bf16.msra.mxu0 0
      %943 = vmatpush.bf16.msra.mxu0 0
      %944 = vmatpush.bf16.msra.mxu0 %v889
      %945 = vmatpush.bf16.msra.mxu0 %v885
      %946 = vmatmul.bf16.gmra.mxu0 %v898
      %v947 = vpop.f32.mrf.mxu0
      %v948 = vadd.f32 0.0, %v947
      %v949 = vpop.f32.mrf.mxu0
      %v950 = vadd.f32 0.0, %v949
      %951 = vmatmul.bf16.gmra.mxu0 %v901
      %v952 = vpop.f32.mrf.mxu0
      %v953 = vadd.f32 0.0, %v952
      %v954 = vpop.f32.mrf.mxu0
      %v955 = vadd.f32 0.0, %v954
      %956 = vmatmul.bf16.gmra.mxu0 %v904
      %v957 = vpop.f32.mrf.mxu0
      %v958 = vadd.f32 0.0, %v957
      %v959 = vpop.f32.mrf.mxu0
      %v960 = vadd.f32 0.0, %v959
      %961 = vmatmul.bf16.gmra.mxu0 %v907
      %v962 = vpop.f32.mrf.mxu0
      %v963 = vadd.f32 0.0, %v962
      %v964 = vpop.f32.mrf.mxu0
      %v965 = vadd.f32 0.0, %v964
      %966 = vdwg.mxu0
      %v967 = vadd.f32 %v837, %v919
      %v968 = vadd.f32 %v838, %v948
      %v969 = vadd.f32 %v839, %v921
      %v970 = vadd.f32 %v840, %v950
      %v971 = vadd.f32 %v841, %v924
      %v972 = vadd.f32 %v842, %v953
      %v973 = vadd.f32 %v843, %v926
      %v974 = vadd.f32 %v844, %v955
      %v975 = vadd.f32 %v845, %v929
      %v976 = vadd.f32 %v846, %v958
      %v977 = vadd.f32 %v847, %v931
      %v978 = vadd.f32 %v848, %v960
      %v979 = vadd.f32 %v849, %v934
      %v980 = vadd.f32 %v850, %v963
      %v981 = vadd.f32 %v851, %v936
      %v982 = vadd.f32 %v852, %v965
      %s983 = scalar_lea.vmem %s1, 192
      %v984 = vld [vmem:[%s983] sm:$0xf]
      %v985 = vld [vmem:[%s983 + $0x4] sm:$0xf]
      %v986 = vld [vmem:[%s983 + $0x8] sm:$0xf]
      %v987 = vld [vmem:[%s983 + $0xc] sm:$0xf]
      %v988 = vld [vmem:[%s983 + $0x10] sm:$0xf]
      %v989 = vld [vmem:[%s983 + $0x14] sm:$0xf]
      %v990 = vld [vmem:[%s983 + $0x18] sm:$0xf]
      %v991 = vld [vmem:[%s983 + $0x1c] sm:$0xf]
      %v1000 = vunpack.c.l.b16 %v984
      %v1001 = vunpack.c.l.b16 %v985
      %v1002 = vunpack.c.l.b16 %v986
      %v1003 = vunpack.c.l.b16 %v987
      %v1004 = vunpack.c.l.b16 %v988
      %v1005 = vunpack.c.l.b16 %v989
      %v1006 = vunpack.c.l.b16 %v990
      %v1007 = vunpack.c.l.b16 %v991
      %v1008 = vpack.c.b16 %v1001, %v1000
      %v1009 = vpack.c.b16 %v1003, %v1002
      %v1010 = vpack.c.b16 %v1005, %v1004
      %v1011 = vpack.c.b16 %v1007, %v1006
      %1012 = vrot.lane.b32.xlu0 %v279, 100
      %v1013 = vpop.permute.xlu0 %1012
      %1014 = vrot.lane.b32.xlu0 %v280, 100
      %v1015 = vpop.permute.xlu0 %1014
      %1016 = vrot.lane.b32.xlu0 %v281, 100
      %v1017 = vpop.permute.xlu0 %1016
      %1018 = vrot.lane.b32.xlu0 %v282, 100
      %v1019 = vpop.permute.xlu0 %1018
      %vm1020 = vcmask 818176
      %v1021 = vsel %vm1020, %v1013, %v1015
      %v1022 = vsel %vm1020, %v1017, %v1019
      %v1028 = vsel %vm298, %v1008, 0
      %v1031 = vsel %vm298, %v1009, 0
      %v1034 = vsel %vm298, %v1010, 0
      %v1037 = vsel %vm298, %v1011, 0
      %1039 = vmatpush.bf16.msra.mxu0 0
      %1040 = vmatpush.bf16.msra.mxu0 0
      %1041 = vmatpush.bf16.msra.mxu0 0
      %1042 = vmatpush.bf16.msra.mxu0 0
      %1043 = vmatpush.bf16.msra.mxu0 0
      %1044 = vmatpush.bf16.msra.mxu0 0
      %1045 = vmatpush.bf16.msra.mxu0 %v1022
      %1046 = vmatpush.bf16.msra.mxu0 %v1021
      %1047 = vmatmul.bf16.gmra.mxu0 %v1028
      %v1048 = vpop.f32.mrf.mxu0
      %v1049 = vadd.f32 0.0, %v1048
      %v1050 = vpop.f32.mrf.mxu0
      %v1051 = vadd.f32 0.0, %v1050
      %1052 = vmatmul.bf16.gmra.mxu0 %v1031
      %v1053 = vpop.f32.mrf.mxu0
      %v1054 = vadd.f32 0.0, %v1053
      %v1055 = vpop.f32.mrf.mxu0
      %v1056 = vadd.f32 0.0, %v1055
      %1057 = vmatmul.bf16.gmra.mxu0 %v1034
      %v1058 = vpop.f32.mrf.mxu0
      %v1059 = vadd.f32 0.0, %v1058
      %v1060 = vpop.f32.mrf.mxu0
      %v1061 = vadd.f32 0.0, %v1060
      %1062 = vmatmul.bf16.gmra.mxu0 %v1037
      %v1063 = vpop.f32.mrf.mxu0
      %v1064 = vadd.f32 0.0, %v1063
      %v1065 = vpop.f32.mrf.mxu0
      %v1066 = vadd.f32 0.0, %v1065
      %1067 = vdwg.mxu0
      %1068 = vmatpush.bf16.msra.mxu0 0
      %1069 = vmatpush.bf16.msra.mxu0 0
      %1070 = vmatpush.bf16.msra.mxu0 0
      %1071 = vmatpush.bf16.msra.mxu0 0
      %1072 = vmatpush.bf16.msra.mxu0 0
      %1073 = vmatpush.bf16.msra.mxu0 0
      %1074 = vmatpush.bf16.msra.mxu0 %v1019
      %1075 = vmatpush.bf16.msra.mxu0 %v1015
      %1076 = vmatmul.bf16.gmra.mxu0 %v1028
      %v1077 = vpop.f32.mrf.mxu0
      %v1078 = vadd.f32 0.0, %v1077
      %v1079 = vpop.f32.mrf.mxu0
      %v1080 = vadd.f32 0.0, %v1079
      %1081 = vmatmul.bf16.gmra.mxu0 %v1031
      %v1082 = vpop.f32.mrf.mxu0
      %v1083 = vadd.f32 0.0, %v1082
      %v1084 = vpop.f32.mrf.mxu0
      %v1085 = vadd.f32 0.0, %v1084
      %1086 = vmatmul.bf16.gmra.mxu0 %v1034
      %v1087 = vpop.f32.mrf.mxu0
      %v1088 = vadd.f32 0.0, %v1087
      %v1089 = vpop.f32.mrf.mxu0
      %v1090 = vadd.f32 0.0, %v1089
      %1091 = vmatmul.bf16.gmra.mxu0 %v1037
      %v1092 = vpop.f32.mrf.mxu0
      %v1093 = vadd.f32 0.0, %v1092
      %v1094 = vpop.f32.mrf.mxu0
      %v1095 = vadd.f32 0.0, %v1094
      %1096 = vdwg.mxu0
      %v1097 = vadd.f32 %v967, %v1049
      %v1098 = vadd.f32 %v968, %v1078
      %v1099 = vadd.f32 %v969, %v1051
      %v1100 = vadd.f32 %v970, %v1080
      %v1101 = vadd.f32 %v971, %v1054
      %v1102 = vadd.f32 %v972, %v1083
      %v1103 = vadd.f32 %v973, %v1056
      %v1104 = vadd.f32 %v974, %v1085
      %v1105 = vadd.f32 %v975, %v1059
      %v1106 = vadd.f32 %v976, %v1088
      %v1107 = vadd.f32 %v977, %v1061
      %v1108 = vadd.f32 %v978, %v1090
      %v1109 = vadd.f32 %v979, %v1064
      %v1110 = vadd.f32 %v980, %v1093
      %v1111 = vadd.f32 %v981, %v1066
      %v1112 = vadd.f32 %v982, %v1095
      %s1113 = scalar_lea.vmem %s1, 224
      %v1114 = vld [vmem:[%s1113] sm:$0xf]
      %v1115 = vld [vmem:[%s1113 + $0x4] sm:$0xf]
      %v1116 = vld [vmem:[%s1113 + $0x8] sm:$0xf]
      %v1117 = vld [vmem:[%s1113 + $0xc] sm:$0xf]
      %v1118 = vld [vmem:[%s1113 + $0x10] sm:$0xf]
      %v1119 = vld [vmem:[%s1113 + $0x14] sm:$0xf]
      %v1120 = vld [vmem:[%s1113 + $0x18] sm:$0xf]
      %v1121 = vld [vmem:[%s1113 + $0x1c] sm:$0xf]
      %v1130 = vunpack.c.l.b16 %v1114
      %v1131 = vunpack.c.l.b16 %v1115
      %v1132 = vunpack.c.l.b16 %v1116
      %v1133 = vunpack.c.l.b16 %v1117
      %v1134 = vunpack.c.l.b16 %v1118
      %v1135 = vunpack.c.l.b16 %v1119
      %v1136 = vunpack.c.l.b16 %v1120
      %v1137 = vunpack.c.l.b16 %v1121
      %v1138 = vpack.c.b16 %v1131, %v1130
      %v1139 = vpack.c.b16 %v1133, %v1132
      %v1140 = vpack.c.b16 %v1135, %v1134
      %v1141 = vpack.c.b16 %v1137, %v1136
      %1142 = vrot.lane.b32.xlu0 %v279, 99
      %v1143 = vpop.permute.xlu0 %1142
      %1144 = vrot.lane.b32.xlu0 %v280, 99
      %v1145 = vpop.permute.xlu0 %1144
      %1146 = vrot.lane.b32.xlu0 %v281, 99
      %v1147 = vpop.permute.xlu0 %1146
      %1148 = vrot.lane.b32.xlu0 %v282, 99
      %v1149 = vpop.permute.xlu0 %1148
      %vm1150 = vcmask 809984
      %v1151 = vsel %vm1150, %v1143, %v1145
      %v1152 = vsel %vm1150, %v1147, %v1149
      %v1158 = vsel %vm298, %v1138, 0
      %v1161 = vsel %vm298, %v1139, 0
      %v1164 = vsel %vm298, %v1140, 0
      %v1167 = vsel %vm298, %v1141, 0
      %1169 = vmatpush.bf16.msra.mxu0 0
      %1170 = vmatpush.bf16.msra.mxu0 0
      %1171 = vmatpush.bf16.msra.mxu0 0
      %1172 = vmatpush.bf16.msra.mxu0 0
      %1173 = vmatpush.bf16.msra.mxu0 0
      %1174 = vmatpush.bf16.msra.mxu0 0
      %1175 = vmatpush.bf16.msra.mxu0 %v1152
      %1176 = vmatpush.bf16.msra.mxu0 %v1151
      %1177 = vmatmul.bf16.gmra.mxu0 %v1158
      %v1178 = vpop.f32.mrf.mxu0
      %v1179 = vadd.f32 0.0, %v1178
      %v1180 = vpop.f32.mrf.mxu0
      %v1181 = vadd.f32 0.0, %v1180
      %1182 = vmatmul.bf16.gmra.mxu0 %v1161
      %v1183 = vpop.f32.mrf.mxu0
      %v1184 = vadd.f32 0.0, %v1183
      %v1185 = vpop.f32.mrf.mxu0
      %v1186 = vadd.f32 0.0, %v1185
      %1187 = vmatmul.bf16.gmra.mxu0 %v1164
      %v1188 = vpop.f32.mrf.mxu0
      %v1189 = vadd.f32 0.0, %v1188
      %v1190 = vpop.f32.mrf.mxu0
      %v1191 = vadd.f32 0.0, %v1190
      %1192 = vmatmul.bf16.gmra.mxu0 %v1167
      %v1193 = vpop.f32.mrf.mxu0
      %v1194 = vadd.f32 0.0, %v1193
      %v1195 = vpop.f32.mrf.mxu0
      %v1196 = vadd.f32 0.0, %v1195
      %1197 = vdwg.mxu0
      %1198 = vmatpush.bf16.msra.mxu0 0
      %1199 = vmatpush.bf16.msra.mxu0 0
      %1200 = vmatpush.bf16.msra.mxu0 0
      %1201 = vmatpush.bf16.msra.mxu0 0
      %1202 = vmatpush.bf16.msra.mxu0 0
      %1203 = vmatpush.bf16.msra.mxu0 0
      %1204 = vmatpush.bf16.msra.mxu0 %v1149
      %1205 = vmatpush.bf16.msra.mxu0 %v1145
      %1206 = vmatmul.bf16.gmra.mxu0 %v1158
      %v1207 = vpop.f32.mrf.mxu0
      %v1208 = vadd.f32 0.0, %v1207
      %v1209 = vpop.f32.mrf.mxu0
      %v1210 = vadd.f32 0.0, %v1209
      %1211 = vmatmul.bf16.gmra.mxu0 %v1161
      %v1212 = vpop.f32.mrf.mxu0
      %v1213 = vadd.f32 0.0, %v1212
      %v1214 = vpop.f32.mrf.mxu0
      %v1215 = vadd.f32 0.0, %v1214
      %1216 = vmatmul.bf16.gmra.mxu0 %v1164
      %v1217 = vpop.f32.mrf.mxu0
      %v1218 = vadd.f32 0.0, %v1217
      %v1219 = vpop.f32.mrf.mxu0
      %v1220 = vadd.f32 0.0, %v1219
      %1221 = vmatmul.bf16.gmra.mxu0 %v1167
      %v1222 = vpop.f32.mrf.mxu0
      %v1223 = vadd.f32 0.0, %v1222
      %v1224 = vpop.f32.mrf.mxu0
      %v1225 = vadd.f32 0.0, %v1224
      %1226 = vdwg.mxu0
      %v1227 = vadd.f32 %v1097, %v1179
      %v1228 = vadd.f32 %v1098, %v1208
      %v1229 = vadd.f32 %v1099, %v1181
      %v1230 = vadd.f32 %v1100, %v1210
      %v1231 = vadd.f32 %v1101, %v1184
      %v1232 = vadd.f32 %v1102, %v1213
      %v1233 = vadd.f32 %v1103, %v1186
      %v1234 = vadd.f32 %v1104, %v1215
      %v1235 = vadd.f32 %v1105, %v1189
      %v1236 = vadd.f32 %v1106, %v1218
      %v1237 = vadd.f32 %v1107, %v1191
      %v1238 = vadd.f32 %v1108, %v1220
      %v1239 = vadd.f32 %v1109, %v1194
      %v1240 = vadd.f32 %v1110, %v1223
      %v1241 = vadd.f32 %v1111, %v1196
      %v1242 = vadd.f32 %v1112, %v1225
      %s1243 = scalar_lea.vmem %s1, 256
      %v1244 = vld [vmem:[%s1243] sm:$0xf]
      %v1245 = vld [vmem:[%s1243 + $0x4] sm:$0xf]
      %v1246 = vld [vmem:[%s1243 + $0x8] sm:$0xf]
      %v1247 = vld [vmem:[%s1243 + $0xc] sm:$0xf]
      %v1248 = vld [vmem:[%s1243 + $0x10] sm:$0xf]
      %v1249 = vld [vmem:[%s1243 + $0x14] sm:$0xf]
      %v1250 = vld [vmem:[%s1243 + $0x18] sm:$0xf]
      %v1251 = vld [vmem:[%s1243 + $0x1c] sm:$0xf]
      %v1260 = vunpack.c.l.b16 %v1244
      %v1261 = vunpack.c.l.b16 %v1245
      %v1262 = vunpack.c.l.b16 %v1246
      %v1263 = vunpack.c.l.b16 %v1247
      %v1264 = vunpack.c.l.b16 %v1248
      %v1265 = vunpack.c.l.b16 %v1249
      %v1266 = vunpack.c.l.b16 %v1250
      %v1267 = vunpack.c.l.b16 %v1251
      %v1268 = vpack.c.b16 %v1261, %v1260
      %v1269 = vpack.c.b16 %v1263, %v1262
      %v1270 = vpack.c.b16 %v1265, %v1264
      %v1271 = vpack.c.b16 %v1267, %v1266
      %1272 = vrot.lane.b32.xlu0 %v279, 98
      %v1273 = vpop.permute.xlu0 %1272
      %1274 = vrot.lane.b32.xlu0 %v280, 98
      %v1275 = vpop.permute.xlu0 %1274
      %1276 = vrot.lane.b32.xlu0 %v281, 98
      %v1277 = vpop.permute.xlu0 %1276
      %1278 = vrot.lane.b32.xlu0 %v282, 98
      %v1279 = vpop.permute.xlu0 %1278
      %vm1280 = vcmask 801792
      %v1281 = vsel %vm1280, %v1273, %v1275
      %v1282 = vsel %vm1280, %v1277, %v1279
      %v1288 = vsel %vm298, %v1268, 0
      %v1291 = vsel %vm298, %v1269, 0
      %v1294 = vsel %vm298, %v1270, 0
      %v1297 = vsel %vm298, %v1271, 0
      %1299 = vmatpush.bf16.msra.mxu0 0
      %1300 = vmatpush.bf16.msra.mxu0 0
      %1301 = vmatpush.bf16.msra.mxu0 0
      %1302 = vmatpush.bf16.msra.mxu0 0
      %1303 = vmatpush.bf16.msra.mxu0 0
      %1304 = vmatpush.bf16.msra.mxu0 0
      %1305 = vmatpush.bf16.msra.mxu0 %v1282
      %1306 = vmatpush.bf16.msra.mxu0 %v1281
      %1307 = vmatmul.bf16.gmra.mxu0 %v1288
      %v1308 = vpop.f32.mrf.mxu0
      %v1309 = vadd.f32 0.0, %v1308
      %v1310 = vpop.f32.mrf.mxu0
      %v1311 = vadd.f32 0.0, %v1310
      %1312 = vmatmul.bf16.gmra.mxu0 %v1291
      %v1313 = vpop.f32.mrf.mxu0
      %v1314 = vadd.f32 0.0, %v1313
      %v1315 = vpop.f32.mrf.mxu0
      %v1316 = vadd.f32 0.0, %v1315
      %1317 = vmatmul.bf16.gmra.mxu0 %v1294
      %v1318 = vpop.f32.mrf.mxu0
      %v1319 = vadd.f32 0.0, %v1318
      %v1320 = vpop.f32.mrf.mxu0
      %v1321 = vadd.f32 0.0, %v1320
      %1322 = vmatmul.bf16.gmra.mxu0 %v1297
      %v1323 = vpop.f32.mrf.mxu0
      %v1324 = vadd.f32 0.0, %v1323
      %v1325 = vpop.f32.mrf.mxu0
      %v1326 = vadd.f32 0.0, %v1325
      %1327 = vdwg.mxu0
      %1328 = vmatpush.bf16.msra.mxu0 0
      %1329 = vmatpush.bf16.msra.mxu0 0
      %1330 = vmatpush.bf16.msra.mxu0 0
      %1331 = vmatpush.bf16.msra.mxu0 0
      %1332 = vmatpush.bf16.msra.mxu0 0
      %1333 = vmatpush.bf16.msra.mxu0 0
      %1334 = vmatpush.bf16.msra.mxu0 %v1279
      %1335 = vmatpush.bf16.msra.mxu0 %v1275
      %1336 = vmatmul.bf16.gmra.mxu0 %v1288
      %v1337 = vpop.f32.mrf.mxu0
      %v1338 = vadd.f32 0.0, %v1337
      %v1339 = vpop.f32.mrf.mxu0
      %v1340 = vadd.f32 0.0, %v1339
      %1341 = vmatmul.bf16.gmra.mxu0 %v1291
      %v1342 = vpop.f32.mrf.mxu0
      %v1343 = vadd.f32 0.0, %v1342
      %v1344 = vpop.f32.mrf.mxu0
      %v1345 = vadd.f32 0.0, %v1344
      %1346 = vmatmul.bf16.gmra.mxu0 %v1294
      %v1347 = vpop.f32.mrf.mxu0
      %v1348 = vadd.f32 0.0, %v1347
      %v1349 = vpop.f32.mrf.mxu0
      %v1350 = vadd.f32 0.0, %v1349
      %1351 = vmatmul.bf16.gmra.mxu0 %v1297
      %v1352 = vpop.f32.mrf.mxu0
      %v1353 = vadd.f32 0.0, %v1352
      %v1354 = vpop.f32.mrf.mxu0
      %v1355 = vadd.f32 0.0, %v1354
      %1356 = vdwg.mxu0
      %v1357 = vadd.f32 %v1227, %v1309
      %v1358 = vadd.f32 %v1228, %v1338
      %v1359 = vadd.f32 %v1229, %v1311
      %v1360 = vadd.f32 %v1230, %v1340
      %v1361 = vadd.f32 %v1231, %v1314
      %v1362 = vadd.f32 %v1232, %v1343
      %v1363 = vadd.f32 %v1233, %v1316
      %v1364 = vadd.f32 %v1234, %v1345
      %v1365 = vadd.f32 %v1235, %v1319
      %v1366 = vadd.f32 %v1236, %v1348
      %v1367 = vadd.f32 %v1237, %v1321
      %v1368 = vadd.f32 %v1238, %v1350
      %v1369 = vadd.f32 %v1239, %v1324
      %v1370 = vadd.f32 %v1240, %v1353
      %v1371 = vadd.f32 %v1241, %v1326
      %v1372 = vadd.f32 %v1242, %v1355
      %v1373 = vld [vmem:[%s2] sm:$0xff]
      %v1374 = vld [vmem:[%s2 + $0x8] sm:$0xff]
      %v1375 = vld [vmem:[%s2 + $0x10] sm:$0xff]
      %v1376 = vld [vmem:[%s2 + $0x18] sm:$0xff]
      %v1377 = vld [vmem:[%s2 + $0x20] sm:$0xff]
      %v1378 = vld [vmem:[%s2 + $0x28] sm:$0xff]
      %v1379 = vld [vmem:[%s2 + $0x30] sm:$0xff]
      %v1380 = vld [vmem:[%s2 + $0x38] sm:$0xff]
      %1382 = vset.pattern.permute.xlu0 0
      %1383 = vperm.xlu0 %1382, %v1373
      %v1384 = vpop.permute.xlu0 %1383
      %1387 = vset.pattern.permute.xlu0 0
      %1388 = vperm.xlu0 %1387, %v1374
      %v1389 = vpop.permute.xlu0 %1388
      %1392 = vset.pattern.permute.xlu0 0
      %1393 = vperm.xlu0 %1392, %v1375
      %v1394 = vpop.permute.xlu0 %1393
      %1397 = vset.pattern.permute.xlu0 0
      %1398 = vperm.xlu0 %1397, %v1376
      %v1399 = vpop.permute.xlu0 %1398
      %1402 = vset.pattern.permute.xlu0 0
      %1403 = vperm.xlu0 %1402, %v1377
      %v1404 = vpop.permute.xlu0 %1403
      %1407 = vset.pattern.permute.xlu0 0
      %1408 = vperm.xlu0 %1407, %v1378
      %v1409 = vpop.permute.xlu0 %1408
      %1412 = vset.pattern.permute.xlu0 0
      %1413 = vperm.xlu0 %1412, %v1379
      %v1414 = vpop.permute.xlu0 %1413
      %1417 = vset.pattern.permute.xlu0 0
      %1418 = vperm.xlu0 %1417, %v1380
      %v1419 = vpop.permute.xlu0 %1418
      %v1421 = vmul.f32 %v1357, %v1384
      %v1422 = vmul.f32 %v1358, %v1384
      %v1423 = vmul.f32 %v1359, %v1389
      %v1424 = vmul.f32 %v1360, %v1389
      %v1425 = vmul.f32 %v1361, %v1394
      %v1426 = vmul.f32 %v1362, %v1394
      %v1427 = vmul.f32 %v1363, %v1399
      %v1428 = vmul.f32 %v1364, %v1399
      %v1429 = vmul.f32 %v1365, %v1404
      %v1430 = vmul.f32 %v1366, %v1404
      %v1431 = vmul.f32 %v1367, %v1409
      %v1432 = vmul.f32 %v1368, %v1409
      %v1433 = vmul.f32 %v1369, %v1414
      %v1434 = vmul.f32 %v1370, %v1414
      %v1435 = vmul.f32 %v1371, %v1419
      %v1436 = vmul.f32 %v1372, %v1419
      %v1437 = vld [vmem:[%s3] sm:$0xff]
      %v1438 = vld [vmem:[%s3 + $0x8] sm:$0xff]
      %v1439 = vld [vmem:[%s3 + $0x10] sm:$0xff]
      %v1440 = vld [vmem:[%s3 + $0x18] sm:$0xff]
      %v1441 = vld [vmem:[%s3 + $0x20] sm:$0xff]
      %v1442 = vld [vmem:[%s3 + $0x28] sm:$0xff]
      %v1443 = vld [vmem:[%s3 + $0x30] sm:$0xff]
      %v1444 = vld [vmem:[%s3 + $0x38] sm:$0xff]
      %1446 = vset.pattern.permute.xlu0 0
      %1447 = vperm.xlu0 %1446, %v1437
      %v1448 = vpop.permute.xlu0 %1447
      %1451 = vset.pattern.permute.xlu0 0
      %1452 = vperm.xlu0 %1451, %v1438
      %v1453 = vpop.permute.xlu0 %1452
      %1456 = vset.pattern.permute.xlu0 0
      %1457 = vperm.xlu0 %1456, %v1439
      %v1458 = vpop.permute.xlu0 %1457
      %1461 = vset.pattern.permute.xlu0 0
      %1462 = vperm.xlu0 %1461, %v1440
      %v1463 = vpop.permute.xlu0 %1462
      %1466 = vset.pattern.permute.xlu0 0
      %1467 = vperm.xlu0 %1466, %v1441
      %v1468 = vpop.permute.xlu0 %1467
      %1471 = vset.pattern.permute.xlu0 0
      %1472 = vperm.xlu0 %1471, %v1442
      %v1473 = vpop.permute.xlu0 %1472
      %1476 = vset.pattern.permute.xlu0 0
      %1477 = vperm.xlu0 %1476, %v1443
      %v1478 = vpop.permute.xlu0 %1477
      %1481 = vset.pattern.permute.xlu0 0
      %1482 = vperm.xlu0 %1481, %v1444
      %v1483 = vpop.permute.xlu0 %1482
      %v1485 = vadd.f32 %v1421, %v1448
      %v1486 = vadd.f32 %v1422, %v1448
      %v1487 = vadd.f32 %v1423, %v1453
      %v1488 = vadd.f32 %v1424, %v1453
      %v1489 = vadd.f32 %v1425, %v1458
      %v1490 = vadd.f32 %v1426, %v1458
      %v1491 = vadd.f32 %v1427, %v1463
      %v1492 = vadd.f32 %v1428, %v1463
      %v1493 = vadd.f32 %v1429, %v1468
      %v1494 = vadd.f32 %v1430, %v1468
      %v1495 = vadd.f32 %v1431, %v1473
      %v1496 = vadd.f32 %v1432, %v1473
      %v1497 = vadd.f32 %v1433, %v1478
      %v1498 = vadd.f32 %v1434, %v1478
      %v1499 = vadd.f32 %v1435, %v1483
      %v1500 = vadd.f32 %v1436, %v1483
      %v1501 = vmax.f32 %v1485, 0.0
      %v1502 = vmax.f32 %v1486, 0.0
      %v1503 = vmax.f32 %v1487, 0.0
      %v1504 = vmax.f32 %v1488, 0.0
      %v1505 = vmax.f32 %v1489, 0.0
      %v1506 = vmax.f32 %v1490, 0.0
      %v1507 = vmax.f32 %v1491, 0.0
      %v1508 = vmax.f32 %v1492, 0.0
      %v1509 = vmax.f32 %v1493, 0.0
      %v1510 = vmax.f32 %v1494, 0.0
      %v1511 = vmax.f32 %v1495, 0.0
      %v1512 = vmax.f32 %v1496, 0.0
      %v1513 = vmax.f32 %v1497, 0.0
      %v1514 = vmax.f32 %v1498, 0.0
      %v1515 = vmax.f32 %v1499, 0.0
      %v1516 = vmax.f32 %v1500, 0.0
      %v1517 = vpack.c.bf16 %v1503, %v1501
      %v1518 = vpack.c.bf16 %v1504, %v1502
      %v1519 = vpack.c.bf16 %v1507, %v1505
      %v1520 = vpack.c.bf16 %v1508, %v1506
      %v1521 = vpack.c.bf16 %v1511, %v1509
      %v1522 = vpack.c.bf16 %v1512, %v1510
      %v1523 = vpack.c.bf16 %v1515, %v1513
      %v1524 = vpack.c.bf16 %v1516, %v1514
      %v1525 = vld [vmem:[%s4] sm:$0xf]
      %v1526 = vld [vmem:[%s4 + $0x4] sm:$0xf]
      %v1527 = vld [vmem:[%s4 + $0x8] sm:$0xf]
      %v1528 = vld [vmem:[%s4 + $0xc] sm:$0xf]
      %v1529 = vld [vmem:[%s4 + $0x10] sm:$0xf]
      %v1530 = vld [vmem:[%s4 + $0x14] sm:$0xf]
      %v1531 = vld [vmem:[%s4 + $0x18] sm:$0xf]
      %v1532 = vld [vmem:[%s4 + $0x1c] sm:$0xf]
      %v1533 = vld [vmem:[%s4 + $0x20] sm:$0xf]
      %v1534 = vld [vmem:[%s4 + $0x24] sm:$0xf]
      %v1535 = vld [vmem:[%s4 + $0x28] sm:$0xf]
      %v1536 = vld [vmem:[%s4 + $0x2c] sm:$0xf]
      %v1537 = vld [vmem:[%s4 + $0x30] sm:$0xf]
      %v1538 = vld [vmem:[%s4 + $0x34] sm:$0xf]
      %v1539 = vld [vmem:[%s4 + $0x38] sm:$0xf]
      %v1540 = vld [vmem:[%s4 + $0x3c] sm:$0xf]
      %v1541 = vld [vmem:[%s4 + $0x40] sm:$0xf]
      %v1542 = vld [vmem:[%s4 + $0x44] sm:$0xf]
      %v1543 = vld [vmem:[%s4 + $0x48] sm:$0xf]
      %v1544 = vld [vmem:[%s4 + $0x4c] sm:$0xf]
      %v1545 = vld [vmem:[%s4 + $0x50] sm:$0xf]
      %v1567 = vunpack.c.l.b16 %v1525
      %v1568 = vunpack.c.l.b16 %v1526
      %v1569 = vunpack.c.l.b16 %v1527
      %v1570 = vunpack.c.l.b16 %v1528
      %v1571 = vunpack.c.l.b16 %v1529
      %v1572 = vunpack.c.l.b16 %v1530
      %v1573 = vunpack.c.l.b16 %v1531
      %v1574 = vunpack.c.l.b16 %v1532
      %v1575 = vunpack.c.l.b16 %v1533
      %v1576 = vunpack.c.l.b16 %v1534
      %v1577 = vunpack.c.l.b16 %v1535
      %v1578 = vunpack.c.l.b16 %v1536
      %v1579 = vunpack.c.l.b16 %v1537
      %v1580 = vunpack.c.l.b16 %v1538
      %v1581 = vunpack.c.l.b16 %v1539
      %v1582 = vunpack.c.l.b16 %v1540
      %v1583 = vunpack.c.l.b16 %v1541
      %v1584 = vunpack.c.l.b16 %v1542
      %v1585 = vunpack.c.l.b16 %v1543
      %v1586 = vunpack.c.l.b16 %v1544
      %v1587 = vunpack.c.l.b16 %v1545
      %v1588 = vpack.c.b16 %v1568, %v1567
      %v1589 = vpack.c.b16 %v1570, %v1569
      %v1590 = vpack.c.b16 %v1572, %v1571
      %v1591 = vpack.c.b16 %v1574, %v1573
      %v1592 = vpack.c.b16 %v1576, %v1575
      %v1593 = vpack.c.b16 %v1578, %v1577
      %v1594 = vpack.c.b16 %v1580, %v1579
      %v1595 = vpack.c.b16 %v1582, %v1581
      %v1596 = vpack.c.b16 %v1584, %v1583
      %v1597 = vpack.c.b16 %v1586, %v1585
      %v1598 = vpack.c.b16 %v1587, %v1587
      %vm1609 = vcmask 326656
      %v1611 = vsel %vm1609, %v1518, 0
      %v1614 = vsel %vm1609, %v1520, 0
      %v1617 = vsel %vm1609, %v1522, 0
      %v1620 = vsel %vm1609, %v1524, 0
      %vm1622 = vcmask 1043456
      %v1624 = vsel %vm1622, %v1598, 0
      %1626 = vmatpush.bf16.msra.mxu0 %v1595
      %1627 = vmatpush.bf16.msra.mxu0 %v1594
      %1628 = vmatpush.bf16.msra.mxu0 %v1593
      %1629 = vmatpush.bf16.msra.mxu0 %v1592
      %1630 = vmatpush.bf16.msra.mxu0 %v1591
      %1631 = vmatpush.bf16.msra.mxu0 %v1590
      %1632 = vmatpush.bf16.msra.mxu0 %v1589
      %1633 = vmatpush.bf16.msra.mxu0 %v1588
      %1634 = vmatmul.bf16.gmra.mxu0 %v1517
      %v1635 = vpop.f32.mrf.mxu0
      %v1636 = vadd.f32 0.0, %v1635
      %v1637 = vpop.f32.mrf.mxu0
      %v1638 = vadd.f32 0.0, %v1637
      %1639 = vmatmul.bf16.gmra.mxu0 %v1519
      %v1640 = vpop.f32.mrf.mxu0
      %v1641 = vadd.f32 0.0, %v1640
      %v1642 = vpop.f32.mrf.mxu0
      %v1643 = vadd.f32 0.0, %v1642
      %1644 = vmatmul.bf16.gmra.mxu0 %v1521
      %v1645 = vpop.f32.mrf.mxu0
      %v1646 = vadd.f32 0.0, %v1645
      %v1647 = vpop.f32.mrf.mxu0
      %v1648 = vadd.f32 0.0, %v1647
      %1649 = vmatmul.bf16.gmra.mxu0 %v1523
      %v1650 = vpop.f32.mrf.mxu0
      %v1651 = vadd.f32 0.0, %v1650
      %v1652 = vpop.f32.mrf.mxu0
      %v1653 = vadd.f32 0.0, %v1652
      %1654 = vdwg.mxu0
      %1655 = vmatpush.bf16.msra.mxu0 0
      %1656 = vmatpush.bf16.msra.mxu0 0
      %1657 = vmatpush.bf16.msra.mxu0 0
      %1658 = vmatpush.bf16.msra.mxu0 0
      %1659 = vmatpush.bf16.msra.mxu0 0
      %1660 = vmatpush.bf16.msra.mxu0 %v1624
      %1661 = vmatpush.bf16.msra.mxu0 %v1597
      %1662 = vmatpush.bf16.msra.mxu0 %v1596
      %1663 = vmatmul.bf16.gmra.mxu0 %v1611
      %v1664 = vpop.f32.mrf.mxu0
      %v1665 = vadd.f32 %v1636, %v1664
      %v1666 = vpop.f32.mrf.mxu0
      %v1667 = vadd.f32 %v1638, %v1666
      %1668 = vmatmul.bf16.gmra.mxu0 %v1614
      %v1669 = vpop.f32.mrf.mxu0
      %v1670 = vadd.f32 %v1641, %v1669
      %v1671 = vpop.f32.mrf.mxu0
      %v1672 = vadd.f32 %v1643, %v1671
      %1673 = vmatmul.bf16.gmra.mxu0 %v1617
      %v1674 = vpop.f32.mrf.mxu0
      %v1675 = vadd.f32 %v1646, %v1674
      %v1676 = vpop.f32.mrf.mxu0
      %v1677 = vadd.f32 %v1648, %v1676
      %1678 = vmatmul.bf16.gmra.mxu0 %v1620
      %v1679 = vpop.f32.mrf.mxu0
      %v1680 = vadd.f32 %v1651, %v1679
      %v1681 = vpop.f32.mrf.mxu0
      %v1682 = vadd.f32 %v1653, %v1681
      %1683 = vdwg.mxu0
      %v1684 = vpack.c.bf16 %v1665, %v1665
      %v1685 = vpack.c.bf16 %v1667, %v1667
      %v1686 = vpack.c.bf16 %v1670, %v1670
      %v1687 = vpack.c.bf16 %v1672, %v1672
      %v1688 = vpack.c.bf16 %v1675, %v1675
      %v1689 = vpack.c.bf16 %v1677, %v1677
      %v1690 = vpack.c.bf16 %v1680, %v1680
      %v1691 = vpack.c.bf16 %v1682, %v1682
      %vm1692 = vcmask 289792
      %1693 = vst.msk [vmem:[%s224] sm:$0xf] %vm1692, %v1684
      %1694 = vst.msk [vmem:[%s224 + $0x4] sm:$0xf] %vm1692, %v1685
      %1695 = vst.msk [vmem:[%s224 + $0x8] sm:$0xf] %vm1692, %v1686
      %1696 = vst.msk [vmem:[%s224 + $0xc] sm:$0xf] %vm1692, %v1687
      %1697 = vst.msk [vmem:[%s224 + $0x10] sm:$0xf] %vm1692, %v1688
      %1698 = vst.msk [vmem:[%s224 + $0x14] sm:$0xf] %vm1692, %v1689
      %1699 = vst.msk [vmem:[%s224 + $0x18] sm:$0xf] %vm1692, %v1690
      %1700 = vst.msk [vmem:[%s224 + $0x1c] sm:$0xf] %vm1692, %v1691
      %p1701 = scmp.lt.s32.totalorder %s16, 1
      %s1702 = scalar_select %p1701, %s16, 1
      %s1703 = smul.addr %s1702, 8
      %s1704 = smul.addr %s1703, 4
      %s1705 = scalar_lea.vmem %s5, %s1704
      // Predicated region
      $region41: #{forward.4} parent=39 // pred_check
        %p1706 = pneg %p144
      $region42: #{forward.4} parent=39 // pred_check_branch
        %1708 = sbr.rel (%p1706) target = $region44
      $region43: #{forward.4} parent=39 // pred_region
        _
      $region44: #{forward.4} parent=39 // pred_fallthru
        _
    $region40: #{forward.4} parent=5 // pred_fallthru
      _
    %p1709 = scmp.le.s32.totalorder 2, %s11
    // Predicated region
    $region45: #{forward.4} parent=5 // pred_check
      %p1710 = pneg %p1709
    $region46: #{forward.4} parent=5 // pred_check_branch
      %1712 = sbr.rel (%p1710) target = $region48
    $region47: #{forward.4} parent=5 // pred_region
      %s1713 = ssub.s32 %s11, 2
      // Predicated region
      $region49: #{forward.4} parent=47 // pred_check
        %p1714 = pneg %p150
      $region50: #{forward.4} parent=47 // pred_check_branch
        %1716 = sbr.rel (%p1714) target = $region52
      $region51: #{forward.4} parent=47 // pred_region
        %p1717 = scmp.lt.s32.totalorder %s17, 1
        %s1718 = scalar_select %p1717, %s17, 1
        %s1719 = smul.addr %s1718, 8
        %s1720 = smul.addr %s1719, 4
        %s1721 = scalar_lea.vmem %s5, %s1720
      $region52: #{forward.4} parent=47 // pred_fallthru
        _
    $region48: #{forward.4} parent=5 // pred_fallthru
      _
  $region6: #{forward.4} parent=0 // loop_footer
    %s15 = sadd.s32 1, %s11
  $region7: #{forward.4} parent=0 // loop_footer_branch
    %10 = sbr.rel target = $region3
  $region8: #{forward.4} parent=0 // loop_exit
    _

// kernel: forward.3
$region0: #{forward.3}
  #allocation0 [shape = 'u32[]', space=smem, size = 0x4, offset = 0x4, fixed_abs, tag = 'smem constant byte address 0x4 - core index']
  #allocation1 [shape = 'u32[72,128]{1,0:T(1,128)}', space=vmem, size = 0x9000, scoped, tag = 'internal scratch']
  %s0 = inlined_call_operand.vmem [shape: f32[2,1,1024], index: 0, kind: input, shape index: {}]
  %s1 = inlined_call_operand.vmem [shape: f32[32,9], index: 1, kind: input, shape index: {}]
  %s2 = inlined_call_operand.vmem [shape: f32[32,1], index: 2, kind: input, shape index: {}]
  %s3 = inlined_call_operand.vmem [shape: f32[32,1], index: 3, kind: input, shape index: {}]
  %s4 = inlined_call_operand.hbm [shape: bf16[896,256], index: 4, kind: input, shape index: {}]
  %s5 = inlined_call_operand.vmem [shape: bf16[2,32,256], index: 5, kind: output, shape index: {}]
  %s6 = sld [smem:[#allocation0]]
  $region57: #{forward.3} parent=0
    _
  %s8 = ssub.s32 1, %s6
  %s9 = scalar_select 0, %s8, %s6
  $region1: #{forward.3} parent=0
    #allocation2 [shape = 'u8[458752]{0}', space=vmem, size = 0x70000, scoped, tag = 'input window, operand 4, single buffered']
    #allocation3 [shape = 's32[2]{0}', space=sflag, size = 0x8, scoped, tag = 'scoped memory for forward.3']
    %10 = vsyncpa [#allocation3], 0
    loop: start=0, step=1, limit=4
    $region2: #{forward.3} parent=1 // loop_pre_header
      _
    $region3: #{forward.3} parent=1 // loop_header
      %s12 = sphi 0, %s16
      %p13 = scmp.ge.s32.totalorder %s12, 4
      %s22 = sphi 0, %s24
      %s25 = sphi 0, %s22
      %s26 = sphi 0, %s25
      %s42 = sphi 0, %s26
      %s46 = sphi 0, %s46
      %s48 = sphi 0, %s46
      %s49 = sphi 0, %s48
      %s63 = sphi 0, %s49
      %s67 = sphi 0, %s67
      %s69 = sphi 0, %s67
      %s70 = sphi 0, %s69
      %s84 = sphi 0, %s70
      %s88 = sphi 0, %s88
      %s90 = sphi 0, %s88
      %s91 = sphi 0, %s90
      %s105 = sphi 0, %s91
      %s109 = sphi 0, %s109
      %s111 = sphi 0, %s109
      %s112 = sphi 0, %s111
      %s126 = sphi 0, %s112
      %s132 = sphi 0, %s134
      %s135 = sphi 0, %s132
      %s136 = sphi 0, %s135
      %s152 = sphi 0, %s136
    $region4: #{forward.3} parent=1 // loop_header_branch
      %15 = sbr.rel (%p13) target = $region8
    $region5: #{forward.3} parent=1 // loop_body
      %s17 = ssub.s32 %s12, 1
      %s18 = ssub.s32 %s12, 2
      %s19 = sadd.s32 %s12, 1
      %s20 = ssub.s32 %s12, %s19
      %p21 = scmp.eq.s32.totalorder %s20, 0
      %s23 = sadd.s32 %s22, 1
      %s24 = scalar_select %p21, %s22, %s23
      %p27 = pneg %p21
      %p28 = scmp.eq.s32.totalorder %s12, 1
      %p29 = por %p27, %p28
      %p30 = scmp.ne.s32.totalorder %s22, %s25
      %p31 = scmp.eq.s32.totalorder %s12, 0
      %p32 = por %p30, %p31
      %p33 = scmp.ne.s32.totalorder %s22, %s25
      %p34 = scmp.eq.s32.totalorder %s17, 1
      %p35 = por %p33, %p34
      %p36 = scmp.ne.s32.totalorder %s25, %s26
      %p37 = scmp.eq.s32.totalorder %s17, 0
      %p38 = por %p36, %p37
      %p39 = scmp.ne.s32.totalorder %s25, %s26
      %p40 = scmp.eq.s32.totalorder %s18, 1
      %p41 = por %p39, %p40
      %p43 = scmp.ne.s32.totalorder %s26, %s42
      %p44 = scmp.eq.s32.totalorder %s18, 0
      %p45 = por %p43, %p44
      %s47 = sadd.s32 %s46, 1
      %p50 = scmp.eq.s32.totalorder %s12, 1
      %p51 = scmp.ne.s32.totalorder %s46, %s48
      %p52 = scmp.eq.s32.totalorder %s12, 0
      %p53 = por %p51, %p52
      %p54 = scmp.ne.s32.totalorder %s46, %s48
      %p55 = scmp.eq.s32.totalorder %s17, 1
      %p56 = por %p54, %p55
      %p57 = scmp.ne.s32.totalorder %s48, %s49
      %p58 = scmp.eq.s32.totalorder %s17, 0
      %p59 = por %p57, %p58
      %p60 = scmp.ne.s32.totalorder %s48, %s49
      %p61 = scmp.eq.s32.totalorder %s18, 1
      %p62 = por %p60, %p61
      %p64 = scmp.ne.s32.totalorder %s49, %s63
      %p65 = scmp.eq.s32.totalorder %s18, 0
      %p66 = por %p64, %p65
      %s68 = sadd.s32 %s67, 1
      %p71 = scmp.eq.s32.totalorder %s12, 1
      %p72 = scmp.ne.s32.totalorder %s67, %s69
      %p73 = scmp.eq.s32.totalorder %s12, 0
      %p74 = por %p72, %p73
      %p75 = scmp.ne.s32.totalorder %s67, %s69
      %p76 = scmp.eq.s32.totalorder %s17, 1
      %p77 = por %p75, %p76
      %p78 = scmp.ne.s32.totalorder %s69, %s70
      %p79 = scmp.eq.s32.totalorder %s17, 0
      %p80 = por %p78, %p79
      %p81 = scmp.ne.s32.totalorder %s69, %s70
      %p82 = scmp.eq.s32.totalorder %s18, 1
      %p83 = por %p81, %p82
      %p85 = scmp.ne.s32.totalorder %s70, %s84
      %p86 = scmp.eq.s32.totalorder %s18, 0
      %p87 = por %p85, %p86
      %s89 = sadd.s32 %s88, 1
      %p92 = scmp.eq.s32.totalorder %s12, 1
      %p93 = scmp.ne.s32.totalorder %s88, %s90
      %p94 = scmp.eq.s32.totalorder %s12, 0
      %p95 = por %p93, %p94
      %p96 = scmp.ne.s32.totalorder %s88, %s90
      %p97 = scmp.eq.s32.totalorder %s17, 1
      %p98 = por %p96, %p97
      %p99 = scmp.ne.s32.totalorder %s90, %s91
      %p100 = scmp.eq.s32.totalorder %s17, 0
      %p101 = por %p99, %p100
      %p102 = scmp.ne.s32.totalorder %s90, %s91
      %p103 = scmp.eq.s32.totalorder %s18, 1
      %p104 = por %p102, %p103
      %p106 = scmp.ne.s32.totalorder %s91, %s105
      %p107 = scmp.eq.s32.totalorder %s18, 0
      %p108 = por %p106, %p107
      %s110 = sadd.s32 %s109, 1
      %p113 = scmp.eq.s32.totalorder %s12, 1
      %p114 = scmp.ne.s32.totalorder %s109, %s111
      %p115 = scmp.eq.s32.totalorder %s12, 0
      %p116 = por %p114, %p115
      %p117 = scmp.ne.s32.totalorder %s109, %s111
      %p118 = scmp.eq.s32.totalorder %s17, 1
      %p119 = por %p117, %p118
      %p120 = scmp.ne.s32.totalorder %s111, %s112
      %p121 = scmp.eq.s32.totalorder %s17, 0
      %p122 = por %p120, %p121
      %p123 = scmp.ne.s32.totalorder %s111, %s112
      %p124 = scmp.eq.s32.totalorder %s18, 1
      %p125 = por %p123, %p124
      %p127 = scmp.ne.s32.totalorder %s112, %s126
      %p128 = scmp.eq.s32.totalorder %s18, 0
      %p129 = por %p127, %p128
      %s130 = ssub.s32 %s12, %s19
      %p131 = scmp.eq.s32.totalorder %s130, 0
      %s133 = sadd.s32 %s132, 1
      %s134 = scalar_select %p131, %s132, %s133
      %p137 = pneg %p131
      %p138 = scmp.eq.s32.totalorder %s12, 1
      %p139 = por %p137, %p138
      %p140 = scmp.ne.s32.totalorder %s132, %s135
      %p141 = scmp.eq.s32.totalorder %s12, 0
      %p142 = por %p140, %p141
      %p143 = scmp.ne.s32.totalorder %s132, %s135
      %p144 = scmp.eq.s32.totalorder %s17, 1
      %p145 = por %p143, %p144
      %p146 = scmp.ne.s32.totalorder %s135, %s136
      %p147 = scmp.eq.s32.totalorder %s17, 0
      %p148 = por %p146, %p147
      %p149 = scmp.ne.s32.totalorder %s135, %s136
      %p150 = scmp.eq.s32.totalorder %s18, 1
      %p151 = por %p149, %p150
      %p153 = scmp.ne.s32.totalorder %s136, %s152
      %p154 = scmp.eq.s32.totalorder %s18, 0
      %p155 = por %p153, %p154
      %p156 = scmp.le.s32.totalorder 1, %s12
      %p157 = scmp.lt.s32.totalorder %s12, 3
      %p158 = pnand %p156, %p157
      %p159 = pneg %p158
      // Predicated region
      $region9: #{forward.3} parent=5 // pred_check
        _
      $region10: #{forward.3} parent=5 // pred_check_branch
        %161 = sbr.rel (%p158) target = $region12
      $region11: #{forward.3} parent=5 // pred_region
        %s162 = ssub.s32 %s12, 1
        // Predicated region
        $region13: #{forward.3} parent=11 // pred_check
          %p163 = pneg %p59
        $region14: #{forward.3} parent=11 // pred_check_branch
          %165 = sbr.rel (%p163) target = $region16
        $region15: #{forward.3} parent=11 // pred_region
          _
        $region16: #{forward.3} parent=11 // pred_fallthru
          _
        // Predicated region
        $region17: #{forward.3} parent=11 // pred_check
          %p166 = pneg %p80
        $region18: #{forward.3} parent=11 // pred_check_branch
          %168 = sbr.rel (%p166) target = $region20
        $region19: #{forward.3} parent=11 // pred_region
          _
        $region20: #{forward.3} parent=11 // pred_fallthru
          _
        // Predicated region
        $region21: #{forward.3} parent=11 // pred_check
          %p169 = pneg %p101
        $region22: #{forward.3} parent=11 // pred_check_branch
          %171 = sbr.rel (%p169) target = $region24
        $region23: #{forward.3} parent=11 // pred_region
          _
        $region24: #{forward.3} parent=11 // pred_fallthru
          _
        // Predicated region
        $region25: #{forward.3} parent=11 // pred_check
          %p172 = pneg %p122
        $region26: #{forward.3} parent=11 // pred_check_branch
          %174 = sbr.rel (%p172) target = $region28
        $region27: #{forward.3} parent=11 // pred_region
          %176 = vsyncadd [#allocation3], 0
          %s177 = sshll.u32 %s4, 4
          %s178 = int_to_ptr.hbm [resolvable:$true] %s177
          %s179 = sshll.u32 [#allocation2], 4
          %s180 = int_to_ptr.vmem [resolvable:$true] %s179
          %185 = dma.hbm_to_vmem [thread:$0]  %s178, 14336, %s180, [#allocation3], 128, 128, 8
        $region28: #{forward.3} parent=11 // pred_fallthru
          _
      $region12: #{forward.3} parent=5 // pred_fallthru
        _
      %p186 = scmp.lt.s32.totalorder %s12, 2
      // Predicated region
      $region29: #{forward.3} parent=5 // pred_check
        %p187 = pneg %p186
      $region30: #{forward.3} parent=5 // pred_check_branch
        %189 = sbr.rel (%p187) target = $region32
      $region31: #{forward.3} parent=5 // pred_region
        // Predicated region
        $region33: #{forward.3} parent=31 // pred_check
          %p190 = pneg %p32
        $region34: #{forward.3} parent=31 // pred_check_branch
          %192 = sbr.rel (%p190) target = $region36
        $region35: #{forward.3} parent=31 // pred_region
          %p193 = scmp.lt.s32.totalorder %s12, 1
          %s194 = scalar_select %p193, %s12, 1
          %s195 = smul.addr %s194, 8
          %s196 = scalar_lea.vmem %s0, %s195
        $region36: #{forward.3} parent=31 // pred_fallthru
          _
      $region32: #{forward.3} parent=5 // pred_fallthru
        _
      %p197 = scmp.le.s32.totalorder 1, %s12
      %p198 = scmp.lt.s32.totalorder %s12, 3
      %p199 = pnand %p197, %p198
      %p200 = pneg %p199
      // Predicated region
      $region37: #{forward.3} parent=5 // pred_check
        _
      $region38: #{forward.3} parent=5 // pred_check_branch
        %202 = sbr.rel (%p199) target = $region40
      $region39: #{forward.3} parent=5 // pred_region
        %s203 = ssub.s32 %s12, 1
        // Predicated region
        $region41: #{forward.3} parent=39 // pred_check
          %p204 = pneg %p122
        $region42: #{forward.3} parent=39 // pred_check_branch
          %206 = sbr.rel (%p204) target = $region44
        $region43: #{forward.3} parent=39 // pred_region
          %208 = dma.done [#allocation3], 14336
        $region44: #{forward.3} parent=39 // pred_fallthru
          _
        %p209 = scmp.lt.s32.totalorder %s17, 1
        %s210 = scalar_select %p209, %s17, 1
        %s211 = smul.addr %s210, 8
        %s212 = scalar_lea.vmem %s0, %s211
        %p213 = pneg %p38
        %p214 = pneg %p35
        %p215 = pneg %p59
        %p216 = pneg %p56
        %p217 = pneg %p80
        %p218 = pneg %p77
        %p219 = pneg %p101
        %p220 = pneg %p98
        %p221 = pneg %p122
        %p222 = pneg %p119
        %p223 = pneg %p148
        %p224 = pneg %p145
        %p225 = scmp.lt.s32.totalorder %s17, 1
        %s226 = scalar_select %p225, %s17, 1
        %s227 = smul.addr %s226, 8
        %s228 = smul.addr %s227, 4
        %s229 = scalar_lea.vmem %s5, %s228
        %p230 = scmp.lt.s32.totalorder %s17, 1
        %s231 = scalar_select %p230, %s17, 1
        %s232 = smul.addr %s231, 8
        %s233 = scalar_lea.vmem %s0, %s232
        %p234 = scmp.lt.s32.totalorder %s17, 1
        %s235 = scalar_select %p234, %s17, 1
        %s236 = smul.addr %s235, 8
        %s237 = smul.addr %s236, 4
        %s238 = scalar_lea.vmem %s5, %s237
        %v239 = vld [vmem:[%s233] sm:$0xff]
        %v240 = vld [vmem:[%s1] sm:$0xff]
        %v241 = vld [vmem:[%s1 + $0x8] sm:$0xff]
        %v242 = vld [vmem:[%s1 + $0x10] sm:$0xff]
        %v243 = vld [vmem:[%s1 + $0x18] sm:$0xff]
        %245 = vset.pattern.permute.xlu0 0
        %246 = vperm.xlu0 %245, %v240
        %v247 = vpop.permute.xlu0 %246
        %250 = vset.pattern.permute.xlu0 0
        %251 = vperm.xlu0 %250, %v241
        %v252 = vpop.permute.xlu0 %251
        %255 = vset.pattern.permute.xlu0 0
        %256 = vperm.xlu0 %255, %v242
        %v257 = vpop.permute.xlu0 %256
        %260 = vset.pattern.permute.xlu0 0
        %261 = vperm.xlu0 %260, %v243
        %v262 = vpop.permute.xlu0 %261
        %v265 = vperm.slane %v239, 0
        %v266 = vperm.slane %v239, 1
        %v267 = vperm.slane %v239, 2
        %v268 = vperm.slane %v239, 3
        %v269 = vperm.slane %v239, 4
        %v270 = vperm.slane %v239, 5
        %v271 = vperm.slane %v239, 6
        %v279 = vmul.f32 %v247, %v265
        %v280 = vmul.f32 %v247, %v266
        %v281 = vmul.f32 %v247, %v267
        %v282 = vmul.f32 %v247, %v268
        %v283 = vmul.f32 %v247, %v269
        %v284 = vmul.f32 %v247, %v270
        %v285 = vmul.f32 %v247, %v271
        %v286 = vmul.f32 %v252, %v265
        %v287 = vmul.f32 %v252, %v266
        %v288 = vmul.f32 %v252, %v267
        %v289 = vmul.f32 %v252, %v268
        %v290 = vmul.f32 %v252, %v269
        %v291 = vmul.f32 %v252, %v270
        %v292 = vmul.f32 %v252, %v271
        %v293 = vmul.f32 %v257, %v265
        %v294 = vmul.f32 %v257, %v266
        %v295 = vmul.f32 %v257, %v267
        %v296 = vmul.f32 %v257, %v268
        %v297 = vmul.f32 %v257, %v269
        %v298 = vmul.f32 %v257, %v270
        %v299 = vmul.f32 %v257, %v271
        %v300 = vmul.f32 %v262, %v265
        %v301 = vmul.f32 %v262, %v266
        %v302 = vmul.f32 %v262, %v267
        %v303 = vmul.f32 %v262, %v268
        %v304 = vmul.f32 %v262, %v269
        %v305 = vmul.f32 %v262, %v270
        %v306 = vmul.f32 %v262, %v271
        %v307 = vadd.f32 %v279, 0.0
        %v308 = vadd.f32 %v280, 0.0
        %v309 = vadd.f32 %v281, 0.0
        %v310 = vadd.f32 %v282, 0.0
        %v311 = vadd.f32 %v283, 0.0
        %v312 = vadd.f32 %v284, 0.0
        %v313 = vadd.f32 %v285, 0.0
        %v314 = vadd.f32 %v286, 0.0
        %v315 = vadd.f32 %v287, 0.0
        %v316 = vadd.f32 %v288, 0.0
        %v317 = vadd.f32 %v289, 0.0
        %v318 = vadd.f32 %v290, 0.0
        %v319 = vadd.f32 %v291, 0.0
        %v320 = vadd.f32 %v292, 0.0
        %v321 = vadd.f32 %v293, 0.0
        %v322 = vadd.f32 %v294, 0.0
        %v323 = vadd.f32 %v295, 0.0
        %v324 = vadd.f32 %v296, 0.0
        %v325 = vadd.f32 %v297, 0.0
        %v326 = vadd.f32 %v298, 0.0
        %v327 = vadd.f32 %v299, 0.0
        %v328 = vadd.f32 %v300, 0.0
        %v329 = vadd.f32 %v301, 0.0
        %v330 = vadd.f32 %v302, 0.0
        %v331 = vadd.f32 %v303, 0.0
        %v332 = vadd.f32 %v304, 0.0
        %v333 = vadd.f32 %v305, 0.0
        %v334 = vadd.f32 %v306, 0.0
        %335 = vset.pattern.permute.xlu0 1
        %336 = vperm.xlu0 %335, %v240
        %v337 = vpop.permute.xlu0 %336
        %339 = vset.pattern.permute.xlu0 1
        %340 = vperm.xlu0 %339, %v241
        %v341 = vpop.permute.xlu0 %340
        %343 = vset.pattern.permute.xlu0 1
        %344 = vperm.xlu0 %343, %v242
        %v345 = vpop.permute.xlu0 %344
        %347 = vset.pattern.permute.xlu0 1
        %348 = vperm.xlu0 %347, %v243
        %v349 = vpop.permute.xlu0 %348
        %v351 = vperm.slane %v239, 7
        %v353 = vmul.f32 %v337, %v265
        %v354 = vmul.f32 %v337, %v266
        %v355 = vmul.f32 %v337, %v267
        %v356 = vmul.f32 %v337, %v268
        %v357 = vmul.f32 %v337, %v269
        %v358 = vmul.f32 %v337, %v270
        %v359 = vmul.f32 %v337, %v271
        %v360 = vmul.f32 %v337, %v351
        %v361 = vmul.f32 %v341, %v265
        %v362 = vmul.f32 %v341, %v266
        %v363 = vmul.f32 %v341, %v267
        %v364 = vmul.f32 %v341, %v268
        %v365 = vmul.f32 %v341, %v269
        %v366 = vmul.f32 %v341, %v270
        %v367 = vmul.f32 %v341, %v271
        %v368 = vmul.f32 %v341, %v351
        %v369 = vmul.f32 %v345, %v265
        %v370 = vmul.f32 %v345, %v266
        %v371 = vmul.f32 %v345, %v267
        %v372 = vmul.f32 %v345, %v268
        %v373 = vmul.f32 %v345, %v269
        %v374 = vmul.f32 %v345, %v270
        %v375 = vmul.f32 %v345, %v271
        %v376 = vmul.f32 %v345, %v351
        %v377 = vmul.f32 %v349, %v265
        %v378 = vmul.f32 %v349, %v266
        %v379 = vmul.f32 %v349, %v267
        %v380 = vmul.f32 %v349, %v268
        %v381 = vmul.f32 %v349, %v269
        %v382 = vmul.f32 %v349, %v270
        %v383 = vmul.f32 %v349, %v271
        %v384 = vmul.f32 %v349, %v351
        %417 = vrot.lane.b32.xlu0 %v353, 127
        %v418 = vpop.permute.xlu0 %417
        %419 = vrot.lane.b32.xlu0 %v354, 127
        %v420 = vpop.permute.xlu0 %419
        %421 = vrot.lane.b32.xlu0 %v355, 127
        %v422 = vpop.permute.xlu0 %421
        %423 = vrot.lane.b32.xlu0 %v356, 127
        %v424 = vpop.permute.xlu0 %423
        %425 = vrot.lane.b32.xlu0 %v357, 127
        %v426 = vpop.permute.xlu0 %425
        %427 = vrot.lane.b32.xlu0 %v358, 127
        %v428 = vpop.permute.xlu0 %427
        %429 = vrot.lane.b32.xlu0 %v359, 127
        %v430 = vpop.permute.xlu0 %429
        %431 = vrot.lane.b32.xlu0 %v360, 127
        %v432 = vpop.permute.xlu0 %431
        %433 = vrot.lane.b32.xlu0 %v361, 127
        %v434 = vpop.permute.xlu0 %433
        %435 = vrot.lane.b32.xlu0 %v362, 127
        %v436 = vpop.permute.xlu0 %435
        %437 = vrot.lane.b32.xlu0 %v363, 127
        %v438 = vpop.permute.xlu0 %437
        %439 = vrot.lane.b32.xlu0 %v364, 127
        %v440 = vpop.permute.xlu0 %439
        %441 = vrot.lane.b32.xlu0 %v365, 127
        %v442 = vpop.permute.xlu0 %441
        %443 = vrot.lane.b32.xlu0 %v366, 127
        %v444 = vpop.permute.xlu0 %443
        %445 = vrot.lane.b32.xlu0 %v367, 127
        %v446 = vpop.permute.xlu0 %445
        %447 = vrot.lane.b32.xlu0 %v368, 127
        %v448 = vpop.permute.xlu0 %447
        %449 = vrot.lane.b32.xlu0 %v369, 127
        %v450 = vpop.permute.xlu0 %449
        %451 = vrot.lane.b32.xlu0 %v370, 127
        %v452 = vpop.permute.xlu0 %451
        %453 = vrot.lane.b32.xlu0 %v371, 127
        %v454 = vpop.permute.xlu0 %453
        %455 = vrot.lane.b32.xlu0 %v372, 127
        %v456 = vpop.permute.xlu0 %455
        %457 = vrot.lane.b32.xlu0 %v373, 127
        %v458 = vpop.permute.xlu0 %457
        %459 = vrot.lane.b32.xlu0 %v374, 127
        %v460 = vpop.permute.xlu0 %459
        %461 = vrot.lane.b32.xlu0 %v375, 127
        %v462 = vpop.permute.xlu0 %461
        %463 = vrot.lane.b32.xlu0 %v376, 127
        %v464 = vpop.permute.xlu0 %463
        %465 = vrot.lane.b32.xlu0 %v377, 127
        %v466 = vpop.permute.xlu0 %465
        %467 = vrot.lane.b32.xlu0 %v378, 127
        %v468 = vpop.permute.xlu0 %467
        %469 = vrot.lane.b32.xlu0 %v379, 127
        %v470 = vpop.permute.xlu0 %469
        %471 = vrot.lane.b32.xlu0 %v380, 127
        %v472 = vpop.permute.xlu0 %471
        %473 = vrot.lane.b32.xlu0 %v381, 127
        %v474 = vpop.permute.xlu0 %473
        %475 = vrot.lane.b32.xlu0 %v382, 127
        %v476 = vpop.permute.xlu0 %475
        %477 = vrot.lane.b32.xlu0 %v383, 127
        %v478 = vpop.permute.xlu0 %477
        %479 = vrot.lane.b32.xlu0 %v384, 127
        %v480 = vpop.permute.xlu0 %479
        %vm481 = vcmask 1039360
        %v482 = vsel %vm481, %v418, %v420
        %v483 = vsel %vm481, %v420, %v422
        %v484 = vsel %vm481, %v422, %v424
        %v485 = vsel %vm481, %v424, %v426
        %v486 = vsel %vm481, %v426, %v428
        %v487 = vsel %vm481, %v428, %v430
        %v488 = vsel %vm481, %v430, %v432
        %v489 = vsel %vm481, %v434, %v436
        %v490 = vsel %vm481, %v436, %v438
        %v491 = vsel %vm481, %v438, %v440
        %v492 = vsel %vm481, %v440, %v442
        %v493 = vsel %vm481, %v442, %v444
        %v494 = vsel %vm481, %v444, %v446
        %v495 = vsel %vm481, %v446, %v448
        %v496 = vsel %vm481, %v450, %v452
        %v497 = vsel %vm481, %v452, %v454
        %v498 = vsel %vm481, %v454, %v456
        %v499 = vsel %vm481, %v456, %v458
        %v500 = vsel %vm481, %v458, %v460
        %v501 = vsel %vm481, %v460, %v462
        %v502 = vsel %vm481, %v462, %v464
        %v503 = vsel %vm481, %v466, %v468
        %v504 = vsel %vm481, %v468, %v470
        %v505 = vsel %vm481, %v470, %v472
        %v506 = vsel %vm481, %v472, %v474
        %v507 = vsel %vm481, %v474, %v476
        %v508 = vsel %vm481, %v476, %v478
        %v509 = vsel %vm481, %v478, %v480
        %v538 = vadd.f32 %v307, %v482
        %v539 = vadd.f32 %v308, %v483
        %v540 = vadd.f32 %v309, %v484
        %v541 = vadd.f32 %v310, %v485
        %v542 = vadd.f32 %v311, %v486
        %v543 = vadd.f32 %v312, %v487
        %v544 = vadd.f32 %v313, %v488
        %v545 = vadd.f32 %v314, %v489
        %v546 = vadd.f32 %v315, %v490
        %v547 = vadd.f32 %v316, %v491
        %v548 = vadd.f32 %v317, %v492
        %v549 = vadd.f32 %v318, %v493
        %v550 = vadd.f32 %v319, %v494
        %v551 = vadd.f32 %v320, %v495
        %v552 = vadd.f32 %v321, %v496
        %v553 = vadd.f32 %v322, %v497
        %v554 = vadd.f32 %v323, %v498
        %v555 = vadd.f32 %v324, %v499
        %v556 = vadd.f32 %v325, %v500
        %v557 = vadd.f32 %v326, %v501
        %v558 = vadd.f32 %v327, %v502
        %v559 = vadd.f32 %v328, %v503
        %v560 = vadd.f32 %v329, %v504
        %v561 = vadd.f32 %v330, %v505
        %v562 = vadd.f32 %v331, %v506
        %v563 = vadd.f32 %v332, %v507
        %v564 = vadd.f32 %v333, %v508
        %v565 = vadd.f32 %v334, %v509
        %566 = vset.pattern.permute.xlu0 2
        %567 = vperm.xlu0 %566, %v240
        %v568 = vpop.permute.xlu0 %567
        %570 = vset.pattern.permute.xlu0 2
        %571 = vperm.xlu0 %570, %v241
        %v572 = vpop.permute.xlu0 %571
        %574 = vset.pattern.permute.xlu0 2
        %575 = vperm.xlu0 %574, %v242
        %v576 = vpop.permute.xlu0 %575
        %578 = vset.pattern.permute.xlu0 2
        %579 = vperm.xlu0 %578, %v243
        %v580 = vpop.permute.xlu0 %579
        %v582 = vmul.f32 %v568, %v265
        %v583 = vmul.f32 %v568, %v266
        %v584 = vmul.f32 %v568, %v267
        %v585 = vmul.f32 %v568, %v268
        %v586 = vmul.f32 %v568, %v269
        %v587 = vmul.f32 %v568, %v270
        %v588 = vmul.f32 %v568, %v271
        %v589 = vmul.f32 %v568, %v351
        %v590 = vmul.f32 %v572, %v265
        %v591 = vmul.f32 %v572, %v266
        %v592 = vmul.f32 %v572, %v267
        %v593 = vmul.f32 %v572, %v268
        %v594 = vmul.f32 %v572, %v269
        %v595 = vmul.f32 %v572, %v270
        %v596 = vmul.f32 %v572, %v271
        %v597 = vmul.f32 %v572, %v351
        %v598 = vmul.f32 %v576, %v265
        %v599 = vmul.f32 %v576, %v266
        %v600 = vmul.f32 %v576, %v267
        %v601 = vmul.f32 %v576, %v268
        %v602 = vmul.f32 %v576, %v269
        %v603 = vmul.f32 %v576, %v270
        %v604 = vmul.f32 %v576, %v271
        %v605 = vmul.f32 %v576, %v351
        %v606 = vmul.f32 %v580, %v265
        %v607 = vmul.f32 %v580, %v266
        %v608 = vmul.f32 %v580, %v267
        %v609 = vmul.f32 %v580, %v268
        %v610 = vmul.f32 %v580, %v269
        %v611 = vmul.f32 %v580, %v270
        %v612 = vmul.f32 %v580, %v271
        %v613 = vmul.f32 %v580, %v351
        %646 = vrot.lane.b32.xlu0 %v582, 126
        %v647 = vpop.permute.xlu0 %646
        %648 = vrot.lane.b32.xlu0 %v583, 126
        %v649 = vpop.permute.xlu0 %648
        %650 = vrot.lane.b32.xlu0 %v584, 126
        %v651 = vpop.permute.xlu0 %650
        %652 = vrot.lane.b32.xlu0 %v585, 126
        %v653 = vpop.permute.xlu0 %652
        %654 = vrot.lane.b32.xlu0 %v586, 126
        %v655 = vpop.permute.xlu0 %654
        %656 = vrot.lane.b32.xlu0 %v587, 126
        %v657 = vpop.permute.xlu0 %656
        %658 = vrot.lane.b32.xlu0 %v588, 126
        %v659 = vpop.permute.xlu0 %658
        %660 = vrot.lane.b32.xlu0 %v589, 126
        %v661 = vpop.permute.xlu0 %660
        %662 = vrot.lane.b32.xlu0 %v590, 126
        %v663 = vpop.permute.xlu0 %662
        %664 = vrot.lane.b32.xlu0 %v591, 126
        %v665 = vpop.permute.xlu0 %664
        %666 = vrot.lane.b32.xlu0 %v592, 126
        %v667 = vpop.permute.xlu0 %666
        %668 = vrot.lane.b32.xlu0 %v593, 126
        %v669 = vpop.permute.xlu0 %668
        %670 = vrot.lane.b32.xlu0 %v594, 126
        %v671 = vpop.permute.xlu0 %670
        %672 = vrot.lane.b32.xlu0 %v595, 126
        %v673 = vpop.permute.xlu0 %672
        %674 = vrot.lane.b32.xlu0 %v596, 126
        %v675 = vpop.permute.xlu0 %674
        %676 = vrot.lane.b32.xlu0 %v597, 126
        %v677 = vpop.permute.xlu0 %676
        %678 = vrot.lane.b32.xlu0 %v598, 126
        %v679 = vpop.permute.xlu0 %678
        %680 = vrot.lane.b32.xlu0 %v599, 126
        %v681 = vpop.permute.xlu0 %680
        %682 = vrot.lane.b32.xlu0 %v600, 126
        %v683 = vpop.permute.xlu0 %682
        %684 = vrot.lane.b32.xlu0 %v601, 126
        %v685 = vpop.permute.xlu0 %684
        %686 = vrot.lane.b32.xlu0 %v602, 126
        %v687 = vpop.permute.xlu0 %686
        %688 = vrot.lane.b32.xlu0 %v603, 126
        %v689 = vpop.permute.xlu0 %688
        %690 = vrot.lane.b32.xlu0 %v604, 126
        %v691 = vpop.permute.xlu0 %690
        %692 = vrot.lane.b32.xlu0 %v605, 126
        %v693 = vpop.permute.xlu0 %692
        %694 = vrot.lane.b32.xlu0 %v606, 126
        %v695 = vpop.permute.xlu0 %694
        %696 = vrot.lane.b32.xlu0 %v607, 126
        %v697 = vpop.permute.xlu0 %696
        %698 = vrot.lane.b32.xlu0 %v608, 126
        %v699 = vpop.permute.xlu0 %698
        %700 = vrot.lane.b32.xlu0 %v609, 126
        %v701 = vpop.permute.xlu0 %700
        %702 = vrot.lane.b32.xlu0 %v610, 126
        %v703 = vpop.permute.xlu0 %702
        %704 = vrot.lane.b32.xlu0 %v611, 126
        %v705 = vpop.permute.xlu0 %704
        %706 = vrot.lane.b32.xlu0 %v612, 126
        %v707 = vpop.permute.xlu0 %706
        %708 = vrot.lane.b32.xlu0 %v613, 126
        %v709 = vpop.permute.xlu0 %708
        %vm710 = vcmask 1031168
        %v711 = vsel %vm710, %v647, %v649
        %v712 = vsel %vm710, %v649, %v651
        %v713 = vsel %vm710, %v651, %v653
        %v714 = vsel %vm710, %v653, %v655
        %v715 = vsel %vm710, %v655, %v657
        %v716 = vsel %vm710, %v657, %v659
        %v717 = vsel %vm710, %v659, %v661
        %v718 = vsel %vm710, %v663, %v665
        %v719 = vsel %vm710, %v665, %v667
        %v720 = vsel %vm710, %v667, %v669
        %v721 = vsel %vm710, %v669, %v671
        %v722 = vsel %vm710, %v671, %v673
        %v723 = vsel %vm710, %v673, %v675
        %v724 = vsel %vm710, %v675, %v677
        %v725 = vsel %vm710, %v679, %v681
        %v726 = vsel %vm710, %v681, %v683
        %v727 = vsel %vm710, %v683, %v685
        %v728 = vsel %vm710, %v685, %v687
        %v729 = vsel %vm710, %v687, %v689
        %v730 = vsel %vm710, %v689, %v691
        %v731 = vsel %vm710, %v691, %v693
        %v732 = vsel %vm710, %v695, %v697
        %v733 = vsel %vm710, %v697, %v699
        %v734 = vsel %vm710, %v699, %v701
        %v735 = vsel %vm710, %v701, %v703
        %v736 = vsel %vm710, %v703, %v705
        %v737 = vsel %vm710, %v705, %v707
        %v738 = vsel %vm710, %v707, %v709
        %v767 = vadd.f32 %v538, %v711
        %v768 = vadd.f32 %v539, %v712
        %v769 = vadd.f32 %v540, %v713
        %v770 = vadd.f32 %v541, %v714
        %v771 = vadd.f32 %v542, %v715
        %v772 = vadd.f32 %v543, %v716
        %v773 = vadd.f32 %v544, %v717
        %v774 = vadd.f32 %v545, %v718
        %v775 = vadd.f32 %v546, %v719
        %v776 = vadd.f32 %v547, %v720
        %v777 = vadd.f32 %v548, %v721
        %v778 = vadd.f32 %v549, %v722
        %v779 = vadd.f32 %v550, %v723
        %v780 = vadd.f32 %v551, %v724
        %v781 = vadd.f32 %v552, %v725
        %v782 = vadd.f32 %v553, %v726
        %v783 = vadd.f32 %v554, %v727
        %v784 = vadd.f32 %v555, %v728
        %v785 = vadd.f32 %v556, %v729
        %v786 = vadd.f32 %v557, %v730
        %v787 = vadd.f32 %v558, %v731
        %v788 = vadd.f32 %v559, %v732
        %v789 = vadd.f32 %v560, %v733
        %v790 = vadd.f32 %v561, %v734
        %v791 = vadd.f32 %v562, %v735
        %v792 = vadd.f32 %v563, %v736
        %v793 = vadd.f32 %v564, %v737
        %v794 = vadd.f32 %v565, %v738
        %795 = vset.pattern.permute.xlu0 3
        %796 = vperm.xlu0 %795, %v240
        %v797 = vpop.permute.xlu0 %796
        %799 = vset.pattern.permute.xlu0 3
        %800 = vperm.xlu0 %799, %v241
        %v801 = vpop.permute.xlu0 %800
        %803 = vset.pattern.permute.xlu0 3
        %804 = vperm.xlu0 %803, %v242
        %v805 = vpop.permute.xlu0 %804
        %807 = vset.pattern.permute.xlu0 3
        %808 = vperm.xlu0 %807, %v243
        %v809 = vpop.permute.xlu0 %808
        %v811 = vmul.f32 %v797, %v265
        %v812 = vmul.f32 %v797, %v266
        %v813 = vmul.f32 %v797, %v267
        %v814 = vmul.f32 %v797, %v268
        %v815 = vmul.f32 %v797, %v269
        %v816 = vmul.f32 %v797, %v270
        %v817 = vmul.f32 %v797, %v271
        %v818 = vmul.f32 %v797, %v351
        %v819 = vmul.f32 %v801, %v265
        %v820 = vmul.f32 %v801, %v266
        %v821 = vmul.f32 %v801, %v267
        %v822 = vmul.f32 %v801, %v268
        %v823 = vmul.f32 %v801, %v269
        %v824 = vmul.f32 %v801, %v270
        %v825 = vmul.f32 %v801, %v271
        %v826 = vmul.f32 %v801, %v351
        %v827 = vmul.f32 %v805, %v265
        %v828 = vmul.f32 %v805, %v266
        %v829 = vmul.f32 %v805, %v267
        %v830 = vmul.f32 %v805, %v268
        %v831 = vmul.f32 %v805, %v269
        %v832 = vmul.f32 %v805, %v270
        %v833 = vmul.f32 %v805, %v271
        %v834 = vmul.f32 %v805, %v351
        %v835 = vmul.f32 %v809, %v265
        %v836 = vmul.f32 %v809, %v266
        %v837 = vmul.f32 %v809, %v267
        %v838 = vmul.f32 %v809, %v268
        %v839 = vmul.f32 %v809, %v269
        %v840 = vmul.f32 %v809, %v270
        %v841 = vmul.f32 %v809, %v271
        %v842 = vmul.f32 %v809, %v351
        %875 = vrot.lane.b32.xlu0 %v811, 96
        %v876 = vpop.permute.xlu0 %875
        %877 = vrot.lane.b32.xlu0 %v812, 96
        %v878 = vpop.permute.xlu0 %877
        %879 = vrot.lane.b32.xlu0 %v813, 96
        %v880 = vpop.permute.xlu0 %879
        %881 = vrot.lane.b32.xlu0 %v814, 96
        %v882 = vpop.permute.xlu0 %881
        %883 = vrot.lane.b32.xlu0 %v815, 96
        %v884 = vpop.permute.xlu0 %883
        %885 = vrot.lane.b32.xlu0 %v816, 96
        %v886 = vpop.permute.xlu0 %885
        %887 = vrot.lane.b32.xlu0 %v817, 96
        %v888 = vpop.permute.xlu0 %887
        %889 = vrot.lane.b32.xlu0 %v818, 96
        %v890 = vpop.permute.xlu0 %889
        %891 = vrot.lane.b32.xlu0 %v819, 96
        %v892 = vpop.permute.xlu0 %891
        %893 = vrot.lane.b32.xlu0 %v820, 96
        %v894 = vpop.permute.xlu0 %893
        %895 = vrot.lane.b32.xlu0 %v821, 96
        %v896 = vpop.permute.xlu0 %895
        %897 = vrot.lane.b32.xlu0 %v822, 96
        %v898 = vpop.permute.xlu0 %897
        %899 = vrot.lane.b32.xlu0 %v823, 96
        %v900 = vpop.permute.xlu0 %899
        %901 = vrot.lane.b32.xlu0 %v824, 96
        %v902 = vpop.permute.xlu0 %901
        %903 = vrot.lane.b32.xlu0 %v825, 96
        %v904 = vpop.permute.xlu0 %903
        %905 = vrot.lane.b32.xlu0 %v826, 96
        %v906 = vpop.permute.xlu0 %905
        %907 = vrot.lane.b32.xlu0 %v827, 96
        %v908 = vpop.permute.xlu0 %907
        %909 = vrot.lane.b32.xlu0 %v828, 96
        %v910 = vpop.permute.xlu0 %909
        %911 = vrot.lane.b32.xlu0 %v829, 96
        %v912 = vpop.permute.xlu0 %911
        %913 = vrot.lane.b32.xlu0 %v830, 96
        %v914 = vpop.permute.xlu0 %913
        %915 = vrot.lane.b32.xlu0 %v831, 96
        %v916 = vpop.permute.xlu0 %915
        %917 = vrot.lane.b32.xlu0 %v832, 96
        %v918 = vpop.permute.xlu0 %917
        %919 = vrot.lane.b32.xlu0 %v833, 96
        %v920 = vpop.permute.xlu0 %919
        %921 = vrot.lane.b32.xlu0 %v834, 96
        %v922 = vpop.permute.xlu0 %921
        %923 = vrot.lane.b32.xlu0 %v835, 96
        %v924 = vpop.permute.xlu0 %923
        %925 = vrot.lane.b32.xlu0 %v836, 96
        %v926 = vpop.permute.xlu0 %925
        %927 = vrot.lane.b32.xlu0 %v837, 96
        %v928 = vpop.permute.xlu0 %927
        %929 = vrot.lane.b32.xlu0 %v838, 96
        %v930 = vpop.permute.xlu0 %929
        %931 = vrot.lane.b32.xlu0 %v839, 96
        %v932 = vpop.permute.xlu0 %931
        %933 = vrot.lane.b32.xlu0 %v840, 96
        %v934 = vpop.permute.xlu0 %933
        %935 = vrot.lane.b32.xlu0 %v841, 96
        %v936 = vpop.permute.xlu0 %935
        %937 = vrot.lane.b32.xlu0 %v842, 96
        %v938 = vpop.permute.xlu0 %937
        %vm939 = vcmask 785408
        %v940 = vsel %vm939, %v876, %v878
        %v941 = vsel %vm939, %v878, %v880
        %v942 = vsel %vm939, %v880, %v882
        %v943 = vsel %vm939, %v882, %v884
        %v944 = vsel %vm939, %v884, %v886
        %v945 = vsel %vm939, %v886, %v888
        %v946 = vsel %vm939, %v888, %v890
        %v947 = vsel %vm939, %v892, %v894
        %v948 = vsel %vm939, %v894, %v896
        %v949 = vsel %vm939, %v896, %v898
        %v950 = vsel %vm939, %v898, %v900
        %v951 = vsel %vm939, %v900, %v902
        %v952 = vsel %vm939, %v902, %v904
        %v953 = vsel %vm939, %v904, %v906
        %v954 = vsel %vm939, %v908, %v910
        %v955 = vsel %vm939, %v910, %v912
        %v956 = vsel %vm939, %v912, %v914
        %v957 = vsel %vm939, %v914, %v916
        %v958 = vsel %vm939, %v916, %v918
        %v959 = vsel %vm939, %v918, %v920
        %v960 = vsel %vm939, %v920, %v922
        %v961 = vsel %vm939, %v924, %v926
        %v962 = vsel %vm939, %v926, %v928
        %v963 = vsel %vm939, %v928, %v930
        %v964 = vsel %vm939, %v930, %v932
        %v965 = vsel %vm939, %v932, %v934
        %v966 = vsel %vm939, %v934, %v936
        %v967 = vsel %vm939, %v936, %v938
        %v996 = vadd.f32 %v767, %v940
        %v997 = vadd.f32 %v768, %v941
        %v998 = vadd.f32 %v769, %v942
        %v999 = vadd.f32 %v770, %v943
        %v1000 = vadd.f32 %v771, %v944
        %v1001 = vadd.f32 %v772, %v945
        %v1002 = vadd.f32 %v773, %v946
        %v1003 = vadd.f32 %v774, %v947
        %v1004 = vadd.f32 %v775, %v948
        %v1005 = vadd.f32 %v776, %v949
        %v1006 = vadd.f32 %v777, %v950
        %v1007 = vadd.f32 %v778, %v951
        %v1008 = vadd.f32 %v779, %v952
        %v1009 = vadd.f32 %v780, %v953
        %v1010 = vadd.f32 %v781, %v954
        %v1011 = vadd.f32 %v782, %v955
        %v1012 = vadd.f32 %v783, %v956
        %v1013 = vadd.f32 %v784, %v957
        %v1014 = vadd.f32 %v785, %v958
        %v1015 = vadd.f32 %v786, %v959
        %v1016 = vadd.f32 %v787, %v960
        %v1017 = vadd.f32 %v788, %v961
        %v1018 = vadd.f32 %v789, %v962
        %v1019 = vadd.f32 %v790, %v963
        %v1020 = vadd.f32 %v791, %v964
        %v1021 = vadd.f32 %v792, %v965
        %v1022 = vadd.f32 %v793, %v966
        %v1023 = vadd.f32 %v794, %v967
        %1024 = vset.pattern.permute.xlu0 4
        %1025 = vperm.xlu0 %1024, %v240
        %v1026 = vpop.permute.xlu0 %1025
        %1028 = vset.pattern.permute.xlu0 4
        %1029 = vperm.xlu0 %1028, %v241
        %v1030 = vpop.permute.xlu0 %1029
        %1032 = vset.pattern.permute.xlu0 4
        %1033 = vperm.xlu0 %1032, %v242
        %v1034 = vpop.permute.xlu0 %1033
        %1036 = vset.pattern.permute.xlu0 4
        %1037 = vperm.xlu0 %1036, %v243
        %v1038 = vpop.permute.xlu0 %1037
        %v1040 = vmul.f32 %v1026, %v265
        %v1041 = vmul.f32 %v1026, %v266
        %v1042 = vmul.f32 %v1026, %v267
        %v1043 = vmul.f32 %v1026, %v268
        %v1044 = vmul.f32 %v1026, %v269
        %v1045 = vmul.f32 %v1026, %v270
        %v1046 = vmul.f32 %v1026, %v271
        %v1047 = vmul.f32 %v1026, %v351
        %v1048 = vmul.f32 %v1030, %v265
        %v1049 = vmul.f32 %v1030, %v266
        %v1050 = vmul.f32 %v1030, %v267
        %v1051 = vmul.f32 %v1030, %v268
        %v1052 = vmul.f32 %v1030, %v269
        %v1053 = vmul.f32 %v1030, %v270
        %v1054 = vmul.f32 %v1030, %v271
        %v1055 = vmul.f32 %v1030, %v351
        %v1056 = vmul.f32 %v1034, %v265
        %v1057 = vmul.f32 %v1034, %v266
        %v1058 = vmul.f32 %v1034, %v267
        %v1059 = vmul.f32 %v1034, %v268
        %v1060 = vmul.f32 %v1034, %v269
        %v1061 = vmul.f32 %v1034, %v270
        %v1062 = vmul.f32 %v1034, %v271
        %v1063 = vmul.f32 %v1034, %v351
        %v1064 = vmul.f32 %v1038, %v265
        %v1065 = vmul.f32 %v1038, %v266
        %v1066 = vmul.f32 %v1038, %v267
        %v1067 = vmul.f32 %v1038, %v268
        %v1068 = vmul.f32 %v1038, %v269
        %v1069 = vmul.f32 %v1038, %v270
        %v1070 = vmul.f32 %v1038, %v271
        %v1071 = vmul.f32 %v1038, %v351
        %1104 = vrot.lane.b32.xlu0 %v1040, 95
        %v1105 = vpop.permute.xlu0 %1104
        %1106 = vrot.lane.b32.xlu0 %v1041, 95
        %v1107 = vpop.permute.xlu0 %1106
        %1108 = vrot.lane.b32.xlu0 %v1042, 95
        %v1109 = vpop.permute.xlu0 %1108
        %1110 = vrot.lane.b32.xlu0 %v1043, 95
        %v1111 = vpop.permute.xlu0 %1110
        %1112 = vrot.lane.b32.xlu0 %v1044, 95
        %v1113 = vpop.permute.xlu0 %1112
        %1114 = vrot.lane.b32.xlu0 %v1045, 95
        %v1115 = vpop.permute.xlu0 %1114
        %1116 = vrot.lane.b32.xlu0 %v1046, 95
        %v1117 = vpop.permute.xlu0 %1116
        %1118 = vrot.lane.b32.xlu0 %v1047, 95
        %v1119 = vpop.permute.xlu0 %1118
        %1120 = vrot.lane.b32.xlu0 %v1048, 95
        %v1121 = vpop.permute.xlu0 %1120
        %1122 = vrot.lane.b32.xlu0 %v1049, 95
        %v1123 = vpop.permute.xlu0 %1122
        %1124 = vrot.lane.b32.xlu0 %v1050, 95
        %v1125 = vpop.permute.xlu0 %1124
        %1126 = vrot.lane.b32.xlu0 %v1051, 95
        %v1127 = vpop.permute.xlu0 %1126
        %1128 = vrot.lane.b32.xlu0 %v1052, 95
        %v1129 = vpop.permute.xlu0 %1128
        %1130 = vrot.lane.b32.xlu0 %v1053, 95
        %v1131 = vpop.permute.xlu0 %1130
        %1132 = vrot.lane.b32.xlu0 %v1054, 95
        %v1133 = vpop.permute.xlu0 %1132
        %1134 = vrot.lane.b32.xlu0 %v1055, 95
        %v1135 = vpop.permute.xlu0 %1134
        %1136 = vrot.lane.b32.xlu0 %v1056, 95
        %v1137 = vpop.permute.xlu0 %1136
        %1138 = vrot.lane.b32.xlu0 %v1057, 95
        %v1139 = vpop.permute.xlu0 %1138
        %1140 = vrot.lane.b32.xlu0 %v1058, 95
        %v1141 = vpop.permute.xlu0 %1140
        %1142 = vrot.lane.b32.xlu0 %v1059, 95
        %v1143 = vpop.permute.xlu0 %1142
        %1144 = vrot.lane.b32.xlu0 %v1060, 95
        %v1145 = vpop.permute.xlu0 %1144
        %1146 = vrot.lane.b32.xlu0 %v1061, 95
        %v1147 = vpop.permute.xlu0 %1146
        %1148 = vrot.lane.b32.xlu0 %v1062, 95
        %v1149 = vpop.permute.xlu0 %1148
        %1150 = vrot.lane.b32.xlu0 %v1063, 95
        %v1151 = vpop.permute.xlu0 %1150
        %1152 = vrot.lane.b32.xlu0 %v1064, 95
        %v1153 = vpop.permute.xlu0 %1152
        %1154 = vrot.lane.b32.xlu0 %v1065, 95
        %v1155 = vpop.permute.xlu0 %1154
        %1156 = vrot.lane.b32.xlu0 %v1066, 95
        %v1157 = vpop.permute.xlu0 %1156
        %1158 = vrot.lane.b32.xlu0 %v1067, 95
        %v1159 = vpop.permute.xlu0 %1158
        %1160 = vrot.lane.b32.xlu0 %v1068, 95
        %v1161 = vpop.permute.xlu0 %1160
        %1162 = vrot.lane.b32.xlu0 %v1069, 95
        %v1163 = vpop.permute.xlu0 %1162
        %1164 = vrot.lane.b32.xlu0 %v1070, 95
        %v1165 = vpop.permute.xlu0 %1164
        %1166 = vrot.lane.b32.xlu0 %v1071, 95
        %v1167 = vpop.permute.xlu0 %1166
        %vm1168 = vcmask 777216
        %v1169 = vsel %vm1168, %v1105, %v1107
        %v1170 = vsel %vm1168, %v1107, %v1109
        %v1171 = vsel %vm1168, %v1109, %v1111
        %v1172 = vsel %vm1168, %v1111, %v1113
        %v1173 = vsel %vm1168, %v1113, %v1115
        %v1174 = vsel %vm1168, %v1115, %v1117
        %v1175 = vsel %vm1168, %v1117, %v1119
        %v1176 = vsel %vm1168, %v1121, %v1123
        %v1177 = vsel %vm1168, %v1123, %v1125
        %v1178 = vsel %vm1168, %v1125, %v1127
        %v1179 = vsel %vm1168, %v1127, %v1129
        %v1180 = vsel %vm1168, %v1129, %v1131
        %v1181 = vsel %vm1168, %v1131, %v1133
        %v1182 = vsel %vm1168, %v1133, %v1135
        %v1183 = vsel %vm1168, %v1137, %v1139
        %v1184 = vsel %vm1168, %v1139, %v1141
        %v1185 = vsel %vm1168, %v1141, %v1143
        %v1186 = vsel %vm1168, %v1143, %v1145
        %v1187 = vsel %vm1168, %v1145, %v1147
        %v1188 = vsel %vm1168, %v1147, %v1149
        %v1189 = vsel %vm1168, %v1149, %v1151
        %v1190 = vsel %vm1168, %v1153, %v1155
        %v1191 = vsel %vm1168, %v1155, %v1157
        %v1192 = vsel %vm1168, %v1157, %v1159
        %v1193 = vsel %vm1168, %v1159, %v1161
        %v1194 = vsel %vm1168, %v1161, %v1163
        %v1195 = vsel %vm1168, %v1163, %v1165
        %v1196 = vsel %vm1168, %v1165, %v1167
        %v1225 = vadd.f32 %v996, %v1169
        %v1226 = vadd.f32 %v997, %v1170
        %v1227 = vadd.f32 %v998, %v1171
        %v1228 = vadd.f32 %v999, %v1172
        %v1229 = vadd.f32 %v1000, %v1173
        %v1230 = vadd.f32 %v1001, %v1174
        %v1231 = vadd.f32 %v1002, %v1175
        %v1232 = vadd.f32 %v1003, %v1176
        %v1233 = vadd.f32 %v1004, %v1177
        %v1234 = vadd.f32 %v1005, %v1178
        %v1235 = vadd.f32 %v1006, %v1179
        %v1236 = vadd.f32 %v1007, %v1180
        %v1237 = vadd.f32 %v1008, %v1181
        %v1238 = vadd.f32 %v1009, %v1182
        %v1239 = vadd.f32 %v1010, %v1183
        %v1240 = vadd.f32 %v1011, %v1184
        %v1241 = vadd.f32 %v1012, %v1185
        %v1242 = vadd.f32 %v1013, %v1186
        %v1243 = vadd.f32 %v1014, %v1187
        %v1244 = vadd.f32 %v1015, %v1188
        %v1245 = vadd.f32 %v1016, %v1189
        %v1246 = vadd.f32 %v1017, %v1190
        %v1247 = vadd.f32 %v1018, %v1191
        %v1248 = vadd.f32 %v1019, %v1192
        %v1249 = vadd.f32 %v1020, %v1193
        %v1250 = vadd.f32 %v1021, %v1194
        %v1251 = vadd.f32 %v1022, %v1195
        %v1252 = vadd.f32 %v1023, %v1196
        %1253 = vset.pattern.permute.xlu0 5
        %1254 = vperm.xlu0 %1253, %v240
        %v1255 = vpop.permute.xlu0 %1254
        %1257 = vset.pattern.permute.xlu0 5
        %1258 = vperm.xlu0 %1257, %v241
        %v1259 = vpop.permute.xlu0 %1258
        %1261 = vset.pattern.permute.xlu0 5
        %1262 = vperm.xlu0 %1261, %v242
        %v1263 = vpop.permute.xlu0 %1262
        %1265 = vset.pattern.permute.xlu0 5
        %1266 = vperm.xlu0 %1265, %v243
        %v1267 = vpop.permute.xlu0 %1266
        %v1269 = vmul.f32 %v1255, %v265
        %v1270 = vmul.f32 %v1255, %v266
        %v1271 = vmul.f32 %v1255, %v267
        %v1272 = vmul.f32 %v1255, %v268
        %v1273 = vmul.f32 %v1255, %v269
        %v1274 = vmul.f32 %v1255, %v270
        %v1275 = vmul.f32 %v1255, %v271
        %v1276 = vmul.f32 %v1255, %v351
        %v1277 = vmul.f32 %v1259, %v265
        %v1278 = vmul.f32 %v1259, %v266
        %v1279 = vmul.f32 %v1259, %v267
        %v1280 = vmul.f32 %v1259, %v268
        %v1281 = vmul.f32 %v1259, %v269
        %v1282 = vmul.f32 %v1259, %v270
        %v1283 = vmul.f32 %v1259, %v271
        %v1284 = vmul.f32 %v1259, %v351
        %v1285 = vmul.f32 %v1263, %v265
        %v1286 = vmul.f32 %v1263, %v266
        %v1287 = vmul.f32 %v1263, %v267
        %v1288 = vmul.f32 %v1263, %v268
        %v1289 = vmul.f32 %v1263, %v269
        %v1290 = vmul.f32 %v1263, %v270
        %v1291 = vmul.f32 %v1263, %v271
        %v1292 = vmul.f32 %v1263, %v351
        %v1293 = vmul.f32 %v1267, %v265
        %v1294 = vmul.f32 %v1267, %v266
        %v1295 = vmul.f32 %v1267, %v267
        %v1296 = vmul.f32 %v1267, %v268
        %v1297 = vmul.f32 %v1267, %v269
        %v1298 = vmul.f32 %v1267, %v270
        %v1299 = vmul.f32 %v1267, %v271
        %v1300 = vmul.f32 %v1267, %v351
        %1333 = vrot.lane.b32.xlu0 %v1269, 94
        %v1334 = vpop.permute.xlu0 %1333
        %1335 = vrot.lane.b32.xlu0 %v1270, 94
        %v1336 = vpop.permute.xlu0 %1335
        %1337 = vrot.lane.b32.xlu0 %v1271, 94
        %v1338 = vpop.permute.xlu0 %1337
        %1339 = vrot.lane.b32.xlu0 %v1272, 94
        %v1340 = vpop.permute.xlu0 %1339
        %1341 = vrot.lane.b32.xlu0 %v1273, 94
        %v1342 = vpop.permute.xlu0 %1341
        %1343 = vrot.lane.b32.xlu0 %v1274, 94
        %v1344 = vpop.permute.xlu0 %1343
        %1345 = vrot.lane.b32.xlu0 %v1275, 94
        %v1346 = vpop.permute.xlu0 %1345
        %1347 = vrot.lane.b32.xlu0 %v1276, 94
        %v1348 = vpop.permute.xlu0 %1347
        %1349 = vrot.lane.b32.xlu0 %v1277, 94
        %v1350 = vpop.permute.xlu0 %1349
        %1351 = vrot.lane.b32.xlu0 %v1278, 94
        %v1352 = vpop.permute.xlu0 %1351
        %1353 = vrot.lane.b32.xlu0 %v1279, 94
        %v1354 = vpop.permute.xlu0 %1353
        %1355 = vrot.lane.b32.xlu0 %v1280, 94
        %v1356 = vpop.permute.xlu0 %1355
        %1357 = vrot.lane.b32.xlu0 %v1281, 94
        %v1358 = vpop.permute.xlu0 %1357
        %1359 = vrot.lane.b32.xlu0 %v1282, 94
        %v1360 = vpop.permute.xlu0 %1359
        %1361 = vrot.lane.b32.xlu0 %v1283, 94
        %v1362 = vpop.permute.xlu0 %1361
        %1363 = vrot.lane.b32.xlu0 %v1284, 94
        %v1364 = vpop.permute.xlu0 %1363
        %1365 = vrot.lane.b32.xlu0 %v1285, 94
        %v1366 = vpop.permute.xlu0 %1365
        %1367 = vrot.lane.b32.xlu0 %v1286, 94
        %v1368 = vpop.permute.xlu0 %1367
        %1369 = vrot.lane.b32.xlu0 %v1287, 94
        %v1370 = vpop.permute.xlu0 %1369
        %1371 = vrot.lane.b32.xlu0 %v1288, 94
        %v1372 = vpop.permute.xlu0 %1371
        %1373 = vrot.lane.b32.xlu0 %v1289, 94
        %v1374 = vpop.permute.xlu0 %1373
        %1375 = vrot.lane.b32.xlu0 %v1290, 94
        %v1376 = vpop.permute.xlu0 %1375
        %1377 = vrot.lane.b32.xlu0 %v1291, 94
        %v1378 = vpop.permute.xlu0 %1377
        %1379 = vrot.lane.b32.xlu0 %v1292, 94
        %v1380 = vpop.permute.xlu0 %1379
        %1381 = vrot.lane.b32.xlu0 %v1293, 94
        %v1382 = vpop.permute.xlu0 %1381
        %1383 = vrot.lane.b32.xlu0 %v1294, 94
        %v1384 = vpop.permute.xlu0 %1383
        %1385 = vrot.lane.b32.xlu0 %v1295, 94
        %v1386 = vpop.permute.xlu0 %1385
        %1387 = vrot.lane.b32.xlu0 %v1296, 94
        %v1388 = vpop.permute.xlu0 %1387
        %1389 = vrot.lane.b32.xlu0 %v1297, 94
        %v1390 = vpop.permute.xlu0 %1389
        %1391 = vrot.lane.b32.xlu0 %v1298, 94
        %v1392 = vpop.permute.xlu0 %1391
        %1393 = vrot.lane.b32.xlu0 %v1299, 94
        %v1394 = vpop.permute.xlu0 %1393
        %1395 = vrot.lane.b32.xlu0 %v1300, 94
        %v1396 = vpop.permute.xlu0 %1395
        %vm1397 = vcmask 769024
        %v1398 = vsel %vm1397, %v1334, %v1336
        %v1399 = vsel %vm1397, %v1336, %v1338
        %v1400 = vsel %vm1397, %v1338, %v1340
        %v1401 = vsel %vm1397, %v1340, %v1342
        %v1402 = vsel %vm1397, %v1342, %v1344
        %v1403 = vsel %vm1397, %v1344, %v1346
        %v1404 = vsel %vm1397, %v1346, %v1348
        %v1405 = vsel %vm1397, %v1350, %v1352
        %v1406 = vsel %vm1397, %v1352, %v1354
        %v1407 = vsel %vm1397, %v1354, %v1356
        %v1408 = vsel %vm1397, %v1356, %v1358
        %v1409 = vsel %vm1397, %v1358, %v1360
        %v1410 = vsel %vm1397, %v1360, %v1362
        %v1411 = vsel %vm1397, %v1362, %v1364
        %v1412 = vsel %vm1397, %v1366, %v1368
        %v1413 = vsel %vm1397, %v1368, %v1370
        %v1414 = vsel %vm1397, %v1370, %v1372
        %v1415 = vsel %vm1397, %v1372, %v1374
        %v1416 = vsel %vm1397, %v1374, %v1376
        %v1417 = vsel %vm1397, %v1376, %v1378
        %v1418 = vsel %vm1397, %v1378, %v1380
        %v1419 = vsel %vm1397, %v1382, %v1384
        %v1420 = vsel %vm1397, %v1384, %v1386
        %v1421 = vsel %vm1397, %v1386, %v1388
        %v1422 = vsel %vm1397, %v1388, %v1390
        %v1423 = vsel %vm1397, %v1390, %v1392
        %v1424 = vsel %vm1397, %v1392, %v1394
        %v1425 = vsel %vm1397, %v1394, %v1396
        %v1454 = vadd.f32 %v1225, %v1398
        %v1455 = vadd.f32 %v1226, %v1399
        %v1456 = vadd.f32 %v1227, %v1400
        %v1457 = vadd.f32 %v1228, %v1401
        %v1458 = vadd.f32 %v1229, %v1402
        %v1459 = vadd.f32 %v1230, %v1403
        %v1460 = vadd.f32 %v1231, %v1404
        %v1461 = vadd.f32 %v1232, %v1405
        %v1462 = vadd.f32 %v1233, %v1406
        %v1463 = vadd.f32 %v1234, %v1407
        %v1464 = vadd.f32 %v1235, %v1408
        %v1465 = vadd.f32 %v1236, %v1409
        %v1466 = vadd.f32 %v1237, %v1410
        %v1467 = vadd.f32 %v1238, %v1411
        %v1468 = vadd.f32 %v1239, %v1412
        %v1469 = vadd.f32 %v1240, %v1413
        %v1470 = vadd.f32 %v1241, %v1414
        %v1471 = vadd.f32 %v1242, %v1415
        %v1472 = vadd.f32 %v1243, %v1416
        %v1473 = vadd.f32 %v1244, %v1417
        %v1474 = vadd.f32 %v1245, %v1418
        %v1475 = vadd.f32 %v1246, %v1419
        %v1476 = vadd.f32 %v1247, %v1420
        %v1477 = vadd.f32 %v1248, %v1421
        %v1478 = vadd.f32 %v1249, %v1422
        %v1479 = vadd.f32 %v1250, %v1423
        %v1480 = vadd.f32 %v1251, %v1424
        %v1481 = vadd.f32 %v1252, %v1425
        %1482 = vset.pattern.permute.xlu0 6
        %1483 = vperm.xlu0 %1482, %v240
        %v1484 = vpop.permute.xlu0 %1483
        %1486 = vset.pattern.permute.xlu0 6
        %1487 = vperm.xlu0 %1486, %v241
        %v1488 = vpop.permute.xlu0 %1487
        %1490 = vset.pattern.permute.xlu0 6
        %1491 = vperm.xlu0 %1490, %v242
        %v1492 = vpop.permute.xlu0 %1491
        %1494 = vset.pattern.permute.xlu0 6
        %1495 = vperm.xlu0 %1494, %v243
        %v1496 = vpop.permute.xlu0 %1495
        %v1498 = vmul.f32 %v1484, %v265
        %v1499 = vmul.f32 %v1484, %v266
        %v1500 = vmul.f32 %v1484, %v267
        %v1501 = vmul.f32 %v1484, %v268
        %v1502 = vmul.f32 %v1484, %v269
        %v1503 = vmul.f32 %v1484, %v270
        %v1504 = vmul.f32 %v1484, %v271
        %v1505 = vmul.f32 %v1484, %v351
        %v1506 = vmul.f32 %v1488, %v265
        %v1507 = vmul.f32 %v1488, %v266
        %v1508 = vmul.f32 %v1488, %v267
        %v1509 = vmul.f32 %v1488, %v268
        %v1510 = vmul.f32 %v1488, %v269
        %v1511 = vmul.f32 %v1488, %v270
        %v1512 = vmul.f32 %v1488, %v271
        %v1513 = vmul.f32 %v1488, %v351
        %v1514 = vmul.f32 %v1492, %v265
        %v1515 = vmul.f32 %v1492, %v266
        %v1516 = vmul.f32 %v1492, %v267
        %v1517 = vmul.f32 %v1492, %v268
        %v1518 = vmul.f32 %v1492, %v269
        %v1519 = vmul.f32 %v1492, %v270
        %v1520 = vmul.f32 %v1492, %v271
        %v1521 = vmul.f32 %v1492, %v351
        %v1522 = vmul.f32 %v1496, %v265
        %v1523 = vmul.f32 %v1496, %v266
        %v1524 = vmul.f32 %v1496, %v267
        %v1525 = vmul.f32 %v1496, %v268
        %v1526 = vmul.f32 %v1496, %v269
        %v1527 = vmul.f32 %v1496, %v270
        %v1528 = vmul.f32 %v1496, %v271
        %v1529 = vmul.f32 %v1496, %v351
        %1562 = vrot.lane.b32.xlu0 %v1498, 64
        %v1563 = vpop.permute.xlu0 %1562
        %1564 = vrot.lane.b32.xlu0 %v1499, 64
        %v1565 = vpop.permute.xlu0 %1564
        %1566 = vrot.lane.b32.xlu0 %v1500, 64
        %v1567 = vpop.permute.xlu0 %1566
        %1568 = vrot.lane.b32.xlu0 %v1501, 64
        %v1569 = vpop.permute.xlu0 %1568
        %1570 = vrot.lane.b32.xlu0 %v1502, 64
        %v1571 = vpop.permute.xlu0 %1570
        %1572 = vrot.lane.b32.xlu0 %v1503, 64
        %v1573 = vpop.permute.xlu0 %1572
        %1574 = vrot.lane.b32.xlu0 %v1504, 64
        %v1575 = vpop.permute.xlu0 %1574
        %1576 = vrot.lane.b32.xlu0 %v1505, 64
        %v1577 = vpop.permute.xlu0 %1576
        %1578 = vrot.lane.b32.xlu0 %v1506, 64
        %v1579 = vpop.permute.xlu0 %1578
        %1580 = vrot.lane.b32.xlu0 %v1507, 64
        %v1581 = vpop.permute.xlu0 %1580
        %1582 = vrot.lane.b32.xlu0 %v1508, 64
        %v1583 = vpop.permute.xlu0 %1582
        %1584 = vrot.lane.b32.xlu0 %v1509, 64
        %v1585 = vpop.permute.xlu0 %1584
        %1586 = vrot.lane.b32.xlu0 %v1510, 64
        %v1587 = vpop.permute.xlu0 %1586
        %1588 = vrot.lane.b32.xlu0 %v1511, 64
        %v1589 = vpop.permute.xlu0 %1588
        %1590 = vrot.lane.b32.xlu0 %v1512, 64
        %v1591 = vpop.permute.xlu0 %1590
        %1592 = vrot.lane.b32.xlu0 %v1513, 64
        %v1593 = vpop.permute.xlu0 %1592
        %1594 = vrot.lane.b32.xlu0 %v1514, 64
        %v1595 = vpop.permute.xlu0 %1594
        %1596 = vrot.lane.b32.xlu0 %v1515, 64
        %v1597 = vpop.permute.xlu0 %1596
        %1598 = vrot.lane.b32.xlu0 %v1516, 64
        %v1599 = vpop.permute.xlu0 %1598
        %1600 = vrot.lane.b32.xlu0 %v1517, 64
        %v1601 = vpop.permute.xlu0 %1600
        %1602 = vrot.lane.b32.xlu0 %v1518, 64
        %v1603 = vpop.permute.xlu0 %1602
        %1604 = vrot.lane.b32.xlu0 %v1519, 64
        %v1605 = vpop.permute.xlu0 %1604
        %1606 = vrot.lane.b32.xlu0 %v1520, 64
        %v1607 = vpop.permute.xlu0 %1606
        %1608 = vrot.lane.b32.xlu0 %v1521, 64
        %v1609 = vpop.permute.xlu0 %1608
        %1610 = vrot.lane.b32.xlu0 %v1522, 64
        %v1611 = vpop.permute.xlu0 %1610
        %1612 = vrot.lane.b32.xlu0 %v1523, 64
        %v1613 = vpop.permute.xlu0 %1612
        %1614 = vrot.lane.b32.xlu0 %v1524, 64
        %v1615 = vpop.permute.xlu0 %1614
        %1616 = vrot.lane.b32.xlu0 %v1525, 64
        %v1617 = vpop.permute.xlu0 %1616
        %1618 = vrot.lane.b32.xlu0 %v1526, 64
        %v1619 = vpop.permute.xlu0 %1618
        %1620 = vrot.lane.b32.xlu0 %v1527, 64
        %v1621 = vpop.permute.xlu0 %1620
        %1622 = vrot.lane.b32.xlu0 %v1528, 64
        %v1623 = vpop.permute.xlu0 %1622
        %1624 = vrot.lane.b32.xlu0 %v1529, 64
        %v1625 = vpop.permute.xlu0 %1624
        %vm1626 = vcmask 523264
        %v1627 = vsel %vm1626, %v1563, %v1565
        %v1628 = vsel %vm1626, %v1565, %v1567
        %v1629 = vsel %vm1626, %v1567, %v1569
        %v1630 = vsel %vm1626, %v1569, %v1571
        %v1631 = vsel %vm1626, %v1571, %v1573
        %v1632 = vsel %vm1626, %v1573, %v1575
        %v1633 = vsel %vm1626, %v1575, %v1577
        %v1634 = vsel %vm1626, %v1579, %v1581
        %v1635 = vsel %vm1626, %v1581, %v1583
        %v1636 = vsel %vm1626, %v1583, %v1585
        %v1637 = vsel %vm1626, %v1585, %v1587
        %v1638 = vsel %vm1626, %v1587, %v1589
        %v1639 = vsel %vm1626, %v1589, %v1591
        %v1640 = vsel %vm1626, %v1591, %v1593
        %v1641 = vsel %vm1626, %v1595, %v1597
        %v1642 = vsel %vm1626, %v1597, %v1599
        %v1643 = vsel %vm1626, %v1599, %v1601
        %v1644 = vsel %vm1626, %v1601, %v1603
        %v1645 = vsel %vm1626, %v1603, %v1605
        %v1646 = vsel %vm1626, %v1605, %v1607
        %v1647 = vsel %vm1626, %v1607, %v1609
        %v1648 = vsel %vm1626, %v1611, %v1613
        %v1649 = vsel %vm1626, %v1613, %v1615
        %v1650 = vsel %vm1626, %v1615, %v1617
        %v1651 = vsel %vm1626, %v1617, %v1619
        %v1652 = vsel %vm1626, %v1619, %v1621
        %v1653 = vsel %vm1626, %v1621, %v1623
        %v1654 = vsel %vm1626, %v1623, %v1625
        %v1683 = vadd.f32 %v1454, %v1627
        %v1684 = vadd.f32 %v1455, %v1628
        %v1685 = vadd.f32 %v1456, %v1629
        %v1686 = vadd.f32 %v1457, %v1630
        %v1687 = vadd.f32 %v1458, %v1631
        %v1688 = vadd.f32 %v1459, %v1632
        %v1689 = vadd.f32 %v1460, %v1633
        %v1690 = vadd.f32 %v1461, %v1634
        %v1691 = vadd.f32 %v1462, %v1635
        %v1692 = vadd.f32 %v1463, %v1636
        %v1693 = vadd.f32 %v1464, %v1637
        %v1694 = vadd.f32 %v1465, %v1638
        %v1695 = vadd.f32 %v1466, %v1639
        %v1696 = vadd.f32 %v1467, %v1640
        %v1697 = vadd.f32 %v1468, %v1641
        %v1698 = vadd.f32 %v1469, %v1642
        %v1699 = vadd.f32 %v1470, %v1643
        %v1700 = vadd.f32 %v1471, %v1644
        %v1701 = vadd.f32 %v1472, %v1645
        %v1702 = vadd.f32 %v1473, %v1646
        %v1703 = vadd.f32 %v1474, %v1647
        %v1704 = vadd.f32 %v1475, %v1648
        %v1705 = vadd.f32 %v1476, %v1649
        %v1706 = vadd.f32 %v1477, %v1650
        %v1707 = vadd.f32 %v1478, %v1651
        %v1708 = vadd.f32 %v1479, %v1652
        %v1709 = vadd.f32 %v1480, %v1653
        %v1710 = vadd.f32 %v1481, %v1654
        %1711 = vset.pattern.permute.xlu0 7
        %1712 = vperm.xlu0 %1711, %v240
        %v1713 = vpop.permute.xlu0 %1712
        %1715 = vset.pattern.permute.xlu0 7
        %1716 = vperm.xlu0 %1715, %v241
        %v1717 = vpop.permute.xlu0 %1716
        %1719 = vset.pattern.permute.xlu0 7
        %1720 = vperm.xlu0 %1719, %v242
        %v1721 = vpop.permute.xlu0 %1720
        %1723 = vset.pattern.permute.xlu0 7
        %1724 = vperm.xlu0 %1723, %v243
        %v1725 = vpop.permute.xlu0 %1724
        %v1727 = vmul.f32 %v1713, %v265
        %v1728 = vmul.f32 %v1713, %v266
        %v1729 = vmul.f32 %v1713, %v267
        %v1730 = vmul.f32 %v1713, %v268
        %v1731 = vmul.f32 %v1713, %v269
        %v1732 = vmul.f32 %v1713, %v270
        %v1733 = vmul.f32 %v1713, %v271
        %v1734 = vmul.f32 %v1713, %v351
        %v1735 = vmul.f32 %v1717, %v265
        %v1736 = vmul.f32 %v1717, %v266
        %v1737 = vmul.f32 %v1717, %v267
        %v1738 = vmul.f32 %v1717, %v268
        %v1739 = vmul.f32 %v1717, %v269
        %v1740 = vmul.f32 %v1717, %v270
        %v1741 = vmul.f32 %v1717, %v271
        %v1742 = vmul.f32 %v1717, %v351
        %v1743 = vmul.f32 %v1721, %v265
        %v1744 = vmul.f32 %v1721, %v266
        %v1745 = vmul.f32 %v1721, %v267
        %v1746 = vmul.f32 %v1721, %v268
        %v1747 = vmul.f32 %v1721, %v269
        %v1748 = vmul.f32 %v1721, %v270
        %v1749 = vmul.f32 %v1721, %v271
        %v1750 = vmul.f32 %v1721, %v351
        %v1751 = vmul.f32 %v1725, %v265
        %v1752 = vmul.f32 %v1725, %v266
        %v1753 = vmul.f32 %v1725, %v267
        %v1754 = vmul.f32 %v1725, %v268
        %v1755 = vmul.f32 %v1725, %v269
        %v1756 = vmul.f32 %v1725, %v270
        %v1757 = vmul.f32 %v1725, %v271
        %v1758 = vmul.f32 %v1725, %v351
        %1791 = vrot.lane.b32.xlu0 %v1727, 63
        %v1792 = vpop.permute.xlu0 %1791
        %1793 = vrot.lane.b32.xlu0 %v1728, 63
        %v1794 = vpop.permute.xlu0 %1793
        %1795 = vrot.lane.b32.xlu0 %v1729, 63
        %v1796 = vpop.permute.xlu0 %1795
        %1797 = vrot.lane.b32.xlu0 %v1730, 63
        %v1798 = vpop.permute.xlu0 %1797
        %1799 = vrot.lane.b32.xlu0 %v1731, 63
        %v1800 = vpop.permute.xlu0 %1799
        %1801 = vrot.lane.b32.xlu0 %v1732, 63
        %v1802 = vpop.permute.xlu0 %1801
        %1803 = vrot.lane.b32.xlu0 %v1733, 63
        %v1804 = vpop.permute.xlu0 %1803
        %1805 = vrot.lane.b32.xlu0 %v1734, 63
        %v1806 = vpop.permute.xlu0 %1805
        %1807 = vrot.lane.b32.xlu0 %v1735, 63
        %v1808 = vpop.permute.xlu0 %1807
        %1809 = vrot.lane.b32.xlu0 %v1736, 63
        %v1810 = vpop.permute.xlu0 %1809
        %1811 = vrot.lane.b32.xlu0 %v1737, 63
        %v1812 = vpop.permute.xlu0 %1811
        %1813 = vrot.lane.b32.xlu0 %v1738, 63
        %v1814 = vpop.permute.xlu0 %1813
        %1815 = vrot.lane.b32.xlu0 %v1739, 63
        %v1816 = vpop.permute.xlu0 %1815
        %1817 = vrot.lane.b32.xlu0 %v1740, 63
        %v1818 = vpop.permute.xlu0 %1817
        %1819 = vrot.lane.b32.xlu0 %v1741, 63
        %v1820 = vpop.permute.xlu0 %1819
        %1821 = vrot.lane.b32.xlu0 %v1742, 63
        %v1822 = vpop.permute.xlu0 %1821
        %1823 = vrot.lane.b32.xlu0 %v1743, 63
        %v1824 = vpop.permute.xlu0 %1823
        %1825 = vrot.lane.b32.xlu0 %v1744, 63
        %v1826 = vpop.permute.xlu0 %1825
        %1827 = vrot.lane.b32.xlu0 %v1745, 63
        %v1828 = vpop.permute.xlu0 %1827
        %1829 = vrot.lane.b32.xlu0 %v1746, 63
        %v1830 = vpop.permute.xlu0 %1829
        %1831 = vrot.lane.b32.xlu0 %v1747, 63
        %v1832 = vpop.permute.xlu0 %1831
        %1833 = vrot.lane.b32.xlu0 %v1748, 63
        %v1834 = vpop.permute.xlu0 %1833
        %1835 = vrot.lane.b32.xlu0 %v1749, 63
        %v1836 = vpop.permute.xlu0 %1835
        %1837 = vrot.lane.b32.xlu0 %v1750, 63
        %v1838 = vpop.permute.xlu0 %1837
        %1839 = vrot.lane.b32.xlu0 %v1751, 63
        %v1840 = vpop.permute.xlu0 %1839
        %1841 = vrot.lane.b32.xlu0 %v1752, 63
        %v1842 = vpop.permute.xlu0 %1841
        %1843 = vrot.lane.b32.xlu0 %v1753, 63
        %v1844 = vpop.permute.xlu0 %1843
        %1845 = vrot.lane.b32.xlu0 %v1754, 63
        %v1846 = vpop.permute.xlu0 %1845
        %1847 = vrot.lane.b32.xlu0 %v1755, 63
        %v1848 = vpop.permute.xlu0 %1847
        %1849 = vrot.lane.b32.xlu0 %v1756, 63
        %v1850 = vpop.permute.xlu0 %1849
        %1851 = vrot.lane.b32.xlu0 %v1757, 63
        %v1852 = vpop.permute.xlu0 %1851
        %1853 = vrot.lane.b32.xlu0 %v1758, 63
        %v1854 = vpop.permute.xlu0 %1853
        %vm1855 = vcmask 515072
        %v1856 = vsel %vm1855, %v1792, %v1794
        %v1857 = vsel %vm1855, %v1794, %v1796
        %v1858 = vsel %vm1855, %v1796, %v1798
        %v1859 = vsel %vm1855, %v1798, %v1800
        %v1860 = vsel %vm1855, %v1800, %v1802
        %v1861 = vsel %vm1855, %v1802, %v1804
        %v1862 = vsel %vm1855, %v1804, %v1806
        %v1863 = vsel %vm1855, %v1808, %v1810
        %v1864 = vsel %vm1855, %v1810, %v1812
        %v1865 = vsel %vm1855, %v1812, %v1814
        %v1866 = vsel %vm1855, %v1814, %v1816
        %v1867 = vsel %vm1855, %v1816, %v1818
        %v1868 = vsel %vm1855, %v1818, %v1820
        %v1869 = vsel %vm1855, %v1820, %v1822
        %v1870 = vsel %vm1855, %v1824, %v1826
        %v1871 = vsel %vm1855, %v1826, %v1828
        %v1872 = vsel %vm1855, %v1828, %v1830
        %v1873 = vsel %vm1855, %v1830, %v1832
        %v1874 = vsel %vm1855, %v1832, %v1834
        %v1875 = vsel %vm1855, %v1834, %v1836
        %v1876 = vsel %vm1855, %v1836, %v1838
        %v1877 = vsel %vm1855, %v1840, %v1842
        %v1878 = vsel %vm1855, %v1842, %v1844
        %v1879 = vsel %vm1855, %v1844, %v1846
        %v1880 = vsel %vm1855, %v1846, %v1848
        %v1881 = vsel %vm1855, %v1848, %v1850
        %v1882 = vsel %vm1855, %v1850, %v1852
        %v1883 = vsel %vm1855, %v1852, %v1854
        %v1912 = vadd.f32 %v1683, %v1856
        %v1913 = vadd.f32 %v1684, %v1857
        %v1914 = vadd.f32 %v1685, %v1858
        %v1915 = vadd.f32 %v1686, %v1859
        %v1916 = vadd.f32 %v1687, %v1860
        %v1917 = vadd.f32 %v1688, %v1861
        %v1918 = vadd.f32 %v1689, %v1862
        %v1919 = vadd.f32 %v1690, %v1863
        %v1920 = vadd.f32 %v1691, %v1864
        %v1921 = vadd.f32 %v1692, %v1865
        %v1922 = vadd.f32 %v1693, %v1866
        %v1923 = vadd.f32 %v1694, %v1867
        %v1924 = vadd.f32 %v1695, %v1868
        %v1925 = vadd.f32 %v1696, %v1869
        %v1926 = vadd.f32 %v1697, %v1870
        %v1927 = vadd.f32 %v1698, %v1871
        %v1928 = vadd.f32 %v1699, %v1872
        %v1929 = vadd.f32 %v1700, %v1873
        %v1930 = vadd.f32 %v1701, %v1874
        %v1931 = vadd.f32 %v1702, %v1875
        %v1932 = vadd.f32 %v1703, %v1876
        %v1933 = vadd.f32 %v1704, %v1877
        %v1934 = vadd.f32 %v1705, %v1878
        %v1935 = vadd.f32 %v1706, %v1879
        %v1936 = vadd.f32 %v1707, %v1880
        %v1937 = vadd.f32 %v1708, %v1881
        %v1938 = vadd.f32 %v1709, %v1882
        %v1939 = vadd.f32 %v1710, %v1883
        %1940 = vset.pattern.permute.xlu0 8
        %1941 = vperm.xlu0 %1940, %v240
        %v1942 = vpop.permute.xlu0 %1941
        %1944 = vset.pattern.permute.xlu0 8
        %1945 = vperm.xlu0 %1944, %v241
        %v1946 = vpop.permute.xlu0 %1945
        %1948 = vset.pattern.permute.xlu0 8
        %1949 = vperm.xlu0 %1948, %v242
        %v1950 = vpop.permute.xlu0 %1949
        %1952 = vset.pattern.permute.xlu0 8
        %1953 = vperm.xlu0 %1952, %v243
        %v1954 = vpop.permute.xlu0 %1953
        %v1956 = vmul.f32 %v1942, %v265
        %v1957 = vmul.f32 %v1942, %v266
        %v1958 = vmul.f32 %v1942, %v267
        %v1959 = vmul.f32 %v1942, %v268
        %v1960 = vmul.f32 %v1942, %v269
        %v1961 = vmul.f32 %v1942, %v270
        %v1962 = vmul.f32 %v1942, %v271
        %v1963 = vmul.f32 %v1942, %v351
        %v1964 = vmul.f32 %v1946, %v265
        %v1965 = vmul.f32 %v1946, %v266
        %v1966 = vmul.f32 %v1946, %v267
        %v1967 = vmul.f32 %v1946, %v268
        %v1968 = vmul.f32 %v1946, %v269
        %v1969 = vmul.f32 %v1946, %v270
        %v1970 = vmul.f32 %v1946, %v271
        %v1971 = vmul.f32 %v1946, %v351
        %v1972 = vmul.f32 %v1950, %v265
        %v1973 = vmul.f32 %v1950, %v266
        %v1974 = vmul.f32 %v1950, %v267
        %v1975 = vmul.f32 %v1950, %v268
        %v1976 = vmul.f32 %v1950, %v269
        %v1977 = vmul.f32 %v1950, %v270
        %v1978 = vmul.f32 %v1950, %v271
        %v1979 = vmul.f32 %v1950, %v351
        %v1980 = vmul.f32 %v1954, %v265
        %v1981 = vmul.f32 %v1954, %v266
        %v1982 = vmul.f32 %v1954, %v267
        %v1983 = vmul.f32 %v1954, %v268
        %v1984 = vmul.f32 %v1954, %v269
        %v1985 = vmul.f32 %v1954, %v270
        %v1986 = vmul.f32 %v1954, %v271
        %v1987 = vmul.f32 %v1954, %v351
        %2020 = vrot.lane.b32.xlu0 %v1956, 62
        %v2021 = vpop.permute.xlu0 %2020
        %2022 = vrot.lane.b32.xlu0 %v1957, 62
        %v2023 = vpop.permute.xlu0 %2022
        %2024 = vrot.lane.b32.xlu0 %v1958, 62
        %v2025 = vpop.permute.xlu0 %2024
        %2026 = vrot.lane.b32.xlu0 %v1959, 62
        %v2027 = vpop.permute.xlu0 %2026
        %2028 = vrot.lane.b32.xlu0 %v1960, 62
        %v2029 = vpop.permute.xlu0 %2028
        %2030 = vrot.lane.b32.xlu0 %v1961, 62
        %v2031 = vpop.permute.xlu0 %2030
        %2032 = vrot.lane.b32.xlu0 %v1962, 62
        %v2033 = vpop.permute.xlu0 %2032
        %2034 = vrot.lane.b32.xlu0 %v1963, 62
        %v2035 = vpop.permute.xlu0 %2034
        %2036 = vrot.lane.b32.xlu0 %v1964, 62
        %v2037 = vpop.permute.xlu0 %2036
        %2038 = vrot.lane.b32.xlu0 %v1965, 62
        %v2039 = vpop.permute.xlu0 %2038
        %2040 = vrot.lane.b32.xlu0 %v1966, 62
        %v2041 = vpop.permute.xlu0 %2040
        %2042 = vrot.lane.b32.xlu0 %v1967, 62
        %v2043 = vpop.permute.xlu0 %2042
        %2044 = vrot.lane.b32.xlu0 %v1968, 62
        %v2045 = vpop.permute.xlu0 %2044
        %2046 = vrot.lane.b32.xlu0 %v1969, 62
        %v2047 = vpop.permute.xlu0 %2046
        %2048 = vrot.lane.b32.xlu0 %v1970, 62
        %v2049 = vpop.permute.xlu0 %2048
        %2050 = vrot.lane.b32.xlu0 %v1971, 62
        %v2051 = vpop.permute.xlu0 %2050
        %2052 = vrot.lane.b32.xlu0 %v1972, 62
        %v2053 = vpop.permute.xlu0 %2052
        %2054 = vrot.lane.b32.xlu0 %v1973, 62
        %v2055 = vpop.permute.xlu0 %2054
        %2056 = vrot.lane.b32.xlu0 %v1974, 62
        %v2057 = vpop.permute.xlu0 %2056
        %2058 = vrot.lane.b32.xlu0 %v1975, 62
        %v2059 = vpop.permute.xlu0 %2058
        %2060 = vrot.lane.b32.xlu0 %v1976, 62
        %v2061 = vpop.permute.xlu0 %2060
        %2062 = vrot.lane.b32.xlu0 %v1977, 62
        %v2063 = vpop.permute.xlu0 %2062
        %2064 = vrot.lane.b32.xlu0 %v1978, 62
        %v2065 = vpop.permute.xlu0 %2064
        %2066 = vrot.lane.b32.xlu0 %v1979, 62
        %v2067 = vpop.permute.xlu0 %2066
        %2068 = vrot.lane.b32.xlu0 %v1980, 62
        %v2069 = vpop.permute.xlu0 %2068
        %2070 = vrot.lane.b32.xlu0 %v1981, 62
        %v2071 = vpop.permute.xlu0 %2070
        %2072 = vrot.lane.b32.xlu0 %v1982, 62
        %v2073 = vpop.permute.xlu0 %2072
        %2074 = vrot.lane.b32.xlu0 %v1983, 62
        %v2075 = vpop.permute.xlu0 %2074
        %2076 = vrot.lane.b32.xlu0 %v1984, 62
        %v2077 = vpop.permute.xlu0 %2076
        %2078 = vrot.lane.b32.xlu0 %v1985, 62
        %v2079 = vpop.permute.xlu0 %2078
        %2080 = vrot.lane.b32.xlu0 %v1986, 62
        %v2081 = vpop.permute.xlu0 %2080
        %2082 = vrot.lane.b32.xlu0 %v1987, 62
        %v2083 = vpop.permute.xlu0 %2082
        %vm2084 = vcmask 506880
        %v2085 = vsel %vm2084, %v2021, %v2023
        %v2086 = vsel %vm2084, %v2023, %v2025
        %v2087 = vsel %vm2084, %v2025, %v2027
        %v2088 = vsel %vm2084, %v2027, %v2029
        %v2089 = vsel %vm2084, %v2029, %v2031
        %v2090 = vsel %vm2084, %v2031, %v2033
        %v2091 = vsel %vm2084, %v2033, %v2035
        %v2092 = vsel %vm2084, %v2037, %v2039
        %v2093 = vsel %vm2084, %v2039, %v2041
        %v2094 = vsel %vm2084, %v2041, %v2043
        %v2095 = vsel %vm2084, %v2043, %v2045
        %v2096 = vsel %vm2084, %v2045, %v2047
        %v2097 = vsel %vm2084, %v2047, %v2049
        %v2098 = vsel %vm2084, %v2049, %v2051
        %v2099 = vsel %vm2084, %v2053, %v2055
        %v2100 = vsel %vm2084, %v2055, %v2057
        %v2101 = vsel %vm2084, %v2057, %v2059
        %v2102 = vsel %vm2084, %v2059, %v2061
        %v2103 = vsel %vm2084, %v2061, %v2063
        %v2104 = vsel %vm2084, %v2063, %v2065
        %v2105 = vsel %vm2084, %v2065, %v2067
        %v2106 = vsel %vm2084, %v2069, %v2071
        %v2107 = vsel %vm2084, %v2071, %v2073
        %v2108 = vsel %vm2084, %v2073, %v2075
        %v2109 = vsel %vm2084, %v2075, %v2077
        %v2110 = vsel %vm2084, %v2077, %v2079
        %v2111 = vsel %vm2084, %v2079, %v2081
        %v2112 = vsel %vm2084, %v2081, %v2083
        %v2141 = vadd.f32 %v1912, %v2085
        %v2142 = vadd.f32 %v1913, %v2086
        %v2143 = vadd.f32 %v1914, %v2087
        %v2144 = vadd.f32 %v1915, %v2088
        %v2145 = vadd.f32 %v1916, %v2089
        %v2146 = vadd.f32 %v1917, %v2090
        %v2147 = vadd.f32 %v1918, %v2091
        %v2148 = vadd.f32 %v1919, %v2092
        %v2149 = vadd.f32 %v1920, %v2093
        %v2150 = vadd.f32 %v1921, %v2094
        %v2151 = vadd.f32 %v1922, %v2095
        %v2152 = vadd.f32 %v1923, %v2096
        %v2153 = vadd.f32 %v1924, %v2097
        %v2154 = vadd.f32 %v1925, %v2098
        %v2155 = vadd.f32 %v1926, %v2099
        %v2156 = vadd.f32 %v1927, %v2100
        %v2157 = vadd.f32 %v1928, %v2101
        %v2158 = vadd.f32 %v1929, %v2102
        %v2159 = vadd.f32 %v1930, %v2103
        %v2160 = vadd.f32 %v1931, %v2104
        %v2161 = vadd.f32 %v1932, %v2105
        %v2162 = vadd.f32 %v1933, %v2106
        %v2163 = vadd.f32 %v1934, %v2107
        %v2164 = vadd.f32 %v1935, %v2108
        %v2165 = vadd.f32 %v1936, %v2109
        %v2166 = vadd.f32 %v1937, %v2110
        %v2167 = vadd.f32 %v1938, %v2111
        %v2168 = vadd.f32 %v1939, %v2112
        %v2169 = vld [vmem:[%s2] sm:$0xff]
        %v2170 = vld [vmem:[%s2 + $0x8] sm:$0xff]
        %v2171 = vld [vmem:[%s2 + $0x10] sm:$0xff]
        %v2172 = vld [vmem:[%s2 + $0x18] sm:$0xff]
        %2174 = vset.pattern.permute.xlu0 0
        %2175 = vperm.xlu0 %2174, %v2169
        %v2176 = vpop.permute.xlu0 %2175
        %2179 = vset.pattern.permute.xlu0 0
        %2180 = vperm.xlu0 %2179, %v2170
        %v2181 = vpop.permute.xlu0 %2180
        %2184 = vset.pattern.permute.xlu0 0
        %2185 = vperm.xlu0 %2184, %v2171
        %v2186 = vpop.permute.xlu0 %2185
        %2189 = vset.pattern.permute.xlu0 0
        %2190 = vperm.xlu0 %2189, %v2172
        %v2191 = vpop.permute.xlu0 %2190
        %v2193 = vmul.f32 %v2141, %v2176
        %v2194 = vmul.f32 %v2142, %v2176
        %v2195 = vmul.f32 %v2143, %v2176
        %v2196 = vmul.f32 %v2144, %v2176
        %v2197 = vmul.f32 %v2145, %v2176
        %v2198 = vmul.f32 %v2146, %v2176
        %v2199 = vmul.f32 %v2147, %v2176
        %v2200 = vmul.f32 %v2148, %v2181
        %v2201 = vmul.f32 %v2149, %v2181
        %v2202 = vmul.f32 %v2150, %v2181
        %v2203 = vmul.f32 %v2151, %v2181
        %v2204 = vmul.f32 %v2152, %v2181
        %v2205 = vmul.f32 %v2153, %v2181
        %v2206 = vmul.f32 %v2154, %v2181
        %v2207 = vmul.f32 %v2155, %v2186
        %v2208 = vmul.f32 %v2156, %v2186
        %v2209 = vmul.f32 %v2157, %v2186
        %v2210 = vmul.f32 %v2158, %v2186
        %v2211 = vmul.f32 %v2159, %v2186
        %v2212 = vmul.f32 %v2160, %v2186
        %v2213 = vmul.f32 %v2161, %v2186
        %v2214 = vmul.f32 %v2162, %v2191
        %v2215 = vmul.f32 %v2163, %v2191
        %v2216 = vmul.f32 %v2164, %v2191
        %v2217 = vmul.f32 %v2165, %v2191
        %v2218 = vmul.f32 %v2166, %v2191
        %v2219 = vmul.f32 %v2167, %v2191
        %v2220 = vmul.f32 %v2168, %v2191
        %v2221 = vld [vmem:[%s3] sm:$0xff]
        %v2222 = vld [vmem:[%s3 + $0x8] sm:$0xff]
        %v2223 = vld [vmem:[%s3 + $0x10] sm:$0xff]
        %v2224 = vld [vmem:[%s3 + $0x18] sm:$0xff]
        %2226 = vset.pattern.permute.xlu0 0
        %2227 = vperm.xlu0 %2226, %v2221
        %v2228 = vpop.permute.xlu0 %2227
        %2231 = vset.pattern.permute.xlu0 0
        %2232 = vperm.xlu0 %2231, %v2222
        %v2233 = vpop.permute.xlu0 %2232
        %2236 = vset.pattern.permute.xlu0 0
        %2237 = vperm.xlu0 %2236, %v2223
        %v2238 = vpop.permute.xlu0 %2237
        %2241 = vset.pattern.permute.xlu0 0
        %2242 = vperm.xlu0 %2241, %v2224
        %v2243 = vpop.permute.xlu0 %2242
        %v2245 = vadd.f32 %v2193, %v2228
        %v2246 = vadd.f32 %v2194, %v2228
        %v2247 = vadd.f32 %v2195, %v2228
        %v2248 = vadd.f32 %v2196, %v2228
        %v2249 = vadd.f32 %v2197, %v2228
        %v2250 = vadd.f32 %v2198, %v2228
        %v2251 = vadd.f32 %v2199, %v2228
        %v2252 = vadd.f32 %v2200, %v2233
        %v2253 = vadd.f32 %v2201, %v2233
        %v2254 = vadd.f32 %v2202, %v2233
        %v2255 = vadd.f32 %v2203, %v2233
        %v2256 = vadd.f32 %v2204, %v2233
        %v2257 = vadd.f32 %v2205, %v2233
        %v2258 = vadd.f32 %v2206, %v2233
        %v2259 = vadd.f32 %v2207, %v2238
        %v2260 = vadd.f32 %v2208, %v2238
        %v2261 = vadd.f32 %v2209, %v2238
        %v2262 = vadd.f32 %v2210, %v2238
        %v2263 = vadd.f32 %v2211, %v2238
        %v2264 = vadd.f32 %v2212, %v2238
        %v2265 = vadd.f32 %v2213, %v2238
        %v2266 = vadd.f32 %v2214, %v2243
        %v2267 = vadd.f32 %v2215, %v2243
        %v2268 = vadd.f32 %v2216, %v2243
        %v2269 = vadd.f32 %v2217, %v2243
        %v2270 = vadd.f32 %v2218, %v2243
        %v2271 = vadd.f32 %v2219, %v2243
        %v2272 = vadd.f32 %v2220, %v2243
        %v2273 = vmax.f32 %v2245, 0.0
        %v2274 = vmax.f32 %v2246, 0.0
        %v2275 = vmax.f32 %v2247, 0.0
        %v2276 = vmax.f32 %v2248, 0.0
        %v2277 = vmax.f32 %v2249, 0.0
        %v2278 = vmax.f32 %v2250, 0.0
        %v2279 = vmax.f32 %v2251, 0.0
        %v2280 = vmax.f32 %v2252, 0.0
        %v2281 = vmax.f32 %v2253, 0.0
        %v2282 = vmax.f32 %v2254, 0.0
        %v2283 = vmax.f32 %v2255, 0.0
        %v2284 = vmax.f32 %v2256, 0.0
        %v2285 = vmax.f32 %v2257, 0.0
        %v2286 = vmax.f32 %v2258, 0.0
        %v2287 = vmax.f32 %v2259, 0.0
        %v2288 = vmax.f32 %v2260, 0.0
        %v2289 = vmax.f32 %v2261, 0.0
        %v2290 = vmax.f32 %v2262, 0.0
        %v2291 = vmax.f32 %v2263, 0.0
        %v2292 = vmax.f32 %v2264, 0.0
        %v2293 = vmax.f32 %v2265, 0.0
        %v2294 = vmax.f32 %v2266, 0.0
        %v2295 = vmax.f32 %v2267, 0.0
        %v2296 = vmax.f32 %v2268, 0.0
        %v2297 = vmax.f32 %v2269, 0.0
        %v2298 = vmax.f32 %v2270, 0.0
        %v2299 = vmax.f32 %v2271, 0.0
        %v2300 = vmax.f32 %v2272, 0.0
        %v2301 = vpack.c.bf16 %v2280, %v2273
        %v2302 = vpack.c.bf16 %v2281, %v2274
        %v2303 = vpack.c.bf16 %v2282, %v2275
        %v2304 = vpack.c.bf16 %v2283, %v2276
        %v2305 = vpack.c.bf16 %v2284, %v2277
        %v2306 = vpack.c.bf16 %v2285, %v2278
        %v2307 = vpack.c.bf16 %v2286, %v2279
        %v2308 = vpack.c.bf16 %v2294, %v2287
        %v2309 = vpack.c.bf16 %v2295, %v2288
        %v2310 = vpack.c.bf16 %v2296, %v2289
        %v2311 = vpack.c.bf16 %v2297, %v2290
        %v2312 = vpack.c.bf16 %v2298, %v2291
        %v2313 = vpack.c.bf16 %v2299, %v2292
        %v2314 = vpack.c.bf16 %v2300, %v2293
        %v2315 = vld [vmem:[#allocation2] sm:$0xff]
        %v2316 = vld [vmem:[#allocation2 + $0x8] sm:$0xff]
        %v2317 = vld [vmem:[#allocation2 + $0x10] sm:$0xff]
        %v2318 = vld [vmem:[#allocation2 + $0x18] sm:$0xff]
        %v2319 = vld [vmem:[#allocation2 + $0x20] sm:$0xff]
        %v2320 = vld [vmem:[#allocation2 + $0x28] sm:$0xff]
        %v2321 = vld [vmem:[#allocation2 + $0x30] sm:$0xff]
        %v2322 = vld [vmem:[#allocation2 + $0x38] sm:$0xff]
        %v2323 = vld [vmem:[#allocation2 + $0x40] sm:$0xff]
        %v2324 = vld [vmem:[#allocation2 + $0x48] sm:$0xff]
        %v2325 = vld [vmem:[#allocation2 + $0x50] sm:$0xff]
        %v2326 = vld [vmem:[#allocation2 + $0x58] sm:$0xff]
        %v2327 = vld [vmem:[#allocation2 + $0x60] sm:$0xff]
        %v2328 = vld [vmem:[#allocation2 + $0x68] sm:$0xff]
        %v2329 = vld [vmem:[#allocation2 + $0x70] sm:$0xff]
        %v2330 = vld [vmem:[#allocation2 + $0x78] sm:$0xff]
        %v2331 = vld [vmem:[#allocation2 + $0x80] sm:$0xff]
        %v2332 = vld [vmem:[#allocation2 + $0x88] sm:$0xff]
        %v2333 = vld [vmem:[#allocation2 + $0x90] sm:$0xff]
        %v2334 = vld [vmem:[#allocation2 + $0x98] sm:$0xff]
        %v2335 = vld [vmem:[#allocation2 + $0xa0] sm:$0xff]
        %v2336 = vld [vmem:[#allocation2 + $0xa8] sm:$0xff]
        %v2337 = vld [vmem:[#allocation2 + $0xb0] sm:$0xff]
        %v2338 = vld [vmem:[#allocation2 + $0xb8] sm:$0xff]
        %v2339 = vld [vmem:[#allocation2 + $0xc0] sm:$0xff]
        %v2340 = vld [vmem:[#allocation2 + $0xc8] sm:$0xff]
        %v2341 = vld [vmem:[#allocation2 + $0xd0] sm:$0xff]
        %v2342 = vld [vmem:[#allocation2 + $0xd8] sm:$0xff]
        %v2343 = vld [vmem:[#allocation2 + $0xe0] sm:$0xff]
        %v2344 = vld [vmem:[#allocation2 + $0xe8] sm:$0xff]
        %v2345 = vld [vmem:[#allocation2 + $0xf0] sm:$0xff]
        %v2346 = vld [vmem:[#allocation2 + $0xf8] sm:$0xff]
        %v2347 = vld [vmem:[#allocation2 + $0x100] sm:$0xff]
        %v2348 = vld [vmem:[#allocation2 + $0x108] sm:$0xff]
        %v2349 = vld [vmem:[#allocation2 + $0x110] sm:$0xff]
        %v2350 = vld [vmem:[#allocation2 + $0x118] sm:$0xff]
        %v2351 = vld [vmem:[#allocation2 + $0x120] sm:$0xff]
        %v2352 = vld [vmem:[#allocation2 + $0x128] sm:$0xff]
        %v2353 = vld [vmem:[#allocation2 + $0x130] sm:$0xff]
        %v2354 = vld [vmem:[#allocation2 + $0x138] sm:$0xff]
        %v2355 = vld [vmem:[#allocation2 + $0x140] sm:$0xff]
        %v2356 = vld [vmem:[#allocation2 + $0x148] sm:$0xff]
        %v2357 = vld [vmem:[#allocation2 + $0x150] sm:$0xff]
        %v2358 = vld [vmem:[#allocation2 + $0x158] sm:$0xff]
        %v2359 = vld [vmem:[#allocation2 + $0x160] sm:$0xff]
        %v2360 = vld [vmem:[#allocation2 + $0x168] sm:$0xff]
        %v2361 = vld [vmem:[#allocation2 + $0x170] sm:$0xff]
        %v2362 = vld [vmem:[#allocation2 + $0x178] sm:$0xff]
        %v2363 = vld [vmem:[#allocation2 + $0x180] sm:$0xff]
        %v2364 = vld [vmem:[#allocation2 + $0x188] sm:$0xff]
        %v2365 = vld [vmem:[#allocation2 + $0x190] sm:$0xff]
        %v2366 = vld [vmem:[#allocation2 + $0x198] sm:$0xff]
        %v2367 = vld [vmem:[#allocation2 + $0x1a0] sm:$0xff]
        %v2368 = vld [vmem:[#allocation2 + $0x1a8] sm:$0xff]
        %v2369 = vld [vmem:[#allocation2 + $0x1b0] sm:$0xff]
        %v2370 = vld [vmem:[#allocation2 + $0x1b8] sm:$0xff]
        %v2371 = vld [vmem:[#allocation2 + $0x1c0] sm:$0xff]
        %v2372 = vld [vmem:[#allocation2 + $0x1c8] sm:$0xff]
        %v2373 = vld [vmem:[#allocation2 + $0x1d0] sm:$0xff]
        %v2374 = vld [vmem:[#allocation2 + $0x1d8] sm:$0xff]
        %v2375 = vld [vmem:[#allocation2 + $0x1e0] sm:$0xff]
        %v2376 = vld [vmem:[#allocation2 + $0x1e8] sm:$0xff]
        %v2377 = vld [vmem:[#allocation2 + $0x1f0] sm:$0xff]
        %v2378 = vld [vmem:[#allocation2 + $0x1f8] sm:$0xff]
        %v2379 = vld [vmem:[#allocation2 + $0x200] sm:$0xff]
        %v2380 = vld [vmem:[#allocation2 + $0x208] sm:$0xff]
        %v2381 = vld [vmem:[#allocation2 + $0x210] sm:$0xff]
        %v2382 = vld [vmem:[#allocation2 + $0x218] sm:$0xff]
        %v2383 = vld [vmem:[#allocation2 + $0x220] sm:$0xff]
        %v2384 = vld [vmem:[#allocation2 + $0x228] sm:$0xff]
        %v2385 = vld [vmem:[#allocation2 + $0x230] sm:$0xff]
        %v2386 = vld [vmem:[#allocation2 + $0x238] sm:$0xff]
        %v2387 = vld [vmem:[#allocation2 + $0x240] sm:$0xff]
        %v2388 = vld [vmem:[#allocation2 + $0x248] sm:$0xff]
        %v2389 = vld [vmem:[#allocation2 + $0x250] sm:$0xff]
        %v2390 = vld [vmem:[#allocation2 + $0x258] sm:$0xff]
        %v2391 = vld [vmem:[#allocation2 + $0x260] sm:$0xff]
        %v2392 = vld [vmem:[#allocation2 + $0x268] sm:$0xff]
        %v2393 = vld [vmem:[#allocation2 + $0x270] sm:$0xff]
        %v2394 = vld [vmem:[#allocation2 + $0x278] sm:$0xff]
        %v2395 = vld [vmem:[#allocation2 + $0x280] sm:$0xff]
        %v2396 = vld [vmem:[#allocation2 + $0x288] sm:$0xff]
        %v2397 = vld [vmem:[#allocation2 + $0x290] sm:$0xff]
        %v2398 = vld [vmem:[#allocation2 + $0x298] sm:$0xff]
        %v2399 = vld [vmem:[#allocation2 + $0x2a0] sm:$0xff]
        %v2400 = vld [vmem:[#allocation2 + $0x2a8] sm:$0xff]
        %v2401 = vld [vmem:[#allocation2 + $0x2b0] sm:$0xff]
        %v2402 = vld [vmem:[#allocation2 + $0x2b8] sm:$0xff]
        %v2403 = vld [vmem:[#allocation2 + $0x2c0] sm:$0xff]
        %v2404 = vld [vmem:[#allocation2 + $0x2c8] sm:$0xff]
        %v2405 = vld [vmem:[#allocation2 + $0x2d0] sm:$0xff]
        %v2406 = vld [vmem:[#allocation2 + $0x2d8] sm:$0xff]
        %v2407 = vld [vmem:[#allocation2 + $0x2e0] sm:$0xff]
        %v2408 = vld [vmem:[#allocation2 + $0x2e8] sm:$0xff]
        %v2409 = vld [vmem:[#allocation2 + $0x2f0] sm:$0xff]
        %v2410 = vld [vmem:[#allocation2 + $0x2f8] sm:$0xff]
        %v2411 = vld [vmem:[#allocation2 + $0x300] sm:$0xff]
        %v2412 = vld [vmem:[#allocation2 + $0x308] sm:$0xff]
        %v2413 = vld [vmem:[#allocation2 + $0x310] sm:$0xff]
        %v2414 = vld [vmem:[#allocation2 + $0x318] sm:$0xff]
        %v2415 = vld [vmem:[#allocation2 + $0x320] sm:$0xff]
        %v2416 = vld [vmem:[#allocation2 + $0x328] sm:$0xff]
        %v2417 = vld [vmem:[#allocation2 + $0x330] sm:$0xff]
        %v2418 = vld [vmem:[#allocation2 + $0x338] sm:$0xff]
        %v2419 = vld [vmem:[#allocation2 + $0x340] sm:$0xff]
        %v2420 = vld [vmem:[#allocation2 + $0x348] sm:$0xff]
        %v2421 = vld [vmem:[#allocation2 + $0x350] sm:$0xff]
        %v2422 = vld [vmem:[#allocation2 + $0x358] sm:$0xff]
        %v2423 = vld [vmem:[#allocation2 + $0x360] sm:$0xff]
        %v2424 = vld [vmem:[#allocation2 + $0x368] sm:$0xff]
        %v2425 = vld [vmem:[#allocation2 + $0x370] sm:$0xff]
        %v2426 = vld [vmem:[#allocation2 + $0x378] sm:$0xff]
        %v2539 = vunpack.c.l.b16 %v2315
        %v2540 = vunpack.c.h.b16 %v2315
        %v2541 = vunpack.c.l.b16 %v2316
        %v2542 = vunpack.c.h.b16 %v2316
        %v2543 = vunpack.c.l.b16 %v2317
        %v2544 = vunpack.c.h.b16 %v2317
        %v2545 = vunpack.c.l.b16 %v2318
        %v2546 = vunpack.c.h.b16 %v2318
        %v2547 = vunpack.c.l.b16 %v2319
        %v2548 = vunpack.c.h.b16 %v2319
        %v2549 = vunpack.c.l.b16 %v2320
        %v2550 = vunpack.c.h.b16 %v2320
        %v2551 = vunpack.c.l.b16 %v2321
        %v2552 = vunpack.c.h.b16 %v2321
        %v2553 = vunpack.c.l.b16 %v2322
        %v2554 = vunpack.c.h.b16 %v2322
        %v2555 = vunpack.c.l.b16 %v2323
        %v2556 = vunpack.c.h.b16 %v2323
        %v2557 = vunpack.c.l.b16 %v2324
        %v2558 = vunpack.c.h.b16 %v2324
        %v2559 = vunpack.c.l.b16 %v2325
        %v2560 = vunpack.c.h.b16 %v2325
        %v2561 = vunpack.c.l.b16 %v2326
        %v2562 = vunpack.c.h.b16 %v2326
        %v2563 = vunpack.c.l.b16 %v2327
        %v2564 = vunpack.c.h.b16 %v2327
        %v2565 = vunpack.c.l.b16 %v2328
        %v2566 = vunpack.c.h.b16 %v2328
        %v2567 = vunpack.c.l.b16 %v2329
        %v2568 = vunpack.c.h.b16 %v2329
        %v2569 = vunpack.c.l.b16 %v2330
        %v2570 = vunpack.c.h.b16 %v2330
        %v2571 = vunpack.c.l.b16 %v2331
        %v2572 = vunpack.c.h.b16 %v2331
        %v2573 = vunpack.c.l.b16 %v2332
        %v2574 = vunpack.c.h.b16 %v2332
        %v2575 = vunpack.c.l.b16 %v2333
        %v2576 = vunpack.c.h.b16 %v2333
        %v2577 = vunpack.c.l.b16 %v2334
        %v2578 = vunpack.c.h.b16 %v2334
        %v2579 = vunpack.c.l.b16 %v2335
        %v2580 = vunpack.c.h.b16 %v2335
        %v2581 = vunpack.c.l.b16 %v2336
        %v2582 = vunpack.c.h.b16 %v2336
        %v2583 = vunpack.c.l.b16 %v2337
        %v2584 = vunpack.c.h.b16 %v2337
        %v2585 = vunpack.c.l.b16 %v2338
        %v2586 = vunpack.c.h.b16 %v2338
        %v2587 = vunpack.c.l.b16 %v2339
        %v2588 = vunpack.c.h.b16 %v2339
        %v2589 = vunpack.c.l.b16 %v2340
        %v2590 = vunpack.c.h.b16 %v2340
        %v2591 = vunpack.c.l.b16 %v2341
        %v2592 = vunpack.c.h.b16 %v2341
        %v2593 = vunpack.c.l.b16 %v2342
        %v2594 = vunpack.c.h.b16 %v2342
        %v2595 = vunpack.c.l.b16 %v2343
        %v2596 = vunpack.c.h.b16 %v2343
        %v2597 = vunpack.c.l.b16 %v2344
        %v2598 = vunpack.c.h.b16 %v2344
        %v2599 = vunpack.c.l.b16 %v2345
        %v2600 = vunpack.c.h.b16 %v2345
        %v2601 = vunpack.c.l.b16 %v2346
        %v2602 = vunpack.c.h.b16 %v2346
        %v2603 = vunpack.c.l.b16 %v2347
        %v2604 = vunpack.c.h.b16 %v2347
        %v2605 = vunpack.c.l.b16 %v2348
        %v2606 = vunpack.c.h.b16 %v2348
        %v2607 = vunpack.c.l.b16 %v2349
        %v2608 = vunpack.c.h.b16 %v2349
        %v2609 = vunpack.c.l.b16 %v2350
        %v2610 = vunpack.c.h.b16 %v2350
        %v2611 = vunpack.c.l.b16 %v2351
        %v2612 = vunpack.c.h.b16 %v2351
        %v2613 = vunpack.c.l.b16 %v2352
        %v2614 = vunpack.c.h.b16 %v2352
        %v2615 = vunpack.c.l.b16 %v2353
        %v2616 = vunpack.c.h.b16 %v2353
        %v2617 = vunpack.c.l.b16 %v2354
        %v2618 = vunpack.c.h.b16 %v2354
        %v2619 = vunpack.c.l.b16 %v2355
        %v2620 = vunpack.c.h.b16 %v2355
        %v2621 = vunpack.c.l.b16 %v2356
        %v2622 = vunpack.c.h.b16 %v2356
        %v2623 = vunpack.c.l.b16 %v2357
        %v2624 = vunpack.c.h.b16 %v2357
        %v2625 = vunpack.c.l.b16 %v2358
        %v2626 = vunpack.c.h.b16 %v2358
        %v2627 = vunpack.c.l.b16 %v2359
        %v2628 = vunpack.c.h.b16 %v2359
        %v2629 = vunpack.c.l.b16 %v2360
        %v2630 = vunpack.c.h.b16 %v2360
        %v2631 = vunpack.c.l.b16 %v2361
        %v2632 = vunpack.c.h.b16 %v2361
        %v2633 = vunpack.c.l.b16 %v2362
        %v2634 = vunpack.c.h.b16 %v2362
        %v2635 = vunpack.c.l.b16 %v2363
        %v2636 = vunpack.c.h.b16 %v2363
        %v2637 = vunpack.c.l.b16 %v2364
        %v2638 = vunpack.c.h.b16 %v2364
        %v2639 = vunpack.c.l.b16 %v2365
        %v2640 = vunpack.c.h.b16 %v2365
        %v2641 = vunpack.c.l.b16 %v2366
        %v2642 = vunpack.c.h.b16 %v2366
        %v2643 = vunpack.c.l.b16 %v2367
        %v2644 = vunpack.c.h.b16 %v2367
        %v2645 = vunpack.c.l.b16 %v2368
        %v2646 = vunpack.c.h.b16 %v2368
        %v2647 = vunpack.c.l.b16 %v2369
        %v2648 = vunpack.c.h.b16 %v2369
        %v2649 = vunpack.c.l.b16 %v2370
        %v2650 = vunpack.c.h.b16 %v2370
        %v2651 = vunpack.c.l.b16 %v2371
        %v2652 = vunpack.c.h.b16 %v2371
        %v2653 = vunpack.c.l.b16 %v2372
        %v2654 = vunpack.c.h.b16 %v2372
        %v2655 = vunpack.c.l.b16 %v2373
        %v2656 = vunpack.c.h.b16 %v2373
        %v2657 = vunpack.c.l.b16 %v2374
        %v2658 = vunpack.c.h.b16 %v2374
        %v2659 = vunpack.c.l.b16 %v2375
        %v2660 = vunpack.c.h.b16 %v2375
        %v2661 = vunpack.c.l.b16 %v2376
        %v2662 = vunpack.c.h.b16 %v2376
        %v2663 = vunpack.c.l.b16 %v2377
        %v2664 = vunpack.c.h.b16 %v2377
        %v2665 = vunpack.c.l.b16 %v2378
        %v2666 = vunpack.c.h.b16 %v2378
        %v2667 = vunpack.c.l.b16 %v2379
        %v2668 = vunpack.c.h.b16 %v2379
        %v2669 = vunpack.c.l.b16 %v2380
        %v2670 = vunpack.c.h.b16 %v2380
        %v2671 = vunpack.c.l.b16 %v2381
        %v2672 = vunpack.c.h.b16 %v2381
        %v2673 = vunpack.c.l.b16 %v2382
        %v2674 = vunpack.c.h.b16 %v2382
        %v2675 = vunpack.c.l.b16 %v2383
        %v2676 = vunpack.c.h.b16 %v2383
        %v2677 = vunpack.c.l.b16 %v2384
        %v2678 = vunpack.c.h.b16 %v2384
        %v2679 = vunpack.c.l.b16 %v2385
        %v2680 = vunpack.c.h.b16 %v2385
        %v2681 = vunpack.c.l.b16 %v2386
        %v2682 = vunpack.c.h.b16 %v2386
        %v2683 = vunpack.c.l.b16 %v2387
        %v2684 = vunpack.c.h.b16 %v2387
        %v2685 = vunpack.c.l.b16 %v2388
        %v2686 = vunpack.c.h.b16 %v2388
        %v2687 = vunpack.c.l.b16 %v2389
        %v2688 = vunpack.c.h.b16 %v2389
        %v2689 = vunpack.c.l.b16 %v2390
        %v2690 = vunpack.c.h.b16 %v2390
        %v2691 = vunpack.c.l.b16 %v2391
        %v2692 = vunpack.c.h.b16 %v2391
        %v2693 = vunpack.c.l.b16 %v2392
        %v2694 = vunpack.c.h.b16 %v2392
        %v2695 = vunpack.c.l.b16 %v2393
        %v2696 = vunpack.c.h.b16 %v2393
        %v2697 = vunpack.c.l.b16 %v2394
        %v2698 = vunpack.c.h.b16 %v2394
        %v2699 = vunpack.c.l.b16 %v2395
        %v2700 = vunpack.c.h.b16 %v2395
        %v2701 = vunpack.c.l.b16 %v2396
        %v2702 = vunpack.c.h.b16 %v2396
        %v2703 = vunpack.c.l.b16 %v2397
        %v2704 = vunpack.c.h.b16 %v2397
        %v2705 = vunpack.c.l.b16 %v2398
        %v2706 = vunpack.c.h.b16 %v2398
        %v2707 = vunpack.c.l.b16 %v2399
        %v2708 = vunpack.c.h.b16 %v2399
        %v2709 = vunpack.c.l.b16 %v2400
        %v2710 = vunpack.c.h.b16 %v2400
        %v2711 = vunpack.c.l.b16 %v2401
        %v2712 = vunpack.c.h.b16 %v2401
        %v2713 = vunpack.c.l.b16 %v2402
        %v2714 = vunpack.c.h.b16 %v2402
        %v2715 = vunpack.c.l.b16 %v2403
        %v2716 = vunpack.c.h.b16 %v2403
        %v2717 = vunpack.c.l.b16 %v2404
        %v2718 = vunpack.c.h.b16 %v2404
        %v2719 = vunpack.c.l.b16 %v2405
        %v2720 = vunpack.c.h.b16 %v2405
        %v2721 = vunpack.c.l.b16 %v2406
        %v2722 = vunpack.c.h.b16 %v2406
        %v2723 = vunpack.c.l.b16 %v2407
        %v2724 = vunpack.c.h.b16 %v2407
        %v2725 = vunpack.c.l.b16 %v2408
        %v2726 = vunpack.c.h.b16 %v2408
        %v2727 = vunpack.c.l.b16 %v2409
        %v2728 = vunpack.c.h.b16 %v2409
        %v2729 = vunpack.c.l.b16 %v2410
        %v2730 = vunpack.c.h.b16 %v2410
        %v2731 = vunpack.c.l.b16 %v2411
        %v2732 = vunpack.c.h.b16 %v2411
        %v2733 = vunpack.c.l.b16 %v2412
        %v2734 = vunpack.c.h.b16 %v2412
        %v2735 = vunpack.c.l.b16 %v2413
        %v2736 = vunpack.c.h.b16 %v2413
        %v2737 = vunpack.c.l.b16 %v2414
        %v2738 = vunpack.c.h.b16 %v2414
        %v2739 = vunpack.c.l.b16 %v2415
        %v2740 = vunpack.c.h.b16 %v2415
        %v2741 = vunpack.c.l.b16 %v2416
        %v2742 = vunpack.c.h.b16 %v2416
        %v2743 = vunpack.c.l.b16 %v2417
        %v2744 = vunpack.c.h.b16 %v2417
        %v2745 = vunpack.c.l.b16 %v2418
        %v2746 = vunpack.c.h.b16 %v2418
        %v2747 = vunpack.c.l.b16 %v2419
        %v2748 = vunpack.c.h.b16 %v2419
        %v2749 = vunpack.c.l.b16 %v2420
        %v2750 = vunpack.c.h.b16 %v2420
        %v2751 = vunpack.c.l.b16 %v2421
        %v2752 = vunpack.c.h.b16 %v2421
        %v2753 = vunpack.c.l.b16 %v2422
        %v2754 = vunpack.c.h.b16 %v2422
        %v2755 = vunpack.c.l.b16 %v2423
        %v2756 = vunpack.c.h.b16 %v2423
        %v2757 = vunpack.c.l.b16 %v2424
        %v2758 = vunpack.c.h.b16 %v2424
        %v2759 = vunpack.c.l.b16 %v2425
        %v2760 = vunpack.c.h.b16 %v2425
        %v2761 = vunpack.c.l.b16 %v2426
        %v2762 = vunpack.c.h.b16 %v2426
        %v2763 = vpack.c.b16 %v2541, %v2539
        %v2764 = vpack.c.b16 %v2542, %v2540
        %v2765 = vpack.c.b16 %v2545, %v2543
        %v2766 = vpack.c.b16 %v2546, %v2544
        %v2767 = vpack.c.b16 %v2549, %v2547
        %v2768 = vpack.c.b16 %v2550, %v2548
        %v2769 = vpack.c.b16 %v2553, %v2551
        %v2770 = vpack.c.b16 %v2554, %v2552
        %v2771 = vpack.c.b16 %v2557, %v2555
        %v2772 = vpack.c.b16 %v2558, %v2556
        %v2773 = vpack.c.b16 %v2561, %v2559
        %v2774 = vpack.c.b16 %v2562, %v2560
        %v2775 = vpack.c.b16 %v2565, %v2563
        %v2776 = vpack.c.b16 %v2566, %v2564
        %v2777 = vpack.c.b16 %v2569, %v2567
        %v2778 = vpack.c.b16 %v2570, %v2568
        %v2779 = vpack.c.b16 %v2573, %v2571
        %v2780 = vpack.c.b16 %v2574, %v2572
        %v2781 = vpack.c.b16 %v2577, %v2575
        %v2782 = vpack.c.b16 %v2578, %v2576
        %v2783 = vpack.c.b16 %v2581, %v2579
        %v2784 = vpack.c.b16 %v2582, %v2580
        %v2785 = vpack.c.b16 %v2585, %v2583
        %v2786 = vpack.c.b16 %v2586, %v2584
        %v2787 = vpack.c.b16 %v2589, %v2587
        %v2788 = vpack.c.b16 %v2590, %v2588
        %v2789 = vpack.c.b16 %v2593, %v2591
        %v2790 = vpack.c.b16 %v2594, %v2592
        %v2791 = vpack.c.b16 %v2597, %v2595
        %v2792 = vpack.c.b16 %v2598, %v2596
        %v2793 = vpack.c.b16 %v2601, %v2599
        %v2794 = vpack.c.b16 %v2602, %v2600
        %v2795 = vpack.c.b16 %v2605, %v2603
        %v2796 = vpack.c.b16 %v2606, %v2604
        %v2797 = vpack.c.b16 %v2609, %v2607
        %v2798 = vpack.c.b16 %v2610, %v2608
        %v2799 = vpack.c.b16 %v2613, %v2611
        %v2800 = vpack.c.b16 %v2614, %v2612
        %v2801 = vpack.c.b16 %v2617, %v2615
        %v2802 = vpack.c.b16 %v2618, %v2616
        %v2803 = vpack.c.b16 %v2621, %v2619
        %v2804 = vpack.c.b16 %v2622, %v2620
        %v2805 = vpack.c.b16 %v2625, %v2623
        %v2806 = vpack.c.b16 %v2626, %v2624
        %v2807 = vpack.c.b16 %v2629, %v2627
        %v2808 = vpack.c.b16 %v2630, %v2628
        %v2809 = vpack.c.b16 %v2633, %v2631
        %v2810 = vpack.c.b16 %v2634, %v2632
        %v2811 = vpack.c.b16 %v2637, %v2635
        %v2812 = vpack.c.b16 %v2638, %v2636
        %v2813 = vpack.c.b16 %v2641, %v2639
        %v2814 = vpack.c.b16 %v2642, %v2640
        %v2815 = vpack.c.b16 %v2645, %v2643
        %v2816 = vpack.c.b16 %v2646, %v2644
        %v2817 = vpack.c.b16 %v2649, %v2647
        %v2818 = vpack.c.b16 %v2650, %v2648
        %v2819 = vpack.c.b16 %v2653, %v2651
        %v2820 = vpack.c.b16 %v2654, %v2652
        %v2821 = vpack.c.b16 %v2657, %v2655
        %v2822 = vpack.c.b16 %v2658, %v2656
        %v2823 = vpack.c.b16 %v2661, %v2659
        %v2824 = vpack.c.b16 %v2662, %v2660
        %v2825 = vpack.c.b16 %v2665, %v2663
        %v2826 = vpack.c.b16 %v2666, %v2664
        %v2827 = vpack.c.b16 %v2669, %v2667
        %v2828 = vpack.c.b16 %v2670, %v2668
        %v2829 = vpack.c.b16 %v2673, %v2671
        %v2830 = vpack.c.b16 %v2674, %v2672
        %v2831 = vpack.c.b16 %v2677, %v2675
        %v2832 = vpack.c.b16 %v2678, %v2676
        %v2833 = vpack.c.b16 %v2681, %v2679
        %v2834 = vpack.c.b16 %v2682, %v2680
        %v2835 = vpack.c.b16 %v2685, %v2683
        %v2836 = vpack.c.b16 %v2686, %v2684
        %v2837 = vpack.c.b16 %v2689, %v2687
        %v2838 = vpack.c.b16 %v2690, %v2688
        %v2839 = vpack.c.b16 %v2693, %v2691
        %v2840 = vpack.c.b16 %v2694, %v2692
        %v2841 = vpack.c.b16 %v2697, %v2695
        %v2842 = vpack.c.b16 %v2698, %v2696
        %v2843 = vpack.c.b16 %v2701, %v2699
        %v2844 = vpack.c.b16 %v2702, %v2700
        %v2845 = vpack.c.b16 %v2705, %v2703
        %v2846 = vpack.c.b16 %v2706, %v2704
        %v2847 = vpack.c.b16 %v2709, %v2707
        %v2848 = vpack.c.b16 %v2710, %v2708
        %v2849 = vpack.c.b16 %v2713, %v2711
        %v2850 = vpack.c.b16 %v2714, %v2712
        %v2851 = vpack.c.b16 %v2717, %v2715
        %v2852 = vpack.c.b16 %v2718, %v2716
        %v2853 = vpack.c.b16 %v2721, %v2719
        %v2854 = vpack.c.b16 %v2722, %v2720
        %v2855 = vpack.c.b16 %v2725, %v2723
        %v2856 = vpack.c.b16 %v2726, %v2724
        %v2857 = vpack.c.b16 %v2729, %v2727
        %v2858 = vpack.c.b16 %v2730, %v2728
        %v2859 = vpack.c.b16 %v2733, %v2731
        %v2860 = vpack.c.b16 %v2734, %v2732
        %v2861 = vpack.c.b16 %v2737, %v2735
        %v2862 = vpack.c.b16 %v2738, %v2736
        %v2863 = vpack.c.b16 %v2741, %v2739
        %v2864 = vpack.c.b16 %v2742, %v2740
        %v2865 = vpack.c.b16 %v2745, %v2743
        %v2866 = vpack.c.b16 %v2746, %v2744
        %v2867 = vpack.c.b16 %v2749, %v2747
        %v2868 = vpack.c.b16 %v2750, %v2748
        %v2869 = vpack.c.b16 %v2753, %v2751
        %v2870 = vpack.c.b16 %v2754, %v2752
        %v2871 = vpack.c.b16 %v2757, %v2755
        %v2872 = vpack.c.b16 %v2758, %v2756
        %v2873 = vpack.c.b16 %v2761, %v2759
        %v2874 = vpack.c.b16 %v2762, %v2760
        %2987 = vmatpush.bf16.msra.mxu0 %v2777
        %2988 = vmatpush.bf16.msra.mxu0 %v2775
        %2989 = vmatpush.bf16.msra.mxu0 %v2773
        %2990 = vmatpush.bf16.msra.mxu0 %v2771
        %2991 = vmatpush.bf16.msra.mxu0 %v2769
        %2992 = vmatpush.bf16.msra.mxu0 %v2767
        %2993 = vmatpush.bf16.msra.mxu0 %v2765
        %2994 = vmatpush.bf16.msra.mxu0 %v2763
        %2995 = vmatmul.bf16.gmra.mxu0 %v2301
        %v2996 = vpop.f32.mrf.mxu0
        %v2997 = vadd.f32 0.0, %v2996
        %v2998 = vpop.f32.mrf.mxu0
        %v2999 = vadd.f32 0.0, %v2998
        %3000 = vmatmul.bf16.gmra.mxu0 %v2308
        %v3001 = vpop.f32.mrf.mxu0
        %v3002 = vadd.f32 0.0, %v3001
        %v3003 = vpop.f32.mrf.mxu0
        %v3004 = vadd.f32 0.0, %v3003
        %3005 = vdwg.mxu0
        %3006 = vmatpush.bf16.msra.mxu0 %v2793
        %3007 = vmatpush.bf16.msra.mxu0 %v2791
        %3008 = vmatpush.bf16.msra.mxu0 %v2789
        %3009 = vmatpush.bf16.msra.mxu0 %v2787
        %3010 = vmatpush.bf16.msra.mxu0 %v2785
        %3011 = vmatpush.bf16.msra.mxu0 %v2783
        %3012 = vmatpush.bf16.msra.mxu0 %v2781
        %3013 = vmatpush.bf16.msra.mxu0 %v2779
        %3014 = vmatmul.bf16.gmra.mxu0 %v2302
        %v3015 = vpop.f32.mrf.mxu0
        %v3016 = vadd.f32 %v2997, %v3015
        %v3017 = vpop.f32.mrf.mxu0
        %v3018 = vadd.f32 %v2999, %v3017
        %3019 = vmatmul.bf16.gmra.mxu0 %v2309
        %v3020 = vpop.f32.mrf.mxu0
        %v3021 = vadd.f32 %v3002, %v3020
        %v3022 = vpop.f32.mrf.mxu0
        %v3023 = vadd.f32 %v3004, %v3022
        %3024 = vdwg.mxu0
        %3025 = vmatpush.bf16.msra.mxu0 %v2809
        %3026 = vmatpush.bf16.msra.mxu0 %v2807
        %3027 = vmatpush.bf16.msra.mxu0 %v2805
        %3028 = vmatpush.bf16.msra.mxu0 %v2803
        %3029 = vmatpush.bf16.msra.mxu0 %v2801
        %3030 = vmatpush.bf16.msra.mxu0 %v2799
        %3031 = vmatpush.bf16.msra.mxu0 %v2797
        %3032 = vmatpush.bf16.msra.mxu0 %v2795
        %3033 = vmatmul.bf16.gmra.mxu0 %v2303
        %v3034 = vpop.f32.mrf.mxu0
        %v3035 = vadd.f32 %v3016, %v3034
        %v3036 = vpop.f32.mrf.mxu0
        %v3037 = vadd.f32 %v3018, %v3036
        %3038 = vmatmul.bf16.gmra.mxu0 %v2310
        %v3039 = vpop.f32.mrf.mxu0
        %v3040 = vadd.f32 %v3021, %v3039
        %v3041 = vpop.f32.mrf.mxu0
        %v3042 = vadd.f32 %v3023, %v3041
        %3043 = vdwg.mxu0
        %3044 = vmatpush.bf16.msra.mxu0 %v2825
        %3045 = vmatpush.bf16.msra.mxu0 %v2823
        %3046 = vmatpush.bf16.msra.mxu0 %v2821
        %3047 = vmatpush.bf16.msra.mxu0 %v2819
        %3048 = vmatpush.bf16.msra.mxu0 %v2817
        %3049 = vmatpush.bf16.msra.mxu0 %v2815
        %3050 = vmatpush.bf16.msra.mxu0 %v2813
        %3051 = vmatpush.bf16.msra.mxu0 %v2811
        %3052 = vmatmul.bf16.gmra.mxu0 %v2304
        %v3053 = vpop.f32.mrf.mxu0
        %v3054 = vadd.f32 %v3035, %v3053
        %v3055 = vpop.f32.mrf.mxu0
        %v3056 = vadd.f32 %v3037, %v3055
        %3057 = vmatmul.bf16.gmra.mxu0 %v2311
        %v3058 = vpop.f32.mrf.mxu0
        %v3059 = vadd.f32 %v3040, %v3058
        %v3060 = vpop.f32.mrf.mxu0
        %v3061 = vadd.f32 %v3042, %v3060
        %3062 = vdwg.mxu0
        %3063 = vmatpush.bf16.msra.mxu0 %v2841
        %3064 = vmatpush.bf16.msra.mxu0 %v2839
        %3065 = vmatpush.bf16.msra.mxu0 %v2837
        %3066 = vmatpush.bf16.msra.mxu0 %v2835
        %3067 = vmatpush.bf16.msra.mxu0 %v2833
        %3068 = vmatpush.bf16.msra.mxu0 %v2831
        %3069 = vmatpush.bf16.msra.mxu0 %v2829
        %3070 = vmatpush.bf16.msra.mxu0 %v2827
        %3071 = vmatmul.bf16.gmra.mxu0 %v2305
        %v3072 = vpop.f32.mrf.mxu0
        %v3073 = vadd.f32 %v3054, %v3072
        %v3074 = vpop.f32.mrf.mxu0
        %v3075 = vadd.f32 %v3056, %v3074
        %3076 = vmatmul.bf16.gmra.mxu0 %v2312
        %v3077 = vpop.f32.mrf.mxu0
        %v3078 = vadd.f32 %v3059, %v3077
        %v3079 = vpop.f32.mrf.mxu0
        %v3080 = vadd.f32 %v3061, %v3079
        %3081 = vdwg.mxu0
        %3082 = vmatpush.bf16.msra.mxu0 %v2857
        %3083 = vmatpush.bf16.msra.mxu0 %v2855
        %3084 = vmatpush.bf16.msra.mxu0 %v2853
        %3085 = vmatpush.bf16.msra.mxu0 %v2851
        %3086 = vmatpush.bf16.msra.mxu0 %v2849
        %3087 = vmatpush.bf16.msra.mxu0 %v2847
        %3088 = vmatpush.bf16.msra.mxu0 %v2845
        %3089 = vmatpush.bf16.msra.mxu0 %v2843
        %3090 = vmatmul.bf16.gmra.mxu0 %v2306
        %v3091 = vpop.f32.mrf.mxu0
        %v3092 = vadd.f32 %v3073, %v3091
        %v3093 = vpop.f32.mrf.mxu0
        %v3094 = vadd.f32 %v3075, %v3093
        %3095 = vmatmul.bf16.gmra.mxu0 %v2313
        %v3096 = vpop.f32.mrf.mxu0
        %v3097 = vadd.f32 %v3078, %v3096
        %v3098 = vpop.f32.mrf.mxu0
        %v3099 = vadd.f32 %v3080, %v3098
        %3100 = vdwg.mxu0
        %3101 = vmatpush.bf16.msra.mxu0 %v2873
        %3102 = vmatpush.bf16.msra.mxu0 %v2871
        %3103 = vmatpush.bf16.msra.mxu0 %v2869
        %3104 = vmatpush.bf16.msra.mxu0 %v2867
        %3105 = vmatpush.bf16.msra.mxu0 %v2865
        %3106 = vmatpush.bf16.msra.mxu0 %v2863
        %3107 = vmatpush.bf16.msra.mxu0 %v2861
        %3108 = vmatpush.bf16.msra.mxu0 %v2859
        %3109 = vmatmul.bf16.gmra.mxu0 %v2307
        %v3110 = vpop.f32.mrf.mxu0
        %v3111 = vadd.f32 %v3092, %v3110
        %v3112 = vpop.f32.mrf.mxu0
        %v3113 = vadd.f32 %v3094, %v3112
        %3114 = vmatmul.bf16.gmra.mxu0 %v2314
        %v3115 = vpop.f32.mrf.mxu0
        %v3116 = vadd.f32 %v3097, %v3115
        %v3117 = vpop.f32.mrf.mxu0
        %v3118 = vadd.f32 %v3099, %v3117
        %3119 = vdwg.mxu0
        %3120 = vmatpush.bf16.msra.mxu0 %v2778
        %3121 = vmatpush.bf16.msra.mxu0 %v2776
        %3122 = vmatpush.bf16.msra.mxu0 %v2774
        %3123 = vmatpush.bf16.msra.mxu0 %v2772
        %3124 = vmatpush.bf16.msra.mxu0 %v2770
        %3125 = vmatpush.bf16.msra.mxu0 %v2768
        %3126 = vmatpush.bf16.msra.mxu0 %v2766
        %3127 = vmatpush.bf16.msra.mxu0 %v2764
        %3128 = vmatmul.bf16.gmra.mxu0 %v2301
        %v3129 = vpop.f32.mrf.mxu0
        %v3130 = vadd.f32 0.0, %v3129
        %v3131 = vpop.f32.mrf.mxu0
        %v3132 = vadd.f32 0.0, %v3131
        %3133 = vmatmul.bf16.gmra.mxu0 %v2308
        %v3134 = vpop.f32.mrf.mxu0
        %v3135 = vadd.f32 0.0, %v3134
        %v3136 = vpop.f32.mrf.mxu0
        %v3137 = vadd.f32 0.0, %v3136
        %3138 = vdwg.mxu0
        %3139 = vmatpush.bf16.msra.mxu0 %v2794
        %3140 = vmatpush.bf16.msra.mxu0 %v2792
        %3141 = vmatpush.bf16.msra.mxu0 %v2790
        %3142 = vmatpush.bf16.msra.mxu0 %v2788
        %3143 = vmatpush.bf16.msra.mxu0 %v2786
        %3144 = vmatpush.bf16.msra.mxu0 %v2784
        %3145 = vmatpush.bf16.msra.mxu0 %v2782
        %3146 = vmatpush.bf16.msra.mxu0 %v2780
        %3147 = vmatmul.bf16.gmra.mxu0 %v2302
        %v3148 = vpop.f32.mrf.mxu0
        %v3149 = vadd.f32 %v3130, %v3148
        %v3150 = vpop.f32.mrf.mxu0
        %v3151 = vadd.f32 %v3132, %v3150
        %3152 = vmatmul.bf16.gmra.mxu0 %v2309
        %v3153 = vpop.f32.mrf.mxu0
        %v3154 = vadd.f32 %v3135, %v3153
        %v3155 = vpop.f32.mrf.mxu0
        %v3156 = vadd.f32 %v3137, %v3155
        %3157 = vdwg.mxu0
        %3158 = vmatpush.bf16.msra.mxu0 %v2810
        %3159 = vmatpush.bf16.msra.mxu0 %v2808
        %3160 = vmatpush.bf16.msra.mxu0 %v2806
        %3161 = vmatpush.bf16.msra.mxu0 %v2804
        %3162 = vmatpush.bf16.msra.mxu0 %v2802
        %3163 = vmatpush.bf16.msra.mxu0 %v2800
        %3164 = vmatpush.bf16.msra.mxu0 %v2798
        %3165 = vmatpush.bf16.msra.mxu0 %v2796
        %3166 = vmatmul.bf16.gmra.mxu0 %v2303
        %v3167 = vpop.f32.mrf.mxu0
        %v3168 = vadd.f32 %v3149, %v3167
        %v3169 = vpop.f32.mrf.mxu0
        %v3170 = vadd.f32 %v3151, %v3169
        %3171 = vmatmul.bf16.gmra.mxu0 %v2310
        %v3172 = vpop.f32.mrf.mxu0
        %v3173 = vadd.f32 %v3154, %v3172
        %v3174 = vpop.f32.mrf.mxu0
        %v3175 = vadd.f32 %v3156, %v3174
        %3176 = vdwg.mxu0
        %3177 = vmatpush.bf16.msra.mxu0 %v2826
        %3178 = vmatpush.bf16.msra.mxu0 %v2824
        %3179 = vmatpush.bf16.msra.mxu0 %v2822
        %3180 = vmatpush.bf16.msra.mxu0 %v2820
        %3181 = vmatpush.bf16.msra.mxu0 %v2818
        %3182 = vmatpush.bf16.msra.mxu0 %v2816
        %3183 = vmatpush.bf16.msra.mxu0 %v2814
        %3184 = vmatpush.bf16.msra.mxu0 %v2812
        %3185 = vmatmul.bf16.gmra.mxu0 %v2304
        %v3186 = vpop.f32.mrf.mxu0
        %v3187 = vadd.f32 %v3168, %v3186
        %v3188 = vpop.f32.mrf.mxu0
        %v3189 = vadd.f32 %v3170, %v3188
        %3190 = vmatmul.bf16.gmra.mxu0 %v2311
        %v3191 = vpop.f32.mrf.mxu0
        %v3192 = vadd.f32 %v3173, %v3191
        %v3193 = vpop.f32.mrf.mxu0
        %v3194 = vadd.f32 %v3175, %v3193
        %3195 = vdwg.mxu0
        %3196 = vmatpush.bf16.msra.mxu0 %v2842
        %3197 = vmatpush.bf16.msra.mxu0 %v2840
        %3198 = vmatpush.bf16.msra.mxu0 %v2838
        %3199 = vmatpush.bf16.msra.mxu0 %v2836
        %3200 = vmatpush.bf16.msra.mxu0 %v2834
        %3201 = vmatpush.bf16.msra.mxu0 %v2832
        %3202 = vmatpush.bf16.msra.mxu0 %v2830
        %3203 = vmatpush.bf16.msra.mxu0 %v2828
        %3204 = vmatmul.bf16.gmra.mxu0 %v2305
        %v3205 = vpop.f32.mrf.mxu0
        %v3206 = vadd.f32 %v3187, %v3205
        %v3207 = vpop.f32.mrf.mxu0
        %v3208 = vadd.f32 %v3189, %v3207
        %3209 = vmatmul.bf16.gmra.mxu0 %v2312
        %v3210 = vpop.f32.mrf.mxu0
        %v3211 = vadd.f32 %v3192, %v3210
        %v3212 = vpop.f32.mrf.mxu0
        %v3213 = vadd.f32 %v3194, %v3212
        %3214 = vdwg.mxu0
        %3215 = vmatpush.bf16.msra.mxu0 %v2858
        %3216 = vmatpush.bf16.msra.mxu0 %v2856
        %3217 = vmatpush.bf16.msra.mxu0 %v2854
        %3218 = vmatpush.bf16.msra.mxu0 %v2852
        %3219 = vmatpush.bf16.msra.mxu0 %v2850
        %3220 = vmatpush.bf16.msra.mxu0 %v2848
        %3221 = vmatpush.bf16.msra.mxu0 %v2846
        %3222 = vmatpush.bf16.msra.mxu0 %v2844
        %3223 = vmatmul.bf16.gmra.mxu0 %v2306
        %v3224 = vpop.f32.mrf.mxu0
        %v3225 = vadd.f32 %v3206, %v3224
        %v3226 = vpop.f32.mrf.mxu0
        %v3227 = vadd.f32 %v3208, %v3226
        %3228 = vmatmul.bf16.gmra.mxu0 %v2313
        %v3229 = vpop.f32.mrf.mxu0
        %v3230 = vadd.f32 %v3211, %v3229
        %v3231 = vpop.f32.mrf.mxu0
        %v3232 = vadd.f32 %v3213, %v3231
        %3233 = vdwg.mxu0
        %3234 = vmatpush.bf16.msra.mxu0 %v2874
        %3235 = vmatpush.bf16.msra.mxu0 %v2872
        %3236 = vmatpush.bf16.msra.mxu0 %v2870
        %3237 = vmatpush.bf16.msra.mxu0 %v2868
        %3238 = vmatpush.bf16.msra.mxu0 %v2866
        %3239 = vmatpush.bf16.msra.mxu0 %v2864
        %3240 = vmatpush.bf16.msra.mxu0 %v2862
        %3241 = vmatpush.bf16.msra.mxu0 %v2860
        %3242 = vmatmul.bf16.gmra.mxu0 %v2307
        %v3243 = vpop.f32.mrf.mxu0
        %v3244 = vadd.f32 %v3225, %v3243
        %v3245 = vpop.f32.mrf.mxu0
        %v3246 = vadd.f32 %v3227, %v3245
        %3247 = vmatmul.bf16.gmra.mxu0 %v2314
        %v3248 = vpop.f32.mrf.mxu0
        %v3249 = vadd.f32 %v3230, %v3248
        %v3250 = vpop.f32.mrf.mxu0
        %v3251 = vadd.f32 %v3232, %v3250
        %3252 = vdwg.mxu0
        %v3253 = vpack.c.bf16 %v3244, %v3111
        %v3254 = vpack.c.bf16 %v3246, %v3113
        %v3255 = vpack.c.bf16 %v3249, %v3116
        %v3256 = vpack.c.bf16 %v3251, %v3118
        %3257 = vst [vmem:[%s238] sm:$0xff] %v3253
        %3258 = vst [vmem:[%s238 + $0x8] sm:$0xff] %v3254
        %3259 = vst [vmem:[%s238 + $0x10] sm:$0xff] %v3255
        %3260 = vst [vmem:[%s238 + $0x18] sm:$0xff] %v3256
        %p3261 = scmp.lt.s32.totalorder %s17, 1
        %s3262 = scalar_select %p3261, %s17, 1
        %s3263 = smul.addr %s3262, 8
        %s3264 = smul.addr %s3263, 4
        %s3265 = scalar_lea.vmem %s5, %s3264
        // Predicated region
        $region45: #{forward.3} parent=39 // pred_check
          %p3266 = pneg %p145
        $region46: #{forward.3} parent=39 // pred_check_branch
          %3268 = sbr.rel (%p3266) target = $region48
        $region47: #{forward.3} parent=39 // pred_region
          _
        $region48: #{forward.3} parent=39 // pred_fallthru
          _
      $region40: #{forward.3} parent=5 // pred_fallthru
        _
      %p3269 = scmp.le.s32.totalorder 2, %s12
      // Predicated region
      $region49: #{forward.3} parent=5 // pred_check
        %p3270 = pneg %p3269
      $region50: #{forward.3} parent=5 // pred_check_branch
        %3272 = sbr.rel (%p3270) target = $region52
      $region51: #{forward.3} parent=5 // pred_region
        %s3273 = ssub.s32 %s12, 2
        // Predicated region
        $region53: #{forward.3} parent=51 // pred_check
          %p3274 = pneg %p151
        $region54: #{forward.3} parent=51 // pred_check_branch
          %3276 = sbr.rel (%p3274) target = $region56
        $region55: #{forward.3} parent=51 // pred_region
          %p3277 = scmp.lt.s32.totalorder %s18, 1
          %s3278 = scalar_select %p3277, %s18, 1
          %s3279 = smul.addr %s3278, 8
          %s3280 = smul.addr %s3279, 4
          %s3281 = scalar_lea.vmem %s5, %s3280
        $region56: #{forward.3} parent=51 // pred_fallthru
          _
      $region52: #{forward.3} parent=5 // pred_fallthru
        _
    $region6: #{forward.3} parent=1 // loop_footer
      %s16 = sadd.s32 1, %s12
    $region7: #{forward.3} parent=1 // loop_footer_branch
      %11 = sbr.rel target = $region3
    $region8: #{forward.3} parent=1 // loop_exit
      _
    %3282 = vsyncpa [#allocation3], 1
    %s3283 = scalar_lea.sflag [#allocation3], 1
    %3284 = vsyncpa %s3283, 1

// kernel: forward.5
$region0: #{forward.5}
  #allocation0 [shape = 'u32[]', space=smem, size = 0x4, offset = 0x4, fixed_abs, tag = 'smem constant byte address 0x4 - core index']
  #allocation1 [shape = 'u32[72,128]{1,0:T(1,128)}', space=vmem, size = 0x9000, scoped, tag = 'internal scratch']
  %s0 = inlined_call_operand.vmem [shape: bf16[2,2304], index: 0, kind: input, shape index: {}]
  %s1 = inlined_call_operand.vmem [shape: bf16[2304,600], index: 1, kind: input, shape index: {}]
  %s2 = inlined_call_operand.vmem [shape: f32[1,600], index: 2, kind: input, shape index: {}]
  %s3 = inlined_call_operand.vmem [shape: bf16[600,120], index: 3, kind: input, shape index: {}]
  %s4 = inlined_call_operand.vmem [shape: f32[1,120], index: 4, kind: input, shape index: {}]
  %s5 = inlined_call_operand.vmem [shape: bf16[120,128], index: 5, kind: input, shape index: {}]
  %s6 = inlined_call_operand.vmem [shape: f32[1,128], index: 6, kind: input, shape index: {}]
  %s7 = inlined_call_operand.hbm [shape: f32[2,128], index: 7, kind: output, shape index: {}]
  %s8 = sld [smem:[#allocation0]]
  $region38: #{forward.5} parent=0
    _
  %s10 = ssub.s32 1, %s8
  %s11 = scalar_select 0, %s10, %s8
  $region1: #{forward.5} parent=0
    #allocation2 [shape = 'u8[1024]{0}', space=vmem, size = 0x400, scoped, tag = 'output window, operand 0, single buffered']
    #allocation3 [shape = 's32[1]{0}', space=sflag, size = 0x4, scoped, tag = 'scoped memory for forward.5']
    %12 = vsyncpa [#allocation3], 0
    // Predicated region
    $region2: #{forward.5} parent=1 // pred_check
      _
    $region3: #{forward.5} parent=1 // pred_check_branch
      %14 = sbr.rel (0) target = $region5
    $region4: #{forward.5} parent=1 // pred_region
      _
    $region5: #{forward.5} parent=1 // pred_fallthru
      _
    // Predicated region
    $region6: #{forward.5} parent=1 // pred_check
      _
    $region7: #{forward.5} parent=1 // pred_check_branch
      %16 = sbr.rel (0) target = $region9
    $region8: #{forward.5} parent=1 // pred_region
      _
    $region9: #{forward.5} parent=1 // pred_fallthru
      _
    // Predicated region
    $region10: #{forward.5} parent=1 // pred_check
      _
    $region11: #{forward.5} parent=1 // pred_check_branch
      %18 = sbr.rel (0) target = $region13
    $region12: #{forward.5} parent=1 // pred_region
      _
    $region13: #{forward.5} parent=1 // pred_fallthru
      _
    // Predicated region
    $region14: #{forward.5} parent=1 // pred_check
      _
    $region15: #{forward.5} parent=1 // pred_check_branch
      %20 = sbr.rel (0) target = $region17
    $region16: #{forward.5} parent=1 // pred_region
      _
    $region17: #{forward.5} parent=1 // pred_fallthru
      _
    // Predicated region
    $region18: #{forward.5} parent=1 // pred_check
      _
    $region19: #{forward.5} parent=1 // pred_check_branch
      %22 = sbr.rel (0) target = $region21
    $region20: #{forward.5} parent=1 // pred_region
      _
    $region21: #{forward.5} parent=1 // pred_fallthru
      _
    // Predicated region
    $region22: #{forward.5} parent=1 // pred_check
      _
    $region23: #{forward.5} parent=1 // pred_check_branch
      %24 = sbr.rel (0) target = $region25
    $region24: #{forward.5} parent=1 // pred_region
      _
    $region25: #{forward.5} parent=1 // pred_fallthru
      _
    // Predicated region
    $region26: #{forward.5} parent=1 // pred_check
      _
    $region27: #{forward.5} parent=1 // pred_check_branch
      %26 = sbr.rel (0) target = $region29
    $region28: #{forward.5} parent=1 // pred_region
      _
    $region29: #{forward.5} parent=1 // pred_fallthru
      _
    %v28 = vld [vmem:[%s0] sm:$0xff]
    %v29 = vld [vmem:[%s0 + $0x8] sm:$0xff]
    %v30 = vld [vmem:[%s0 + $0x10] sm:$0x3]
    %v31 = vld [vmem:[%s1] sm:$0xff]
    %v32 = vld [vmem:[%s1 + $0x8] sm:$0xff]
    %v33 = vld [vmem:[%s1 + $0x10] sm:$0xf]
    %v34 = vld [vmem:[%s1 + $0x14] sm:$0xff]
    %v35 = vld [vmem:[%s1 + $0x1c] sm:$0xff]
    %v36 = vld [vmem:[%s1 + $0x24] sm:$0xf]
    %v37 = vld [vmem:[%s1 + $0x28] sm:$0xff]
    %v38 = vld [vmem:[%s1 + $0x30] sm:$0xff]
    %v39 = vld [vmem:[%s1 + $0x38] sm:$0xf]
    %v40 = vld [vmem:[%s1 + $0x3c] sm:$0xff]
    %v41 = vld [vmem:[%s1 + $0x44] sm:$0xff]
    %v42 = vld [vmem:[%s1 + $0x4c] sm:$0xf]
    %v43 = vld [vmem:[%s1 + $0x50] sm:$0xff]
    %v44 = vld [vmem:[%s1 + $0x58] sm:$0xff]
    %v45 = vld [vmem:[%s1 + $0x60] sm:$0xf]
    %v46 = vld [vmem:[%s1 + $0x64] sm:$0xff]
    %v47 = vld [vmem:[%s1 + $0x6c] sm:$0xff]
    %v48 = vld [vmem:[%s1 + $0x74] sm:$0xf]
    %v49 = vld [vmem:[%s1 + $0x78] sm:$0xff]
    %v50 = vld [vmem:[%s1 + $0x80] sm:$0xff]
    %v51 = vld [vmem:[%s1 + $0x88] sm:$0xf]
    %v52 = vld [vmem:[%s1 + $0x8c] sm:$0xff]
    %v53 = vld [vmem:[%s1 + $0x94] sm:$0xff]
    %v54 = vld [vmem:[%s1 + $0x9c] sm:$0xf]
    %v55 = vld [vmem:[%s1 + $0xa0] sm:$0xff]
    %v56 = vld [vmem:[%s1 + $0xa8] sm:$0xff]
    %v57 = vld [vmem:[%s1 + $0xb0] sm:$0xf]
    %v58 = vld [vmem:[%s1 + $0xb4] sm:$0xff]
    %v59 = vld [vmem:[%s1 + $0xbc] sm:$0xff]
    %v60 = vld [vmem:[%s1 + $0xc4] sm:$0xf]
    %v61 = vld [vmem:[%s1 + $0xc8] sm:$0xff]
    %v62 = vld [vmem:[%s1 + $0xd0] sm:$0xff]
    %v63 = vld [vmem:[%s1 + $0xd8] sm:$0xf]
    %v64 = vld [vmem:[%s1 + $0xdc] sm:$0xff]
    %v65 = vld [vmem:[%s1 + $0xe4] sm:$0xff]
    %v66 = vld [vmem:[%s1 + $0xec] sm:$0xf]
    %v67 = vld [vmem:[%s1 + $0xf0] sm:$0xff]
    %v68 = vld [vmem:[%s1 + $0xf8] sm:$0xff]
    %v69 = vld [vmem:[%s1 + $0x100] sm:$0xf]
    %v70 = vld [vmem:[%s1 + $0x104] sm:$0xff]
    %v71 = vld [vmem:[%s1 + $0x10c] sm:$0xff]
    %v72 = vld [vmem:[%s1 + $0x114] sm:$0xf]
    %v73 = vld [vmem:[%s1 + $0x118] sm:$0xff]
    %v74 = vld [vmem:[%s1 + $0x120] sm:$0xff]
    %v75 = vld [vmem:[%s1 + $0x128] sm:$0xf]
    %v76 = vld [vmem:[%s1 + $0x12c] sm:$0xff]
    %v77 = vld [vmem:[%s1 + $0x134] sm:$0xff]
    %v78 = vld [vmem:[%s1 + $0x13c] sm:$0xf]
    %v79 = vld [vmem:[%s1 + $0x140] sm:$0xff]
    %v80 = vld [vmem:[%s1 + $0x148] sm:$0xff]
    %v81 = vld [vmem:[%s1 + $0x150] sm:$0xf]
    %v82 = vld [vmem:[%s1 + $0x154] sm:$0xff]
    %v83 = vld [vmem:[%s1 + $0x15c] sm:$0xff]
    %v84 = vld [vmem:[%s1 + $0x164] sm:$0xf]
    %v85 = vld [vmem:[%s1 + $0x168] sm:$0xff]
    %v86 = vld [vmem:[%s1 + $0x170] sm:$0xff]
    %v87 = vld [vmem:[%s1 + $0x178] sm:$0xf]
    %v88 = vld [vmem:[%s1 + $0x17c] sm:$0xff]
    %v89 = vld [vmem:[%s1 + $0x184] sm:$0xff]
    %v90 = vld [vmem:[%s1 + $0x18c] sm:$0xf]
    %v91 = vld [vmem:[%s1 + $0x190] sm:$0xff]
    %v92 = vld [vmem:[%s1 + $0x198] sm:$0xff]
    %v93 = vld [vmem:[%s1 + $0x1a0] sm:$0xf]
    %v94 = vld [vmem:[%s1 + $0x1a4] sm:$0xff]
    %v95 = vld [vmem:[%s1 + $0x1ac] sm:$0xff]
    %v96 = vld [vmem:[%s1 + $0x1b4] sm:$0xf]
    %v97 = vld [vmem:[%s1 + $0x1b8] sm:$0xff]
    %v98 = vld [vmem:[%s1 + $0x1c0] sm:$0xff]
    %v99 = vld [vmem:[%s1 + $0x1c8] sm:$0xf]
    %v100 = vld [vmem:[%s1 + $0x1cc] sm:$0xff]
    %v101 = vld [vmem:[%s1 + $0x1d4] sm:$0xff]
    %v102 = vld [vmem:[%s1 + $0x1dc] sm:$0xf]
    %v103 = vld [vmem:[%s1 + $0x1e0] sm:$0xff]
    %v104 = vld [vmem:[%s1 + $0x1e8] sm:$0xff]
    %v105 = vld [vmem:[%s1 + $0x1f0] sm:$0xf]
    %v106 = vld [vmem:[%s1 + $0x1f4] sm:$0xff]
    %v107 = vld [vmem:[%s1 + $0x1fc] sm:$0xff]
    %v108 = vld [vmem:[%s1 + $0x204] sm:$0xf]
    %v109 = vld [vmem:[%s1 + $0x208] sm:$0xff]
    %v110 = vld [vmem:[%s1 + $0x210] sm:$0xff]
    %v111 = vld [vmem:[%s1 + $0x218] sm:$0xf]
    %v112 = vld [vmem:[%s1 + $0x21c] sm:$0xff]
    %v113 = vld [vmem:[%s1 + $0x224] sm:$0xff]
    %v114 = vld [vmem:[%s1 + $0x22c] sm:$0xf]
    %v115 = vld [vmem:[%s1 + $0x230] sm:$0xff]
    %v116 = vld [vmem:[%s1 + $0x238] sm:$0xff]
    %v117 = vld [vmem:[%s1 + $0x240] sm:$0xf]
    %v118 = vld [vmem:[%s1 + $0x244] sm:$0xff]
    %v119 = vld [vmem:[%s1 + $0x24c] sm:$0xff]
    %v120 = vld [vmem:[%s1 + $0x254] sm:$0xf]
    %v121 = vld [vmem:[%s1 + $0x258] sm:$0xff]
    %v122 = vld [vmem:[%s1 + $0x260] sm:$0xff]
    %v123 = vld [vmem:[%s1 + $0x268] sm:$0xf]
    %v124 = vld [vmem:[%s1 + $0x26c] sm:$0xff]
    %v125 = vld [vmem:[%s1 + $0x274] sm:$0xff]
    %v126 = vld [vmem:[%s1 + $0x27c] sm:$0xf]
    %v127 = vld [vmem:[%s1 + $0x280] sm:$0xff]
    %v128 = vld [vmem:[%s1 + $0x288] sm:$0xff]
    %v129 = vld [vmem:[%s1 + $0x290] sm:$0xf]
    %v130 = vld [vmem:[%s1 + $0x294] sm:$0xff]
    %v131 = vld [vmem:[%s1 + $0x29c] sm:$0xff]
    %v132 = vld [vmem:[%s1 + $0x2a4] sm:$0xf]
    %v133 = vld [vmem:[%s1 + $0x2a8] sm:$0xff]
    %v134 = vld [vmem:[%s1 + $0x2b0] sm:$0xff]
    %v135 = vld [vmem:[%s1 + $0x2b8] sm:$0xf]
    %v136 = vld [vmem:[%s1 + $0x2bc] sm:$0xff]
    %v137 = vld [vmem:[%s1 + $0x2c4] sm:$0xff]
    %v138 = vld [vmem:[%s1 + $0x2cc] sm:$0xf]
    %v139 = vld [vmem:[%s1 + $0x2d0] sm:$0xff]
    %v140 = vld [vmem:[%s1 + $0x2d8] sm:$0xff]
    %v141 = vld [vmem:[%s1 + $0x2e0] sm:$0xf]
    %v142 = vld [vmem:[%s1 + $0x2e4] sm:$0xff]
    %v143 = vld [vmem:[%s1 + $0x2ec] sm:$0xff]
    %v144 = vld [vmem:[%s1 + $0x2f4] sm:$0xf]
    %v145 = vld [vmem:[%s1 + $0x2f8] sm:$0xff]
    %v146 = vld [vmem:[%s1 + $0x300] sm:$0xff]
    %v147 = vld [vmem:[%s1 + $0x308] sm:$0xf]
    %v148 = vld [vmem:[%s1 + $0x30c] sm:$0xff]
    %v149 = vld [vmem:[%s1 + $0x314] sm:$0xff]
    %v150 = vld [vmem:[%s1 + $0x31c] sm:$0xf]
    %v151 = vld [vmem:[%s1 + $0x320] sm:$0xff]
    %v152 = vld [vmem:[%s1 + $0x328] sm:$0xff]
    %v153 = vld [vmem:[%s1 + $0x330] sm:$0xf]
    %v154 = vld [vmem:[%s1 + $0x334] sm:$0xff]
    %v155 = vld [vmem:[%s1 + $0x33c] sm:$0xff]
    %v156 = vld [vmem:[%s1 + $0x344] sm:$0xf]
    %v157 = vld [vmem:[%s1 + $0x348] sm:$0xff]
    %v158 = vld [vmem:[%s1 + $0x350] sm:$0xff]
    %v159 = vld [vmem:[%s1 + $0x358] sm:$0xf]
    %v160 = vld [vmem:[%s1 + $0x35c] sm:$0xff]
    %v161 = vld [vmem:[%s1 + $0x364] sm:$0xff]
    %v162 = vld [vmem:[%s1 + $0x36c] sm:$0xf]
    %v163 = vld [vmem:[%s1 + $0x370] sm:$0xff]
    %v164 = vld [vmem:[%s1 + $0x378] sm:$0xff]
    %v165 = vld [vmem:[%s1 + $0x380] sm:$0xf]
    %v166 = vld [vmem:[%s1 + $0x384] sm:$0xff]
    %v167 = vld [vmem:[%s1 + $0x38c] sm:$0xff]
    %v168 = vld [vmem:[%s1 + $0x394] sm:$0xf]
    %v169 = vld [vmem:[%s1 + $0x398] sm:$0xff]
    %v170 = vld [vmem:[%s1 + $0x3a0] sm:$0xff]
    %v171 = vld [vmem:[%s1 + $0x3a8] sm:$0xf]
    %v172 = vld [vmem:[%s1 + $0x3ac] sm:$0xff]
    %v173 = vld [vmem:[%s1 + $0x3b4] sm:$0xff]
    %v174 = vld [vmem:[%s1 + $0x3bc] sm:$0xf]
    %v175 = vld [vmem:[%s1 + $0x3c0] sm:$0xff]
    %v176 = vld [vmem:[%s1 + $0x3c8] sm:$0xff]
    %v177 = vld [vmem:[%s1 + $0x3d0] sm:$0xf]
    %v178 = vld [vmem:[%s1 + $0x3d4] sm:$0xff]
    %v179 = vld [vmem:[%s1 + $0x3dc] sm:$0xff]
    %v180 = vld [vmem:[%s1 + $0x3e4] sm:$0xf]
    %v181 = vld [vmem:[%s1 + $0x3e8] sm:$0xff]
    %v182 = vld [vmem:[%s1 + $0x3f0] sm:$0xff]
    %v183 = vld [vmem:[%s1 + $0x3f8] sm:$0xf]
    %v184 = vld [vmem:[%s1 + $0x3fc] sm:$0xff]
    %v185 = vld [vmem:[%s1 + $0x404] sm:$0xff]
    %v186 = vld [vmem:[%s1 + $0x40c] sm:$0xf]
    %v187 = vld [vmem:[%s1 + $0x410] sm:$0xff]
    %v188 = vld [vmem:[%s1 + $0x418] sm:$0xff]
    %v189 = vld [vmem:[%s1 + $0x420] sm:$0xf]
    %v190 = vld [vmem:[%s1 + $0x424] sm:$0xff]
    %v191 = vld [vmem:[%s1 + $0x42c] sm:$0xff]
    %v192 = vld [vmem:[%s1 + $0x434] sm:$0xf]
    %v193 = vld [vmem:[%s1 + $0x438] sm:$0xff]
    %v194 = vld [vmem:[%s1 + $0x440] sm:$0xff]
    %v195 = vld [vmem:[%s1 + $0x448] sm:$0xf]
    %v196 = vld [vmem:[%s1 + $0x44c] sm:$0xff]
    %v197 = vld [vmem:[%s1 + $0x454] sm:$0xff]
    %v198 = vld [vmem:[%s1 + $0x45c] sm:$0xf]
    %v199 = vld [vmem:[%s1 + $0x460] sm:$0xff]
    %v200 = vld [vmem:[%s1 + $0x468] sm:$0xff]
    %v201 = vld [vmem:[%s1 + $0x470] sm:$0xf]
    %v202 = vld [vmem:[%s1 + $0x474] sm:$0xff]
    %v203 = vld [vmem:[%s1 + $0x47c] sm:$0xff]
    %v204 = vld [vmem:[%s1 + $0x484] sm:$0xf]
    %v205 = vld [vmem:[%s1 + $0x488] sm:$0xff]
    %v206 = vld [vmem:[%s1 + $0x490] sm:$0xff]
    %v207 = vld [vmem:[%s1 + $0x498] sm:$0xf]
    %v208 = vld [vmem:[%s1 + $0x49c] sm:$0xff]
    %v209 = vld [vmem:[%s1 + $0x4a4] sm:$0xff]
    %v210 = vld [vmem:[%s1 + $0x4ac] sm:$0xf]
    %v211 = vld [vmem:[%s1 + $0x4b0] sm:$0xff]
    %v212 = vld [vmem:[%s1 + $0x4b8] sm:$0xff]
    %v213 = vld [vmem:[%s1 + $0x4c0] sm:$0xf]
    %v214 = vld [vmem:[%s1 + $0x4c4] sm:$0xff]
    %v215 = vld [vmem:[%s1 + $0x4cc] sm:$0xff]
    %v216 = vld [vmem:[%s1 + $0x4d4] sm:$0xf]
    %v217 = vld [vmem:[%s1 + $0x4d8] sm:$0xff]
    %v218 = vld [vmem:[%s1 + $0x4e0] sm:$0xff]
    %v219 = vld [vmem:[%s1 + $0x4e8] sm:$0xf]
    %v220 = vld [vmem:[%s1 + $0x4ec] sm:$0xff]
    %v221 = vld [vmem:[%s1 + $0x4f4] sm:$0xff]
    %v222 = vld [vmem:[%s1 + $0x4fc] sm:$0xf]
    %v223 = vld [vmem:[%s1 + $0x500] sm:$0xff]
    %v224 = vld [vmem:[%s1 + $0x508] sm:$0xff]
    %v225 = vld [vmem:[%s1 + $0x510] sm:$0xf]
    %v226 = vld [vmem:[%s1 + $0x514] sm:$0xff]
    %v227 = vld [vmem:[%s1 + $0x51c] sm:$0xff]
    %v228 = vld [vmem:[%s1 + $0x524] sm:$0xf]
    %v229 = vld [vmem:[%s1 + $0x528] sm:$0xff]
    %v230 = vld [vmem:[%s1 + $0x530] sm:$0xff]
    %v231 = vld [vmem:[%s1 + $0x538] sm:$0xf]
    %v232 = vld [vmem:[%s1 + $0x53c] sm:$0xff]
    %v233 = vld [vmem:[%s1 + $0x544] sm:$0xff]
    %v234 = vld [vmem:[%s1 + $0x54c] sm:$0xf]
    %v235 = vld [vmem:[%s1 + $0x550] sm:$0xff]
    %v236 = vld [vmem:[%s1 + $0x558] sm:$0xff]
    %v237 = vld [vmem:[%s1 + $0x560] sm:$0xf]
    %v238 = vld [vmem:[%s1 + $0x564] sm:$0xff]
    %v239 = vld [vmem:[%s1 + $0x56c] sm:$0xff]
    %v240 = vld [vmem:[%s1 + $0x574] sm:$0xf]
    %v241 = vld [vmem:[%s1 + $0x578] sm:$0xff]
    %v242 = vld [vmem:[%s1 + $0x580] sm:$0xff]
    %v243 = vld [vmem:[%s1 + $0x588] sm:$0xf]
    %v244 = vld [vmem:[%s1 + $0x58c] sm:$0xff]
    %v245 = vld [vmem:[%s1 + $0x594] sm:$0xff]
    %v246 = vld [vmem:[%s1 + $0x59c] sm:$0xf]
    %v247 = vld [vmem:[%s1 + $0x5a0] sm:$0xff]
    %v248 = vld [vmem:[%s1 + $0x5a8] sm:$0xff]
    %v249 = vld [vmem:[%s1 + $0x5b0] sm:$0xf]
    %v250 = vld [vmem:[%s1 + $0x5b4] sm:$0xff]
    %v251 = vld [vmem:[%s1 + $0x5bc] sm:$0xff]
    %v252 = vld [vmem:[%s1 + $0x5c4] sm:$0xf]
    %v253 = vld [vmem:[%s1 + $0x5c8] sm:$0xff]
    %v254 = vld [vmem:[%s1 + $0x5d0] sm:$0xff]
    %v255 = vld [vmem:[%s1 + $0x5d8] sm:$0xf]
    %v256 = vld [vmem:[%s1 + $0x5dc] sm:$0xff]
    %v257 = vld [vmem:[%s1 + $0x5e4] sm:$0xff]
    %v258 = vld [vmem:[%s1 + $0x5ec] sm:$0xf]
    %v259 = vld [vmem:[%s1 + $0x5f0] sm:$0xff]
    %v260 = vld [vmem:[%s1 + $0x5f8] sm:$0xff]
    %v261 = vld [vmem:[%s1 + $0x600] sm:$0xf]
    %v262 = vld [vmem:[%s1 + $0x604] sm:$0xff]
    %v263 = vld [vmem:[%s1 + $0x60c] sm:$0xff]
    %v264 = vld [vmem:[%s1 + $0x614] sm:$0xf]
    %v265 = vld [vmem:[%s1 + $0x618] sm:$0xff]
    %v266 = vld [vmem:[%s1 + $0x620] sm:$0xff]
    %v267 = vld [vmem:[%s1 + $0x628] sm:$0xf]
    %v268 = vld [vmem:[%s1 + $0x62c] sm:$0xff]
    %v269 = vld [vmem:[%s1 + $0x634] sm:$0xff]
    %v270 = vld [vmem:[%s1 + $0x63c] sm:$0xf]
    %v271 = vld [vmem:[%s1 + $0x640] sm:$0xff]
    %v272 = vld [vmem:[%s1 + $0x648] sm:$0xff]
    %v273 = vld [vmem:[%s1 + $0x650] sm:$0xf]
    %v274 = vld [vmem:[%s1 + $0x654] sm:$0xff]
    %v275 = vld [vmem:[%s1 + $0x65c] sm:$0xff]
    %v276 = vld [vmem:[%s1 + $0x664] sm:$0xf]
    %v277 = vld [vmem:[%s1 + $0x668] sm:$0xff]
    %v278 = vld [vmem:[%s1 + $0x670] sm:$0xff]
    %v279 = vld [vmem:[%s1 + $0x678] sm:$0xf]
    %v280 = vld [vmem:[%s1 + $0x67c] sm:$0xff]
    %v281 = vld [vmem:[%s1 + $0x684] sm:$0xff]
    %v282 = vld [vmem:[%s1 + $0x68c] sm:$0xf]
    %v283 = vld [vmem:[%s1 + $0x690] sm:$0xff]
    %v284 = vld [vmem:[%s1 + $0x698] sm:$0xff]
    %v285 = vld [vmem:[%s1 + $0x6a0] sm:$0xf]
    %v286 = vld [vmem:[%s1 + $0x6a4] sm:$0xff]
    %v287 = vld [vmem:[%s1 + $0x6ac] sm:$0xff]
    %v288 = vld [vmem:[%s1 + $0x6b4] sm:$0xf]
    %v289 = vld [vmem:[%s1 + $0x6b8] sm:$0xff]
    %v290 = vld [vmem:[%s1 + $0x6c0] sm:$0xff]
    %v291 = vld [vmem:[%s1 + $0x6c8] sm:$0xf]
    %v292 = vld [vmem:[%s1 + $0x6cc] sm:$0xff]
    %v293 = vld [vmem:[%s1 + $0x6d4] sm:$0xff]
    %v294 = vld [vmem:[%s1 + $0x6dc] sm:$0xf]
    %v295 = vld [vmem:[%s1 + $0x6e0] sm:$0xff]
    %v296 = vld [vmem:[%s1 + $0x6e8] sm:$0xff]
    %v297 = vld [vmem:[%s1 + $0x6f0] sm:$0xf]
    %v298 = vld [vmem:[%s1 + $0x6f4] sm:$0xff]
    %v299 = vld [vmem:[%s1 + $0x6fc] sm:$0xff]
    %v300 = vld [vmem:[%s1 + $0x704] sm:$0xf]
    %v301 = vld [vmem:[%s1 + $0x708] sm:$0xff]
    %v302 = vld [vmem:[%s1 + $0x710] sm:$0xff]
    %v303 = vld [vmem:[%s1 + $0x718] sm:$0xf]
    %v304 = vld [vmem:[%s1 + $0x71c] sm:$0xff]
    %v305 = vld [vmem:[%s1 + $0x724] sm:$0xff]
    %v306 = vld [vmem:[%s1 + $0x72c] sm:$0xf]
    %v307 = vld [vmem:[%s1 + $0x730] sm:$0xff]
    %v308 = vld [vmem:[%s1 + $0x738] sm:$0xff]
    %v309 = vld [vmem:[%s1 + $0x740] sm:$0xf]
    %v310 = vld [vmem:[%s1 + $0x744] sm:$0xff]
    %v311 = vld [vmem:[%s1 + $0x74c] sm:$0xff]
    %v312 = vld [vmem:[%s1 + $0x754] sm:$0xf]
    %v313 = vld [vmem:[%s1 + $0x758] sm:$0xff]
    %v314 = vld [vmem:[%s1 + $0x760] sm:$0xff]
    %v315 = vld [vmem:[%s1 + $0x768] sm:$0xf]
    %v316 = vld [vmem:[%s1 + $0x76c] sm:$0xff]
    %v317 = vld [vmem:[%s1 + $0x774] sm:$0xff]
    %v318 = vld [vmem:[%s1 + $0x77c] sm:$0xf]
    %v319 = vld [vmem:[%s1 + $0x780] sm:$0xff]
    %v320 = vld [vmem:[%s1 + $0x788] sm:$0xff]
    %v321 = vld [vmem:[%s1 + $0x790] sm:$0xf]
    %v322 = vld [vmem:[%s1 + $0x794] sm:$0xff]
    %v323 = vld [vmem:[%s1 + $0x79c] sm:$0xff]
    %v324 = vld [vmem:[%s1 + $0x7a4] sm:$0xf]
    %v325 = vld [vmem:[%s1 + $0x7a8] sm:$0xff]
    %v326 = vld [vmem:[%s1 + $0x7b0] sm:$0xff]
    %v327 = vld [vmem:[%s1 + $0x7b8] sm:$0xf]
    %v328 = vld [vmem:[%s1 + $0x7bc] sm:$0xff]
    %v329 = vld [vmem:[%s1 + $0x7c4] sm:$0xff]
    %v330 = vld [vmem:[%s1 + $0x7cc] sm:$0xf]
    %v331 = vld [vmem:[%s1 + $0x7d0] sm:$0xff]
    %v332 = vld [vmem:[%s1 + $0x7d8] sm:$0xff]
    %v333 = vld [vmem:[%s1 + $0x7e0] sm:$0xf]
    %v334 = vld [vmem:[%s1 + $0x7e4] sm:$0xff]
    %v335 = vld [vmem:[%s1 + $0x7ec] sm:$0xff]
    %v336 = vld [vmem:[%s1 + $0x7f4] sm:$0xf]
    %v337 = vld [vmem:[%s1 + $0x7f8] sm:$0xff]
    %v338 = vld [vmem:[%s1 + $0x800] sm:$0xff]
    %v339 = vld [vmem:[%s1 + $0x808] sm:$0xf]
    %v340 = vld [vmem:[%s1 + $0x80c] sm:$0xff]
    %v341 = vld [vmem:[%s1 + $0x814] sm:$0xff]
    %v342 = vld [vmem:[%s1 + $0x81c] sm:$0xf]
    %v343 = vld [vmem:[%s1 + $0x820] sm:$0xff]
    %v344 = vld [vmem:[%s1 + $0x828] sm:$0xff]
    %v345 = vld [vmem:[%s1 + $0x830] sm:$0xf]
    %v346 = vld [vmem:[%s1 + $0x834] sm:$0xff]
    %v347 = vld [vmem:[%s1 + $0x83c] sm:$0xff]
    %v348 = vld [vmem:[%s1 + $0x844] sm:$0xf]
    %v349 = vld [vmem:[%s1 + $0x848] sm:$0xff]
    %v350 = vld [vmem:[%s1 + $0x850] sm:$0xff]
    %v351 = vld [vmem:[%s1 + $0x858] sm:$0xf]
    %v352 = vld [vmem:[%s1 + $0x85c] sm:$0xff]
    %v353 = vld [vmem:[%s1 + $0x864] sm:$0xff]
    %v354 = vld [vmem:[%s1 + $0x86c] sm:$0xf]
    %v355 = vld [vmem:[%s1 + $0x870] sm:$0xff]
    %v356 = vld [vmem:[%s1 + $0x878] sm:$0xff]
    %v357 = vld [vmem:[%s1 + $0x880] sm:$0xf]
    %v358 = vld [vmem:[%s1 + $0x884] sm:$0xff]
    %v359 = vld [vmem:[%s1 + $0x88c] sm:$0xff]
    %v360 = vld [vmem:[%s1 + $0x894] sm:$0xf]
    %v361 = vld [vmem:[%s1 + $0x898] sm:$0xff]
    %v362 = vld [vmem:[%s1 + $0x8a0] sm:$0xff]
    %v363 = vld [vmem:[%s1 + $0x8a8] sm:$0xf]
    %v364 = vld [vmem:[%s1 + $0x8ac] sm:$0xff]
    %v365 = vld [vmem:[%s1 + $0x8b4] sm:$0xff]
    %v366 = vld [vmem:[%s1 + $0x8bc] sm:$0xf]
    %v367 = vld [vmem:[%s1 + $0x8c0] sm:$0xff]
    %v368 = vld [vmem:[%s1 + $0x8c8] sm:$0xff]
    %v369 = vld [vmem:[%s1 + $0x8d0] sm:$0xf]
    %v370 = vld [vmem:[%s1 + $0x8d4] sm:$0xff]
    %v371 = vld [vmem:[%s1 + $0x8dc] sm:$0xff]
    %v372 = vld [vmem:[%s1 + $0x8e4] sm:$0xf]
    %v373 = vld [vmem:[%s1 + $0x8e8] sm:$0xff]
    %v374 = vld [vmem:[%s1 + $0x8f0] sm:$0xff]
    %v375 = vld [vmem:[%s1 + $0x8f8] sm:$0xf]
    %v376 = vld [vmem:[%s1 + $0x8fc] sm:$0xff]
    %v377 = vld [vmem:[%s1 + $0x904] sm:$0xff]
    %v378 = vld [vmem:[%s1 + $0x90c] sm:$0xf]
    %v379 = vld [vmem:[%s1 + $0x910] sm:$0xff]
    %v380 = vld [vmem:[%s1 + $0x918] sm:$0xff]
    %v381 = vld [vmem:[%s1 + $0x920] sm:$0xf]
    %v382 = vld [vmem:[%s1 + $0x924] sm:$0xff]
    %v383 = vld [vmem:[%s1 + $0x92c] sm:$0xff]
    %v384 = vld [vmem:[%s1 + $0x934] sm:$0xf]
    %v385 = vld [vmem:[%s1 + $0x938] sm:$0xff]
    %v386 = vld [vmem:[%s1 + $0x940] sm:$0xff]
    %v387 = vld [vmem:[%s1 + $0x948] sm:$0xf]
    %v388 = vld [vmem:[%s1 + $0x94c] sm:$0xff]
    %v389 = vld [vmem:[%s1 + $0x954] sm:$0xff]
    %v390 = vld [vmem:[%s1 + $0x95c] sm:$0xf]
    %v391 = vld [vmem:[%s1 + $0x960] sm:$0xff]
    %v392 = vld [vmem:[%s1 + $0x968] sm:$0xff]
    %v393 = vld [vmem:[%s1 + $0x970] sm:$0xf]
    %v394 = vld [vmem:[%s1 + $0x974] sm:$0xff]
    %v395 = vld [vmem:[%s1 + $0x97c] sm:$0xff]
    %v396 = vld [vmem:[%s1 + $0x984] sm:$0xf]
    %v397 = vld [vmem:[%s1 + $0x988] sm:$0xff]
    %v398 = vld [vmem:[%s1 + $0x990] sm:$0xff]
    %v399 = vld [vmem:[%s1 + $0x998] sm:$0xf]
    %v400 = vld [vmem:[%s1 + $0x99c] sm:$0xff]
    %v401 = vld [vmem:[%s1 + $0x9a4] sm:$0xff]
    %v402 = vld [vmem:[%s1 + $0x9ac] sm:$0xf]
    %v403 = vld [vmem:[%s1 + $0x9b0] sm:$0xff]
    %v404 = vld [vmem:[%s1 + $0x9b8] sm:$0xff]
    %v405 = vld [vmem:[%s1 + $0x9c0] sm:$0xf]
    %v406 = vld [vmem:[%s1 + $0x9c4] sm:$0xff]
    %v407 = vld [vmem:[%s1 + $0x9cc] sm:$0xff]
    %v408 = vld [vmem:[%s1 + $0x9d4] sm:$0xf]
    %v409 = vld [vmem:[%s1 + $0x9d8] sm:$0xff]
    %v410 = vld [vmem:[%s1 + $0x9e0] sm:$0xff]
    %v411 = vld [vmem:[%s1 + $0x9e8] sm:$0xf]
    %v412 = vld [vmem:[%s1 + $0x9ec] sm:$0xff]
    %v413 = vld [vmem:[%s1 + $0x9f4] sm:$0xff]
    %v414 = vld [vmem:[%s1 + $0x9fc] sm:$0xf]
    %v415 = vld [vmem:[%s1 + $0xa00] sm:$0xff]
    %v416 = vld [vmem:[%s1 + $0xa08] sm:$0xff]
    %v417 = vld [vmem:[%s1 + $0xa10] sm:$0xf]
    %v418 = vld [vmem:[%s1 + $0xa14] sm:$0xff]
    %v419 = vld [vmem:[%s1 + $0xa1c] sm:$0xff]
    %v420 = vld [vmem:[%s1 + $0xa24] sm:$0xf]
    %v421 = vld [vmem:[%s1 + $0xa28] sm:$0xff]
    %v422 = vld [vmem:[%s1 + $0xa30] sm:$0xff]
    %v423 = vld [vmem:[%s1 + $0xa38] sm:$0xf]
    %v424 = vld [vmem:[%s1 + $0xa3c] sm:$0xff]
    %v425 = vld [vmem:[%s1 + $0xa44] sm:$0xff]
    %v426 = vld [vmem:[%s1 + $0xa4c] sm:$0xf]
    %v427 = vld [vmem:[%s1 + $0xa50] sm:$0xff]
    %v428 = vld [vmem:[%s1 + $0xa58] sm:$0xff]
    %v429 = vld [vmem:[%s1 + $0xa60] sm:$0xf]
    %v430 = vld [vmem:[%s1 + $0xa64] sm:$0xff]
    %v431 = vld [vmem:[%s1 + $0xa6c] sm:$0xff]
    %v432 = vld [vmem:[%s1 + $0xa74] sm:$0xf]
    %v433 = vld [vmem:[%s1 + $0xa78] sm:$0xff]
    %v434 = vld [vmem:[%s1 + $0xa80] sm:$0xff]
    %v435 = vld [vmem:[%s1 + $0xa88] sm:$0xf]
    %v436 = vld [vmem:[%s1 + $0xa8c] sm:$0xff]
    %v437 = vld [vmem:[%s1 + $0xa94] sm:$0xff]
    %v438 = vld [vmem:[%s1 + $0xa9c] sm:$0xf]
    %v439 = vld [vmem:[%s1 + $0xaa0] sm:$0xff]
    %v440 = vld [vmem:[%s1 + $0xaa8] sm:$0xff]
    %v441 = vld [vmem:[%s1 + $0xab0] sm:$0xf]
    %v442 = vld [vmem:[%s1 + $0xab4] sm:$0xff]
    %v443 = vld [vmem:[%s1 + $0xabc] sm:$0xff]
    %v444 = vld [vmem:[%s1 + $0xac4] sm:$0xf]
    %v445 = vld [vmem:[%s1 + $0xac8] sm:$0xff]
    %v446 = vld [vmem:[%s1 + $0xad0] sm:$0xff]
    %v447 = vld [vmem:[%s1 + $0xad8] sm:$0xf]
    %v448 = vld [vmem:[%s1 + $0xadc] sm:$0xff]
    %v449 = vld [vmem:[%s1 + $0xae4] sm:$0xff]
    %v450 = vld [vmem:[%s1 + $0xaec] sm:$0xf]
    %v451 = vld [vmem:[%s1 + $0xaf0] sm:$0xff]
    %v452 = vld [vmem:[%s1 + $0xaf8] sm:$0xff]
    %v453 = vld [vmem:[%s1 + $0xb00] sm:$0xf]
    %v454 = vld [vmem:[%s1 + $0xb04] sm:$0xff]
    %v455 = vld [vmem:[%s1 + $0xb0c] sm:$0xff]
    %v456 = vld [vmem:[%s1 + $0xb14] sm:$0xf]
    %v457 = vld [vmem:[%s1 + $0xb18] sm:$0xff]
    %v458 = vld [vmem:[%s1 + $0xb20] sm:$0xff]
    %v459 = vld [vmem:[%s1 + $0xb28] sm:$0xf]
    %v460 = vld [vmem:[%s1 + $0xb2c] sm:$0xff]
    %v461 = vld [vmem:[%s1 + $0xb34] sm:$0xff]
    %v462 = vld [vmem:[%s1 + $0xb3c] sm:$0xf]
    %v463 = vld [vmem:[%s1 + $0xb40] sm:$0xff]
    %v464 = vld [vmem:[%s1 + $0xb48] sm:$0xff]
    %v465 = vld [vmem:[%s1 + $0xb50] sm:$0xf]
    %v466 = vld [vmem:[%s1 + $0xb54] sm:$0xff]
    %v467 = vld [vmem:[%s1 + $0xb5c] sm:$0xff]
    %v468 = vld [vmem:[%s1 + $0xb64] sm:$0xf]
    %v469 = vld [vmem:[%s1 + $0xb68] sm:$0xff]
    %v470 = vld [vmem:[%s1 + $0xb70] sm:$0xff]
    %v471 = vld [vmem:[%s1 + $0xb78] sm:$0xf]
    %v472 = vld [vmem:[%s1 + $0xb7c] sm:$0xff]
    %v473 = vld [vmem:[%s1 + $0xb84] sm:$0xff]
    %v474 = vld [vmem:[%s1 + $0xb8c] sm:$0xf]
    %v475 = vld [vmem:[%s1 + $0xb90] sm:$0xff]
    %v476 = vld [vmem:[%s1 + $0xb98] sm:$0xff]
    %v477 = vld [vmem:[%s1 + $0xba0] sm:$0xf]
    %v478 = vld [vmem:[%s1 + $0xba4] sm:$0xff]
    %v479 = vld [vmem:[%s1 + $0xbac] sm:$0xff]
    %v480 = vld [vmem:[%s1 + $0xbb4] sm:$0xf]
    %v481 = vld [vmem:[%s1 + $0xbb8] sm:$0xff]
    %v482 = vld [vmem:[%s1 + $0xbc0] sm:$0xff]
    %v483 = vld [vmem:[%s1 + $0xbc8] sm:$0xf]
    %v484 = vld [vmem:[%s1 + $0xbcc] sm:$0xff]
    %v485 = vld [vmem:[%s1 + $0xbd4] sm:$0xff]
    %v486 = vld [vmem:[%s1 + $0xbdc] sm:$0xf]
    %v487 = vld [vmem:[%s1 + $0xbe0] sm:$0xff]
    %v488 = vld [vmem:[%s1 + $0xbe8] sm:$0xff]
    %v489 = vld [vmem:[%s1 + $0xbf0] sm:$0xf]
    %v490 = vld [vmem:[%s1 + $0xbf4] sm:$0xff]
    %v491 = vld [vmem:[%s1 + $0xbfc] sm:$0xff]
    %v492 = vld [vmem:[%s1 + $0xc04] sm:$0xf]
    %v493 = vld [vmem:[%s1 + $0xc08] sm:$0xff]
    %v494 = vld [vmem:[%s1 + $0xc10] sm:$0xff]
    %v495 = vld [vmem:[%s1 + $0xc18] sm:$0xf]
    %v496 = vld [vmem:[%s1 + $0xc1c] sm:$0xff]
    %v497 = vld [vmem:[%s1 + $0xc24] sm:$0xff]
    %v498 = vld [vmem:[%s1 + $0xc2c] sm:$0xf]
    %v499 = vld [vmem:[%s1 + $0xc30] sm:$0xff]
    %v500 = vld [vmem:[%s1 + $0xc38] sm:$0xff]
    %v501 = vld [vmem:[%s1 + $0xc40] sm:$0xf]
    %v502 = vld [vmem:[%s1 + $0xc44] sm:$0xff]
    %v503 = vld [vmem:[%s1 + $0xc4c] sm:$0xff]
    %v504 = vld [vmem:[%s1 + $0xc54] sm:$0xf]
    %v505 = vld [vmem:[%s1 + $0xc58] sm:$0xff]
    %v506 = vld [vmem:[%s1 + $0xc60] sm:$0xff]
    %v507 = vld [vmem:[%s1 + $0xc68] sm:$0xf]
    %v508 = vld [vmem:[%s1 + $0xc6c] sm:$0xff]
    %v509 = vld [vmem:[%s1 + $0xc74] sm:$0xff]
    %v510 = vld [vmem:[%s1 + $0xc7c] sm:$0xf]
    %v511 = vld [vmem:[%s1 + $0xc80] sm:$0xff]
    %v512 = vld [vmem:[%s1 + $0xc88] sm:$0xff]
    %v513 = vld [vmem:[%s1 + $0xc90] sm:$0xf]
    %v514 = vld [vmem:[%s1 + $0xc94] sm:$0xff]
    %v515 = vld [vmem:[%s1 + $0xc9c] sm:$0xff]
    %v516 = vld [vmem:[%s1 + $0xca4] sm:$0xf]
    %v517 = vld [vmem:[%s1 + $0xca8] sm:$0xff]
    %v518 = vld [vmem:[%s1 + $0xcb0] sm:$0xff]
    %v519 = vld [vmem:[%s1 + $0xcb8] sm:$0xf]
    %v520 = vld [vmem:[%s1 + $0xcbc] sm:$0xff]
    %v521 = vld [vmem:[%s1 + $0xcc4] sm:$0xff]
    %v522 = vld [vmem:[%s1 + $0xccc] sm:$0xf]
    %v523 = vld [vmem:[%s1 + $0xcd0] sm:$0xff]
    %v524 = vld [vmem:[%s1 + $0xcd8] sm:$0xff]
    %v525 = vld [vmem:[%s1 + $0xce0] sm:$0xf]
    %v526 = vld [vmem:[%s1 + $0xce4] sm:$0xff]
    %v527 = vld [vmem:[%s1 + $0xcec] sm:$0xff]
    %v528 = vld [vmem:[%s1 + $0xcf4] sm:$0xf]
    %v529 = vld [vmem:[%s1 + $0xcf8] sm:$0xff]
    %v530 = vld [vmem:[%s1 + $0xd00] sm:$0xff]
    %v531 = vld [vmem:[%s1 + $0xd08] sm:$0xf]
    %v532 = vld [vmem:[%s1 + $0xd0c] sm:$0xff]
    %v533 = vld [vmem:[%s1 + $0xd14] sm:$0xff]
    %v534 = vld [vmem:[%s1 + $0xd1c] sm:$0xf]
    %v535 = vld [vmem:[%s1 + $0xd20] sm:$0xff]
    %v536 = vld [vmem:[%s1 + $0xd28] sm:$0xff]
    %v537 = vld [vmem:[%s1 + $0xd30] sm:$0xf]
    %v538 = vld [vmem:[%s1 + $0xd34] sm:$0xff]
    %v539 = vld [vmem:[%s1 + $0xd3c] sm:$0xff]
    %v540 = vld [vmem:[%s1 + $0xd44] sm:$0xf]
    %v541 = vld [vmem:[%s1 + $0xd48] sm:$0xff]
    %v542 = vld [vmem:[%s1 + $0xd50] sm:$0xff]
    %v543 = vld [vmem:[%s1 + $0xd58] sm:$0xf]
    %v544 = vld [vmem:[%s1 + $0xd5c] sm:$0xff]
    %v545 = vld [vmem:[%s1 + $0xd64] sm:$0xff]
    %v546 = vld [vmem:[%s1 + $0xd6c] sm:$0xf]
    %v547 = vld [vmem:[%s1 + $0xd70] sm:$0xff]
    %v548 = vld [vmem:[%s1 + $0xd78] sm:$0xff]
    %v549 = vld [vmem:[%s1 + $0xd80] sm:$0xf]
    %v550 = vld [vmem:[%s1 + $0xd84] sm:$0xff]
    %v551 = vld [vmem:[%s1 + $0xd8c] sm:$0xff]
    %v552 = vld [vmem:[%s1 + $0xd94] sm:$0xf]
    %v553 = vld [vmem:[%s1 + $0xd98] sm:$0xff]
    %v554 = vld [vmem:[%s1 + $0xda0] sm:$0xff]
    %v555 = vld [vmem:[%s1 + $0xda8] sm:$0xf]
    %v556 = vld [vmem:[%s1 + $0xdac] sm:$0xff]
    %v557 = vld [vmem:[%s1 + $0xdb4] sm:$0xff]
    %v558 = vld [vmem:[%s1 + $0xdbc] sm:$0xf]
    %v559 = vld [vmem:[%s1 + $0xdc0] sm:$0xff]
    %v560 = vld [vmem:[%s1 + $0xdc8] sm:$0xff]
    %v561 = vld [vmem:[%s1 + $0xdd0] sm:$0xf]
    %v562 = vld [vmem:[%s1 + $0xdd4] sm:$0xff]
    %v563 = vld [vmem:[%s1 + $0xddc] sm:$0xff]
    %v564 = vld [vmem:[%s1 + $0xde4] sm:$0xf]
    %v565 = vld [vmem:[%s1 + $0xde8] sm:$0xff]
    %v566 = vld [vmem:[%s1 + $0xdf0] sm:$0xff]
    %v567 = vld [vmem:[%s1 + $0xdf8] sm:$0xf]
    %v568 = vld [vmem:[%s1 + $0xdfc] sm:$0xff]
    %v569 = vld [vmem:[%s1 + $0xe04] sm:$0xff]
    %v570 = vld [vmem:[%s1 + $0xe0c] sm:$0xf]
    %v571 = vld [vmem:[%s1 + $0xe10] sm:$0xff]
    %v572 = vld [vmem:[%s1 + $0xe18] sm:$0xff]
    %v573 = vld [vmem:[%s1 + $0xe20] sm:$0xf]
    %v574 = vld [vmem:[%s1 + $0xe24] sm:$0xff]
    %v575 = vld [vmem:[%s1 + $0xe2c] sm:$0xff]
    %v576 = vld [vmem:[%s1 + $0xe34] sm:$0xf]
    %v577 = vld [vmem:[%s1 + $0xe38] sm:$0xff]
    %v578 = vld [vmem:[%s1 + $0xe40] sm:$0xff]
    %v579 = vld [vmem:[%s1 + $0xe48] sm:$0xf]
    %v580 = vld [vmem:[%s1 + $0xe4c] sm:$0xff]
    %v581 = vld [vmem:[%s1 + $0xe54] sm:$0xff]
    %v582 = vld [vmem:[%s1 + $0xe5c] sm:$0xf]
    %v583 = vld [vmem:[%s1 + $0xe60] sm:$0xff]
    %v584 = vld [vmem:[%s1 + $0xe68] sm:$0xff]
    %v585 = vld [vmem:[%s1 + $0xe70] sm:$0xf]
    %v586 = vld [vmem:[%s1 + $0xe74] sm:$0xff]
    %v587 = vld [vmem:[%s1 + $0xe7c] sm:$0xff]
    %v588 = vld [vmem:[%s1 + $0xe84] sm:$0xf]
    %v589 = vld [vmem:[%s1 + $0xe88] sm:$0xff]
    %v590 = vld [vmem:[%s1 + $0xe90] sm:$0xff]
    %v591 = vld [vmem:[%s1 + $0xe98] sm:$0xf]
    %v592 = vld [vmem:[%s1 + $0xe9c] sm:$0xff]
    %v593 = vld [vmem:[%s1 + $0xea4] sm:$0xff]
    %v594 = vld [vmem:[%s1 + $0xeac] sm:$0xf]
    %v595 = vld [vmem:[%s1 + $0xeb0] sm:$0xff]
    %v596 = vld [vmem:[%s1 + $0xeb8] sm:$0xff]
    %v597 = vld [vmem:[%s1 + $0xec0] sm:$0xf]
    %v598 = vld [vmem:[%s1 + $0xec4] sm:$0xff]
    %v599 = vld [vmem:[%s1 + $0xecc] sm:$0xff]
    %v600 = vld [vmem:[%s1 + $0xed4] sm:$0xf]
    %v601 = vld [vmem:[%s1 + $0xed8] sm:$0xff]
    %v602 = vld [vmem:[%s1 + $0xee0] sm:$0xff]
    %v603 = vld [vmem:[%s1 + $0xee8] sm:$0xf]
    %v604 = vld [vmem:[%s1 + $0xeec] sm:$0xff]
    %v605 = vld [vmem:[%s1 + $0xef4] sm:$0xff]
    %v606 = vld [vmem:[%s1 + $0xefc] sm:$0xf]
    %v607 = vld [vmem:[%s1 + $0xf00] sm:$0xff]
    %v608 = vld [vmem:[%s1 + $0xf08] sm:$0xff]
    %v609 = vld [vmem:[%s1 + $0xf10] sm:$0xf]
    %v610 = vld [vmem:[%s1 + $0xf14] sm:$0xff]
    %v611 = vld [vmem:[%s1 + $0xf1c] sm:$0xff]
    %v612 = vld [vmem:[%s1 + $0xf24] sm:$0xf]
    %v613 = vld [vmem:[%s1 + $0xf28] sm:$0xff]
    %v614 = vld [vmem:[%s1 + $0xf30] sm:$0xff]
    %v615 = vld [vmem:[%s1 + $0xf38] sm:$0xf]
    %v616 = vld [vmem:[%s1 + $0xf3c] sm:$0xff]
    %v617 = vld [vmem:[%s1 + $0xf44] sm:$0xff]
    %v618 = vld [vmem:[%s1 + $0xf4c] sm:$0xf]
    %v619 = vld [vmem:[%s1 + $0xf50] sm:$0xff]
    %v620 = vld [vmem:[%s1 + $0xf58] sm:$0xff]
    %v621 = vld [vmem:[%s1 + $0xf60] sm:$0xf]
    %v622 = vld [vmem:[%s1 + $0xf64] sm:$0xff]
    %v623 = vld [vmem:[%s1 + $0xf6c] sm:$0xff]
    %v624 = vld [vmem:[%s1 + $0xf74] sm:$0xf]
    %v625 = vld [vmem:[%s1 + $0xf78] sm:$0xff]
    %v626 = vld [vmem:[%s1 + $0xf80] sm:$0xff]
    %v627 = vld [vmem:[%s1 + $0xf88] sm:$0xf]
    %v628 = vld [vmem:[%s1 + $0xf8c] sm:$0xff]
    %v629 = vld [vmem:[%s1 + $0xf94] sm:$0xff]
    %v630 = vld [vmem:[%s1 + $0xf9c] sm:$0xf]
    %v631 = vld [vmem:[%s1 + $0xfa0] sm:$0xff]
    %v632 = vld [vmem:[%s1 + $0xfa8] sm:$0xff]
    %v633 = vld [vmem:[%s1 + $0xfb0] sm:$0xf]
    %v634 = vld [vmem:[%s1 + $0xfb4] sm:$0xff]
    %v635 = vld [vmem:[%s1 + $0xfbc] sm:$0xff]
    %v636 = vld [vmem:[%s1 + $0xfc4] sm:$0xf]
    %v637 = vld [vmem:[%s1 + $0xfc8] sm:$0xff]
    %v638 = vld [vmem:[%s1 + $0xfd0] sm:$0xff]
    %v639 = vld [vmem:[%s1 + $0xfd8] sm:$0xf]
    %v640 = vld [vmem:[%s1 + $0xfdc] sm:$0xff]
    %v641 = vld [vmem:[%s1 + $0xfe4] sm:$0xff]
    %v642 = vld [vmem:[%s1 + $0xfec] sm:$0xf]
    %v643 = vld [vmem:[%s1 + $0xff0] sm:$0xff]
    %v644 = vld [vmem:[%s1 + $0xff8] sm:$0xff]
    %v645 = vld [vmem:[%s1 + $0x1000] sm:$0xf]
    %v646 = vld [vmem:[%s1 + $0x1004] sm:$0xff]
    %v647 = vld [vmem:[%s1 + $0x100c] sm:$0xff]
    %v648 = vld [vmem:[%s1 + $0x1014] sm:$0xf]
    %v649 = vld [vmem:[%s1 + $0x1018] sm:$0xff]
    %v650 = vld [vmem:[%s1 + $0x1020] sm:$0xff]
    %v651 = vld [vmem:[%s1 + $0x1028] sm:$0xf]
    %v652 = vld [vmem:[%s1 + $0x102c] sm:$0xff]
    %v653 = vld [vmem:[%s1 + $0x1034] sm:$0xff]
    %v654 = vld [vmem:[%s1 + $0x103c] sm:$0xf]
    %v655 = vld [vmem:[%s1 + $0x1040] sm:$0xff]
    %v656 = vld [vmem:[%s1 + $0x1048] sm:$0xff]
    %v657 = vld [vmem:[%s1 + $0x1050] sm:$0xf]
    %v658 = vld [vmem:[%s1 + $0x1054] sm:$0xff]
    %v659 = vld [vmem:[%s1 + $0x105c] sm:$0xff]
    %v660 = vld [vmem:[%s1 + $0x1064] sm:$0xf]
    %v661 = vld [vmem:[%s1 + $0x1068] sm:$0xff]
    %v662 = vld [vmem:[%s1 + $0x1070] sm:$0xff]
    %v663 = vld [vmem:[%s1 + $0x1078] sm:$0xf]
    %v664 = vld [vmem:[%s1 + $0x107c] sm:$0xff]
    %v665 = vld [vmem:[%s1 + $0x1084] sm:$0xff]
    %v666 = vld [vmem:[%s1 + $0x108c] sm:$0xf]
    %v667 = vld [vmem:[%s1 + $0x1090] sm:$0xff]
    %v668 = vld [vmem:[%s1 + $0x1098] sm:$0xff]
    %v669 = vld [vmem:[%s1 + $0x10a0] sm:$0xf]
    %v670 = vld [vmem:[%s1 + $0x10a4] sm:$0xff]
    %v671 = vld [vmem:[%s1 + $0x10ac] sm:$0xff]
    %v672 = vld [vmem:[%s1 + $0x10b4] sm:$0xf]
    %v673 = vld [vmem:[%s1 + $0x10b8] sm:$0xff]
    %v674 = vld [vmem:[%s1 + $0x10c0] sm:$0xff]
    %v675 = vld [vmem:[%s1 + $0x10c8] sm:$0xf]
    %v676 = vld [vmem:[%s1 + $0x10cc] sm:$0xff]
    %v677 = vld [vmem:[%s1 + $0x10d4] sm:$0xff]
    %v678 = vld [vmem:[%s1 + $0x10dc] sm:$0xf]
    %v679 = vld [vmem:[%s1 + $0x10e0] sm:$0xff]
    %v680 = vld [vmem:[%s1 + $0x10e8] sm:$0xff]
    %v681 = vld [vmem:[%s1 + $0x10f0] sm:$0xf]
    %v682 = vld [vmem:[%s1 + $0x10f4] sm:$0xff]
    %v683 = vld [vmem:[%s1 + $0x10fc] sm:$0xff]
    %v684 = vld [vmem:[%s1 + $0x1104] sm:$0xf]
    %v685 = vld [vmem:[%s1 + $0x1108] sm:$0xff]
    %v686 = vld [vmem:[%s1 + $0x1110] sm:$0xff]
    %v687 = vld [vmem:[%s1 + $0x1118] sm:$0xf]
    %v688 = vld [vmem:[%s1 + $0x111c] sm:$0xff]
    %v689 = vld [vmem:[%s1 + $0x1124] sm:$0xff]
    %v690 = vld [vmem:[%s1 + $0x112c] sm:$0xf]
    %v691 = vld [vmem:[%s1 + $0x1130] sm:$0xff]
    %v692 = vld [vmem:[%s1 + $0x1138] sm:$0xff]
    %v693 = vld [vmem:[%s1 + $0x1140] sm:$0xf]
    %v694 = vld [vmem:[%s1 + $0x1144] sm:$0xff]
    %v695 = vld [vmem:[%s1 + $0x114c] sm:$0xff]
    %v696 = vld [vmem:[%s1 + $0x1154] sm:$0xf]
    %v697 = vld [vmem:[%s1 + $0x1158] sm:$0xff]
    %v698 = vld [vmem:[%s1 + $0x1160] sm:$0xff]
    %v699 = vld [vmem:[%s1 + $0x1168] sm:$0xf]
    %v700 = vld [vmem:[%s1 + $0x116c] sm:$0xff]
    %v701 = vld [vmem:[%s1 + $0x1174] sm:$0xff]
    %v702 = vld [vmem:[%s1 + $0x117c] sm:$0xf]
    %v703 = vld [vmem:[%s1 + $0x1180] sm:$0xff]
    %v704 = vld [vmem:[%s1 + $0x1188] sm:$0xff]
    %v705 = vld [vmem:[%s1 + $0x1190] sm:$0xf]
    %v706 = vld [vmem:[%s1 + $0x1194] sm:$0xff]
    %v707 = vld [vmem:[%s1 + $0x119c] sm:$0xff]
    %v708 = vld [vmem:[%s1 + $0x11a4] sm:$0xf]
    %v709 = vld [vmem:[%s1 + $0x11a8] sm:$0xff]
    %v710 = vld [vmem:[%s1 + $0x11b0] sm:$0xff]
    %v711 = vld [vmem:[%s1 + $0x11b8] sm:$0xf]
    %v712 = vld [vmem:[%s1 + $0x11bc] sm:$0xff]
    %v713 = vld [vmem:[%s1 + $0x11c4] sm:$0xff]
    %v714 = vld [vmem:[%s1 + $0x11cc] sm:$0xf]
    %v715 = vld [vmem:[%s1 + $0x11d0] sm:$0xff]
    %v716 = vld [vmem:[%s1 + $0x11d8] sm:$0xff]
    %v717 = vld [vmem:[%s1 + $0x11e0] sm:$0xf]
    %v718 = vld [vmem:[%s1 + $0x11e4] sm:$0xff]
    %v719 = vld [vmem:[%s1 + $0x11ec] sm:$0xff]
    %v720 = vld [vmem:[%s1 + $0x11f4] sm:$0xf]
    %v721 = vld [vmem:[%s1 + $0x11f8] sm:$0xff]
    %v722 = vld [vmem:[%s1 + $0x1200] sm:$0xff]
    %v723 = vld [vmem:[%s1 + $0x1208] sm:$0xf]
    %v724 = vld [vmem:[%s1 + $0x120c] sm:$0xff]
    %v725 = vld [vmem:[%s1 + $0x1214] sm:$0xff]
    %v726 = vld [vmem:[%s1 + $0x121c] sm:$0xf]
    %v727 = vld [vmem:[%s1 + $0x1220] sm:$0xff]
    %v728 = vld [vmem:[%s1 + $0x1228] sm:$0xff]
    %v729 = vld [vmem:[%s1 + $0x1230] sm:$0xf]
    %v730 = vld [vmem:[%s1 + $0x1234] sm:$0xff]
    %v731 = vld [vmem:[%s1 + $0x123c] sm:$0xff]
    %v732 = vld [vmem:[%s1 + $0x1244] sm:$0xf]
    %v733 = vld [vmem:[%s1 + $0x1248] sm:$0xff]
    %v734 = vld [vmem:[%s1 + $0x1250] sm:$0xff]
    %v735 = vld [vmem:[%s1 + $0x1258] sm:$0xf]
    %v736 = vld [vmem:[%s1 + $0x125c] sm:$0xff]
    %v737 = vld [vmem:[%s1 + $0x1264] sm:$0xff]
    %v738 = vld [vmem:[%s1 + $0x126c] sm:$0xf]
    %v739 = vld [vmem:[%s1 + $0x1270] sm:$0xff]
    %v740 = vld [vmem:[%s1 + $0x1278] sm:$0xff]
    %v741 = vld [vmem:[%s1 + $0x1280] sm:$0xf]
    %v742 = vld [vmem:[%s1 + $0x1284] sm:$0xff]
    %v743 = vld [vmem:[%s1 + $0x128c] sm:$0xff]
    %v744 = vld [vmem:[%s1 + $0x1294] sm:$0xf]
    %v745 = vld [vmem:[%s1 + $0x1298] sm:$0xff]
    %v746 = vld [vmem:[%s1 + $0x12a0] sm:$0xff]
    %v747 = vld [vmem:[%s1 + $0x12a8] sm:$0xf]
    %v748 = vld [vmem:[%s1 + $0x12ac] sm:$0xff]
    %v749 = vld [vmem:[%s1 + $0x12b4] sm:$0xff]
    %v750 = vld [vmem:[%s1 + $0x12bc] sm:$0xf]
    %v751 = vld [vmem:[%s1 + $0x12c0] sm:$0xff]
    %v752 = vld [vmem:[%s1 + $0x12c8] sm:$0xff]
    %v753 = vld [vmem:[%s1 + $0x12d0] sm:$0xf]
    %v754 = vld [vmem:[%s1 + $0x12d4] sm:$0xff]
    %v755 = vld [vmem:[%s1 + $0x12dc] sm:$0xff]
    %v756 = vld [vmem:[%s1 + $0x12e4] sm:$0xf]
    %v757 = vld [vmem:[%s1 + $0x12e8] sm:$0xff]
    %v758 = vld [vmem:[%s1 + $0x12f0] sm:$0xff]
    %v759 = vld [vmem:[%s1 + $0x12f8] sm:$0xf]
    %v760 = vld [vmem:[%s1 + $0x12fc] sm:$0xff]
    %v761 = vld [vmem:[%s1 + $0x1304] sm:$0xff]
    %v762 = vld [vmem:[%s1 + $0x130c] sm:$0xf]
    %v763 = vld [vmem:[%s1 + $0x1310] sm:$0xff]
    %v764 = vld [vmem:[%s1 + $0x1318] sm:$0xff]
    %v765 = vld [vmem:[%s1 + $0x1320] sm:$0xf]
    %v766 = vld [vmem:[%s1 + $0x1324] sm:$0xff]
    %v767 = vld [vmem:[%s1 + $0x132c] sm:$0xff]
    %v768 = vld [vmem:[%s1 + $0x1334] sm:$0xf]
    %v769 = vld [vmem:[%s1 + $0x1338] sm:$0xff]
    %v770 = vld [vmem:[%s1 + $0x1340] sm:$0xff]
    %v771 = vld [vmem:[%s1 + $0x1348] sm:$0xf]
    %v772 = vld [vmem:[%s1 + $0x134c] sm:$0xff]
    %v773 = vld [vmem:[%s1 + $0x1354] sm:$0xff]
    %v774 = vld [vmem:[%s1 + $0x135c] sm:$0xf]
    %v775 = vld [vmem:[%s1 + $0x1360] sm:$0xff]
    %v776 = vld [vmem:[%s1 + $0x1368] sm:$0xff]
    %v777 = vld [vmem:[%s1 + $0x1370] sm:$0xf]
    %v778 = vld [vmem:[%s1 + $0x1374] sm:$0xff]
    %v779 = vld [vmem:[%s1 + $0x137c] sm:$0xff]
    %v780 = vld [vmem:[%s1 + $0x1384] sm:$0xf]
    %v781 = vld [vmem:[%s1 + $0x1388] sm:$0xff]
    %v782 = vld [vmem:[%s1 + $0x1390] sm:$0xff]
    %v783 = vld [vmem:[%s1 + $0x1398] sm:$0xf]
    %v784 = vld [vmem:[%s1 + $0x139c] sm:$0xff]
    %v785 = vld [vmem:[%s1 + $0x13a4] sm:$0xff]
    %v786 = vld [vmem:[%s1 + $0x13ac] sm:$0xf]
    %v787 = vld [vmem:[%s1 + $0x13b0] sm:$0xff]
    %v788 = vld [vmem:[%s1 + $0x13b8] sm:$0xff]
    %v789 = vld [vmem:[%s1 + $0x13c0] sm:$0xf]
    %v790 = vld [vmem:[%s1 + $0x13c4] sm:$0xff]
    %v791 = vld [vmem:[%s1 + $0x13cc] sm:$0xff]
    %v792 = vld [vmem:[%s1 + $0x13d4] sm:$0xf]
    %v793 = vld [vmem:[%s1 + $0x13d8] sm:$0xff]
    %v794 = vld [vmem:[%s1 + $0x13e0] sm:$0xff]
    %v795 = vld [vmem:[%s1 + $0x13e8] sm:$0xf]
    %v796 = vld [vmem:[%s1 + $0x13ec] sm:$0xff]
    %v797 = vld [vmem:[%s1 + $0x13f4] sm:$0xff]
    %v798 = vld [vmem:[%s1 + $0x13fc] sm:$0xf]
    %v799 = vld [vmem:[%s1 + $0x1400] sm:$0xff]
    %v800 = vld [vmem:[%s1 + $0x1408] sm:$0xff]
    %v801 = vld [vmem:[%s1 + $0x1410] sm:$0xf]
    %v802 = vld [vmem:[%s1 + $0x1414] sm:$0xff]
    %v803 = vld [vmem:[%s1 + $0x141c] sm:$0xff]
    %v804 = vld [vmem:[%s1 + $0x1424] sm:$0xf]
    %v805 = vld [vmem:[%s1 + $0x1428] sm:$0xff]
    %v806 = vld [vmem:[%s1 + $0x1430] sm:$0xff]
    %v807 = vld [vmem:[%s1 + $0x1438] sm:$0xf]
    %v808 = vld [vmem:[%s1 + $0x143c] sm:$0xff]
    %v809 = vld [vmem:[%s1 + $0x1444] sm:$0xff]
    %v810 = vld [vmem:[%s1 + $0x144c] sm:$0xf]
    %v811 = vld [vmem:[%s1 + $0x1450] sm:$0xff]
    %v812 = vld [vmem:[%s1 + $0x1458] sm:$0xff]
    %v813 = vld [vmem:[%s1 + $0x1460] sm:$0xf]
    %v814 = vld [vmem:[%s1 + $0x1464] sm:$0xff]
    %v815 = vld [vmem:[%s1 + $0x146c] sm:$0xff]
    %v816 = vld [vmem:[%s1 + $0x1474] sm:$0xf]
    %v817 = vld [vmem:[%s1 + $0x1478] sm:$0xff]
    %v818 = vld [vmem:[%s1 + $0x1480] sm:$0xff]
    %v819 = vld [vmem:[%s1 + $0x1488] sm:$0xf]
    %v820 = vld [vmem:[%s1 + $0x148c] sm:$0xff]
    %v821 = vld [vmem:[%s1 + $0x1494] sm:$0xff]
    %v822 = vld [vmem:[%s1 + $0x149c] sm:$0xf]
    %v823 = vld [vmem:[%s1 + $0x14a0] sm:$0xff]
    %v824 = vld [vmem:[%s1 + $0x14a8] sm:$0xff]
    %v825 = vld [vmem:[%s1 + $0x14b0] sm:$0xf]
    %v826 = vld [vmem:[%s1 + $0x14b4] sm:$0xff]
    %v827 = vld [vmem:[%s1 + $0x14bc] sm:$0xff]
    %v828 = vld [vmem:[%s1 + $0x14c4] sm:$0xf]
    %v829 = vld [vmem:[%s1 + $0x14c8] sm:$0xff]
    %v830 = vld [vmem:[%s1 + $0x14d0] sm:$0xff]
    %v831 = vld [vmem:[%s1 + $0x14d8] sm:$0xf]
    %v832 = vld [vmem:[%s1 + $0x14dc] sm:$0xff]
    %v833 = vld [vmem:[%s1 + $0x14e4] sm:$0xff]
    %v834 = vld [vmem:[%s1 + $0x14ec] sm:$0xf]
    %v835 = vld [vmem:[%s1 + $0x14f0] sm:$0xff]
    %v836 = vld [vmem:[%s1 + $0x14f8] sm:$0xff]
    %v837 = vld [vmem:[%s1 + $0x1500] sm:$0xf]
    %v838 = vld [vmem:[%s1 + $0x1504] sm:$0xff]
    %v839 = vld [vmem:[%s1 + $0x150c] sm:$0xff]
    %v840 = vld [vmem:[%s1 + $0x1514] sm:$0xf]
    %v841 = vld [vmem:[%s1 + $0x1518] sm:$0xff]
    %v842 = vld [vmem:[%s1 + $0x1520] sm:$0xff]
    %v843 = vld [vmem:[%s1 + $0x1528] sm:$0xf]
    %v844 = vld [vmem:[%s1 + $0x152c] sm:$0xff]
    %v845 = vld [vmem:[%s1 + $0x1534] sm:$0xff]
    %v846 = vld [vmem:[%s1 + $0x153c] sm:$0xf]
    %v847 = vld [vmem:[%s1 + $0x1540] sm:$0xff]
    %v848 = vld [vmem:[%s1 + $0x1548] sm:$0xff]
    %v849 = vld [vmem:[%s1 + $0x1550] sm:$0xf]
    %v850 = vld [vmem:[%s1 + $0x1554] sm:$0xff]
    %v851 = vld [vmem:[%s1 + $0x155c] sm:$0xff]
    %v852 = vld [vmem:[%s1 + $0x1564] sm:$0xf]
    %v853 = vld [vmem:[%s1 + $0x1568] sm:$0xff]
    %v854 = vld [vmem:[%s1 + $0x1570] sm:$0xff]
    %v855 = vld [vmem:[%s1 + $0x1578] sm:$0xf]
    %v856 = vld [vmem:[%s1 + $0x157c] sm:$0xff]
    %v857 = vld [vmem:[%s1 + $0x1584] sm:$0xff]
    %v858 = vld [vmem:[%s1 + $0x158c] sm:$0xf]
    %v859 = vld [vmem:[%s1 + $0x1590] sm:$0xff]
    %v860 = vld [vmem:[%s1 + $0x1598] sm:$0xff]
    %v861 = vld [vmem:[%s1 + $0x15a0] sm:$0xf]
    %v862 = vld [vmem:[%s1 + $0x15a4] sm:$0xff]
    %v863 = vld [vmem:[%s1 + $0x15ac] sm:$0xff]
    %v864 = vld [vmem:[%s1 + $0x15b4] sm:$0xf]
    %v865 = vld [vmem:[%s1 + $0x15b8] sm:$0xff]
    %v866 = vld [vmem:[%s1 + $0x15c0] sm:$0xff]
    %v867 = vld [vmem:[%s1 + $0x15c8] sm:$0xf]
    %v868 = vld [vmem:[%s1 + $0x15cc] sm:$0xff]
    %v869 = vld [vmem:[%s1 + $0x15d4] sm:$0xff]
    %v870 = vld [vmem:[%s1 + $0x15dc] sm:$0xf]
    %v871 = vld [vmem:[%s1 + $0x15e0] sm:$0xff]
    %v872 = vld [vmem:[%s1 + $0x15e8] sm:$0xff]
    %v873 = vld [vmem:[%s1 + $0x15f0] sm:$0xf]
    %v874 = vld [vmem:[%s1 + $0x15f4] sm:$0xff]
    %v875 = vld [vmem:[%s1 + $0x15fc] sm:$0xff]
    %v876 = vld [vmem:[%s1 + $0x1604] sm:$0xf]
    %v877 = vld [vmem:[%s1 + $0x1608] sm:$0xff]
    %v878 = vld [vmem:[%s1 + $0x1610] sm:$0xff]
    %v879 = vld [vmem:[%s1 + $0x1618] sm:$0xf]
    %v880 = vld [vmem:[%s1 + $0x161c] sm:$0xff]
    %v881 = vld [vmem:[%s1 + $0x1624] sm:$0xff]
    %v882 = vld [vmem:[%s1 + $0x162c] sm:$0xf]
    %v883 = vld [vmem:[%s1 + $0x1630] sm:$0xff]
    %v884 = vld [vmem:[%s1 + $0x1638] sm:$0xff]
    %v885 = vld [vmem:[%s1 + $0x1640] sm:$0xf]
    %v886 = vld [vmem:[%s1 + $0x1644] sm:$0xff]
    %v887 = vld [vmem:[%s1 + $0x164c] sm:$0xff]
    %v888 = vld [vmem:[%s1 + $0x1654] sm:$0xf]
    %v889 = vld [vmem:[%s1 + $0x1658] sm:$0xff]
    %v890 = vld [vmem:[%s1 + $0x1660] sm:$0xff]
    %v891 = vld [vmem:[%s1 + $0x1668] sm:$0xf]
    %v892 = vld [vmem:[%s1 + $0x166c] sm:$0xff]
    %v893 = vld [vmem:[%s1 + $0x1674] sm:$0xff]
    %v894 = vld [vmem:[%s1 + $0x167c] sm:$0xf]
    %v895 = vld [vmem:[%s2] sm:$0x1f]
    %v897 = vperm.slane %v895, 0
    %v898 = vperm.slane %v895, 1
    %v899 = vperm.slane %v895, 2
    %v900 = vperm.slane %v895, 3
    %v901 = vperm.slane %v895, 4
    %908 = vst [vmem:[#allocation1] ss:$9 sm:$0xff] %v28
    %v909 = vld [vmem:[#allocation1] sm:$0xff]
    %v910 = vld [vmem:[#allocation1 + $0x9] sm:$0xff]
    %v911 = vld [vmem:[#allocation1 + $0x12] sm:$0xff]
    %v912 = vld [vmem:[#allocation1 + $0x1b] sm:$0xff]
    %v913 = vld [vmem:[#allocation1 + $0x24] sm:$0xff]
    %v914 = vld [vmem:[#allocation1 + $0x2d] sm:$0xff]
    %v915 = vld [vmem:[#allocation1 + $0x36] sm:$0xff]
    %v916 = vld [vmem:[#allocation1 + $0x3f] sm:$0xff]
    %918 = vst [vmem:[#allocation1] ss:$9 sm:$0xff] %v29
    %v919 = vld [vmem:[#allocation1] sm:$0xff]
    %v920 = vld [vmem:[#allocation1 + $0x9] sm:$0xff]
    %v921 = vld [vmem:[#allocation1 + $0x12] sm:$0xff]
    %v922 = vld [vmem:[#allocation1 + $0x1b] sm:$0xff]
    %v923 = vld [vmem:[#allocation1 + $0x24] sm:$0xff]
    %v924 = vld [vmem:[#allocation1 + $0x2d] sm:$0xff]
    %v925 = vld [vmem:[#allocation1 + $0x36] sm:$0xff]
    %v926 = vld [vmem:[#allocation1 + $0x3f] sm:$0xff]
    %928 = vst [vmem:[#allocation1] ss:$9 sm:$0xff] %v30
    %v929 = vld [vmem:[#allocation1] sm:$0xff]
    %v930 = vld [vmem:[#allocation1 + $0x9] sm:$0xff]
    %v1813 = vunpack.c.l.b16 %v31
    %v1814 = vunpack.c.h.b16 %v31
    %v1815 = vunpack.c.l.b16 %v32
    %v1816 = vunpack.c.h.b16 %v32
    %v1817 = vunpack.c.l.b16 %v33
    %v1818 = vunpack.c.l.b16 %v34
    %v1819 = vunpack.c.h.b16 %v34
    %v1820 = vunpack.c.l.b16 %v35
    %v1821 = vunpack.c.h.b16 %v35
    %v1822 = vunpack.c.l.b16 %v36
    %v1823 = vunpack.c.l.b16 %v37
    %v1824 = vunpack.c.h.b16 %v37
    %v1825 = vunpack.c.l.b16 %v38
    %v1826 = vunpack.c.h.b16 %v38
    %v1827 = vunpack.c.l.b16 %v39
    %v1828 = vunpack.c.l.b16 %v40
    %v1829 = vunpack.c.h.b16 %v40
    %v1830 = vunpack.c.l.b16 %v41
    %v1831 = vunpack.c.h.b16 %v41
    %v1832 = vunpack.c.l.b16 %v42
    %v1833 = vunpack.c.l.b16 %v43
    %v1834 = vunpack.c.h.b16 %v43
    %v1835 = vunpack.c.l.b16 %v44
    %v1836 = vunpack.c.h.b16 %v44
    %v1837 = vunpack.c.l.b16 %v45
    %v1838 = vunpack.c.l.b16 %v46
    %v1839 = vunpack.c.h.b16 %v46
    %v1840 = vunpack.c.l.b16 %v47
    %v1841 = vunpack.c.h.b16 %v47
    %v1842 = vunpack.c.l.b16 %v48
    %v1843 = vunpack.c.l.b16 %v49
    %v1844 = vunpack.c.h.b16 %v49
    %v1845 = vunpack.c.l.b16 %v50
    %v1846 = vunpack.c.h.b16 %v50
    %v1847 = vunpack.c.l.b16 %v51
    %v1848 = vunpack.c.l.b16 %v52
    %v1849 = vunpack.c.h.b16 %v52
    %v1850 = vunpack.c.l.b16 %v53
    %v1851 = vunpack.c.h.b16 %v53
    %v1852 = vunpack.c.l.b16 %v54
    %v1853 = vunpack.c.l.b16 %v55
    %v1854 = vunpack.c.h.b16 %v55
    %v1855 = vunpack.c.l.b16 %v56
    %v1856 = vunpack.c.h.b16 %v56
    %v1857 = vunpack.c.l.b16 %v57
    %v1858 = vunpack.c.l.b16 %v58
    %v1859 = vunpack.c.h.b16 %v58
    %v1860 = vunpack.c.l.b16 %v59
    %v1861 = vunpack.c.h.b16 %v59
    %v1862 = vunpack.c.l.b16 %v60
    %v1863 = vunpack.c.l.b16 %v61
    %v1864 = vunpack.c.h.b16 %v61
    %v1865 = vunpack.c.l.b16 %v62
    %v1866 = vunpack.c.h.b16 %v62
    %v1867 = vunpack.c.l.b16 %v63
    %v1868 = vunpack.c.l.b16 %v64
    %v1869 = vunpack.c.h.b16 %v64
    %v1870 = vunpack.c.l.b16 %v65
    %v1871 = vunpack.c.h.b16 %v65
    %v1872 = vunpack.c.l.b16 %v66
    %v1873 = vunpack.c.l.b16 %v67
    %v1874 = vunpack.c.h.b16 %v67
    %v1875 = vunpack.c.l.b16 %v68
    %v1876 = vunpack.c.h.b16 %v68
    %v1877 = vunpack.c.l.b16 %v69
    %v1878 = vunpack.c.l.b16 %v70
    %v1879 = vunpack.c.h.b16 %v70
    %v1880 = vunpack.c.l.b16 %v71
    %v1881 = vunpack.c.h.b16 %v71
    %v1882 = vunpack.c.l.b16 %v72
    %v1883 = vunpack.c.l.b16 %v73
    %v1884 = vunpack.c.h.b16 %v73
    %v1885 = vunpack.c.l.b16 %v74
    %v1886 = vunpack.c.h.b16 %v74
    %v1887 = vunpack.c.l.b16 %v75
    %v1888 = vunpack.c.l.b16 %v76
    %v1889 = vunpack.c.h.b16 %v76
    %v1890 = vunpack.c.l.b16 %v77
    %v1891 = vunpack.c.h.b16 %v77
    %v1892 = vunpack.c.l.b16 %v78
    %v1893 = vunpack.c.l.b16 %v79
    %v1894 = vunpack.c.h.b16 %v79
    %v1895 = vunpack.c.l.b16 %v80
    %v1896 = vunpack.c.h.b16 %v80
    %v1897 = vunpack.c.l.b16 %v81
    %v1898 = vunpack.c.l.b16 %v82
    %v1899 = vunpack.c.h.b16 %v82
    %v1900 = vunpack.c.l.b16 %v83
    %v1901 = vunpack.c.h.b16 %v83
    %v1902 = vunpack.c.l.b16 %v84
    %v1903 = vunpack.c.l.b16 %v85
    %v1904 = vunpack.c.h.b16 %v85
    %v1905 = vunpack.c.l.b16 %v86
    %v1906 = vunpack.c.h.b16 %v86
    %v1907 = vunpack.c.l.b16 %v87
    %v1908 = vunpack.c.l.b16 %v88
    %v1909 = vunpack.c.h.b16 %v88
    %v1910 = vunpack.c.l.b16 %v89
    %v1911 = vunpack.c.h.b16 %v89
    %v1912 = vunpack.c.l.b16 %v90
    %v1913 = vunpack.c.l.b16 %v91
    %v1914 = vunpack.c.h.b16 %v91
    %v1915 = vunpack.c.l.b16 %v92
    %v1916 = vunpack.c.h.b16 %v92
    %v1917 = vunpack.c.l.b16 %v93
    %v1918 = vunpack.c.l.b16 %v94
    %v1919 = vunpack.c.h.b16 %v94
    %v1920 = vunpack.c.l.b16 %v95
    %v1921 = vunpack.c.h.b16 %v95
    %v1922 = vunpack.c.l.b16 %v96
    %v1923 = vunpack.c.l.b16 %v97
    %v1924 = vunpack.c.h.b16 %v97
    %v1925 = vunpack.c.l.b16 %v98
    %v1926 = vunpack.c.h.b16 %v98
    %v1927 = vunpack.c.l.b16 %v99
    %v1928 = vunpack.c.l.b16 %v100
    %v1929 = vunpack.c.h.b16 %v100
    %v1930 = vunpack.c.l.b16 %v101
    %v1931 = vunpack.c.h.b16 %v101
    %v1932 = vunpack.c.l.b16 %v102
    %v1933 = vunpack.c.l.b16 %v103
    %v1934 = vunpack.c.h.b16 %v103
    %v1935 = vunpack.c.l.b16 %v104
    %v1936 = vunpack.c.h.b16 %v104
    %v1937 = vunpack.c.l.b16 %v105
    %v1938 = vunpack.c.l.b16 %v106
    %v1939 = vunpack.c.h.b16 %v106
    %v1940 = vunpack.c.l.b16 %v107
    %v1941 = vunpack.c.h.b16 %v107
    %v1942 = vunpack.c.l.b16 %v108
    %v1943 = vunpack.c.l.b16 %v109
    %v1944 = vunpack.c.h.b16 %v109
    %v1945 = vunpack.c.l.b16 %v110
    %v1946 = vunpack.c.h.b16 %v110
    %v1947 = vunpack.c.l.b16 %v111
    %v1948 = vunpack.c.l.b16 %v112
    %v1949 = vunpack.c.h.b16 %v112
    %v1950 = vunpack.c.l.b16 %v113
    %v1951 = vunpack.c.h.b16 %v113
    %v1952 = vunpack.c.l.b16 %v114
    %v1953 = vunpack.c.l.b16 %v115
    %v1954 = vunpack.c.h.b16 %v115
    %v1955 = vunpack.c.l.b16 %v116
    %v1956 = vunpack.c.h.b16 %v116
    %v1957 = vunpack.c.l.b16 %v117
    %v1958 = vunpack.c.l.b16 %v118
    %v1959 = vunpack.c.h.b16 %v118
    %v1960 = vunpack.c.l.b16 %v119
    %v1961 = vunpack.c.h.b16 %v119
    %v1962 = vunpack.c.l.b16 %v120
    %v1963 = vunpack.c.l.b16 %v121
    %v1964 = vunpack.c.h.b16 %v121
    %v1965 = vunpack.c.l.b16 %v122
    %v1966 = vunpack.c.h.b16 %v122
    %v1967 = vunpack.c.l.b16 %v123
    %v1968 = vunpack.c.l.b16 %v124
    %v1969 = vunpack.c.h.b16 %v124
    %v1970 = vunpack.c.l.b16 %v125
    %v1971 = vunpack.c.h.b16 %v125
    %v1972 = vunpack.c.l.b16 %v126
    %v1973 = vunpack.c.l.b16 %v127
    %v1974 = vunpack.c.h.b16 %v127
    %v1975 = vunpack.c.l.b16 %v128
    %v1976 = vunpack.c.h.b16 %v128
    %v1977 = vunpack.c.l.b16 %v129
    %v1978 = vunpack.c.l.b16 %v130
    %v1979 = vunpack.c.h.b16 %v130
    %v1980 = vunpack.c.l.b16 %v131
    %v1981 = vunpack.c.h.b16 %v131
    %v1982 = vunpack.c.l.b16 %v132
    %v1983 = vunpack.c.l.b16 %v133
    %v1984 = vunpack.c.h.b16 %v133
    %v1985 = vunpack.c.l.b16 %v134
    %v1986 = vunpack.c.h.b16 %v134
    %v1987 = vunpack.c.l.b16 %v135
    %v1988 = vunpack.c.l.b16 %v136
    %v1989 = vunpack.c.h.b16 %v136
    %v1990 = vunpack.c.l.b16 %v137
    %v1991 = vunpack.c.h.b16 %v137
    %v1992 = vunpack.c.l.b16 %v138
    %v1993 = vunpack.c.l.b16 %v139
    %v1994 = vunpack.c.h.b16 %v139
    %v1995 = vunpack.c.l.b16 %v140
    %v1996 = vunpack.c.h.b16 %v140
    %v1997 = vunpack.c.l.b16 %v141
    %v1998 = vunpack.c.l.b16 %v142
    %v1999 = vunpack.c.h.b16 %v142
    %v2000 = vunpack.c.l.b16 %v143
    %v2001 = vunpack.c.h.b16 %v143
    %v2002 = vunpack.c.l.b16 %v144
    %v2003 = vunpack.c.l.b16 %v145
    %v2004 = vunpack.c.h.b16 %v145
    %v2005 = vunpack.c.l.b16 %v146
    %v2006 = vunpack.c.h.b16 %v146
    %v2007 = vunpack.c.l.b16 %v147
    %v2008 = vunpack.c.l.b16 %v148
    %v2009 = vunpack.c.h.b16 %v148
    %v2010 = vunpack.c.l.b16 %v149
    %v2011 = vunpack.c.h.b16 %v149
    %v2012 = vunpack.c.l.b16 %v150
    %v2013 = vunpack.c.l.b16 %v151
    %v2014 = vunpack.c.h.b16 %v151
    %v2015 = vunpack.c.l.b16 %v152
    %v2016 = vunpack.c.h.b16 %v152
    %v2017 = vunpack.c.l.b16 %v153
    %v2018 = vunpack.c.l.b16 %v154
    %v2019 = vunpack.c.h.b16 %v154
    %v2020 = vunpack.c.l.b16 %v155
    %v2021 = vunpack.c.h.b16 %v155
    %v2022 = vunpack.c.l.b16 %v156
    %v2023 = vunpack.c.l.b16 %v157
    %v2024 = vunpack.c.h.b16 %v157
    %v2025 = vunpack.c.l.b16 %v158
    %v2026 = vunpack.c.h.b16 %v158
    %v2027 = vunpack.c.l.b16 %v159
    %v2028 = vunpack.c.l.b16 %v160
    %v2029 = vunpack.c.h.b16 %v160
    %v2030 = vunpack.c.l.b16 %v161
    %v2031 = vunpack.c.h.b16 %v161
    %v2032 = vunpack.c.l.b16 %v162
    %v2033 = vunpack.c.l.b16 %v163
    %v2034 = vunpack.c.h.b16 %v163
    %v2035 = vunpack.c.l.b16 %v164
    %v2036 = vunpack.c.h.b16 %v164
    %v2037 = vunpack.c.l.b16 %v165
    %v2038 = vunpack.c.l.b16 %v166
    %v2039 = vunpack.c.h.b16 %v166
    %v2040 = vunpack.c.l.b16 %v167
    %v2041 = vunpack.c.h.b16 %v167
    %v2042 = vunpack.c.l.b16 %v168
    %v2043 = vunpack.c.l.b16 %v169
    %v2044 = vunpack.c.h.b16 %v169
    %v2045 = vunpack.c.l.b16 %v170
    %v2046 = vunpack.c.h.b16 %v170
    %v2047 = vunpack.c.l.b16 %v171
    %v2048 = vunpack.c.l.b16 %v172
    %v2049 = vunpack.c.h.b16 %v172
    %v2050 = vunpack.c.l.b16 %v173
    %v2051 = vunpack.c.h.b16 %v173
    %v2052 = vunpack.c.l.b16 %v174
    %v2053 = vunpack.c.l.b16 %v175
    %v2054 = vunpack.c.h.b16 %v175
    %v2055 = vunpack.c.l.b16 %v176
    %v2056 = vunpack.c.h.b16 %v176
    %v2057 = vunpack.c.l.b16 %v177
    %v2058 = vunpack.c.l.b16 %v178
    %v2059 = vunpack.c.h.b16 %v178
    %v2060 = vunpack.c.l.b16 %v179
    %v2061 = vunpack.c.h.b16 %v179
    %v2062 = vunpack.c.l.b16 %v180
    %v2063 = vunpack.c.l.b16 %v181
    %v2064 = vunpack.c.h.b16 %v181
    %v2065 = vunpack.c.l.b16 %v182
    %v2066 = vunpack.c.h.b16 %v182
    %v2067 = vunpack.c.l.b16 %v183
    %v2068 = vunpack.c.l.b16 %v184
    %v2069 = vunpack.c.h.b16 %v184
    %v2070 = vunpack.c.l.b16 %v185
    %v2071 = vunpack.c.h.b16 %v185
    %v2072 = vunpack.c.l.b16 %v186
    %v2073 = vunpack.c.l.b16 %v187
    %v2074 = vunpack.c.h.b16 %v187
    %v2075 = vunpack.c.l.b16 %v188
    %v2076 = vunpack.c.h.b16 %v188
    %v2077 = vunpack.c.l.b16 %v189
    %v2078 = vunpack.c.l.b16 %v190
    %v2079 = vunpack.c.h.b16 %v190
    %v2080 = vunpack.c.l.b16 %v191
    %v2081 = vunpack.c.h.b16 %v191
    %v2082 = vunpack.c.l.b16 %v192
    %v2083 = vunpack.c.l.b16 %v193
    %v2084 = vunpack.c.h.b16 %v193
    %v2085 = vunpack.c.l.b16 %v194
    %v2086 = vunpack.c.h.b16 %v194
    %v2087 = vunpack.c.l.b16 %v195
    %v2088 = vunpack.c.l.b16 %v196
    %v2089 = vunpack.c.h.b16 %v196
    %v2090 = vunpack.c.l.b16 %v197
    %v2091 = vunpack.c.h.b16 %v197
    %v2092 = vunpack.c.l.b16 %v198
    %v2093 = vunpack.c.l.b16 %v199
    %v2094 = vunpack.c.h.b16 %v199
    %v2095 = vunpack.c.l.b16 %v200
    %v2096 = vunpack.c.h.b16 %v200
    %v2097 = vunpack.c.l.b16 %v201
    %v2098 = vunpack.c.l.b16 %v202
    %v2099 = vunpack.c.h.b16 %v202
    %v2100 = vunpack.c.l.b16 %v203
    %v2101 = vunpack.c.h.b16 %v203
    %v2102 = vunpack.c.l.b16 %v204
    %v2103 = vunpack.c.l.b16 %v205
    %v2104 = vunpack.c.h.b16 %v205
    %v2105 = vunpack.c.l.b16 %v206
    %v2106 = vunpack.c.h.b16 %v206
    %v2107 = vunpack.c.l.b16 %v207
    %v2108 = vunpack.c.l.b16 %v208
    %v2109 = vunpack.c.h.b16 %v208
    %v2110 = vunpack.c.l.b16 %v209
    %v2111 = vunpack.c.h.b16 %v209
    %v2112 = vunpack.c.l.b16 %v210
    %v2113 = vunpack.c.l.b16 %v211
    %v2114 = vunpack.c.h.b16 %v211
    %v2115 = vunpack.c.l.b16 %v212
    %v2116 = vunpack.c.h.b16 %v212
    %v2117 = vunpack.c.l.b16 %v213
    %v2118 = vunpack.c.l.b16 %v214
    %v2119 = vunpack.c.h.b16 %v214
    %v2120 = vunpack.c.l.b16 %v215
    %v2121 = vunpack.c.h.b16 %v215
    %v2122 = vunpack.c.l.b16 %v216
    %v2123 = vunpack.c.l.b16 %v217
    %v2124 = vunpack.c.h.b16 %v217
    %v2125 = vunpack.c.l.b16 %v218
    %v2126 = vunpack.c.h.b16 %v218
    %v2127 = vunpack.c.l.b16 %v219
    %v2128 = vunpack.c.l.b16 %v220
    %v2129 = vunpack.c.h.b16 %v220
    %v2130 = vunpack.c.l.b16 %v221
    %v2131 = vunpack.c.h.b16 %v221
    %v2132 = vunpack.c.l.b16 %v222
    %v2133 = vunpack.c.l.b16 %v223
    %v2134 = vunpack.c.h.b16 %v223
    %v2135 = vunpack.c.l.b16 %v224
    %v2136 = vunpack.c.h.b16 %v224
    %v2137 = vunpack.c.l.b16 %v225
    %v2138 = vunpack.c.l.b16 %v226
    %v2139 = vunpack.c.h.b16 %v226
    %v2140 = vunpack.c.l.b16 %v227
    %v2141 = vunpack.c.h.b16 %v227
    %v2142 = vunpack.c.l.b16 %v228
    %v2143 = vunpack.c.l.b16 %v229
    %v2144 = vunpack.c.h.b16 %v229
    %v2145 = vunpack.c.l.b16 %v230
    %v2146 = vunpack.c.h.b16 %v230
    %v2147 = vunpack.c.l.b16 %v231
    %v2148 = vunpack.c.l.b16 %v232
    %v2149 = vunpack.c.h.b16 %v232
    %v2150 = vunpack.c.l.b16 %v233
    %v2151 = vunpack.c.h.b16 %v233
    %v2152 = vunpack.c.l.b16 %v234
    %v2153 = vunpack.c.l.b16 %v235
    %v2154 = vunpack.c.h.b16 %v235
    %v2155 = vunpack.c.l.b16 %v236
    %v2156 = vunpack.c.h.b16 %v236
    %v2157 = vunpack.c.l.b16 %v237
    %v2158 = vunpack.c.l.b16 %v238
    %v2159 = vunpack.c.h.b16 %v238
    %v2160 = vunpack.c.l.b16 %v239
    %v2161 = vunpack.c.h.b16 %v239
    %v2162 = vunpack.c.l.b16 %v240
    %v2163 = vunpack.c.l.b16 %v241
    %v2164 = vunpack.c.h.b16 %v241
    %v2165 = vunpack.c.l.b16 %v242
    %v2166 = vunpack.c.h.b16 %v242
    %v2167 = vunpack.c.l.b16 %v243
    %v2168 = vunpack.c.l.b16 %v244
    %v2169 = vunpack.c.h.b16 %v244
    %v2170 = vunpack.c.l.b16 %v245
    %v2171 = vunpack.c.h.b16 %v245
    %v2172 = vunpack.c.l.b16 %v246
    %v2173 = vunpack.c.l.b16 %v247
    %v2174 = vunpack.c.h.b16 %v247
    %v2175 = vunpack.c.l.b16 %v248
    %v2176 = vunpack.c.h.b16 %v248
    %v2177 = vunpack.c.l.b16 %v249
    %v2178 = vunpack.c.l.b16 %v250
    %v2179 = vunpack.c.h.b16 %v250
    %v2180 = vunpack.c.l.b16 %v251
    %v2181 = vunpack.c.h.b16 %v251
    %v2182 = vunpack.c.l.b16 %v252
    %v2183 = vunpack.c.l.b16 %v253
    %v2184 = vunpack.c.h.b16 %v253
    %v2185 = vunpack.c.l.b16 %v254
    %v2186 = vunpack.c.h.b16 %v254
    %v2187 = vunpack.c.l.b16 %v255
    %v2188 = vunpack.c.l.b16 %v256
    %v2189 = vunpack.c.h.b16 %v256
    %v2190 = vunpack.c.l.b16 %v257
    %v2191 = vunpack.c.h.b16 %v257
    %v2192 = vunpack.c.l.b16 %v258
    %v2193 = vunpack.c.l.b16 %v259
    %v2194 = vunpack.c.h.b16 %v259
    %v2195 = vunpack.c.l.b16 %v260
    %v2196 = vunpack.c.h.b16 %v260
    %v2197 = vunpack.c.l.b16 %v261
    %v2198 = vunpack.c.l.b16 %v262
    %v2199 = vunpack.c.h.b16 %v262
    %v2200 = vunpack.c.l.b16 %v263
    %v2201 = vunpack.c.h.b16 %v263
    %v2202 = vunpack.c.l.b16 %v264
    %v2203 = vunpack.c.l.b16 %v265
    %v2204 = vunpack.c.h.b16 %v265
    %v2205 = vunpack.c.l.b16 %v266
    %v2206 = vunpack.c.h.b16 %v266
    %v2207 = vunpack.c.l.b16 %v267
    %v2208 = vunpack.c.l.b16 %v268
    %v2209 = vunpack.c.h.b16 %v268
    %v2210 = vunpack.c.l.b16 %v269
    %v2211 = vunpack.c.h.b16 %v269
    %v2212 = vunpack.c.l.b16 %v270
    %v2213 = vunpack.c.l.b16 %v271
    %v2214 = vunpack.c.h.b16 %v271
    %v2215 = vunpack.c.l.b16 %v272
    %v2216 = vunpack.c.h.b16 %v272
    %v2217 = vunpack.c.l.b16 %v273
    %v2218 = vunpack.c.l.b16 %v274
    %v2219 = vunpack.c.h.b16 %v274
    %v2220 = vunpack.c.l.b16 %v275
    %v2221 = vunpack.c.h.b16 %v275
    %v2222 = vunpack.c.l.b16 %v276
    %v2223 = vunpack.c.l.b16 %v277
    %v2224 = vunpack.c.h.b16 %v277
    %v2225 = vunpack.c.l.b16 %v278
    %v2226 = vunpack.c.h.b16 %v278
    %v2227 = vunpack.c.l.b16 %v279
    %v2228 = vunpack.c.l.b16 %v280
    %v2229 = vunpack.c.h.b16 %v280
    %v2230 = vunpack.c.l.b16 %v281
    %v2231 = vunpack.c.h.b16 %v281
    %v2232 = vunpack.c.l.b16 %v282
    %v2233 = vunpack.c.l.b16 %v283
    %v2234 = vunpack.c.h.b16 %v283
    %v2235 = vunpack.c.l.b16 %v284
    %v2236 = vunpack.c.h.b16 %v284
    %v2237 = vunpack.c.l.b16 %v285
    %v2238 = vunpack.c.l.b16 %v286
    %v2239 = vunpack.c.h.b16 %v286
    %v2240 = vunpack.c.l.b16 %v287
    %v2241 = vunpack.c.h.b16 %v287
    %v2242 = vunpack.c.l.b16 %v288
    %v2243 = vunpack.c.l.b16 %v289
    %v2244 = vunpack.c.h.b16 %v289
    %v2245 = vunpack.c.l.b16 %v290
    %v2246 = vunpack.c.h.b16 %v290
    %v2247 = vunpack.c.l.b16 %v291
    %v2248 = vunpack.c.l.b16 %v292
    %v2249 = vunpack.c.h.b16 %v292
    %v2250 = vunpack.c.l.b16 %v293
    %v2251 = vunpack.c.h.b16 %v293
    %v2252 = vunpack.c.l.b16 %v294
    %v2253 = vunpack.c.l.b16 %v295
    %v2254 = vunpack.c.h.b16 %v295
    %v2255 = vunpack.c.l.b16 %v296
    %v2256 = vunpack.c.h.b16 %v296
    %v2257 = vunpack.c.l.b16 %v297
    %v2258 = vunpack.c.l.b16 %v298
    %v2259 = vunpack.c.h.b16 %v298
    %v2260 = vunpack.c.l.b16 %v299
    %v2261 = vunpack.c.h.b16 %v299
    %v2262 = vunpack.c.l.b16 %v300
    %v2263 = vunpack.c.l.b16 %v301
    %v2264 = vunpack.c.h.b16 %v301
    %v2265 = vunpack.c.l.b16 %v302
    %v2266 = vunpack.c.h.b16 %v302
    %v2267 = vunpack.c.l.b16 %v303
    %v2268 = vunpack.c.l.b16 %v304
    %v2269 = vunpack.c.h.b16 %v304
    %v2270 = vunpack.c.l.b16 %v305
    %v2271 = vunpack.c.h.b16 %v305
    %v2272 = vunpack.c.l.b16 %v306
    %v2273 = vunpack.c.l.b16 %v307
    %v2274 = vunpack.c.h.b16 %v307
    %v2275 = vunpack.c.l.b16 %v308
    %v2276 = vunpack.c.h.b16 %v308
    %v2277 = vunpack.c.l.b16 %v309
    %v2278 = vunpack.c.l.b16 %v310
    %v2279 = vunpack.c.h.b16 %v310
    %v2280 = vunpack.c.l.b16 %v311
    %v2281 = vunpack.c.h.b16 %v311
    %v2282 = vunpack.c.l.b16 %v312
    %v2283 = vunpack.c.l.b16 %v313
    %v2284 = vunpack.c.h.b16 %v313
    %v2285 = vunpack.c.l.b16 %v314
    %v2286 = vunpack.c.h.b16 %v314
    %v2287 = vunpack.c.l.b16 %v315
    %v2288 = vunpack.c.l.b16 %v316
    %v2289 = vunpack.c.h.b16 %v316
    %v2290 = vunpack.c.l.b16 %v317
    %v2291 = vunpack.c.h.b16 %v317
    %v2292 = vunpack.c.l.b16 %v318
    %v2293 = vunpack.c.l.b16 %v319
    %v2294 = vunpack.c.h.b16 %v319
    %v2295 = vunpack.c.l.b16 %v320
    %v2296 = vunpack.c.h.b16 %v320
    %v2297 = vunpack.c.l.b16 %v321
    %v2298 = vunpack.c.l.b16 %v322
    %v2299 = vunpack.c.h.b16 %v322
    %v2300 = vunpack.c.l.b16 %v323
    %v2301 = vunpack.c.h.b16 %v323
    %v2302 = vunpack.c.l.b16 %v324
    %v2303 = vunpack.c.l.b16 %v325
    %v2304 = vunpack.c.h.b16 %v325
    %v2305 = vunpack.c.l.b16 %v326
    %v2306 = vunpack.c.h.b16 %v326
    %v2307 = vunpack.c.l.b16 %v327
    %v2308 = vunpack.c.l.b16 %v328
    %v2309 = vunpack.c.h.b16 %v328
    %v2310 = vunpack.c.l.b16 %v329
    %v2311 = vunpack.c.h.b16 %v329
    %v2312 = vunpack.c.l.b16 %v330
    %v2313 = vunpack.c.l.b16 %v331
    %v2314 = vunpack.c.h.b16 %v331
    %v2315 = vunpack.c.l.b16 %v332
    %v2316 = vunpack.c.h.b16 %v332
    %v2317 = vunpack.c.l.b16 %v333
    %v2318 = vunpack.c.l.b16 %v334
    %v2319 = vunpack.c.h.b16 %v334
    %v2320 = vunpack.c.l.b16 %v335
    %v2321 = vunpack.c.h.b16 %v335
    %v2322 = vunpack.c.l.b16 %v336
    %v2323 = vunpack.c.l.b16 %v337
    %v2324 = vunpack.c.h.b16 %v337
    %v2325 = vunpack.c.l.b16 %v338
    %v2326 = vunpack.c.h.b16 %v338
    %v2327 = vunpack.c.l.b16 %v339
    %v2328 = vunpack.c.l.b16 %v340
    %v2329 = vunpack.c.h.b16 %v340
    %v2330 = vunpack.c.l.b16 %v341
    %v2331 = vunpack.c.h.b16 %v341
    %v2332 = vunpack.c.l.b16 %v342
    %v2333 = vunpack.c.l.b16 %v343
    %v2334 = vunpack.c.h.b16 %v343
    %v2335 = vunpack.c.l.b16 %v344
    %v2336 = vunpack.c.h.b16 %v344
    %v2337 = vunpack.c.l.b16 %v345
    %v2338 = vunpack.c.l.b16 %v346
    %v2339 = vunpack.c.h.b16 %v346
    %v2340 = vunpack.c.l.b16 %v347
    %v2341 = vunpack.c.h.b16 %v347
    %v2342 = vunpack.c.l.b16 %v348
    %v2343 = vunpack.c.l.b16 %v349
    %v2344 = vunpack.c.h.b16 %v349
    %v2345 = vunpack.c.l.b16 %v350
    %v2346 = vunpack.c.h.b16 %v350
    %v2347 = vunpack.c.l.b16 %v351
    %v2348 = vunpack.c.l.b16 %v352
    %v2349 = vunpack.c.h.b16 %v352
    %v2350 = vunpack.c.l.b16 %v353
    %v2351 = vunpack.c.h.b16 %v353
    %v2352 = vunpack.c.l.b16 %v354
    %v2353 = vunpack.c.l.b16 %v355
    %v2354 = vunpack.c.h.b16 %v355
    %v2355 = vunpack.c.l.b16 %v356
    %v2356 = vunpack.c.h.b16 %v356
    %v2357 = vunpack.c.l.b16 %v357
    %v2358 = vunpack.c.l.b16 %v358
    %v2359 = vunpack.c.h.b16 %v358
    %v2360 = vunpack.c.l.b16 %v359
    %v2361 = vunpack.c.h.b16 %v359
    %v2362 = vunpack.c.l.b16 %v360
    %v2363 = vunpack.c.l.b16 %v361
    %v2364 = vunpack.c.h.b16 %v361
    %v2365 = vunpack.c.l.b16 %v362
    %v2366 = vunpack.c.h.b16 %v362
    %v2367 = vunpack.c.l.b16 %v363
    %v2368 = vunpack.c.l.b16 %v364
    %v2369 = vunpack.c.h.b16 %v364
    %v2370 = vunpack.c.l.b16 %v365
    %v2371 = vunpack.c.h.b16 %v365
    %v2372 = vunpack.c.l.b16 %v366
    %v2373 = vunpack.c.l.b16 %v367
    %v2374 = vunpack.c.h.b16 %v367
    %v2375 = vunpack.c.l.b16 %v368
    %v2376 = vunpack.c.h.b16 %v368
    %v2377 = vunpack.c.l.b16 %v369
    %v2378 = vunpack.c.l.b16 %v370
    %v2379 = vunpack.c.h.b16 %v370
    %v2380 = vunpack.c.l.b16 %v371
    %v2381 = vunpack.c.h.b16 %v371
    %v2382 = vunpack.c.l.b16 %v372
    %v2383 = vunpack.c.l.b16 %v373
    %v2384 = vunpack.c.h.b16 %v373
    %v2385 = vunpack.c.l.b16 %v374
    %v2386 = vunpack.c.h.b16 %v374
    %v2387 = vunpack.c.l.b16 %v375
    %v2388 = vunpack.c.l.b16 %v376
    %v2389 = vunpack.c.h.b16 %v376
    %v2390 = vunpack.c.l.b16 %v377
    %v2391 = vunpack.c.h.b16 %v377
    %v2392 = vunpack.c.l.b16 %v378
    %v2393 = vunpack.c.l.b16 %v379
    %v2394 = vunpack.c.h.b16 %v379
    %v2395 = vunpack.c.l.b16 %v380
    %v2396 = vunpack.c.h.b16 %v380
    %v2397 = vunpack.c.l.b16 %v381
    %v2398 = vunpack.c.l.b16 %v382
    %v2399 = vunpack.c.h.b16 %v382
    %v2400 = vunpack.c.l.b16 %v383
    %v2401 = vunpack.c.h.b16 %v383
    %v2402 = vunpack.c.l.b16 %v384
    %v2403 = vunpack.c.l.b16 %v385
    %v2404 = vunpack.c.h.b16 %v385
    %v2405 = vunpack.c.l.b16 %v386
    %v2406 = vunpack.c.h.b16 %v386
    %v2407 = vunpack.c.l.b16 %v387
    %v2408 = vunpack.c.l.b16 %v388
    %v2409 = vunpack.c.h.b16 %v388
    %v2410 = vunpack.c.l.b16 %v389
    %v2411 = vunpack.c.h.b16 %v389
    %v2412 = vunpack.c.l.b16 %v390
    %v2413 = vunpack.c.l.b16 %v391
    %v2414 = vunpack.c.h.b16 %v391
    %v2415 = vunpack.c.l.b16 %v392
    %v2416 = vunpack.c.h.b16 %v392
    %v2417 = vunpack.c.l.b16 %v393
    %v2418 = vunpack.c.l.b16 %v394
    %v2419 = vunpack.c.h.b16 %v394
    %v2420 = vunpack.c.l.b16 %v395
    %v2421 = vunpack.c.h.b16 %v395
    %v2422 = vunpack.c.l.b16 %v396
    %v2423 = vunpack.c.l.b16 %v397
    %v2424 = vunpack.c.h.b16 %v397
    %v2425 = vunpack.c.l.b16 %v398
    %v2426 = vunpack.c.h.b16 %v398
    %v2427 = vunpack.c.l.b16 %v399
    %v2428 = vunpack.c.l.b16 %v400
    %v2429 = vunpack.c.h.b16 %v400
    %v2430 = vunpack.c.l.b16 %v401
    %v2431 = vunpack.c.h.b16 %v401
    %v2432 = vunpack.c.l.b16 %v402
    %v2433 = vunpack.c.l.b16 %v403
    %v2434 = vunpack.c.h.b16 %v403
    %v2435 = vunpack.c.l.b16 %v404
    %v2436 = vunpack.c.h.b16 %v404
    %v2437 = vunpack.c.l.b16 %v405
    %v2438 = vunpack.c.l.b16 %v406
    %v2439 = vunpack.c.h.b16 %v406
    %v2440 = vunpack.c.l.b16 %v407
    %v2441 = vunpack.c.h.b16 %v407
    %v2442 = vunpack.c.l.b16 %v408
    %v2443 = vunpack.c.l.b16 %v409
    %v2444 = vunpack.c.h.b16 %v409
    %v2445 = vunpack.c.l.b16 %v410
    %v2446 = vunpack.c.h.b16 %v410
    %v2447 = vunpack.c.l.b16 %v411
    %v2448 = vunpack.c.l.b16 %v412
    %v2449 = vunpack.c.h.b16 %v412
    %v2450 = vunpack.c.l.b16 %v413
    %v2451 = vunpack.c.h.b16 %v413
    %v2452 = vunpack.c.l.b16 %v414
    %v2453 = vunpack.c.l.b16 %v415
    %v2454 = vunpack.c.h.b16 %v415
    %v2455 = vunpack.c.l.b16 %v416
    %v2456 = vunpack.c.h.b16 %v416
    %v2457 = vunpack.c.l.b16 %v417
    %v2458 = vunpack.c.l.b16 %v418
    %v2459 = vunpack.c.h.b16 %v418
    %v2460 = vunpack.c.l.b16 %v419
    %v2461 = vunpack.c.h.b16 %v419
    %v2462 = vunpack.c.l.b16 %v420
    %v2463 = vunpack.c.l.b16 %v421
    %v2464 = vunpack.c.h.b16 %v421
    %v2465 = vunpack.c.l.b16 %v422
    %v2466 = vunpack.c.h.b16 %v422
    %v2467 = vunpack.c.l.b16 %v423
    %v2468 = vunpack.c.l.b16 %v424
    %v2469 = vunpack.c.h.b16 %v424
    %v2470 = vunpack.c.l.b16 %v425
    %v2471 = vunpack.c.h.b16 %v425
    %v2472 = vunpack.c.l.b16 %v426
    %v2473 = vunpack.c.l.b16 %v427
    %v2474 = vunpack.c.h.b16 %v427
    %v2475 = vunpack.c.l.b16 %v428
    %v2476 = vunpack.c.h.b16 %v428
    %v2477 = vunpack.c.l.b16 %v429
    %v2478 = vunpack.c.l.b16 %v430
    %v2479 = vunpack.c.h.b16 %v430
    %v2480 = vunpack.c.l.b16 %v431
    %v2481 = vunpack.c.h.b16 %v431
    %v2482 = vunpack.c.l.b16 %v432
    %v2483 = vunpack.c.l.b16 %v433
    %v2484 = vunpack.c.h.b16 %v433
    %v2485 = vunpack.c.l.b16 %v434
    %v2486 = vunpack.c.h.b16 %v434
    %v2487 = vunpack.c.l.b16 %v435
    %v2488 = vunpack.c.l.b16 %v436
    %v2489 = vunpack.c.h.b16 %v436
    %v2490 = vunpack.c.l.b16 %v437
    %v2491 = vunpack.c.h.b16 %v437
    %v2492 = vunpack.c.l.b16 %v438
    %v2493 = vunpack.c.l.b16 %v439
    %v2494 = vunpack.c.h.b16 %v439
    %v2495 = vunpack.c.l.b16 %v440
    %v2496 = vunpack.c.h.b16 %v440
    %v2497 = vunpack.c.l.b16 %v441
    %v2498 = vunpack.c.l.b16 %v442
    %v2499 = vunpack.c.h.b16 %v442
    %v2500 = vunpack.c.l.b16 %v443
    %v2501 = vunpack.c.h.b16 %v443
    %v2502 = vunpack.c.l.b16 %v444
    %v2503 = vunpack.c.l.b16 %v445
    %v2504 = vunpack.c.h.b16 %v445
    %v2505 = vunpack.c.l.b16 %v446
    %v2506 = vunpack.c.h.b16 %v446
    %v2507 = vunpack.c.l.b16 %v447
    %v2508 = vunpack.c.l.b16 %v448
    %v2509 = vunpack.c.h.b16 %v448
    %v2510 = vunpack.c.l.b16 %v449
    %v2511 = vunpack.c.h.b16 %v449
    %v2512 = vunpack.c.l.b16 %v450
    %v2513 = vunpack.c.l.b16 %v451
    %v2514 = vunpack.c.h.b16 %v451
    %v2515 = vunpack.c.l.b16 %v452
    %v2516 = vunpack.c.h.b16 %v452
    %v2517 = vunpack.c.l.b16 %v453
    %v2518 = vunpack.c.l.b16 %v454
    %v2519 = vunpack.c.h.b16 %v454
    %v2520 = vunpack.c.l.b16 %v455
    %v2521 = vunpack.c.h.b16 %v455
    %v2522 = vunpack.c.l.b16 %v456
    %v2523 = vunpack.c.l.b16 %v457
    %v2524 = vunpack.c.h.b16 %v457
    %v2525 = vunpack.c.l.b16 %v458
    %v2526 = vunpack.c.h.b16 %v458
    %v2527 = vunpack.c.l.b16 %v459
    %v2528 = vunpack.c.l.b16 %v460
    %v2529 = vunpack.c.h.b16 %v460
    %v2530 = vunpack.c.l.b16 %v461
    %v2531 = vunpack.c.h.b16 %v461
    %v2532 = vunpack.c.l.b16 %v462
    %v2533 = vunpack.c.l.b16 %v463
    %v2534 = vunpack.c.h.b16 %v463
    %v2535 = vunpack.c.l.b16 %v464
    %v2536 = vunpack.c.h.b16 %v464
    %v2537 = vunpack.c.l.b16 %v465
    %v2538 = vunpack.c.l.b16 %v466
    %v2539 = vunpack.c.h.b16 %v466
    %v2540 = vunpack.c.l.b16 %v467
    %v2541 = vunpack.c.h.b16 %v467
    %v2542 = vunpack.c.l.b16 %v468
    %v2543 = vunpack.c.l.b16 %v469
    %v2544 = vunpack.c.h.b16 %v469
    %v2545 = vunpack.c.l.b16 %v470
    %v2546 = vunpack.c.h.b16 %v470
    %v2547 = vunpack.c.l.b16 %v471
    %v2548 = vunpack.c.l.b16 %v472
    %v2549 = vunpack.c.h.b16 %v472
    %v2550 = vunpack.c.l.b16 %v473
    %v2551 = vunpack.c.h.b16 %v473
    %v2552 = vunpack.c.l.b16 %v474
    %v2553 = vunpack.c.l.b16 %v475
    %v2554 = vunpack.c.h.b16 %v475
    %v2555 = vunpack.c.l.b16 %v476
    %v2556 = vunpack.c.h.b16 %v476
    %v2557 = vunpack.c.l.b16 %v477
    %v2558 = vunpack.c.l.b16 %v478
    %v2559 = vunpack.c.h.b16 %v478
    %v2560 = vunpack.c.l.b16 %v479
    %v2561 = vunpack.c.h.b16 %v479
    %v2562 = vunpack.c.l.b16 %v480
    %v2563 = vunpack.c.l.b16 %v481
    %v2564 = vunpack.c.h.b16 %v481
    %v2565 = vunpack.c.l.b16 %v482
    %v2566 = vunpack.c.h.b16 %v482
    %v2567 = vunpack.c.l.b16 %v483
    %v2568 = vunpack.c.l.b16 %v484
    %v2569 = vunpack.c.h.b16 %v484
    %v2570 = vunpack.c.l.b16 %v485
    %v2571 = vunpack.c.h.b16 %v485
    %v2572 = vunpack.c.l.b16 %v486
    %v2573 = vunpack.c.l.b16 %v487
    %v2574 = vunpack.c.h.b16 %v487
    %v2575 = vunpack.c.l.b16 %v488
    %v2576 = vunpack.c.h.b16 %v488
    %v2577 = vunpack.c.l.b16 %v489
    %v2578 = vunpack.c.l.b16 %v490
    %v2579 = vunpack.c.h.b16 %v490
    %v2580 = vunpack.c.l.b16 %v491
    %v2581 = vunpack.c.h.b16 %v491
    %v2582 = vunpack.c.l.b16 %v492
    %v2583 = vunpack.c.l.b16 %v493
    %v2584 = vunpack.c.h.b16 %v493
    %v2585 = vunpack.c.l.b16 %v494
    %v2586 = vunpack.c.h.b16 %v494
    %v2587 = vunpack.c.l.b16 %v495
    %v2588 = vunpack.c.l.b16 %v496
    %v2589 = vunpack.c.h.b16 %v496
    %v2590 = vunpack.c.l.b16 %v497
    %v2591 = vunpack.c.h.b16 %v497
    %v2592 = vunpack.c.l.b16 %v498
    %v2593 = vunpack.c.l.b16 %v499
    %v2594 = vunpack.c.h.b16 %v499
    %v2595 = vunpack.c.l.b16 %v500
    %v2596 = vunpack.c.h.b16 %v500
    %v2597 = vunpack.c.l.b16 %v501
    %v2598 = vunpack.c.l.b16 %v502
    %v2599 = vunpack.c.h.b16 %v502
    %v2600 = vunpack.c.l.b16 %v503
    %v2601 = vunpack.c.h.b16 %v503
    %v2602 = vunpack.c.l.b16 %v504
    %v2603 = vunpack.c.l.b16 %v505
    %v2604 = vunpack.c.h.b16 %v505
    %v2605 = vunpack.c.l.b16 %v506
    %v2606 = vunpack.c.h.b16 %v506
    %v2607 = vunpack.c.l.b16 %v507
    %v2608 = vunpack.c.l.b16 %v508
    %v2609 = vunpack.c.h.b16 %v508
    %v2610 = vunpack.c.l.b16 %v509
    %v2611 = vunpack.c.h.b16 %v509
    %v2612 = vunpack.c.l.b16 %v510
    %v2613 = vunpack.c.l.b16 %v511
    %v2614 = vunpack.c.h.b16 %v511
    %v2615 = vunpack.c.l.b16 %v512
    %v2616 = vunpack.c.h.b16 %v512
    %v2617 = vunpack.c.l.b16 %v513
    %v2618 = vunpack.c.l.b16 %v514
    %v2619 = vunpack.c.h.b16 %v514
    %v2620 = vunpack.c.l.b16 %v515
    %v2621 = vunpack.c.h.b16 %v515
    %v2622 = vunpack.c.l.b16 %v516
    %v2623 = vunpack.c.l.b16 %v517
    %v2624 = vunpack.c.h.b16 %v517
    %v2625 = vunpack.c.l.b16 %v518
    %v2626 = vunpack.c.h.b16 %v518
    %v2627 = vunpack.c.l.b16 %v519
    %v2628 = vunpack.c.l.b16 %v520
    %v2629 = vunpack.c.h.b16 %v520
    %v2630 = vunpack.c.l.b16 %v521
    %v2631 = vunpack.c.h.b16 %v521
    %v2632 = vunpack.c.l.b16 %v522
    %v2633 = vunpack.c.l.b16 %v523
    %v2634 = vunpack.c.h.b16 %v523
    %v2635 = vunpack.c.l.b16 %v524
    %v2636 = vunpack.c.h.b16 %v524
    %v2637 = vunpack.c.l.b16 %v525
    %v2638 = vunpack.c.l.b16 %v526
    %v2639 = vunpack.c.h.b16 %v526
    %v2640 = vunpack.c.l.b16 %v527
    %v2641 = vunpack.c.h.b16 %v527
    %v2642 = vunpack.c.l.b16 %v528
    %v2643 = vunpack.c.l.b16 %v529
    %v2644 = vunpack.c.h.b16 %v529
    %v2645 = vunpack.c.l.b16 %v530
    %v2646 = vunpack.c.h.b16 %v530
    %v2647 = vunpack.c.l.b16 %v531
    %v2648 = vunpack.c.l.b16 %v532
    %v2649 = vunpack.c.h.b16 %v532
    %v2650 = vunpack.c.l.b16 %v533
    %v2651 = vunpack.c.h.b16 %v533
    %v2652 = vunpack.c.l.b16 %v534
    %v2653 = vunpack.c.l.b16 %v535
    %v2654 = vunpack.c.h.b16 %v535
    %v2655 = vunpack.c.l.b16 %v536
    %v2656 = vunpack.c.h.b16 %v536
    %v2657 = vunpack.c.l.b16 %v537
    %v2658 = vunpack.c.l.b16 %v538
    %v2659 = vunpack.c.h.b16 %v538
    %v2660 = vunpack.c.l.b16 %v539
    %v2661 = vunpack.c.h.b16 %v539
    %v2662 = vunpack.c.l.b16 %v540
    %v2663 = vunpack.c.l.b16 %v541
    %v2664 = vunpack.c.h.b16 %v541
    %v2665 = vunpack.c.l.b16 %v542
    %v2666 = vunpack.c.h.b16 %v542
    %v2667 = vunpack.c.l.b16 %v543
    %v2668 = vunpack.c.l.b16 %v544
    %v2669 = vunpack.c.h.b16 %v544
    %v2670 = vunpack.c.l.b16 %v545
    %v2671 = vunpack.c.h.b16 %v545
    %v2672 = vunpack.c.l.b16 %v546
    %v2673 = vunpack.c.l.b16 %v547
    %v2674 = vunpack.c.h.b16 %v547
    %v2675 = vunpack.c.l.b16 %v548
    %v2676 = vunpack.c.h.b16 %v548
    %v2677 = vunpack.c.l.b16 %v549
    %v2678 = vunpack.c.l.b16 %v550
    %v2679 = vunpack.c.h.b16 %v550
    %v2680 = vunpack.c.l.b16 %v551
    %v2681 = vunpack.c.h.b16 %v551
    %v2682 = vunpack.c.l.b16 %v552
    %v2683 = vunpack.c.l.b16 %v553
    %v2684 = vunpack.c.h.b16 %v553
    %v2685 = vunpack.c.l.b16 %v554
    %v2686 = vunpack.c.h.b16 %v554
    %v2687 = vunpack.c.l.b16 %v555
    %v2688 = vunpack.c.l.b16 %v556
    %v2689 = vunpack.c.h.b16 %v556
    %v2690 = vunpack.c.l.b16 %v557
    %v2691 = vunpack.c.h.b16 %v557
    %v2692 = vunpack.c.l.b16 %v558
    %v2693 = vunpack.c.l.b16 %v559
    %v2694 = vunpack.c.h.b16 %v559
    %v2695 = vunpack.c.l.b16 %v560
    %v2696 = vunpack.c.h.b16 %v560
    %v2697 = vunpack.c.l.b16 %v561
    %v2698 = vunpack.c.l.b16 %v562
    %v2699 = vunpack.c.h.b16 %v562
    %v2700 = vunpack.c.l.b16 %v563
    %v2701 = vunpack.c.h.b16 %v563
    %v2702 = vunpack.c.l.b16 %v564
    %v2703 = vunpack.c.l.b16 %v565
    %v2704 = vunpack.c.h.b16 %v565
    %v2705 = vunpack.c.l.b16 %v566
    %v2706 = vunpack.c.h.b16 %v566
    %v2707 = vunpack.c.l.b16 %v567
    %v2708 = vunpack.c.l.b16 %v568
    %v2709 = vunpack.c.h.b16 %v568
    %v2710 = vunpack.c.l.b16 %v569
    %v2711 = vunpack.c.h.b16 %v569
    %v2712 = vunpack.c.l.b16 %v570
    %v2713 = vunpack.c.l.b16 %v571
    %v2714 = vunpack.c.h.b16 %v571
    %v2715 = vunpack.c.l.b16 %v572
    %v2716 = vunpack.c.h.b16 %v572
    %v2717 = vunpack.c.l.b16 %v573
    %v2718 = vunpack.c.l.b16 %v574
    %v2719 = vunpack.c.h.b16 %v574
    %v2720 = vunpack.c.l.b16 %v575
    %v2721 = vunpack.c.h.b16 %v575
    %v2722 = vunpack.c.l.b16 %v576
    %v2723 = vunpack.c.l.b16 %v577
    %v2724 = vunpack.c.h.b16 %v577
    %v2725 = vunpack.c.l.b16 %v578
    %v2726 = vunpack.c.h.b16 %v578
    %v2727 = vunpack.c.l.b16 %v579
    %v2728 = vunpack.c.l.b16 %v580
    %v2729 = vunpack.c.h.b16 %v580
    %v2730 = vunpack.c.l.b16 %v581
    %v2731 = vunpack.c.h.b16 %v581
    %v2732 = vunpack.c.l.b16 %v582
    %v2733 = vunpack.c.l.b16 %v583
    %v2734 = vunpack.c.h.b16 %v583
    %v2735 = vunpack.c.l.b16 %v584
    %v2736 = vunpack.c.h.b16 %v584
    %v2737 = vunpack.c.l.b16 %v585
    %v2738 = vunpack.c.l.b16 %v586
    %v2739 = vunpack.c.h.b16 %v586
    %v2740 = vunpack.c.l.b16 %v587
    %v2741 = vunpack.c.h.b16 %v587
    %v2742 = vunpack.c.l.b16 %v588
    %v2743 = vunpack.c.l.b16 %v589
    %v2744 = vunpack.c.h.b16 %v589
    %v2745 = vunpack.c.l.b16 %v590
    %v2746 = vunpack.c.h.b16 %v590
    %v2747 = vunpack.c.l.b16 %v591
    %v2748 = vunpack.c.l.b16 %v592
    %v2749 = vunpack.c.h.b16 %v592
    %v2750 = vunpack.c.l.b16 %v593
    %v2751 = vunpack.c.h.b16 %v593
    %v2752 = vunpack.c.l.b16 %v594
    %v2753 = vunpack.c.l.b16 %v595
    %v2754 = vunpack.c.h.b16 %v595
    %v2755 = vunpack.c.l.b16 %v596
    %v2756 = vunpack.c.h.b16 %v596
    %v2757 = vunpack.c.l.b16 %v597
    %v2758 = vunpack.c.l.b16 %v598
    %v2759 = vunpack.c.h.b16 %v598
    %v2760 = vunpack.c.l.b16 %v599
    %v2761 = vunpack.c.h.b16 %v599
    %v2762 = vunpack.c.l.b16 %v600
    %v2763 = vunpack.c.l.b16 %v601
    %v2764 = vunpack.c.h.b16 %v601
    %v2765 = vunpack.c.l.b16 %v602
    %v2766 = vunpack.c.h.b16 %v602
    %v2767 = vunpack.c.l.b16 %v603
    %v2768 = vunpack.c.l.b16 %v604
    %v2769 = vunpack.c.h.b16 %v604
    %v2770 = vunpack.c.l.b16 %v605
    %v2771 = vunpack.c.h.b16 %v605
    %v2772 = vunpack.c.l.b16 %v606
    %v2773 = vunpack.c.l.b16 %v607
    %v2774 = vunpack.c.h.b16 %v607
    %v2775 = vunpack.c.l.b16 %v608
    %v2776 = vunpack.c.h.b16 %v608
    %v2777 = vunpack.c.l.b16 %v609
    %v2778 = vunpack.c.l.b16 %v610
    %v2779 = vunpack.c.h.b16 %v610
    %v2780 = vunpack.c.l.b16 %v611
    %v2781 = vunpack.c.h.b16 %v611
    %v2782 = vunpack.c.l.b16 %v612
    %v2783 = vunpack.c.l.b16 %v613
    %v2784 = vunpack.c.h.b16 %v613
    %v2785 = vunpack.c.l.b16 %v614
    %v2786 = vunpack.c.h.b16 %v614
    %v2787 = vunpack.c.l.b16 %v615
    %v2788 = vunpack.c.l.b16 %v616
    %v2789 = vunpack.c.h.b16 %v616
    %v2790 = vunpack.c.l.b16 %v617
    %v2791 = vunpack.c.h.b16 %v617
    %v2792 = vunpack.c.l.b16 %v618
    %v2793 = vunpack.c.l.b16 %v619
    %v2794 = vunpack.c.h.b16 %v619
    %v2795 = vunpack.c.l.b16 %v620
    %v2796 = vunpack.c.h.b16 %v620
    %v2797 = vunpack.c.l.b16 %v621
    %v2798 = vunpack.c.l.b16 %v622
    %v2799 = vunpack.c.h.b16 %v622
    %v2800 = vunpack.c.l.b16 %v623
    %v2801 = vunpack.c.h.b16 %v623
    %v2802 = vunpack.c.l.b16 %v624
    %v2803 = vunpack.c.l.b16 %v625
    %v2804 = vunpack.c.h.b16 %v625
    %v2805 = vunpack.c.l.b16 %v626
    %v2806 = vunpack.c.h.b16 %v626
    %v2807 = vunpack.c.l.b16 %v627
    %v2808 = vunpack.c.l.b16 %v628
    %v2809 = vunpack.c.h.b16 %v628
    %v2810 = vunpack.c.l.b16 %v629
    %v2811 = vunpack.c.h.b16 %v629
    %v2812 = vunpack.c.l.b16 %v630
    %v2813 = vunpack.c.l.b16 %v631
    %v2814 = vunpack.c.h.b16 %v631
    %v2815 = vunpack.c.l.b16 %v632
    %v2816 = vunpack.c.h.b16 %v632
    %v2817 = vunpack.c.l.b16 %v633
    %v2818 = vunpack.c.l.b16 %v634
    %v2819 = vunpack.c.h.b16 %v634
    %v2820 = vunpack.c.l.b16 %v635
    %v2821 = vunpack.c.h.b16 %v635
    %v2822 = vunpack.c.l.b16 %v636
    %v2823 = vunpack.c.l.b16 %v637
    %v2824 = vunpack.c.h.b16 %v637
    %v2825 = vunpack.c.l.b16 %v638
    %v2826 = vunpack.c.h.b16 %v638
    %v2827 = vunpack.c.l.b16 %v639
    %v2828 = vunpack.c.l.b16 %v640
    %v2829 = vunpack.c.h.b16 %v640
    %v2830 = vunpack.c.l.b16 %v641
    %v2831 = vunpack.c.h.b16 %v641
    %v2832 = vunpack.c.l.b16 %v642
    %v2833 = vunpack.c.l.b16 %v643
    %v2834 = vunpack.c.h.b16 %v643
    %v2835 = vunpack.c.l.b16 %v644
    %v2836 = vunpack.c.h.b16 %v644
    %v2837 = vunpack.c.l.b16 %v645
    %v2838 = vunpack.c.l.b16 %v646
    %v2839 = vunpack.c.h.b16 %v646
    %v2840 = vunpack.c.l.b16 %v647
    %v2841 = vunpack.c.h.b16 %v647
    %v2842 = vunpack.c.l.b16 %v648
    %v2843 = vunpack.c.l.b16 %v649
    %v2844 = vunpack.c.h.b16 %v649
    %v2845 = vunpack.c.l.b16 %v650
    %v2846 = vunpack.c.h.b16 %v650
    %v2847 = vunpack.c.l.b16 %v651
    %v2848 = vunpack.c.l.b16 %v652
    %v2849 = vunpack.c.h.b16 %v652
    %v2850 = vunpack.c.l.b16 %v653
    %v2851 = vunpack.c.h.b16 %v653
    %v2852 = vunpack.c.l.b16 %v654
    %v2853 = vunpack.c.l.b16 %v655
    %v2854 = vunpack.c.h.b16 %v655
    %v2855 = vunpack.c.l.b16 %v656
    %v2856 = vunpack.c.h.b16 %v656
    %v2857 = vunpack.c.l.b16 %v657
    %v2858 = vunpack.c.l.b16 %v658
    %v2859 = vunpack.c.h.b16 %v658
    %v2860 = vunpack.c.l.b16 %v659
    %v2861 = vunpack.c.h.b16 %v659
    %v2862 = vunpack.c.l.b16 %v660
    %v2863 = vunpack.c.l.b16 %v661
    %v2864 = vunpack.c.h.b16 %v661
    %v2865 = vunpack.c.l.b16 %v662
    %v2866 = vunpack.c.h.b16 %v662
    %v2867 = vunpack.c.l.b16 %v663
    %v2868 = vunpack.c.l.b16 %v664
    %v2869 = vunpack.c.h.b16 %v664
    %v2870 = vunpack.c.l.b16 %v665
    %v2871 = vunpack.c.h.b16 %v665
    %v2872 = vunpack.c.l.b16 %v666
    %v2873 = vunpack.c.l.b16 %v667
    %v2874 = vunpack.c.h.b16 %v667
    %v2875 = vunpack.c.l.b16 %v668
    %v2876 = vunpack.c.h.b16 %v668
    %v2877 = vunpack.c.l.b16 %v669
    %v2878 = vunpack.c.l.b16 %v670
    %v2879 = vunpack.c.h.b16 %v670
    %v2880 = vunpack.c.l.b16 %v671
    %v2881 = vunpack.c.h.b16 %v671
    %v2882 = vunpack.c.l.b16 %v672
    %v2883 = vunpack.c.l.b16 %v673
    %v2884 = vunpack.c.h.b16 %v673
    %v2885 = vunpack.c.l.b16 %v674
    %v2886 = vunpack.c.h.b16 %v674
    %v2887 = vunpack.c.l.b16 %v675
    %v2888 = vunpack.c.l.b16 %v676
    %v2889 = vunpack.c.h.b16 %v676
    %v2890 = vunpack.c.l.b16 %v677
    %v2891 = vunpack.c.h.b16 %v677
    %v2892 = vunpack.c.l.b16 %v678
    %v2893 = vunpack.c.l.b16 %v679
    %v2894 = vunpack.c.h.b16 %v679
    %v2895 = vunpack.c.l.b16 %v680
    %v2896 = vunpack.c.h.b16 %v680
    %v2897 = vunpack.c.l.b16 %v681
    %v2898 = vunpack.c.l.b16 %v682
    %v2899 = vunpack.c.h.b16 %v682
    %v2900 = vunpack.c.l.b16 %v683
    %v2901 = vunpack.c.h.b16 %v683
    %v2902 = vunpack.c.l.b16 %v684
    %v2903 = vunpack.c.l.b16 %v685
    %v2904 = vunpack.c.h.b16 %v685
    %v2905 = vunpack.c.l.b16 %v686
    %v2906 = vunpack.c.h.b16 %v686
    %v2907 = vunpack.c.l.b16 %v687
    %v2908 = vunpack.c.l.b16 %v688
    %v2909 = vunpack.c.h.b16 %v688
    %v2910 = vunpack.c.l.b16 %v689
    %v2911 = vunpack.c.h.b16 %v689
    %v2912 = vunpack.c.l.b16 %v690
    %v2913 = vunpack.c.l.b16 %v691
    %v2914 = vunpack.c.h.b16 %v691
    %v2915 = vunpack.c.l.b16 %v692
    %v2916 = vunpack.c.h.b16 %v692
    %v2917 = vunpack.c.l.b16 %v693
    %v2918 = vunpack.c.l.b16 %v694
    %v2919 = vunpack.c.h.b16 %v694
    %v2920 = vunpack.c.l.b16 %v695
    %v2921 = vunpack.c.h.b16 %v695
    %v2922 = vunpack.c.l.b16 %v696
    %v2923 = vunpack.c.l.b16 %v697
    %v2924 = vunpack.c.h.b16 %v697
    %v2925 = vunpack.c.l.b16 %v698
    %v2926 = vunpack.c.h.b16 %v698
    %v2927 = vunpack.c.l.b16 %v699
    %v2928 = vunpack.c.l.b16 %v700
    %v2929 = vunpack.c.h.b16 %v700
    %v2930 = vunpack.c.l.b16 %v701
    %v2931 = vunpack.c.h.b16 %v701
    %v2932 = vunpack.c.l.b16 %v702
    %v2933 = vunpack.c.l.b16 %v703
    %v2934 = vunpack.c.h.b16 %v703
    %v2935 = vunpack.c.l.b16 %v704
    %v2936 = vunpack.c.h.b16 %v704
    %v2937 = vunpack.c.l.b16 %v705
    %v2938 = vunpack.c.l.b16 %v706
    %v2939 = vunpack.c.h.b16 %v706
    %v2940 = vunpack.c.l.b16 %v707
    %v2941 = vunpack.c.h.b16 %v707
    %v2942 = vunpack.c.l.b16 %v708
    %v2943 = vunpack.c.l.b16 %v709
    %v2944 = vunpack.c.h.b16 %v709
    %v2945 = vunpack.c.l.b16 %v710
    %v2946 = vunpack.c.h.b16 %v710
    %v2947 = vunpack.c.l.b16 %v711
    %v2948 = vunpack.c.l.b16 %v712
    %v2949 = vunpack.c.h.b16 %v712
    %v2950 = vunpack.c.l.b16 %v713
    %v2951 = vunpack.c.h.b16 %v713
    %v2952 = vunpack.c.l.b16 %v714
    %v2953 = vunpack.c.l.b16 %v715
    %v2954 = vunpack.c.h.b16 %v715
    %v2955 = vunpack.c.l.b16 %v716
    %v2956 = vunpack.c.h.b16 %v716
    %v2957 = vunpack.c.l.b16 %v717
    %v2958 = vunpack.c.l.b16 %v718
    %v2959 = vunpack.c.h.b16 %v718
    %v2960 = vunpack.c.l.b16 %v719
    %v2961 = vunpack.c.h.b16 %v719
    %v2962 = vunpack.c.l.b16 %v720
    %v2963 = vunpack.c.l.b16 %v721
    %v2964 = vunpack.c.h.b16 %v721
    %v2965 = vunpack.c.l.b16 %v722
    %v2966 = vunpack.c.h.b16 %v722
    %v2967 = vunpack.c.l.b16 %v723
    %v2968 = vunpack.c.l.b16 %v724
    %v2969 = vunpack.c.h.b16 %v724
    %v2970 = vunpack.c.l.b16 %v725
    %v2971 = vunpack.c.h.b16 %v725
    %v2972 = vunpack.c.l.b16 %v726
    %v2973 = vunpack.c.l.b16 %v727
    %v2974 = vunpack.c.h.b16 %v727
    %v2975 = vunpack.c.l.b16 %v728
    %v2976 = vunpack.c.h.b16 %v728
    %v2977 = vunpack.c.l.b16 %v729
    %v2978 = vunpack.c.l.b16 %v730
    %v2979 = vunpack.c.h.b16 %v730
    %v2980 = vunpack.c.l.b16 %v731
    %v2981 = vunpack.c.h.b16 %v731
    %v2982 = vunpack.c.l.b16 %v732
    %v2983 = vunpack.c.l.b16 %v733
    %v2984 = vunpack.c.h.b16 %v733
    %v2985 = vunpack.c.l.b16 %v734
    %v2986 = vunpack.c.h.b16 %v734
    %v2987 = vunpack.c.l.b16 %v735
    %v2988 = vunpack.c.l.b16 %v736
    %v2989 = vunpack.c.h.b16 %v736
    %v2990 = vunpack.c.l.b16 %v737
    %v2991 = vunpack.c.h.b16 %v737
    %v2992 = vunpack.c.l.b16 %v738
    %v2993 = vunpack.c.l.b16 %v739
    %v2994 = vunpack.c.h.b16 %v739
    %v2995 = vunpack.c.l.b16 %v740
    %v2996 = vunpack.c.h.b16 %v740
    %v2997 = vunpack.c.l.b16 %v741
    %v2998 = vunpack.c.l.b16 %v742
    %v2999 = vunpack.c.h.b16 %v742
    %v3000 = vunpack.c.l.b16 %v743
    %v3001 = vunpack.c.h.b16 %v743
    %v3002 = vunpack.c.l.b16 %v744
    %v3003 = vunpack.c.l.b16 %v745
    %v3004 = vunpack.c.h.b16 %v745
    %v3005 = vunpack.c.l.b16 %v746
    %v3006 = vunpack.c.h.b16 %v746
    %v3007 = vunpack.c.l.b16 %v747
    %v3008 = vunpack.c.l.b16 %v748
    %v3009 = vunpack.c.h.b16 %v748
    %v3010 = vunpack.c.l.b16 %v749
    %v3011 = vunpack.c.h.b16 %v749
    %v3012 = vunpack.c.l.b16 %v750
    %v3013 = vunpack.c.l.b16 %v751
    %v3014 = vunpack.c.h.b16 %v751
    %v3015 = vunpack.c.l.b16 %v752
    %v3016 = vunpack.c.h.b16 %v752
    %v3017 = vunpack.c.l.b16 %v753
    %v3018 = vunpack.c.l.b16 %v754
    %v3019 = vunpack.c.h.b16 %v754
    %v3020 = vunpack.c.l.b16 %v755
    %v3021 = vunpack.c.h.b16 %v755
    %v3022 = vunpack.c.l.b16 %v756
    %v3023 = vunpack.c.l.b16 %v757
    %v3024 = vunpack.c.h.b16 %v757
    %v3025 = vunpack.c.l.b16 %v758
    %v3026 = vunpack.c.h.b16 %v758
    %v3027 = vunpack.c.l.b16 %v759
    %v3028 = vunpack.c.l.b16 %v760
    %v3029 = vunpack.c.h.b16 %v760
    %v3030 = vunpack.c.l.b16 %v761
    %v3031 = vunpack.c.h.b16 %v761
    %v3032 = vunpack.c.l.b16 %v762
    %v3033 = vunpack.c.l.b16 %v763
    %v3034 = vunpack.c.h.b16 %v763
    %v3035 = vunpack.c.l.b16 %v764
    %v3036 = vunpack.c.h.b16 %v764
    %v3037 = vunpack.c.l.b16 %v765
    %v3038 = vunpack.c.l.b16 %v766
    %v3039 = vunpack.c.h.b16 %v766
    %v3040 = vunpack.c.l.b16 %v767
    %v3041 = vunpack.c.h.b16 %v767
    %v3042 = vunpack.c.l.b16 %v768
    %v3043 = vunpack.c.l.b16 %v769
    %v3044 = vunpack.c.h.b16 %v769
    %v3045 = vunpack.c.l.b16 %v770
    %v3046 = vunpack.c.h.b16 %v770
    %v3047 = vunpack.c.l.b16 %v771
    %v3048 = vunpack.c.l.b16 %v772
    %v3049 = vunpack.c.h.b16 %v772
    %v3050 = vunpack.c.l.b16 %v773
    %v3051 = vunpack.c.h.b16 %v773
    %v3052 = vunpack.c.l.b16 %v774
    %v3053 = vunpack.c.l.b16 %v775
    %v3054 = vunpack.c.h.b16 %v775
    %v3055 = vunpack.c.l.b16 %v776
    %v3056 = vunpack.c.h.b16 %v776
    %v3057 = vunpack.c.l.b16 %v777
    %v3058 = vunpack.c.l.b16 %v778
    %v3059 = vunpack.c.h.b16 %v778
    %v3060 = vunpack.c.l.b16 %v779
    %v3061 = vunpack.c.h.b16 %v779
    %v3062 = vunpack.c.l.b16 %v780
    %v3063 = vunpack.c.l.b16 %v781
    %v3064 = vunpack.c.h.b16 %v781
    %v3065 = vunpack.c.l.b16 %v782
    %v3066 = vunpack.c.h.b16 %v782
    %v3067 = vunpack.c.l.b16 %v783
    %v3068 = vunpack.c.l.b16 %v784
    %v3069 = vunpack.c.h.b16 %v784
    %v3070 = vunpack.c.l.b16 %v785
    %v3071 = vunpack.c.h.b16 %v785
    %v3072 = vunpack.c.l.b16 %v786
    %v3073 = vunpack.c.l.b16 %v787
    %v3074 = vunpack.c.h.b16 %v787
    %v3075 = vunpack.c.l.b16 %v788
    %v3076 = vunpack.c.h.b16 %v788
    %v3077 = vunpack.c.l.b16 %v789
    %v3078 = vunpack.c.l.b16 %v790
    %v3079 = vunpack.c.h.b16 %v790
    %v3080 = vunpack.c.l.b16 %v791
    %v3081 = vunpack.c.h.b16 %v791
    %v3082 = vunpack.c.l.b16 %v792
    %v3083 = vunpack.c.l.b16 %v793
    %v3084 = vunpack.c.h.b16 %v793
    %v3085 = vunpack.c.l.b16 %v794
    %v3086 = vunpack.c.h.b16 %v794
    %v3087 = vunpack.c.l.b16 %v795
    %v3088 = vunpack.c.l.b16 %v796
    %v3089 = vunpack.c.h.b16 %v796
    %v3090 = vunpack.c.l.b16 %v797
    %v3091 = vunpack.c.h.b16 %v797
    %v3092 = vunpack.c.l.b16 %v798
    %v3093 = vunpack.c.l.b16 %v799
    %v3094 = vunpack.c.h.b16 %v799
    %v3095 = vunpack.c.l.b16 %v800
    %v3096 = vunpack.c.h.b16 %v800
    %v3097 = vunpack.c.l.b16 %v801
    %v3098 = vunpack.c.l.b16 %v802
    %v3099 = vunpack.c.h.b16 %v802
    %v3100 = vunpack.c.l.b16 %v803
    %v3101 = vunpack.c.h.b16 %v803
    %v3102 = vunpack.c.l.b16 %v804
    %v3103 = vunpack.c.l.b16 %v805
    %v3104 = vunpack.c.h.b16 %v805
    %v3105 = vunpack.c.l.b16 %v806
    %v3106 = vunpack.c.h.b16 %v806
    %v3107 = vunpack.c.l.b16 %v807
    %v3108 = vunpack.c.l.b16 %v808
    %v3109 = vunpack.c.h.b16 %v808
    %v3110 = vunpack.c.l.b16 %v809
    %v3111 = vunpack.c.h.b16 %v809
    %v3112 = vunpack.c.l.b16 %v810
    %v3113 = vunpack.c.l.b16 %v811
    %v3114 = vunpack.c.h.b16 %v811
    %v3115 = vunpack.c.l.b16 %v812
    %v3116 = vunpack.c.h.b16 %v812
    %v3117 = vunpack.c.l.b16 %v813
    %v3118 = vunpack.c.l.b16 %v814
    %v3119 = vunpack.c.h.b16 %v814
    %v3120 = vunpack.c.l.b16 %v815
    %v3121 = vunpack.c.h.b16 %v815
    %v3122 = vunpack.c.l.b16 %v816
    %v3123 = vunpack.c.l.b16 %v817
    %v3124 = vunpack.c.h.b16 %v817
    %v3125 = vunpack.c.l.b16 %v818
    %v3126 = vunpack.c.h.b16 %v818
    %v3127 = vunpack.c.l.b16 %v819
    %v3128 = vunpack.c.l.b16 %v820
    %v3129 = vunpack.c.h.b16 %v820
    %v3130 = vunpack.c.l.b16 %v821
    %v3131 = vunpack.c.h.b16 %v821
    %v3132 = vunpack.c.l.b16 %v822
    %v3133 = vunpack.c.l.b16 %v823
    %v3134 = vunpack.c.h.b16 %v823
    %v3135 = vunpack.c.l.b16 %v824
    %v3136 = vunpack.c.h.b16 %v824
    %v3137 = vunpack.c.l.b16 %v825
    %v3138 = vunpack.c.l.b16 %v826
    %v3139 = vunpack.c.h.b16 %v826
    %v3140 = vunpack.c.l.b16 %v827
    %v3141 = vunpack.c.h.b16 %v827
    %v3142 = vunpack.c.l.b16 %v828
    %v3143 = vunpack.c.l.b16 %v829
    %v3144 = vunpack.c.h.b16 %v829
    %v3145 = vunpack.c.l.b16 %v830
    %v3146 = vunpack.c.h.b16 %v830
    %v3147 = vunpack.c.l.b16 %v831
    %v3148 = vunpack.c.l.b16 %v832
    %v3149 = vunpack.c.h.b16 %v832
    %v3150 = vunpack.c.l.b16 %v833
    %v3151 = vunpack.c.h.b16 %v833
    %v3152 = vunpack.c.l.b16 %v834
    %v3153 = vunpack.c.l.b16 %v835
    %v3154 = vunpack.c.h.b16 %v835
    %v3155 = vunpack.c.l.b16 %v836
    %v3156 = vunpack.c.h.b16 %v836
    %v3157 = vunpack.c.l.b16 %v837
    %v3158 = vunpack.c.l.b16 %v838
    %v3159 = vunpack.c.h.b16 %v838
    %v3160 = vunpack.c.l.b16 %v839
    %v3161 = vunpack.c.h.b16 %v839
    %v3162 = vunpack.c.l.b16 %v840
    %v3163 = vunpack.c.l.b16 %v841
    %v3164 = vunpack.c.h.b16 %v841
    %v3165 = vunpack.c.l.b16 %v842
    %v3166 = vunpack.c.h.b16 %v842
    %v3167 = vunpack.c.l.b16 %v843
    %v3168 = vunpack.c.l.b16 %v844
    %v3169 = vunpack.c.h.b16 %v844
    %v3170 = vunpack.c.l.b16 %v845
    %v3171 = vunpack.c.h.b16 %v845
    %v3172 = vunpack.c.l.b16 %v846
    %v3173 = vunpack.c.l.b16 %v847
    %v3174 = vunpack.c.h.b16 %v847
    %v3175 = vunpack.c.l.b16 %v848
    %v3176 = vunpack.c.h.b16 %v848
    %v3177 = vunpack.c.l.b16 %v849
    %v3178 = vunpack.c.l.b16 %v850
    %v3179 = vunpack.c.h.b16 %v850
    %v3180 = vunpack.c.l.b16 %v851
    %v3181 = vunpack.c.h.b16 %v851
    %v3182 = vunpack.c.l.b16 %v852
    %v3183 = vunpack.c.l.b16 %v853
    %v3184 = vunpack.c.h.b16 %v853
    %v3185 = vunpack.c.l.b16 %v854
    %v3186 = vunpack.c.h.b16 %v854
    %v3187 = vunpack.c.l.b16 %v855
    %v3188 = vunpack.c.l.b16 %v856
    %v3189 = vunpack.c.h.b16 %v856
    %v3190 = vunpack.c.l.b16 %v857
    %v3191 = vunpack.c.h.b16 %v857
    %v3192 = vunpack.c.l.b16 %v858
    %v3193 = vunpack.c.l.b16 %v859
    %v3194 = vunpack.c.h.b16 %v859
    %v3195 = vunpack.c.l.b16 %v860
    %v3196 = vunpack.c.h.b16 %v860
    %v3197 = vunpack.c.l.b16 %v861
    %v3198 = vunpack.c.l.b16 %v862
    %v3199 = vunpack.c.h.b16 %v862
    %v3200 = vunpack.c.l.b16 %v863
    %v3201 = vunpack.c.h.b16 %v863
    %v3202 = vunpack.c.l.b16 %v864
    %v3203 = vunpack.c.l.b16 %v865
    %v3204 = vunpack.c.h.b16 %v865
    %v3205 = vunpack.c.l.b16 %v866
    %v3206 = vunpack.c.h.b16 %v866
    %v3207 = vunpack.c.l.b16 %v867
    %v3208 = vunpack.c.l.b16 %v868
    %v3209 = vunpack.c.h.b16 %v868
    %v3210 = vunpack.c.l.b16 %v869
    %v3211 = vunpack.c.h.b16 %v869
    %v3212 = vunpack.c.l.b16 %v870
    %v3213 = vunpack.c.l.b16 %v871
    %v3214 = vunpack.c.h.b16 %v871
    %v3215 = vunpack.c.l.b16 %v872
    %v3216 = vunpack.c.h.b16 %v872
    %v3217 = vunpack.c.l.b16 %v873
    %v3218 = vunpack.c.l.b16 %v874
    %v3219 = vunpack.c.h.b16 %v874
    %v3220 = vunpack.c.l.b16 %v875
    %v3221 = vunpack.c.h.b16 %v875
    %v3222 = vunpack.c.l.b16 %v876
    %v3223 = vunpack.c.l.b16 %v877
    %v3224 = vunpack.c.h.b16 %v877
    %v3225 = vunpack.c.l.b16 %v878
    %v3226 = vunpack.c.h.b16 %v878
    %v3227 = vunpack.c.l.b16 %v879
    %v3228 = vunpack.c.l.b16 %v880
    %v3229 = vunpack.c.h.b16 %v880
    %v3230 = vunpack.c.l.b16 %v881
    %v3231 = vunpack.c.h.b16 %v881
    %v3232 = vunpack.c.l.b16 %v882
    %v3233 = vunpack.c.l.b16 %v883
    %v3234 = vunpack.c.h.b16 %v883
    %v3235 = vunpack.c.l.b16 %v884
    %v3236 = vunpack.c.h.b16 %v884
    %v3237 = vunpack.c.l.b16 %v885
    %v3238 = vunpack.c.l.b16 %v886
    %v3239 = vunpack.c.h.b16 %v886
    %v3240 = vunpack.c.l.b16 %v887
    %v3241 = vunpack.c.h.b16 %v887
    %v3242 = vunpack.c.l.b16 %v888
    %v3243 = vunpack.c.l.b16 %v889
    %v3244 = vunpack.c.h.b16 %v889
    %v3245 = vunpack.c.l.b16 %v890
    %v3246 = vunpack.c.h.b16 %v890
    %v3247 = vunpack.c.l.b16 %v891
    %v3248 = vunpack.c.l.b16 %v892
    %v3249 = vunpack.c.h.b16 %v892
    %v3250 = vunpack.c.l.b16 %v893
    %v3251 = vunpack.c.h.b16 %v893
    %v3252 = vunpack.c.l.b16 %v894
    %v3253 = vpack.c.b16 %v1818, %v1813
    %v3254 = vpack.c.b16 %v1819, %v1814
    %v3255 = vpack.c.b16 %v1820, %v1815
    %v3256 = vpack.c.b16 %v1821, %v1816
    %v3257 = vpack.c.b16 %v1822, %v1817
    %v3258 = vpack.c.b16 %v1828, %v1823
    %v3259 = vpack.c.b16 %v1829, %v1824
    %v3260 = vpack.c.b16 %v1830, %v1825
    %v3261 = vpack.c.b16 %v1831, %v1826
    %v3262 = vpack.c.b16 %v1832, %v1827
    %v3263 = vpack.c.b16 %v1838, %v1833
    %v3264 = vpack.c.b16 %v1839, %v1834
    %v3265 = vpack.c.b16 %v1840, %v1835
    %v3266 = vpack.c.b16 %v1841, %v1836
    %v3267 = vpack.c.b16 %v1842, %v1837
    %v3268 = vpack.c.b16 %v1848, %v1843
    %v3269 = vpack.c.b16 %v1849, %v1844
    %v3270 = vpack.c.b16 %v1850, %v1845
    %v3271 = vpack.c.b16 %v1851, %v1846
    %v3272 = vpack.c.b16 %v1852, %v1847
    %v3273 = vpack.c.b16 %v1858, %v1853
    %v3274 = vpack.c.b16 %v1859, %v1854
    %v3275 = vpack.c.b16 %v1860, %v1855
    %v3276 = vpack.c.b16 %v1861, %v1856
    %v3277 = vpack.c.b16 %v1862, %v1857
    %v3278 = vpack.c.b16 %v1868, %v1863
    %v3279 = vpack.c.b16 %v1869, %v1864
    %v3280 = vpack.c.b16 %v1870, %v1865
    %v3281 = vpack.c.b16 %v1871, %v1866
    %v3282 = vpack.c.b16 %v1872, %v1867
    %v3283 = vpack.c.b16 %v1878, %v1873
    %v3284 = vpack.c.b16 %v1879, %v1874
    %v3285 = vpack.c.b16 %v1880, %v1875
    %v3286 = vpack.c.b16 %v1881, %v1876
    %v3287 = vpack.c.b16 %v1882, %v1877
    %v3288 = vpack.c.b16 %v1888, %v1883
    %v3289 = vpack.c.b16 %v1889, %v1884
    %v3290 = vpack.c.b16 %v1890, %v1885
    %v3291 = vpack.c.b16 %v1891, %v1886
    %v3292 = vpack.c.b16 %v1892, %v1887
    %v3293 = vpack.c.b16 %v1898, %v1893
    %v3294 = vpack.c.b16 %v1899, %v1894
    %v3295 = vpack.c.b16 %v1900, %v1895
    %v3296 = vpack.c.b16 %v1901, %v1896
    %v3297 = vpack.c.b16 %v1902, %v1897
    %v3298 = vpack.c.b16 %v1908, %v1903
    %v3299 = vpack.c.b16 %v1909, %v1904
    %v3300 = vpack.c.b16 %v1910, %v1905
    %v3301 = vpack.c.b16 %v1911, %v1906
    %v3302 = vpack.c.b16 %v1912, %v1907
    %v3303 = vpack.c.b16 %v1918, %v1913
    %v3304 = vpack.c.b16 %v1919, %v1914
    %v3305 = vpack.c.b16 %v1920, %v1915
    %v3306 = vpack.c.b16 %v1921, %v1916
    %v3307 = vpack.c.b16 %v1922, %v1917
    %v3308 = vpack.c.b16 %v1928, %v1923
    %v3309 = vpack.c.b16 %v1929, %v1924
    %v3310 = vpack.c.b16 %v1930, %v1925
    %v3311 = vpack.c.b16 %v1931, %v1926
    %v3312 = vpack.c.b16 %v1932, %v1927
    %v3313 = vpack.c.b16 %v1938, %v1933
    %v3314 = vpack.c.b16 %v1939, %v1934
    %v3315 = vpack.c.b16 %v1940, %v1935
    %v3316 = vpack.c.b16 %v1941, %v1936
    %v3317 = vpack.c.b16 %v1942, %v1937
    %v3318 = vpack.c.b16 %v1948, %v1943
    %v3319 = vpack.c.b16 %v1949, %v1944
    %v3320 = vpack.c.b16 %v1950, %v1945
    %v3321 = vpack.c.b16 %v1951, %v1946
    %v3322 = vpack.c.b16 %v1952, %v1947
    %v3323 = vpack.c.b16 %v1958, %v1953
    %v3324 = vpack.c.b16 %v1959, %v1954
    %v3325 = vpack.c.b16 %v1960, %v1955
    %v3326 = vpack.c.b16 %v1961, %v1956
    %v3327 = vpack.c.b16 %v1962, %v1957
    %v3328 = vpack.c.b16 %v1968, %v1963
    %v3329 = vpack.c.b16 %v1969, %v1964
    %v3330 = vpack.c.b16 %v1970, %v1965
    %v3331 = vpack.c.b16 %v1971, %v1966
    %v3332 = vpack.c.b16 %v1972, %v1967
    %v3333 = vpack.c.b16 %v1978, %v1973
    %v3334 = vpack.c.b16 %v1979, %v1974
    %v3335 = vpack.c.b16 %v1980, %v1975
    %v3336 = vpack.c.b16 %v1981, %v1976
    %v3337 = vpack.c.b16 %v1982, %v1977
    %v3338 = vpack.c.b16 %v1988, %v1983
    %v3339 = vpack.c.b16 %v1989, %v1984
    %v3340 = vpack.c.b16 %v1990, %v1985
    %v3341 = vpack.c.b16 %v1991, %v1986
    %v3342 = vpack.c.b16 %v1992, %v1987
    %v3343 = vpack.c.b16 %v1998, %v1993
    %v3344 = vpack.c.b16 %v1999, %v1994
    %v3345 = vpack.c.b16 %v2000, %v1995
    %v3346 = vpack.c.b16 %v2001, %v1996
    %v3347 = vpack.c.b16 %v2002, %v1997
    %v3348 = vpack.c.b16 %v2008, %v2003
    %v3349 = vpack.c.b16 %v2009, %v2004
    %v3350 = vpack.c.b16 %v2010, %v2005
    %v3351 = vpack.c.b16 %v2011, %v2006
    %v3352 = vpack.c.b16 %v2012, %v2007
    %v3353 = vpack.c.b16 %v2018, %v2013
    %v3354 = vpack.c.b16 %v2019, %v2014
    %v3355 = vpack.c.b16 %v2020, %v2015
    %v3356 = vpack.c.b16 %v2021, %v2016
    %v3357 = vpack.c.b16 %v2022, %v2017
    %v3358 = vpack.c.b16 %v2028, %v2023
    %v3359 = vpack.c.b16 %v2029, %v2024
    %v3360 = vpack.c.b16 %v2030, %v2025
    %v3361 = vpack.c.b16 %v2031, %v2026
    %v3362 = vpack.c.b16 %v2032, %v2027
    %v3363 = vpack.c.b16 %v2038, %v2033
    %v3364 = vpack.c.b16 %v2039, %v2034
    %v3365 = vpack.c.b16 %v2040, %v2035
    %v3366 = vpack.c.b16 %v2041, %v2036
    %v3367 = vpack.c.b16 %v2042, %v2037
    %v3368 = vpack.c.b16 %v2048, %v2043
    %v3369 = vpack.c.b16 %v2049, %v2044
    %v3370 = vpack.c.b16 %v2050, %v2045
    %v3371 = vpack.c.b16 %v2051, %v2046
    %v3372 = vpack.c.b16 %v2052, %v2047
    %v3373 = vpack.c.b16 %v2058, %v2053
    %v3374 = vpack.c.b16 %v2059, %v2054
    %v3375 = vpack.c.b16 %v2060, %v2055
    %v3376 = vpack.c.b16 %v2061, %v2056
    %v3377 = vpack.c.b16 %v2062, %v2057
    %v3378 = vpack.c.b16 %v2068, %v2063
    %v3379 = vpack.c.b16 %v2069, %v2064
    %v3380 = vpack.c.b16 %v2070, %v2065
    %v3381 = vpack.c.b16 %v2071, %v2066
    %v3382 = vpack.c.b16 %v2072, %v2067
    %v3383 = vpack.c.b16 %v2078, %v2073
    %v3384 = vpack.c.b16 %v2079, %v2074
    %v3385 = vpack.c.b16 %v2080, %v2075
    %v3386 = vpack.c.b16 %v2081, %v2076
    %v3387 = vpack.c.b16 %v2082, %v2077
    %v3388 = vpack.c.b16 %v2088, %v2083
    %v3389 = vpack.c.b16 %v2089, %v2084
    %v3390 = vpack.c.b16 %v2090, %v2085
    %v3391 = vpack.c.b16 %v2091, %v2086
    %v3392 = vpack.c.b16 %v2092, %v2087
    %v3393 = vpack.c.b16 %v2098, %v2093
    %v3394 = vpack.c.b16 %v2099, %v2094
    %v3395 = vpack.c.b16 %v2100, %v2095
    %v3396 = vpack.c.b16 %v2101, %v2096
    %v3397 = vpack.c.b16 %v2102, %v2097
    %v3398 = vpack.c.b16 %v2108, %v2103
    %v3399 = vpack.c.b16 %v2109, %v2104
    %v3400 = vpack.c.b16 %v2110, %v2105
    %v3401 = vpack.c.b16 %v2111, %v2106
    %v3402 = vpack.c.b16 %v2112, %v2107
    %v3403 = vpack.c.b16 %v2118, %v2113
    %v3404 = vpack.c.b16 %v2119, %v2114
    %v3405 = vpack.c.b16 %v2120, %v2115
    %v3406 = vpack.c.b16 %v2121, %v2116
    %v3407 = vpack.c.b16 %v2122, %v2117
    %v3408 = vpack.c.b16 %v2128, %v2123
    %v3409 = vpack.c.b16 %v2129, %v2124
    %v3410 = vpack.c.b16 %v2130, %v2125
    %v3411 = vpack.c.b16 %v2131, %v2126
    %v3412 = vpack.c.b16 %v2132, %v2127
    %v3413 = vpack.c.b16 %v2138, %v2133
    %v3414 = vpack.c.b16 %v2139, %v2134
    %v3415 = vpack.c.b16 %v2140, %v2135
    %v3416 = vpack.c.b16 %v2141, %v2136
    %v3417 = vpack.c.b16 %v2142, %v2137
    %v3418 = vpack.c.b16 %v2148, %v2143
    %v3419 = vpack.c.b16 %v2149, %v2144
    %v3420 = vpack.c.b16 %v2150, %v2145
    %v3421 = vpack.c.b16 %v2151, %v2146
    %v3422 = vpack.c.b16 %v2152, %v2147
    %v3423 = vpack.c.b16 %v2158, %v2153
    %v3424 = vpack.c.b16 %v2159, %v2154
    %v3425 = vpack.c.b16 %v2160, %v2155
    %v3426 = vpack.c.b16 %v2161, %v2156
    %v3427 = vpack.c.b16 %v2162, %v2157
    %v3428 = vpack.c.b16 %v2168, %v2163
    %v3429 = vpack.c.b16 %v2169, %v2164
    %v3430 = vpack.c.b16 %v2170, %v2165
    %v3431 = vpack.c.b16 %v2171, %v2166
    %v3432 = vpack.c.b16 %v2172, %v2167
    %v3433 = vpack.c.b16 %v2178, %v2173
    %v3434 = vpack.c.b16 %v2179, %v2174
    %v3435 = vpack.c.b16 %v2180, %v2175
    %v3436 = vpack.c.b16 %v2181, %v2176
    %v3437 = vpack.c.b16 %v2182, %v2177
    %v3438 = vpack.c.b16 %v2188, %v2183
    %v3439 = vpack.c.b16 %v2189, %v2184
    %v3440 = vpack.c.b16 %v2190, %v2185
    %v3441 = vpack.c.b16 %v2191, %v2186
    %v3442 = vpack.c.b16 %v2192, %v2187
    %v3443 = vpack.c.b16 %v2198, %v2193
    %v3444 = vpack.c.b16 %v2199, %v2194
    %v3445 = vpack.c.b16 %v2200, %v2195
    %v3446 = vpack.c.b16 %v2201, %v2196
    %v3447 = vpack.c.b16 %v2202, %v2197
    %v3448 = vpack.c.b16 %v2208, %v2203
    %v3449 = vpack.c.b16 %v2209, %v2204
    %v3450 = vpack.c.b16 %v2210, %v2205
    %v3451 = vpack.c.b16 %v2211, %v2206
    %v3452 = vpack.c.b16 %v2212, %v2207
    %v3453 = vpack.c.b16 %v2218, %v2213
    %v3454 = vpack.c.b16 %v2219, %v2214
    %v3455 = vpack.c.b16 %v2220, %v2215
    %v3456 = vpack.c.b16 %v2221, %v2216
    %v3457 = vpack.c.b16 %v2222, %v2217
    %v3458 = vpack.c.b16 %v2228, %v2223
    %v3459 = vpack.c.b16 %v2229, %v2224
    %v3460 = vpack.c.b16 %v2230, %v2225
    %v3461 = vpack.c.b16 %v2231, %v2226
    %v3462 = vpack.c.b16 %v2232, %v2227
    %v3463 = vpack.c.b16 %v2238, %v2233
    %v3464 = vpack.c.b16 %v2239, %v2234
    %v3465 = vpack.c.b16 %v2240, %v2235
    %v3466 = vpack.c.b16 %v2241, %v2236
    %v3467 = vpack.c.b16 %v2242, %v2237
    %v3468 = vpack.c.b16 %v2248, %v2243
    %v3469 = vpack.c.b16 %v2249, %v2244
    %v3470 = vpack.c.b16 %v2250, %v2245
    %v3471 = vpack.c.b16 %v2251, %v2246
    %v3472 = vpack.c.b16 %v2252, %v2247
    %v3473 = vpack.c.b16 %v2258, %v2253
    %v3474 = vpack.c.b16 %v2259, %v2254
    %v3475 = vpack.c.b16 %v2260, %v2255
    %v3476 = vpack.c.b16 %v2261, %v2256
    %v3477 = vpack.c.b16 %v2262, %v2257
    %v3478 = vpack.c.b16 %v2268, %v2263
    %v3479 = vpack.c.b16 %v2269, %v2264
    %v3480 = vpack.c.b16 %v2270, %v2265
    %v3481 = vpack.c.b16 %v2271, %v2266
    %v3482 = vpack.c.b16 %v2272, %v2267
    %v3483 = vpack.c.b16 %v2278, %v2273
    %v3484 = vpack.c.b16 %v2279, %v2274
    %v3485 = vpack.c.b16 %v2280, %v2275
    %v3486 = vpack.c.b16 %v2281, %v2276
    %v3487 = vpack.c.b16 %v2282, %v2277
    %v3488 = vpack.c.b16 %v2288, %v2283
    %v3489 = vpack.c.b16 %v2289, %v2284
    %v3490 = vpack.c.b16 %v2290, %v2285
    %v3491 = vpack.c.b16 %v2291, %v2286
    %v3492 = vpack.c.b16 %v2292, %v2287
    %v3493 = vpack.c.b16 %v2298, %v2293
    %v3494 = vpack.c.b16 %v2299, %v2294
    %v3495 = vpack.c.b16 %v2300, %v2295
    %v3496 = vpack.c.b16 %v2301, %v2296
    %v3497 = vpack.c.b16 %v2302, %v2297
    %v3498 = vpack.c.b16 %v2308, %v2303
    %v3499 = vpack.c.b16 %v2309, %v2304
    %v3500 = vpack.c.b16 %v2310, %v2305
    %v3501 = vpack.c.b16 %v2311, %v2306
    %v3502 = vpack.c.b16 %v2312, %v2307
    %v3503 = vpack.c.b16 %v2318, %v2313
    %v3504 = vpack.c.b16 %v2319, %v2314
    %v3505 = vpack.c.b16 %v2320, %v2315
    %v3506 = vpack.c.b16 %v2321, %v2316
    %v3507 = vpack.c.b16 %v2322, %v2317
    %v3508 = vpack.c.b16 %v2328, %v2323
    %v3509 = vpack.c.b16 %v2329, %v2324
    %v3510 = vpack.c.b16 %v2330, %v2325
    %v3511 = vpack.c.b16 %v2331, %v2326
    %v3512 = vpack.c.b16 %v2332, %v2327
    %v3513 = vpack.c.b16 %v2338, %v2333
    %v3514 = vpack.c.b16 %v2339, %v2334
    %v3515 = vpack.c.b16 %v2340, %v2335
    %v3516 = vpack.c.b16 %v2341, %v2336
    %v3517 = vpack.c.b16 %v2342, %v2337
    %v3518 = vpack.c.b16 %v2348, %v2343
    %v3519 = vpack.c.b16 %v2349, %v2344
    %v3520 = vpack.c.b16 %v2350, %v2345
    %v3521 = vpack.c.b16 %v2351, %v2346
    %v3522 = vpack.c.b16 %v2352, %v2347
    %v3523 = vpack.c.b16 %v2358, %v2353
    %v3524 = vpack.c.b16 %v2359, %v2354
    %v3525 = vpack.c.b16 %v2360, %v2355
    %v3526 = vpack.c.b16 %v2361, %v2356
    %v3527 = vpack.c.b16 %v2362, %v2357
    %v3528 = vpack.c.b16 %v2368, %v2363
    %v3529 = vpack.c.b16 %v2369, %v2364
    %v3530 = vpack.c.b16 %v2370, %v2365
    %v3531 = vpack.c.b16 %v2371, %v2366
    %v3532 = vpack.c.b16 %v2372, %v2367
    %v3533 = vpack.c.b16 %v2378, %v2373
    %v3534 = vpack.c.b16 %v2379, %v2374
    %v3535 = vpack.c.b16 %v2380, %v2375
    %v3536 = vpack.c.b16 %v2381, %v2376
    %v3537 = vpack.c.b16 %v2382, %v2377
    %v3538 = vpack.c.b16 %v2388, %v2383
    %v3539 = vpack.c.b16 %v2389, %v2384
    %v3540 = vpack.c.b16 %v2390, %v2385
    %v3541 = vpack.c.b16 %v2391, %v2386
    %v3542 = vpack.c.b16 %v2392, %v2387
    %v3543 = vpack.c.b16 %v2398, %v2393
    %v3544 = vpack.c.b16 %v2399, %v2394
    %v3545 = vpack.c.b16 %v2400, %v2395
    %v3546 = vpack.c.b16 %v2401, %v2396
    %v3547 = vpack.c.b16 %v2402, %v2397
    %v3548 = vpack.c.b16 %v2408, %v2403
    %v3549 = vpack.c.b16 %v2409, %v2404
    %v3550 = vpack.c.b16 %v2410, %v2405
    %v3551 = vpack.c.b16 %v2411, %v2406
    %v3552 = vpack.c.b16 %v2412, %v2407
    %v3553 = vpack.c.b16 %v2418, %v2413
    %v3554 = vpack.c.b16 %v2419, %v2414
    %v3555 = vpack.c.b16 %v2420, %v2415
    %v3556 = vpack.c.b16 %v2421, %v2416
    %v3557 = vpack.c.b16 %v2422, %v2417
    %v3558 = vpack.c.b16 %v2428, %v2423
    %v3559 = vpack.c.b16 %v2429, %v2424
    %v3560 = vpack.c.b16 %v2430, %v2425
    %v3561 = vpack.c.b16 %v2431, %v2426
    %v3562 = vpack.c.b16 %v2432, %v2427
    %v3563 = vpack.c.b16 %v2438, %v2433
    %v3564 = vpack.c.b16 %v2439, %v2434
    %v3565 = vpack.c.b16 %v2440, %v2435
    %v3566 = vpack.c.b16 %v2441, %v2436
    %v3567 = vpack.c.b16 %v2442, %v2437
    %v3568 = vpack.c.b16 %v2448, %v2443
    %v3569 = vpack.c.b16 %v2449, %v2444
    %v3570 = vpack.c.b16 %v2450, %v2445
    %v3571 = vpack.c.b16 %v2451, %v2446
    %v3572 = vpack.c.b16 %v2452, %v2447
    %v3573 = vpack.c.b16 %v2458, %v2453
    %v3574 = vpack.c.b16 %v2459, %v2454
    %v3575 = vpack.c.b16 %v2460, %v2455
    %v3576 = vpack.c.b16 %v2461, %v2456
    %v3577 = vpack.c.b16 %v2462, %v2457
    %v3578 = vpack.c.b16 %v2468, %v2463
    %v3579 = vpack.c.b16 %v2469, %v2464
    %v3580 = vpack.c.b16 %v2470, %v2465
    %v3581 = vpack.c.b16 %v2471, %v2466
    %v3582 = vpack.c.b16 %v2472, %v2467
    %v3583 = vpack.c.b16 %v2478, %v2473
    %v3584 = vpack.c.b16 %v2479, %v2474
    %v3585 = vpack.c.b16 %v2480, %v2475
    %v3586 = vpack.c.b16 %v2481, %v2476
    %v3587 = vpack.c.b16 %v2482, %v2477
    %v3588 = vpack.c.b16 %v2488, %v2483
    %v3589 = vpack.c.b16 %v2489, %v2484
    %v3590 = vpack.c.b16 %v2490, %v2485
    %v3591 = vpack.c.b16 %v2491, %v2486
    %v3592 = vpack.c.b16 %v2492, %v2487
    %v3593 = vpack.c.b16 %v2498, %v2493
    %v3594 = vpack.c.b16 %v2499, %v2494
    %v3595 = vpack.c.b16 %v2500, %v2495
    %v3596 = vpack.c.b16 %v2501, %v2496
    %v3597 = vpack.c.b16 %v2502, %v2497
    %v3598 = vpack.c.b16 %v2508, %v2503
    %v3599 = vpack.c.b16 %v2509, %v2504
    %v3600 = vpack.c.b16 %v2510, %v2505
    %v3601 = vpack.c.b16 %v2511, %v2506
    %v3602 = vpack.c.b16 %v2512, %v2507
    %v3603 = vpack.c.b16 %v2518, %v2513
    %v3604 = vpack.c.b16 %v2519, %v2514
    %v3605 = vpack.c.b16 %v2520, %v2515
    %v3606 = vpack.c.b16 %v2521, %v2516
    %v3607 = vpack.c.b16 %v2522, %v2517
    %v3608 = vpack.c.b16 %v2528, %v2523
    %v3609 = vpack.c.b16 %v2529, %v2524
    %v3610 = vpack.c.b16 %v2530, %v2525
    %v3611 = vpack.c.b16 %v2531, %v2526
    %v3612 = vpack.c.b16 %v2532, %v2527
    %v3613 = vpack.c.b16 %v2538, %v2533
    %v3614 = vpack.c.b16 %v2539, %v2534
    %v3615 = vpack.c.b16 %v2540, %v2535
    %v3616 = vpack.c.b16 %v2541, %v2536
    %v3617 = vpack.c.b16 %v2542, %v2537
    %v3618 = vpack.c.b16 %v2548, %v2543
    %v3619 = vpack.c.b16 %v2549, %v2544
    %v3620 = vpack.c.b16 %v2550, %v2545
    %v3621 = vpack.c.b16 %v2551, %v2546
    %v3622 = vpack.c.b16 %v2552, %v2547
    %v3623 = vpack.c.b16 %v2558, %v2553
    %v3624 = vpack.c.b16 %v2559, %v2554
    %v3625 = vpack.c.b16 %v2560, %v2555
    %v3626 = vpack.c.b16 %v2561, %v2556
    %v3627 = vpack.c.b16 %v2562, %v2557
    %v3628 = vpack.c.b16 %v2568, %v2563
    %v3629 = vpack.c.b16 %v2569, %v2564
    %v3630 = vpack.c.b16 %v2570, %v2565
    %v3631 = vpack.c.b16 %v2571, %v2566
    %v3632 = vpack.c.b16 %v2572, %v2567
    %v3633 = vpack.c.b16 %v2578, %v2573
    %v3634 = vpack.c.b16 %v2579, %v2574
    %v3635 = vpack.c.b16 %v2580, %v2575
    %v3636 = vpack.c.b16 %v2581, %v2576
    %v3637 = vpack.c.b16 %v2582, %v2577
    %v3638 = vpack.c.b16 %v2588, %v2583
    %v3639 = vpack.c.b16 %v2589, %v2584
    %v3640 = vpack.c.b16 %v2590, %v2585
    %v3641 = vpack.c.b16 %v2591, %v2586
    %v3642 = vpack.c.b16 %v2592, %v2587
    %v3643 = vpack.c.b16 %v2598, %v2593
    %v3644 = vpack.c.b16 %v2599, %v2594
    %v3645 = vpack.c.b16 %v2600, %v2595
    %v3646 = vpack.c.b16 %v2601, %v2596
    %v3647 = vpack.c.b16 %v2602, %v2597
    %v3648 = vpack.c.b16 %v2608, %v2603
    %v3649 = vpack.c.b16 %v2609, %v2604
    %v3650 = vpack.c.b16 %v2610, %v2605
    %v3651 = vpack.c.b16 %v2611, %v2606
    %v3652 = vpack.c.b16 %v2612, %v2607
    %v3653 = vpack.c.b16 %v2618, %v2613
    %v3654 = vpack.c.b16 %v2619, %v2614
    %v3655 = vpack.c.b16 %v2620, %v2615
    %v3656 = vpack.c.b16 %v2621, %v2616
    %v3657 = vpack.c.b16 %v2622, %v2617
    %v3658 = vpack.c.b16 %v2628, %v2623
    %v3659 = vpack.c.b16 %v2629, %v2624
    %v3660 = vpack.c.b16 %v2630, %v2625
    %v3661 = vpack.c.b16 %v2631, %v2626
    %v3662 = vpack.c.b16 %v2632, %v2627
    %v3663 = vpack.c.b16 %v2638, %v2633
    %v3664 = vpack.c.b16 %v2639, %v2634
    %v3665 = vpack.c.b16 %v2640, %v2635
    %v3666 = vpack.c.b16 %v2641, %v2636
    %v3667 = vpack.c.b16 %v2642, %v2637
    %v3668 = vpack.c.b16 %v2648, %v2643
    %v3669 = vpack.c.b16 %v2649, %v2644
    %v3670 = vpack.c.b16 %v2650, %v2645
    %v3671 = vpack.c.b16 %v2651, %v2646
    %v3672 = vpack.c.b16 %v2652, %v2647
    %v3673 = vpack.c.b16 %v2658, %v2653
    %v3674 = vpack.c.b16 %v2659, %v2654
    %v3675 = vpack.c.b16 %v2660, %v2655
    %v3676 = vpack.c.b16 %v2661, %v2656
    %v3677 = vpack.c.b16 %v2662, %v2657
    %v3678 = vpack.c.b16 %v2668, %v2663
    %v3679 = vpack.c.b16 %v2669, %v2664
    %v3680 = vpack.c.b16 %v2670, %v2665
    %v3681 = vpack.c.b16 %v2671, %v2666
    %v3682 = vpack.c.b16 %v2672, %v2667
    %v3683 = vpack.c.b16 %v2678, %v2673
    %v3684 = vpack.c.b16 %v2679, %v2674
    %v3685 = vpack.c.b16 %v2680, %v2675
    %v3686 = vpack.c.b16 %v2681, %v2676
    %v3687 = vpack.c.b16 %v2682, %v2677
    %v3688 = vpack.c.b16 %v2688, %v2683
    %v3689 = vpack.c.b16 %v2689, %v2684
    %v3690 = vpack.c.b16 %v2690, %v2685
    %v3691 = vpack.c.b16 %v2691, %v2686
    %v3692 = vpack.c.b16 %v2692, %v2687
    %v3693 = vpack.c.b16 %v2698, %v2693
    %v3694 = vpack.c.b16 %v2699, %v2694
    %v3695 = vpack.c.b16 %v2700, %v2695
    %v3696 = vpack.c.b16 %v2701, %v2696
    %v3697 = vpack.c.b16 %v2702, %v2697
    %v3698 = vpack.c.b16 %v2708, %v2703
    %v3699 = vpack.c.b16 %v2709, %v2704
    %v3700 = vpack.c.b16 %v2710, %v2705
    %v3701 = vpack.c.b16 %v2711, %v2706
    %v3702 = vpack.c.b16 %v2712, %v2707
    %v3703 = vpack.c.b16 %v2718, %v2713
    %v3704 = vpack.c.b16 %v2719, %v2714
    %v3705 = vpack.c.b16 %v2720, %v2715
    %v3706 = vpack.c.b16 %v2721, %v2716
    %v3707 = vpack.c.b16 %v2722, %v2717
    %v3708 = vpack.c.b16 %v2728, %v2723
    %v3709 = vpack.c.b16 %v2729, %v2724
    %v3710 = vpack.c.b16 %v2730, %v2725
    %v3711 = vpack.c.b16 %v2731, %v2726
    %v3712 = vpack.c.b16 %v2732, %v2727
    %v3713 = vpack.c.b16 %v2738, %v2733
    %v3714 = vpack.c.b16 %v2739, %v2734
    %v3715 = vpack.c.b16 %v2740, %v2735
    %v3716 = vpack.c.b16 %v2741, %v2736
    %v3717 = vpack.c.b16 %v2742, %v2737
    %v3718 = vpack.c.b16 %v2748, %v2743
    %v3719 = vpack.c.b16 %v2749, %v2744
    %v3720 = vpack.c.b16 %v2750, %v2745
    %v3721 = vpack.c.b16 %v2751, %v2746
    %v3722 = vpack.c.b16 %v2752, %v2747
    %v3723 = vpack.c.b16 %v2758, %v2753
    %v3724 = vpack.c.b16 %v2759, %v2754
    %v3725 = vpack.c.b16 %v2760, %v2755
    %v3726 = vpack.c.b16 %v2761, %v2756
    %v3727 = vpack.c.b16 %v2762, %v2757
    %v3728 = vpack.c.b16 %v2768, %v2763
    %v3729 = vpack.c.b16 %v2769, %v2764
    %v3730 = vpack.c.b16 %v2770, %v2765
    %v3731 = vpack.c.b16 %v2771, %v2766
    %v3732 = vpack.c.b16 %v2772, %v2767
    %v3733 = vpack.c.b16 %v2778, %v2773
    %v3734 = vpack.c.b16 %v2779, %v2774
    %v3735 = vpack.c.b16 %v2780, %v2775
    %v3736 = vpack.c.b16 %v2781, %v2776
    %v3737 = vpack.c.b16 %v2782, %v2777
    %v3738 = vpack.c.b16 %v2788, %v2783
    %v3739 = vpack.c.b16 %v2789, %v2784
    %v3740 = vpack.c.b16 %v2790, %v2785
    %v3741 = vpack.c.b16 %v2791, %v2786
    %v3742 = vpack.c.b16 %v2792, %v2787
    %v3743 = vpack.c.b16 %v2798, %v2793
    %v3744 = vpack.c.b16 %v2799, %v2794
    %v3745 = vpack.c.b16 %v2800, %v2795
    %v3746 = vpack.c.b16 %v2801, %v2796
    %v3747 = vpack.c.b16 %v2802, %v2797
    %v3748 = vpack.c.b16 %v2808, %v2803
    %v3749 = vpack.c.b16 %v2809, %v2804
    %v3750 = vpack.c.b16 %v2810, %v2805
    %v3751 = vpack.c.b16 %v2811, %v2806
    %v3752 = vpack.c.b16 %v2812, %v2807
    %v3753 = vpack.c.b16 %v2818, %v2813
    %v3754 = vpack.c.b16 %v2819, %v2814
    %v3755 = vpack.c.b16 %v2820, %v2815
    %v3756 = vpack.c.b16 %v2821, %v2816
    %v3757 = vpack.c.b16 %v2822, %v2817
    %v3758 = vpack.c.b16 %v2828, %v2823
    %v3759 = vpack.c.b16 %v2829, %v2824
    %v3760 = vpack.c.b16 %v2830, %v2825
    %v3761 = vpack.c.b16 %v2831, %v2826
    %v3762 = vpack.c.b16 %v2832, %v2827
    %v3763 = vpack.c.b16 %v2838, %v2833
    %v3764 = vpack.c.b16 %v2839, %v2834
    %v3765 = vpack.c.b16 %v2840, %v2835
    %v3766 = vpack.c.b16 %v2841, %v2836
    %v3767 = vpack.c.b16 %v2842, %v2837
    %v3768 = vpack.c.b16 %v2848, %v2843
    %v3769 = vpack.c.b16 %v2849, %v2844
    %v3770 = vpack.c.b16 %v2850, %v2845
    %v3771 = vpack.c.b16 %v2851, %v2846
    %v3772 = vpack.c.b16 %v2852, %v2847
    %v3773 = vpack.c.b16 %v2858, %v2853
    %v3774 = vpack.c.b16 %v2859, %v2854
    %v3775 = vpack.c.b16 %v2860, %v2855
    %v3776 = vpack.c.b16 %v2861, %v2856
    %v3777 = vpack.c.b16 %v2862, %v2857
    %v3778 = vpack.c.b16 %v2868, %v2863
    %v3779 = vpack.c.b16 %v2869, %v2864
    %v3780 = vpack.c.b16 %v2870, %v2865
    %v3781 = vpack.c.b16 %v2871, %v2866
    %v3782 = vpack.c.b16 %v2872, %v2867
    %v3783 = vpack.c.b16 %v2878, %v2873
    %v3784 = vpack.c.b16 %v2879, %v2874
    %v3785 = vpack.c.b16 %v2880, %v2875
    %v3786 = vpack.c.b16 %v2881, %v2876
    %v3787 = vpack.c.b16 %v2882, %v2877
    %v3788 = vpack.c.b16 %v2888, %v2883
    %v3789 = vpack.c.b16 %v2889, %v2884
    %v3790 = vpack.c.b16 %v2890, %v2885
    %v3791 = vpack.c.b16 %v2891, %v2886
    %v3792 = vpack.c.b16 %v2892, %v2887
    %v3793 = vpack.c.b16 %v2898, %v2893
    %v3794 = vpack.c.b16 %v2899, %v2894
    %v3795 = vpack.c.b16 %v2900, %v2895
    %v3796 = vpack.c.b16 %v2901, %v2896
    %v3797 = vpack.c.b16 %v2902, %v2897
    %v3798 = vpack.c.b16 %v2908, %v2903
    %v3799 = vpack.c.b16 %v2909, %v2904
    %v3800 = vpack.c.b16 %v2910, %v2905
    %v3801 = vpack.c.b16 %v2911, %v2906
    %v3802 = vpack.c.b16 %v2912, %v2907
    %v3803 = vpack.c.b16 %v2918, %v2913
    %v3804 = vpack.c.b16 %v2919, %v2914
    %v3805 = vpack.c.b16 %v2920, %v2915
    %v3806 = vpack.c.b16 %v2921, %v2916
    %v3807 = vpack.c.b16 %v2922, %v2917
    %v3808 = vpack.c.b16 %v2928, %v2923
    %v3809 = vpack.c.b16 %v2929, %v2924
    %v3810 = vpack.c.b16 %v2930, %v2925
    %v3811 = vpack.c.b16 %v2931, %v2926
    %v3812 = vpack.c.b16 %v2932, %v2927
    %v3813 = vpack.c.b16 %v2938, %v2933
    %v3814 = vpack.c.b16 %v2939, %v2934
    %v3815 = vpack.c.b16 %v2940, %v2935
    %v3816 = vpack.c.b16 %v2941, %v2936
    %v3817 = vpack.c.b16 %v2942, %v2937
    %v3818 = vpack.c.b16 %v2948, %v2943
    %v3819 = vpack.c.b16 %v2949, %v2944
    %v3820 = vpack.c.b16 %v2950, %v2945
    %v3821 = vpack.c.b16 %v2951, %v2946
    %v3822 = vpack.c.b16 %v2952, %v2947
    %v3823 = vpack.c.b16 %v2958, %v2953
    %v3824 = vpack.c.b16 %v2959, %v2954
    %v3825 = vpack.c.b16 %v2960, %v2955
    %v3826 = vpack.c.b16 %v2961, %v2956
    %v3827 = vpack.c.b16 %v2962, %v2957
    %v3828 = vpack.c.b16 %v2968, %v2963
    %v3829 = vpack.c.b16 %v2969, %v2964
    %v3830 = vpack.c.b16 %v2970, %v2965
    %v3831 = vpack.c.b16 %v2971, %v2966
    %v3832 = vpack.c.b16 %v2972, %v2967
    %v3833 = vpack.c.b16 %v2978, %v2973
    %v3834 = vpack.c.b16 %v2979, %v2974
    %v3835 = vpack.c.b16 %v2980, %v2975
    %v3836 = vpack.c.b16 %v2981, %v2976
    %v3837 = vpack.c.b16 %v2982, %v2977
    %v3838 = vpack.c.b16 %v2988, %v2983
    %v3839 = vpack.c.b16 %v2989, %v2984
    %v3840 = vpack.c.b16 %v2990, %v2985
    %v3841 = vpack.c.b16 %v2991, %v2986
    %v3842 = vpack.c.b16 %v2992, %v2987
    %v3843 = vpack.c.b16 %v2998, %v2993
    %v3844 = vpack.c.b16 %v2999, %v2994
    %v3845 = vpack.c.b16 %v3000, %v2995
    %v3846 = vpack.c.b16 %v3001, %v2996
    %v3847 = vpack.c.b16 %v3002, %v2997
    %v3848 = vpack.c.b16 %v3008, %v3003
    %v3849 = vpack.c.b16 %v3009, %v3004
    %v3850 = vpack.c.b16 %v3010, %v3005
    %v3851 = vpack.c.b16 %v3011, %v3006
    %v3852 = vpack.c.b16 %v3012, %v3007
    %v3853 = vpack.c.b16 %v3018, %v3013
    %v3854 = vpack.c.b16 %v3019, %v3014
    %v3855 = vpack.c.b16 %v3020, %v3015
    %v3856 = vpack.c.b16 %v3021, %v3016
    %v3857 = vpack.c.b16 %v3022, %v3017
    %v3858 = vpack.c.b16 %v3028, %v3023
    %v3859 = vpack.c.b16 %v3029, %v3024
    %v3860 = vpack.c.b16 %v3030, %v3025
    %v3861 = vpack.c.b16 %v3031, %v3026
    %v3862 = vpack.c.b16 %v3032, %v3027
    %v3863 = vpack.c.b16 %v3038, %v3033
    %v3864 = vpack.c.b16 %v3039, %v3034
    %v3865 = vpack.c.b16 %v3040, %v3035
    %v3866 = vpack.c.b16 %v3041, %v3036
    %v3867 = vpack.c.b16 %v3042, %v3037
    %v3868 = vpack.c.b16 %v3048, %v3043
    %v3869 = vpack.c.b16 %v3049, %v3044
    %v3870 = vpack.c.b16 %v3050, %v3045
    %v3871 = vpack.c.b16 %v3051, %v3046
    %v3872 = vpack.c.b16 %v3052, %v3047
    %v3873 = vpack.c.b16 %v3058, %v3053
    %v3874 = vpack.c.b16 %v3059, %v3054
    %v3875 = vpack.c.b16 %v3060, %v3055
    %v3876 = vpack.c.b16 %v3061, %v3056
    %v3877 = vpack.c.b16 %v3062, %v3057
    %v3878 = vpack.c.b16 %v3068, %v3063
    %v3879 = vpack.c.b16 %v3069, %v3064
    %v3880 = vpack.c.b16 %v3070, %v3065
    %v3881 = vpack.c.b16 %v3071, %v3066
    %v3882 = vpack.c.b16 %v3072, %v3067
    %v3883 = vpack.c.b16 %v3078, %v3073
    %v3884 = vpack.c.b16 %v3079, %v3074
    %v3885 = vpack.c.b16 %v3080, %v3075
    %v3886 = vpack.c.b16 %v3081, %v3076
    %v3887 = vpack.c.b16 %v3082, %v3077
    %v3888 = vpack.c.b16 %v3088, %v3083
    %v3889 = vpack.c.b16 %v3089, %v3084
    %v3890 = vpack.c.b16 %v3090, %v3085
    %v3891 = vpack.c.b16 %v3091, %v3086
    %v3892 = vpack.c.b16 %v3092, %v3087
    %v3893 = vpack.c.b16 %v3098, %v3093
    %v3894 = vpack.c.b16 %v3099, %v3094
    %v3895 = vpack.c.b16 %v3100, %v3095
    %v3896 = vpack.c.b16 %v3101, %v3096
    %v3897 = vpack.c.b16 %v3102, %v3097
    %v3898 = vpack.c.b16 %v3108, %v3103
    %v3899 = vpack.c.b16 %v3109, %v3104
    %v3900 = vpack.c.b16 %v3110, %v3105
    %v3901 = vpack.c.b16 %v3111, %v3106
    %v3902 = vpack.c.b16 %v3112, %v3107
    %v3903 = vpack.c.b16 %v3118, %v3113
    %v3904 = vpack.c.b16 %v3119, %v3114
    %v3905 = vpack.c.b16 %v3120, %v3115
    %v3906 = vpack.c.b16 %v3121, %v3116
    %v3907 = vpack.c.b16 %v3122, %v3117
    %v3908 = vpack.c.b16 %v3128, %v3123
    %v3909 = vpack.c.b16 %v3129, %v3124
    %v3910 = vpack.c.b16 %v3130, %v3125
    %v3911 = vpack.c.b16 %v3131, %v3126
    %v3912 = vpack.c.b16 %v3132, %v3127
    %v3913 = vpack.c.b16 %v3138, %v3133
    %v3914 = vpack.c.b16 %v3139, %v3134
    %v3915 = vpack.c.b16 %v3140, %v3135
    %v3916 = vpack.c.b16 %v3141, %v3136
    %v3917 = vpack.c.b16 %v3142, %v3137
    %v3918 = vpack.c.b16 %v3148, %v3143
    %v3919 = vpack.c.b16 %v3149, %v3144
    %v3920 = vpack.c.b16 %v3150, %v3145
    %v3921 = vpack.c.b16 %v3151, %v3146
    %v3922 = vpack.c.b16 %v3152, %v3147
    %v3923 = vpack.c.b16 %v3158, %v3153
    %v3924 = vpack.c.b16 %v3159, %v3154
    %v3925 = vpack.c.b16 %v3160, %v3155
    %v3926 = vpack.c.b16 %v3161, %v3156
    %v3927 = vpack.c.b16 %v3162, %v3157
    %v3928 = vpack.c.b16 %v3168, %v3163
    %v3929 = vpack.c.b16 %v3169, %v3164
    %v3930 = vpack.c.b16 %v3170, %v3165
    %v3931 = vpack.c.b16 %v3171, %v3166
    %v3932 = vpack.c.b16 %v3172, %v3167
    %v3933 = vpack.c.b16 %v3178, %v3173
    %v3934 = vpack.c.b16 %v3179, %v3174
    %v3935 = vpack.c.b16 %v3180, %v3175
    %v3936 = vpack.c.b16 %v3181, %v3176
    %v3937 = vpack.c.b16 %v3182, %v3177
    %v3938 = vpack.c.b16 %v3188, %v3183
    %v3939 = vpack.c.b16 %v3189, %v3184
    %v3940 = vpack.c.b16 %v3190, %v3185
    %v3941 = vpack.c.b16 %v3191, %v3186
    %v3942 = vpack.c.b16 %v3192, %v3187
    %v3943 = vpack.c.b16 %v3198, %v3193
    %v3944 = vpack.c.b16 %v3199, %v3194
    %v3945 = vpack.c.b16 %v3200, %v3195
    %v3946 = vpack.c.b16 %v3201, %v3196
    %v3947 = vpack.c.b16 %v3202, %v3197
    %v3948 = vpack.c.b16 %v3208, %v3203
    %v3949 = vpack.c.b16 %v3209, %v3204
    %v3950 = vpack.c.b16 %v3210, %v3205
    %v3951 = vpack.c.b16 %v3211, %v3206
    %v3952 = vpack.c.b16 %v3212, %v3207
    %v3953 = vpack.c.b16 %v3218, %v3213
    %v3954 = vpack.c.b16 %v3219, %v3214
    %v3955 = vpack.c.b16 %v3220, %v3215
    %v3956 = vpack.c.b16 %v3221, %v3216
    %v3957 = vpack.c.b16 %v3222, %v3217
    %v3958 = vpack.c.b16 %v3228, %v3223
    %v3959 = vpack.c.b16 %v3229, %v3224
    %v3960 = vpack.c.b16 %v3230, %v3225
    %v3961 = vpack.c.b16 %v3231, %v3226
    %v3962 = vpack.c.b16 %v3232, %v3227
    %v3963 = vpack.c.b16 %v3238, %v3233
    %v3964 = vpack.c.b16 %v3239, %v3234
    %v3965 = vpack.c.b16 %v3240, %v3235
    %v3966 = vpack.c.b16 %v3241, %v3236
    %v3967 = vpack.c.b16 %v3242, %v3237
    %v3968 = vpack.c.b16 %v3248, %v3243
    %v3969 = vpack.c.b16 %v3249, %v3244
    %v3970 = vpack.c.b16 %v3250, %v3245
    %v3971 = vpack.c.b16 %v3251, %v3246
    %v3972 = vpack.c.b16 %v3252, %v3247
    %4693 = vmatpush.bf16.msra.mxu0 %v3288
    %4694 = vmatpush.bf16.msra.mxu0 %v3283
    %4695 = vmatpush.bf16.msra.mxu0 %v3278
    %4696 = vmatpush.bf16.msra.mxu0 %v3273
    %4697 = vmatpush.bf16.msra.mxu0 %v3268
    %4698 = vmatpush.bf16.msra.mxu0 %v3263
    %4699 = vmatpush.bf16.msra.mxu0 %v3258
    %4700 = vmatpush.bf16.msra.mxu0 %v3253
    %4701 = vmatmul.bf16.gmra.mxu0 %v909
    %v4702 = vpop.f32.mrf.mxu0
    %v4703 = vadd.f32 %v897, %v4702
    %v4704 = vpop.f32.mrf.mxu0
    %4705 = vdwg.mxu0
    %4706 = vmatpush.bf16.msra.mxu0 %v3328
    %4707 = vmatpush.bf16.msra.mxu0 %v3323
    %4708 = vmatpush.bf16.msra.mxu0 %v3318
    %4709 = vmatpush.bf16.msra.mxu0 %v3313
    %4710 = vmatpush.bf16.msra.mxu0 %v3308
    %4711 = vmatpush.bf16.msra.mxu0 %v3303
    %4712 = vmatpush.bf16.msra.mxu0 %v3298
    %4713 = vmatpush.bf16.msra.mxu0 %v3293
    %4714 = vmatmul.bf16.gmra.mxu0 %v910
    %v4715 = vpop.f32.mrf.mxu0
    %v4716 = vadd.f32 %v4703, %v4715
    %v4717 = vpop.f32.mrf.mxu0
    %4718 = vdwg.mxu0
    %4719 = vmatpush.bf16.msra.mxu0 %v3368
    %4720 = vmatpush.bf16.msra.mxu0 %v3363
    %4721 = vmatpush.bf16.msra.mxu0 %v3358
    %4722 = vmatpush.bf16.msra.mxu0 %v3353
    %4723 = vmatpush.bf16.msra.mxu0 %v3348
    %4724 = vmatpush.bf16.msra.mxu0 %v3343
    %4725 = vmatpush.bf16.msra.mxu0 %v3338
    %4726 = vmatpush.bf16.msra.mxu0 %v3333
    %4727 = vmatmul.bf16.gmra.mxu0 %v911
    %v4728 = vpop.f32.mrf.mxu0
    %v4729 = vadd.f32 %v4716, %v4728
    %v4730 = vpop.f32.mrf.mxu0
    %4731 = vdwg.mxu0
    %4732 = vmatpush.bf16.msra.mxu0 %v3408
    %4733 = vmatpush.bf16.msra.mxu0 %v3403
    %4734 = vmatpush.bf16.msra.mxu0 %v3398
    %4735 = vmatpush.bf16.msra.mxu0 %v3393
    %4736 = vmatpush.bf16.msra.mxu0 %v3388
    %4737 = vmatpush.bf16.msra.mxu0 %v3383
    %4738 = vmatpush.bf16.msra.mxu0 %v3378
    %4739 = vmatpush.bf16.msra.mxu0 %v3373
    %4740 = vmatmul.bf16.gmra.mxu0 %v912
    %v4741 = vpop.f32.mrf.mxu0
    %v4742 = vadd.f32 %v4729, %v4741
    %v4743 = vpop.f32.mrf.mxu0
    %4744 = vdwg.mxu0
    %4745 = vmatpush.bf16.msra.mxu0 %v3448
    %4746 = vmatpush.bf16.msra.mxu0 %v3443
    %4747 = vmatpush.bf16.msra.mxu0 %v3438
    %4748 = vmatpush.bf16.msra.mxu0 %v3433
    %4749 = vmatpush.bf16.msra.mxu0 %v3428
    %4750 = vmatpush.bf16.msra.mxu0 %v3423
    %4751 = vmatpush.bf16.msra.mxu0 %v3418
    %4752 = vmatpush.bf16.msra.mxu0 %v3413
    %4753 = vmatmul.bf16.gmra.mxu0 %v913
    %v4754 = vpop.f32.mrf.mxu0
    %v4755 = vadd.f32 %v4742, %v4754
    %v4756 = vpop.f32.mrf.mxu0
    %4757 = vdwg.mxu0
    %4758 = vmatpush.bf16.msra.mxu0 %v3488
    %4759 = vmatpush.bf16.msra.mxu0 %v3483
    %4760 = vmatpush.bf16.msra.mxu0 %v3478
    %4761 = vmatpush.bf16.msra.mxu0 %v3473
    %4762 = vmatpush.bf16.msra.mxu0 %v3468
    %4763 = vmatpush.bf16.msra.mxu0 %v3463
    %4764 = vmatpush.bf16.msra.mxu0 %v3458
    %4765 = vmatpush.bf16.msra.mxu0 %v3453
    %4766 = vmatmul.bf16.gmra.mxu0 %v914
    %v4767 = vpop.f32.mrf.mxu0
    %v4768 = vadd.f32 %v4755, %v4767
    %v4769 = vpop.f32.mrf.mxu0
    %4770 = vdwg.mxu0
    %4771 = vmatpush.bf16.msra.mxu0 %v3528
    %4772 = vmatpush.bf16.msra.mxu0 %v3523
    %4773 = vmatpush.bf16.msra.mxu0 %v3518
    %4774 = vmatpush.bf16.msra.mxu0 %v3513
    %4775 = vmatpush.bf16.msra.mxu0 %v3508
    %4776 = vmatpush.bf16.msra.mxu0 %v3503
    %4777 = vmatpush.bf16.msra.mxu0 %v3498
    %4778 = vmatpush.bf16.msra.mxu0 %v3493
    %4779 = vmatmul.bf16.gmra.mxu0 %v915
    %v4780 = vpop.f32.mrf.mxu0
    %v4781 = vadd.f32 %v4768, %v4780
    %v4782 = vpop.f32.mrf.mxu0
    %4783 = vdwg.mxu0
    %4784 = vmatpush.bf16.msra.mxu0 %v3568
    %4785 = vmatpush.bf16.msra.mxu0 %v3563
    %4786 = vmatpush.bf16.msra.mxu0 %v3558
    %4787 = vmatpush.bf16.msra.mxu0 %v3553
    %4788 = vmatpush.bf16.msra.mxu0 %v3548
    %4789 = vmatpush.bf16.msra.mxu0 %v3543
    %4790 = vmatpush.bf16.msra.mxu0 %v3538
    %4791 = vmatpush.bf16.msra.mxu0 %v3533
    %4792 = vmatmul.bf16.gmra.mxu0 %v916
    %v4793 = vpop.f32.mrf.mxu0
    %v4794 = vadd.f32 %v4781, %v4793
    %v4795 = vpop.f32.mrf.mxu0
    %4796 = vdwg.mxu0
    %4797 = vmatpush.bf16.msra.mxu0 %v3608
    %4798 = vmatpush.bf16.msra.mxu0 %v3603
    %4799 = vmatpush.bf16.msra.mxu0 %v3598
    %4800 = vmatpush.bf16.msra.mxu0 %v3593
    %4801 = vmatpush.bf16.msra.mxu0 %v3588
    %4802 = vmatpush.bf16.msra.mxu0 %v3583
    %4803 = vmatpush.bf16.msra.mxu0 %v3578
    %4804 = vmatpush.bf16.msra.mxu0 %v3573
    %4805 = vmatmul.bf16.gmra.mxu0 %v919
    %v4806 = vpop.f32.mrf.mxu0
    %v4807 = vadd.f32 %v4794, %v4806
    %v4808 = vpop.f32.mrf.mxu0
    %4809 = vdwg.mxu0
    %4810 = vmatpush.bf16.msra.mxu0 %v3648
    %4811 = vmatpush.bf16.msra.mxu0 %v3643
    %4812 = vmatpush.bf16.msra.mxu0 %v3638
    %4813 = vmatpush.bf16.msra.mxu0 %v3633
    %4814 = vmatpush.bf16.msra.mxu0 %v3628
    %4815 = vmatpush.bf16.msra.mxu0 %v3623
    %4816 = vmatpush.bf16.msra.mxu0 %v3618
    %4817 = vmatpush.bf16.msra.mxu0 %v3613
    %4818 = vmatmul.bf16.gmra.mxu0 %v920
    %v4819 = vpop.f32.mrf.mxu0
    %v4820 = vadd.f32 %v4807, %v4819
    %v4821 = vpop.f32.mrf.mxu0
    %4822 = vdwg.mxu0
    %4823 = vmatpush.bf16.msra.mxu0 %v3688
    %4824 = vmatpush.bf16.msra.mxu0 %v3683
    %4825 = vmatpush.bf16.msra.mxu0 %v3678
    %4826 = vmatpush.bf16.msra.mxu0 %v3673
    %4827 = vmatpush.bf16.msra.mxu0 %v3668
    %4828 = vmatpush.bf16.msra.mxu0 %v3663
    %4829 = vmatpush.bf16.msra.mxu0 %v3658
    %4830 = vmatpush.bf16.msra.mxu0 %v3653
    %4831 = vmatmul.bf16.gmra.mxu0 %v921
    %v4832 = vpop.f32.mrf.mxu0
    %v4833 = vadd.f32 %v4820, %v4832
    %v4834 = vpop.f32.mrf.mxu0
    %4835 = vdwg.mxu0
    %4836 = vmatpush.bf16.msra.mxu0 %v3728
    %4837 = vmatpush.bf16.msra.mxu0 %v3723
    %4838 = vmatpush.bf16.msra.mxu0 %v3718
    %4839 = vmatpush.bf16.msra.mxu0 %v3713
    %4840 = vmatpush.bf16.msra.mxu0 %v3708
    %4841 = vmatpush.bf16.msra.mxu0 %v3703
    %4842 = vmatpush.bf16.msra.mxu0 %v3698
    %4843 = vmatpush.bf16.msra.mxu0 %v3693
    %4844 = vmatmul.bf16.gmra.mxu0 %v922
    %v4845 = vpop.f32.mrf.mxu0
    %v4846 = vadd.f32 %v4833, %v4845
    %v4847 = vpop.f32.mrf.mxu0
    %4848 = vdwg.mxu0
    %4849 = vmatpush.bf16.msra.mxu0 %v3768
    %4850 = vmatpush.bf16.msra.mxu0 %v3763
    %4851 = vmatpush.bf16.msra.mxu0 %v3758
    %4852 = vmatpush.bf16.msra.mxu0 %v3753
    %4853 = vmatpush.bf16.msra.mxu0 %v3748
    %4854 = vmatpush.bf16.msra.mxu0 %v3743
    %4855 = vmatpush.bf16.msra.mxu0 %v3738
    %4856 = vmatpush.bf16.msra.mxu0 %v3733
    %4857 = vmatmul.bf16.gmra.mxu0 %v923
    %v4858 = vpop.f32.mrf.mxu0
    %v4859 = vadd.f32 %v4846, %v4858
    %v4860 = vpop.f32.mrf.mxu0
    %4861 = vdwg.mxu0
    %4862 = vmatpush.bf16.msra.mxu0 %v3808
    %4863 = vmatpush.bf16.msra.mxu0 %v3803
    %4864 = vmatpush.bf16.msra.mxu0 %v3798
    %4865 = vmatpush.bf16.msra.mxu0 %v3793
    %4866 = vmatpush.bf16.msra.mxu0 %v3788
    %4867 = vmatpush.bf16.msra.mxu0 %v3783
    %4868 = vmatpush.bf16.msra.mxu0 %v3778
    %4869 = vmatpush.bf16.msra.mxu0 %v3773
    %4870 = vmatmul.bf16.gmra.mxu0 %v924
    %v4871 = vpop.f32.mrf.mxu0
    %v4872 = vadd.f32 %v4859, %v4871
    %v4873 = vpop.f32.mrf.mxu0
    %4874 = vdwg.mxu0
    %4875 = vmatpush.bf16.msra.mxu0 %v3848
    %4876 = vmatpush.bf16.msra.mxu0 %v3843
    %4877 = vmatpush.bf16.msra.mxu0 %v3838
    %4878 = vmatpush.bf16.msra.mxu0 %v3833
    %4879 = vmatpush.bf16.msra.mxu0 %v3828
    %4880 = vmatpush.bf16.msra.mxu0 %v3823
    %4881 = vmatpush.bf16.msra.mxu0 %v3818
    %4882 = vmatpush.bf16.msra.mxu0 %v3813
    %4883 = vmatmul.bf16.gmra.mxu0 %v925
    %v4884 = vpop.f32.mrf.mxu0
    %v4885 = vadd.f32 %v4872, %v4884
    %v4886 = vpop.f32.mrf.mxu0
    %4887 = vdwg.mxu0
    %4888 = vmatpush.bf16.msra.mxu0 %v3888
    %4889 = vmatpush.bf16.msra.mxu0 %v3883
    %4890 = vmatpush.bf16.msra.mxu0 %v3878
    %4891 = vmatpush.bf16.msra.mxu0 %v3873
    %4892 = vmatpush.bf16.msra.mxu0 %v3868
    %4893 = vmatpush.bf16.msra.mxu0 %v3863
    %4894 = vmatpush.bf16.msra.mxu0 %v3858
    %4895 = vmatpush.bf16.msra.mxu0 %v3853
    %4896 = vmatmul.bf16.gmra.mxu0 %v926
    %v4897 = vpop.f32.mrf.mxu0
    %v4898 = vadd.f32 %v4885, %v4897
    %v4899 = vpop.f32.mrf.mxu0
    %4900 = vdwg.mxu0
    %4901 = vmatpush.bf16.msra.mxu0 %v3928
    %4902 = vmatpush.bf16.msra.mxu0 %v3923
    %4903 = vmatpush.bf16.msra.mxu0 %v3918
    %4904 = vmatpush.bf16.msra.mxu0 %v3913
    %4905 = vmatpush.bf16.msra.mxu0 %v3908
    %4906 = vmatpush.bf16.msra.mxu0 %v3903
    %4907 = vmatpush.bf16.msra.mxu0 %v3898
    %4908 = vmatpush.bf16.msra.mxu0 %v3893
    %4909 = vmatmul.bf16.gmra.mxu0 %v929
    %v4910 = vpop.f32.mrf.mxu0
    %v4911 = vadd.f32 %v4898, %v4910
    %v4912 = vpop.f32.mrf.mxu0
    %4913 = vdwg.mxu0
    %4914 = vmatpush.bf16.msra.mxu0 %v3968
    %4915 = vmatpush.bf16.msra.mxu0 %v3963
    %4916 = vmatpush.bf16.msra.mxu0 %v3958
    %4917 = vmatpush.bf16.msra.mxu0 %v3953
    %4918 = vmatpush.bf16.msra.mxu0 %v3948
    %4919 = vmatpush.bf16.msra.mxu0 %v3943
    %4920 = vmatpush.bf16.msra.mxu0 %v3938
    %4921 = vmatpush.bf16.msra.mxu0 %v3933
    %4922 = vmatmul.bf16.gmra.mxu0 %v930
    %v4923 = vpop.f32.mrf.mxu0
    %v4924 = vadd.f32 %v4911, %v4923
    %v4925 = vpop.f32.mrf.mxu0
    %4926 = vdwg.mxu0
    %4927 = vmatpush.bf16.msra.mxu0 %v3289
    %4928 = vmatpush.bf16.msra.mxu0 %v3284
    %4929 = vmatpush.bf16.msra.mxu0 %v3279
    %4930 = vmatpush.bf16.msra.mxu0 %v3274
    %4931 = vmatpush.bf16.msra.mxu0 %v3269
    %4932 = vmatpush.bf16.msra.mxu0 %v3264
    %4933 = vmatpush.bf16.msra.mxu0 %v3259
    %4934 = vmatpush.bf16.msra.mxu0 %v3254
    %4935 = vmatmul.bf16.gmra.mxu0 %v909
    %v4936 = vpop.f32.mrf.mxu0
    %v4937 = vadd.f32 %v898, %v4936
    %v4938 = vpop.f32.mrf.mxu0
    %4939 = vdwg.mxu0
    %4940 = vmatpush.bf16.msra.mxu0 %v3329
    %4941 = vmatpush.bf16.msra.mxu0 %v3324
    %4942 = vmatpush.bf16.msra.mxu0 %v3319
    %4943 = vmatpush.bf16.msra.mxu0 %v3314
    %4944 = vmatpush.bf16.msra.mxu0 %v3309
    %4945 = vmatpush.bf16.msra.mxu0 %v3304
    %4946 = vmatpush.bf16.msra.mxu0 %v3299
    %4947 = vmatpush.bf16.msra.mxu0 %v3294
    %4948 = vmatmul.bf16.gmra.mxu0 %v910
    %v4949 = vpop.f32.mrf.mxu0
    %v4950 = vadd.f32 %v4937, %v4949
    %v4951 = vpop.f32.mrf.mxu0
    %4952 = vdwg.mxu0
    %4953 = vmatpush.bf16.msra.mxu0 %v3369
    %4954 = vmatpush.bf16.msra.mxu0 %v3364
    %4955 = vmatpush.bf16.msra.mxu0 %v3359
    %4956 = vmatpush.bf16.msra.mxu0 %v3354
    %4957 = vmatpush.bf16.msra.mxu0 %v3349
    %4958 = vmatpush.bf16.msra.mxu0 %v3344
    %4959 = vmatpush.bf16.msra.mxu0 %v3339
    %4960 = vmatpush.bf16.msra.mxu0 %v3334
    %4961 = vmatmul.bf16.gmra.mxu0 %v911
    %v4962 = vpop.f32.mrf.mxu0
    %v4963 = vadd.f32 %v4950, %v4962
    %v4964 = vpop.f32.mrf.mxu0
    %4965 = vdwg.mxu0
    %4966 = vmatpush.bf16.msra.mxu0 %v3409
    %4967 = vmatpush.bf16.msra.mxu0 %v3404
    %4968 = vmatpush.bf16.msra.mxu0 %v3399
    %4969 = vmatpush.bf16.msra.mxu0 %v3394
    %4970 = vmatpush.bf16.msra.mxu0 %v3389
    %4971 = vmatpush.bf16.msra.mxu0 %v3384
    %4972 = vmatpush.bf16.msra.mxu0 %v3379
    %4973 = vmatpush.bf16.msra.mxu0 %v3374
    %4974 = vmatmul.bf16.gmra.mxu0 %v912
    %v4975 = vpop.f32.mrf.mxu0
    %v4976 = vadd.f32 %v4963, %v4975
    %v4977 = vpop.f32.mrf.mxu0
    %4978 = vdwg.mxu0
    %4979 = vmatpush.bf16.msra.mxu0 %v3449
    %4980 = vmatpush.bf16.msra.mxu0 %v3444
    %4981 = vmatpush.bf16.msra.mxu0 %v3439
    %4982 = vmatpush.bf16.msra.mxu0 %v3434
    %4983 = vmatpush.bf16.msra.mxu0 %v3429
    %4984 = vmatpush.bf16.msra.mxu0 %v3424
    %4985 = vmatpush.bf16.msra.mxu0 %v3419
    %4986 = vmatpush.bf16.msra.mxu0 %v3414
    %4987 = vmatmul.bf16.gmra.mxu0 %v913
    %v4988 = vpop.f32.mrf.mxu0
    %v4989 = vadd.f32 %v4976, %v4988
    %v4990 = vpop.f32.mrf.mxu0
    %4991 = vdwg.mxu0
    %4992 = vmatpush.bf16.msra.mxu0 %v3489
    %4993 = vmatpush.bf16.msra.mxu0 %v3484
    %4994 = vmatpush.bf16.msra.mxu0 %v3479
    %4995 = vmatpush.bf16.msra.mxu0 %v3474
    %4996 = vmatpush.bf16.msra.mxu0 %v3469
    %4997 = vmatpush.bf16.msra.mxu0 %v3464
    %4998 = vmatpush.bf16.msra.mxu0 %v3459
    %4999 = vmatpush.bf16.msra.mxu0 %v3454
    %5000 = vmatmul.bf16.gmra.mxu0 %v914
    %v5001 = vpop.f32.mrf.mxu0
    %v5002 = vadd.f32 %v4989, %v5001
    %v5003 = vpop.f32.mrf.mxu0
    %5004 = vdwg.mxu0
    %5005 = vmatpush.bf16.msra.mxu0 %v3529
    %5006 = vmatpush.bf16.msra.mxu0 %v3524
    %5007 = vmatpush.bf16.msra.mxu0 %v3519
    %5008 = vmatpush.bf16.msra.mxu0 %v3514
    %5009 = vmatpush.bf16.msra.mxu0 %v3509
    %5010 = vmatpush.bf16.msra.mxu0 %v3504
    %5011 = vmatpush.bf16.msra.mxu0 %v3499
    %5012 = vmatpush.bf16.msra.mxu0 %v3494
    %5013 = vmatmul.bf16.gmra.mxu0 %v915
    %v5014 = vpop.f32.mrf.mxu0
    %v5015 = vadd.f32 %v5002, %v5014
    %v5016 = vpop.f32.mrf.mxu0
    %5017 = vdwg.mxu0
    %5018 = vmatpush.bf16.msra.mxu0 %v3569
    %5019 = vmatpush.bf16.msra.mxu0 %v3564
    %5020 = vmatpush.bf16.msra.mxu0 %v3559
    %5021 = vmatpush.bf16.msra.mxu0 %v3554
    %5022 = vmatpush.bf16.msra.mxu0 %v3549
    %5023 = vmatpush.bf16.msra.mxu0 %v3544
    %5024 = vmatpush.bf16.msra.mxu0 %v3539
    %5025 = vmatpush.bf16.msra.mxu0 %v3534
    %5026 = vmatmul.bf16.gmra.mxu0 %v916
    %v5027 = vpop.f32.mrf.mxu0
    %v5028 = vadd.f32 %v5015, %v5027
    %v5029 = vpop.f32.mrf.mxu0
    %5030 = vdwg.mxu0
    %5031 = vmatpush.bf16.msra.mxu0 %v3609
    %5032 = vmatpush.bf16.msra.mxu0 %v3604
    %5033 = vmatpush.bf16.msra.mxu0 %v3599
    %5034 = vmatpush.bf16.msra.mxu0 %v3594
    %5035 = vmatpush.bf16.msra.mxu0 %v3589
    %5036 = vmatpush.bf16.msra.mxu0 %v3584
    %5037 = vmatpush.bf16.msra.mxu0 %v3579
    %5038 = vmatpush.bf16.msra.mxu0 %v3574
    %5039 = vmatmul.bf16.gmra.mxu0 %v919
    %v5040 = vpop.f32.mrf.mxu0
    %v5041 = vadd.f32 %v5028, %v5040
    %v5042 = vpop.f32.mrf.mxu0
    %5043 = vdwg.mxu0
    %5044 = vmatpush.bf16.msra.mxu0 %v3649
    %5045 = vmatpush.bf16.msra.mxu0 %v3644
    %5046 = vmatpush.bf16.msra.mxu0 %v3639
    %5047 = vmatpush.bf16.msra.mxu0 %v3634
    %5048 = vmatpush.bf16.msra.mxu0 %v3629
    %5049 = vmatpush.bf16.msra.mxu0 %v3624
    %5050 = vmatpush.bf16.msra.mxu0 %v3619
    %5051 = vmatpush.bf16.msra.mxu0 %v3614
    %5052 = vmatmul.bf16.gmra.mxu0 %v920
    %v5053 = vpop.f32.mrf.mxu0
    %v5054 = vadd.f32 %v5041, %v5053
    %v5055 = vpop.f32.mrf.mxu0
    %5056 = vdwg.mxu0
    %5057 = vmatpush.bf16.msra.mxu0 %v3689
    %5058 = vmatpush.bf16.msra.mxu0 %v3684
    %5059 = vmatpush.bf16.msra.mxu0 %v3679
    %5060 = vmatpush.bf16.msra.mxu0 %v3674
    %5061 = vmatpush.bf16.msra.mxu0 %v3669
    %5062 = vmatpush.bf16.msra.mxu0 %v3664
    %5063 = vmatpush.bf16.msra.mxu0 %v3659
    %5064 = vmatpush.bf16.msra.mxu0 %v3654
    %5065 = vmatmul.bf16.gmra.mxu0 %v921
    %v5066 = vpop.f32.mrf.mxu0
    %v5067 = vadd.f32 %v5054, %v5066
    %v5068 = vpop.f32.mrf.mxu0
    %5069 = vdwg.mxu0
    %5070 = vmatpush.bf16.msra.mxu0 %v3729
    %5071 = vmatpush.bf16.msra.mxu0 %v3724
    %5072 = vmatpush.bf16.msra.mxu0 %v3719
    %5073 = vmatpush.bf16.msra.mxu0 %v3714
    %5074 = vmatpush.bf16.msra.mxu0 %v3709
    %5075 = vmatpush.bf16.msra.mxu0 %v3704
    %5076 = vmatpush.bf16.msra.mxu0 %v3699
    %5077 = vmatpush.bf16.msra.mxu0 %v3694
    %5078 = vmatmul.bf16.gmra.mxu0 %v922
    %v5079 = vpop.f32.mrf.mxu0
    %v5080 = vadd.f32 %v5067, %v5079
    %v5081 = vpop.f32.mrf.mxu0
    %5082 = vdwg.mxu0
    %5083 = vmatpush.bf16.msra.mxu0 %v3769
    %5084 = vmatpush.bf16.msra.mxu0 %v3764
    %5085 = vmatpush.bf16.msra.mxu0 %v3759
    %5086 = vmatpush.bf16.msra.mxu0 %v3754
    %5087 = vmatpush.bf16.msra.mxu0 %v3749
    %5088 = vmatpush.bf16.msra.mxu0 %v3744
    %5089 = vmatpush.bf16.msra.mxu0 %v3739
    %5090 = vmatpush.bf16.msra.mxu0 %v3734
    %5091 = vmatmul.bf16.gmra.mxu0 %v923
    %v5092 = vpop.f32.mrf.mxu0
    %v5093 = vadd.f32 %v5080, %v5092
    %v5094 = vpop.f32.mrf.mxu0
    %5095 = vdwg.mxu0
    %5096 = vmatpush.bf16.msra.mxu0 %v3809
    %5097 = vmatpush.bf16.msra.mxu0 %v3804
    %5098 = vmatpush.bf16.msra.mxu0 %v3799
    %5099 = vmatpush.bf16.msra.mxu0 %v3794
    %5100 = vmatpush.bf16.msra.mxu0 %v3789
    %5101 = vmatpush.bf16.msra.mxu0 %v3784
    %5102 = vmatpush.bf16.msra.mxu0 %v3779
    %5103 = vmatpush.bf16.msra.mxu0 %v3774
    %5104 = vmatmul.bf16.gmra.mxu0 %v924
    %v5105 = vpop.f32.mrf.mxu0
    %v5106 = vadd.f32 %v5093, %v5105
    %v5107 = vpop.f32.mrf.mxu0
    %5108 = vdwg.mxu0
    %5109 = vmatpush.bf16.msra.mxu0 %v3849
    %5110 = vmatpush.bf16.msra.mxu0 %v3844
    %5111 = vmatpush.bf16.msra.mxu0 %v3839
    %5112 = vmatpush.bf16.msra.mxu0 %v3834
    %5113 = vmatpush.bf16.msra.mxu0 %v3829
    %5114 = vmatpush.bf16.msra.mxu0 %v3824
    %5115 = vmatpush.bf16.msra.mxu0 %v3819
    %5116 = vmatpush.bf16.msra.mxu0 %v3814
    %5117 = vmatmul.bf16.gmra.mxu0 %v925
    %v5118 = vpop.f32.mrf.mxu0
    %v5119 = vadd.f32 %v5106, %v5118
    %v5120 = vpop.f32.mrf.mxu0
    %5121 = vdwg.mxu0
    %5122 = vmatpush.bf16.msra.mxu0 %v3889
    %5123 = vmatpush.bf16.msra.mxu0 %v3884
    %5124 = vmatpush.bf16.msra.mxu0 %v3879
    %5125 = vmatpush.bf16.msra.mxu0 %v3874
    %5126 = vmatpush.bf16.msra.mxu0 %v3869
    %5127 = vmatpush.bf16.msra.mxu0 %v3864
    %5128 = vmatpush.bf16.msra.mxu0 %v3859
    %5129 = vmatpush.bf16.msra.mxu0 %v3854
    %5130 = vmatmul.bf16.gmra.mxu0 %v926
    %v5131 = vpop.f32.mrf.mxu0
    %v5132 = vadd.f32 %v5119, %v5131
    %v5133 = vpop.f32.mrf.mxu0
    %5134 = vdwg.mxu0
    %5135 = vmatpush.bf16.msra.mxu0 %v3929
    %5136 = vmatpush.bf16.msra.mxu0 %v3924
    %5137 = vmatpush.bf16.msra.mxu0 %v3919
    %5138 = vmatpush.bf16.msra.mxu0 %v3914
    %5139 = vmatpush.bf16.msra.mxu0 %v3909
    %5140 = vmatpush.bf16.msra.mxu0 %v3904
    %5141 = vmatpush.bf16.msra.mxu0 %v3899
    %5142 = vmatpush.bf16.msra.mxu0 %v3894
    %5143 = vmatmul.bf16.gmra.mxu0 %v929
    %v5144 = vpop.f32.mrf.mxu0
    %v5145 = vadd.f32 %v5132, %v5144
    %v5146 = vpop.f32.mrf.mxu0
    %5147 = vdwg.mxu0
    %5148 = vmatpush.bf16.msra.mxu0 %v3969
    %5149 = vmatpush.bf16.msra.mxu0 %v3964
    %5150 = vmatpush.bf16.msra.mxu0 %v3959
    %5151 = vmatpush.bf16.msra.mxu0 %v3954
    %5152 = vmatpush.bf16.msra.mxu0 %v3949
    %5153 = vmatpush.bf16.msra.mxu0 %v3944
    %5154 = vmatpush.bf16.msra.mxu0 %v3939
    %5155 = vmatpush.bf16.msra.mxu0 %v3934
    %5156 = vmatmul.bf16.gmra.mxu0 %v930
    %v5157 = vpop.f32.mrf.mxu0
    %v5158 = vadd.f32 %v5145, %v5157
    %v5159 = vpop.f32.mrf.mxu0
    %5160 = vdwg.mxu0
    %5161 = vmatpush.bf16.msra.mxu0 %v3290
    %5162 = vmatpush.bf16.msra.mxu0 %v3285
    %5163 = vmatpush.bf16.msra.mxu0 %v3280
    %5164 = vmatpush.bf16.msra.mxu0 %v3275
    %5165 = vmatpush.bf16.msra.mxu0 %v3270
    %5166 = vmatpush.bf16.msra.mxu0 %v3265
    %5167 = vmatpush.bf16.msra.mxu0 %v3260
    %5168 = vmatpush.bf16.msra.mxu0 %v3255
    %5169 = vmatmul.bf16.gmra.mxu0 %v909
    %v5170 = vpop.f32.mrf.mxu0
    %v5171 = vadd.f32 %v899, %v5170
    %v5172 = vpop.f32.mrf.mxu0
    %5173 = vdwg.mxu0
    %5174 = vmatpush.bf16.msra.mxu0 %v3330
    %5175 = vmatpush.bf16.msra.mxu0 %v3325
    %5176 = vmatpush.bf16.msra.mxu0 %v3320
    %5177 = vmatpush.bf16.msra.mxu0 %v3315
    %5178 = vmatpush.bf16.msra.mxu0 %v3310
    %5179 = vmatpush.bf16.msra.mxu0 %v3305
    %5180 = vmatpush.bf16.msra.mxu0 %v3300
    %5181 = vmatpush.bf16.msra.mxu0 %v3295
    %5182 = vmatmul.bf16.gmra.mxu0 %v910
    %v5183 = vpop.f32.mrf.mxu0
    %v5184 = vadd.f32 %v5171, %v5183
    %v5185 = vpop.f32.mrf.mxu0
    %5186 = vdwg.mxu0
    %5187 = vmatpush.bf16.msra.mxu0 %v3370
    %5188 = vmatpush.bf16.msra.mxu0 %v3365
    %5189 = vmatpush.bf16.msra.mxu0 %v3360
    %5190 = vmatpush.bf16.msra.mxu0 %v3355
    %5191 = vmatpush.bf16.msra.mxu0 %v3350
    %5192 = vmatpush.bf16.msra.mxu0 %v3345
    %5193 = vmatpush.bf16.msra.mxu0 %v3340
    %5194 = vmatpush.bf16.msra.mxu0 %v3335
    %5195 = vmatmul.bf16.gmra.mxu0 %v911
    %v5196 = vpop.f32.mrf.mxu0
    %v5197 = vadd.f32 %v5184, %v5196
    %v5198 = vpop.f32.mrf.mxu0
    %5199 = vdwg.mxu0
    %5200 = vmatpush.bf16.msra.mxu0 %v3410
    %5201 = vmatpush.bf16.msra.mxu0 %v3405
    %5202 = vmatpush.bf16.msra.mxu0 %v3400
    %5203 = vmatpush.bf16.msra.mxu0 %v3395
    %5204 = vmatpush.bf16.msra.mxu0 %v3390
    %5205 = vmatpush.bf16.msra.mxu0 %v3385
    %5206 = vmatpush.bf16.msra.mxu0 %v3380
    %5207 = vmatpush.bf16.msra.mxu0 %v3375
    %5208 = vmatmul.bf16.gmra.mxu0 %v912
    %v5209 = vpop.f32.mrf.mxu0
    %v5210 = vadd.f32 %v5197, %v5209
    %v5211 = vpop.f32.mrf.mxu0
    %5212 = vdwg.mxu0
    %5213 = vmatpush.bf16.msra.mxu0 %v3450
    %5214 = vmatpush.bf16.msra.mxu0 %v3445
    %5215 = vmatpush.bf16.msra.mxu0 %v3440
    %5216 = vmatpush.bf16.msra.mxu0 %v3435
    %5217 = vmatpush.bf16.msra.mxu0 %v3430
    %5218 = vmatpush.bf16.msra.mxu0 %v3425
    %5219 = vmatpush.bf16.msra.mxu0 %v3420
    %5220 = vmatpush.bf16.msra.mxu0 %v3415
    %5221 = vmatmul.bf16.gmra.mxu0 %v913
    %v5222 = vpop.f32.mrf.mxu0
    %v5223 = vadd.f32 %v5210, %v5222
    %v5224 = vpop.f32.mrf.mxu0
    %5225 = vdwg.mxu0
    %5226 = vmatpush.bf16.msra.mxu0 %v3490
    %5227 = vmatpush.bf16.msra.mxu0 %v3485
    %5228 = vmatpush.bf16.msra.mxu0 %v3480
    %5229 = vmatpush.bf16.msra.mxu0 %v3475
    %5230 = vmatpush.bf16.msra.mxu0 %v3470
    %5231 = vmatpush.bf16.msra.mxu0 %v3465
    %5232 = vmatpush.bf16.msra.mxu0 %v3460
    %5233 = vmatpush.bf16.msra.mxu0 %v3455
    %5234 = vmatmul.bf16.gmra.mxu0 %v914
    %v5235 = vpop.f32.mrf.mxu0
    %v5236 = vadd.f32 %v5223, %v5235
    %v5237 = vpop.f32.mrf.mxu0
    %5238 = vdwg.mxu0
    %5239 = vmatpush.bf16.msra.mxu0 %v3530
    %5240 = vmatpush.bf16.msra.mxu0 %v3525
    %5241 = vmatpush.bf16.msra.mxu0 %v3520
    %5242 = vmatpush.bf16.msra.mxu0 %v3515
    %5243 = vmatpush.bf16.msra.mxu0 %v3510
    %5244 = vmatpush.bf16.msra.mxu0 %v3505
    %5245 = vmatpush.bf16.msra.mxu0 %v3500
    %5246 = vmatpush.bf16.msra.mxu0 %v3495
    %5247 = vmatmul.bf16.gmra.mxu0 %v915
    %v5248 = vpop.f32.mrf.mxu0
    %v5249 = vadd.f32 %v5236, %v5248
    %v5250 = vpop.f32.mrf.mxu0
    %5251 = vdwg.mxu0
    %5252 = vmatpush.bf16.msra.mxu0 %v3570
    %5253 = vmatpush.bf16.msra.mxu0 %v3565
    %5254 = vmatpush.bf16.msra.mxu0 %v3560
    %5255 = vmatpush.bf16.msra.mxu0 %v3555
    %5256 = vmatpush.bf16.msra.mxu0 %v3550
    %5257 = vmatpush.bf16.msra.mxu0 %v3545
    %5258 = vmatpush.bf16.msra.mxu0 %v3540
    %5259 = vmatpush.bf16.msra.mxu0 %v3535
    %5260 = vmatmul.bf16.gmra.mxu0 %v916
    %v5261 = vpop.f32.mrf.mxu0
    %v5262 = vadd.f32 %v5249, %v5261
    %v5263 = vpop.f32.mrf.mxu0
    %5264 = vdwg.mxu0
    %5265 = vmatpush.bf16.msra.mxu0 %v3610
    %5266 = vmatpush.bf16.msra.mxu0 %v3605
    %5267 = vmatpush.bf16.msra.mxu0 %v3600
    %5268 = vmatpush.bf16.msra.mxu0 %v3595
    %5269 = vmatpush.bf16.msra.mxu0 %v3590
    %5270 = vmatpush.bf16.msra.mxu0 %v3585
    %5271 = vmatpush.bf16.msra.mxu0 %v3580
    %5272 = vmatpush.bf16.msra.mxu0 %v3575
    %5273 = vmatmul.bf16.gmra.mxu0 %v919
    %v5274 = vpop.f32.mrf.mxu0
    %v5275 = vadd.f32 %v5262, %v5274
    %v5276 = vpop.f32.mrf.mxu0
    %5277 = vdwg.mxu0
    %5278 = vmatpush.bf16.msra.mxu0 %v3650
    %5279 = vmatpush.bf16.msra.mxu0 %v3645
    %5280 = vmatpush.bf16.msra.mxu0 %v3640
    %5281 = vmatpush.bf16.msra.mxu0 %v3635
    %5282 = vmatpush.bf16.msra.mxu0 %v3630
    %5283 = vmatpush.bf16.msra.mxu0 %v3625
    %5284 = vmatpush.bf16.msra.mxu0 %v3620
    %5285 = vmatpush.bf16.msra.mxu0 %v3615
    %5286 = vmatmul.bf16.gmra.mxu0 %v920
    %v5287 = vpop.f32.mrf.mxu0
    %v5288 = vadd.f32 %v5275, %v5287
    %v5289 = vpop.f32.mrf.mxu0
    %5290 = vdwg.mxu0
    %5291 = vmatpush.bf16.msra.mxu0 %v3690
    %5292 = vmatpush.bf16.msra.mxu0 %v3685
    %5293 = vmatpush.bf16.msra.mxu0 %v3680
    %5294 = vmatpush.bf16.msra.mxu0 %v3675
    %5295 = vmatpush.bf16.msra.mxu0 %v3670
    %5296 = vmatpush.bf16.msra.mxu0 %v3665
    %5297 = vmatpush.bf16.msra.mxu0 %v3660
    %5298 = vmatpush.bf16.msra.mxu0 %v3655
    %5299 = vmatmul.bf16.gmra.mxu0 %v921
    %v5300 = vpop.f32.mrf.mxu0
    %v5301 = vadd.f32 %v5288, %v5300
    %v5302 = vpop.f32.mrf.mxu0
    %5303 = vdwg.mxu0
    %5304 = vmatpush.bf16.msra.mxu0 %v3730
    %5305 = vmatpush.bf16.msra.mxu0 %v3725
    %5306 = vmatpush.bf16.msra.mxu0 %v3720
    %5307 = vmatpush.bf16.msra.mxu0 %v3715
    %5308 = vmatpush.bf16.msra.mxu0 %v3710
    %5309 = vmatpush.bf16.msra.mxu0 %v3705
    %5310 = vmatpush.bf16.msra.mxu0 %v3700
    %5311 = vmatpush.bf16.msra.mxu0 %v3695
    %5312 = vmatmul.bf16.gmra.mxu0 %v922
    %v5313 = vpop.f32.mrf.mxu0
    %v5314 = vadd.f32 %v5301, %v5313
    %v5315 = vpop.f32.mrf.mxu0
    %5316 = vdwg.mxu0
    %5317 = vmatpush.bf16.msra.mxu0 %v3770
    %5318 = vmatpush.bf16.msra.mxu0 %v3765
    %5319 = vmatpush.bf16.msra.mxu0 %v3760
    %5320 = vmatpush.bf16.msra.mxu0 %v3755
    %5321 = vmatpush.bf16.msra.mxu0 %v3750
    %5322 = vmatpush.bf16.msra.mxu0 %v3745
    %5323 = vmatpush.bf16.msra.mxu0 %v3740
    %5324 = vmatpush.bf16.msra.mxu0 %v3735
    %5325 = vmatmul.bf16.gmra.mxu0 %v923
    %v5326 = vpop.f32.mrf.mxu0
    %v5327 = vadd.f32 %v5314, %v5326
    %v5328 = vpop.f32.mrf.mxu0
    %5329 = vdwg.mxu0
    %5330 = vmatpush.bf16.msra.mxu0 %v3810
    %5331 = vmatpush.bf16.msra.mxu0 %v3805
    %5332 = vmatpush.bf16.msra.mxu0 %v3800
    %5333 = vmatpush.bf16.msra.mxu0 %v3795
    %5334 = vmatpush.bf16.msra.mxu0 %v3790
    %5335 = vmatpush.bf16.msra.mxu0 %v3785
    %5336 = vmatpush.bf16.msra.mxu0 %v3780
    %5337 = vmatpush.bf16.msra.mxu0 %v3775
    %5338 = vmatmul.bf16.gmra.mxu0 %v924
    %v5339 = vpop.f32.mrf.mxu0
    %v5340 = vadd.f32 %v5327, %v5339
    %v5341 = vpop.f32.mrf.mxu0
    %5342 = vdwg.mxu0
    %5343 = vmatpush.bf16.msra.mxu0 %v3850
    %5344 = vmatpush.bf16.msra.mxu0 %v3845
    %5345 = vmatpush.bf16.msra.mxu0 %v3840
    %5346 = vmatpush.bf16.msra.mxu0 %v3835
    %5347 = vmatpush.bf16.msra.mxu0 %v3830
    %5348 = vmatpush.bf16.msra.mxu0 %v3825
    %5349 = vmatpush.bf16.msra.mxu0 %v3820
    %5350 = vmatpush.bf16.msra.mxu0 %v3815
    %5351 = vmatmul.bf16.gmra.mxu0 %v925
    %v5352 = vpop.f32.mrf.mxu0
    %v5353 = vadd.f32 %v5340, %v5352
    %v5354 = vpop.f32.mrf.mxu0
    %5355 = vdwg.mxu0
    %5356 = vmatpush.bf16.msra.mxu0 %v3890
    %5357 = vmatpush.bf16.msra.mxu0 %v3885
    %5358 = vmatpush.bf16.msra.mxu0 %v3880
    %5359 = vmatpush.bf16.msra.mxu0 %v3875
    %5360 = vmatpush.bf16.msra.mxu0 %v3870
    %5361 = vmatpush.bf16.msra.mxu0 %v3865
    %5362 = vmatpush.bf16.msra.mxu0 %v3860
    %5363 = vmatpush.bf16.msra.mxu0 %v3855
    %5364 = vmatmul.bf16.gmra.mxu0 %v926
    %v5365 = vpop.f32.mrf.mxu0
    %v5366 = vadd.f32 %v5353, %v5365
    %v5367 = vpop.f32.mrf.mxu0
    %5368 = vdwg.mxu0
    %5369 = vmatpush.bf16.msra.mxu0 %v3930
    %5370 = vmatpush.bf16.msra.mxu0 %v3925
    %5371 = vmatpush.bf16.msra.mxu0 %v3920
    %5372 = vmatpush.bf16.msra.mxu0 %v3915
    %5373 = vmatpush.bf16.msra.mxu0 %v3910
    %5374 = vmatpush.bf16.msra.mxu0 %v3905
    %5375 = vmatpush.bf16.msra.mxu0 %v3900
    %5376 = vmatpush.bf16.msra.mxu0 %v3895
    %5377 = vmatmul.bf16.gmra.mxu0 %v929
    %v5378 = vpop.f32.mrf.mxu0
    %v5379 = vadd.f32 %v5366, %v5378
    %v5380 = vpop.f32.mrf.mxu0
    %5381 = vdwg.mxu0
    %5382 = vmatpush.bf16.msra.mxu0 %v3970
    %5383 = vmatpush.bf16.msra.mxu0 %v3965
    %5384 = vmatpush.bf16.msra.mxu0 %v3960
    %5385 = vmatpush.bf16.msra.mxu0 %v3955
    %5386 = vmatpush.bf16.msra.mxu0 %v3950
    %5387 = vmatpush.bf16.msra.mxu0 %v3945
    %5388 = vmatpush.bf16.msra.mxu0 %v3940
    %5389 = vmatpush.bf16.msra.mxu0 %v3935
    %5390 = vmatmul.bf16.gmra.mxu0 %v930
    %v5391 = vpop.f32.mrf.mxu0
    %v5392 = vadd.f32 %v5379, %v5391
    %v5393 = vpop.f32.mrf.mxu0
    %5394 = vdwg.mxu0
    %5395 = vmatpush.bf16.msra.mxu0 %v3291
    %5396 = vmatpush.bf16.msra.mxu0 %v3286
    %5397 = vmatpush.bf16.msra.mxu0 %v3281
    %5398 = vmatpush.bf16.msra.mxu0 %v3276
    %5399 = vmatpush.bf16.msra.mxu0 %v3271
    %5400 = vmatpush.bf16.msra.mxu0 %v3266
    %5401 = vmatpush.bf16.msra.mxu0 %v3261
    %5402 = vmatpush.bf16.msra.mxu0 %v3256
    %5403 = vmatmul.bf16.gmra.mxu0 %v909
    %v5404 = vpop.f32.mrf.mxu0
    %v5405 = vadd.f32 %v900, %v5404
    %v5406 = vpop.f32.mrf.mxu0
    %5407 = vdwg.mxu0
    %5408 = vmatpush.bf16.msra.mxu0 %v3331
    %5409 = vmatpush.bf16.msra.mxu0 %v3326
    %5410 = vmatpush.bf16.msra.mxu0 %v3321
    %5411 = vmatpush.bf16.msra.mxu0 %v3316
    %5412 = vmatpush.bf16.msra.mxu0 %v3311
    %5413 = vmatpush.bf16.msra.mxu0 %v3306
    %5414 = vmatpush.bf16.msra.mxu0 %v3301
    %5415 = vmatpush.bf16.msra.mxu0 %v3296
    %5416 = vmatmul.bf16.gmra.mxu0 %v910
    %v5417 = vpop.f32.mrf.mxu0
    %v5418 = vadd.f32 %v5405, %v5417
    %v5419 = vpop.f32.mrf.mxu0
    %5420 = vdwg.mxu0
    %5421 = vmatpush.bf16.msra.mxu0 %v3371
    %5422 = vmatpush.bf16.msra.mxu0 %v3366
    %5423 = vmatpush.bf16.msra.mxu0 %v3361
    %5424 = vmatpush.bf16.msra.mxu0 %v3356
    %5425 = vmatpush.bf16.msra.mxu0 %v3351
    %5426 = vmatpush.bf16.msra.mxu0 %v3346
    %5427 = vmatpush.bf16.msra.mxu0 %v3341
    %5428 = vmatpush.bf16.msra.mxu0 %v3336
    %5429 = vmatmul.bf16.gmra.mxu0 %v911
    %v5430 = vpop.f32.mrf.mxu0
    %v5431 = vadd.f32 %v5418, %v5430
    %v5432 = vpop.f32.mrf.mxu0
    %5433 = vdwg.mxu0
    %5434 = vmatpush.bf16.msra.mxu0 %v3411
    %5435 = vmatpush.bf16.msra.mxu0 %v3406
    %5436 = vmatpush.bf16.msra.mxu0 %v3401
    %5437 = vmatpush.bf16.msra.mxu0 %v3396
    %5438 = vmatpush.bf16.msra.mxu0 %v3391
    %5439 = vmatpush.bf16.msra.mxu0 %v3386
    %5440 = vmatpush.bf16.msra.mxu0 %v3381
    %5441 = vmatpush.bf16.msra.mxu0 %v3376
    %5442 = vmatmul.bf16.gmra.mxu0 %v912
    %v5443 = vpop.f32.mrf.mxu0
    %v5444 = vadd.f32 %v5431, %v5443
    %v5445 = vpop.f32.mrf.mxu0
    %5446 = vdwg.mxu0
    %5447 = vmatpush.bf16.msra.mxu0 %v3451
    %5448 = vmatpush.bf16.msra.mxu0 %v3446
    %5449 = vmatpush.bf16.msra.mxu0 %v3441
    %5450 = vmatpush.bf16.msra.mxu0 %v3436
    %5451 = vmatpush.bf16.msra.mxu0 %v3431
    %5452 = vmatpush.bf16.msra.mxu0 %v3426
    %5453 = vmatpush.bf16.msra.mxu0 %v3421
    %5454 = vmatpush.bf16.msra.mxu0 %v3416
    %5455 = vmatmul.bf16.gmra.mxu0 %v913
    %v5456 = vpop.f32.mrf.mxu0
    %v5457 = vadd.f32 %v5444, %v5456
    %v5458 = vpop.f32.mrf.mxu0
    %5459 = vdwg.mxu0
    %5460 = vmatpush.bf16.msra.mxu0 %v3491
    %5461 = vmatpush.bf16.msra.mxu0 %v3486
    %5462 = vmatpush.bf16.msra.mxu0 %v3481
    %5463 = vmatpush.bf16.msra.mxu0 %v3476
    %5464 = vmatpush.bf16.msra.mxu0 %v3471
    %5465 = vmatpush.bf16.msra.mxu0 %v3466
    %5466 = vmatpush.bf16.msra.mxu0 %v3461
    %5467 = vmatpush.bf16.msra.mxu0 %v3456
    %5468 = vmatmul.bf16.gmra.mxu0 %v914
    %v5469 = vpop.f32.mrf.mxu0
    %v5470 = vadd.f32 %v5457, %v5469
    %v5471 = vpop.f32.mrf.mxu0
    %5472 = vdwg.mxu0
    %5473 = vmatpush.bf16.msra.mxu0 %v3531
    %5474 = vmatpush.bf16.msra.mxu0 %v3526
    %5475 = vmatpush.bf16.msra.mxu0 %v3521
    %5476 = vmatpush.bf16.msra.mxu0 %v3516
    %5477 = vmatpush.bf16.msra.mxu0 %v3511
    %5478 = vmatpush.bf16.msra.mxu0 %v3506
    %5479 = vmatpush.bf16.msra.mxu0 %v3501
    %5480 = vmatpush.bf16.msra.mxu0 %v3496
    %5481 = vmatmul.bf16.gmra.mxu0 %v915
    %v5482 = vpop.f32.mrf.mxu0
    %v5483 = vadd.f32 %v5470, %v5482
    %v5484 = vpop.f32.mrf.mxu0
    %5485 = vdwg.mxu0
    %5486 = vmatpush.bf16.msra.mxu0 %v3571
    %5487 = vmatpush.bf16.msra.mxu0 %v3566
    %5488 = vmatpush.bf16.msra.mxu0 %v3561
    %5489 = vmatpush.bf16.msra.mxu0 %v3556
    %5490 = vmatpush.bf16.msra.mxu0 %v3551
    %5491 = vmatpush.bf16.msra.mxu0 %v3546
    %5492 = vmatpush.bf16.msra.mxu0 %v3541
    %5493 = vmatpush.bf16.msra.mxu0 %v3536
    %5494 = vmatmul.bf16.gmra.mxu0 %v916
    %v5495 = vpop.f32.mrf.mxu0
    %v5496 = vadd.f32 %v5483, %v5495
    %v5497 = vpop.f32.mrf.mxu0
    %5498 = vdwg.mxu0
    %5499 = vmatpush.bf16.msra.mxu0 %v3611
    %5500 = vmatpush.bf16.msra.mxu0 %v3606
    %5501 = vmatpush.bf16.msra.mxu0 %v3601
    %5502 = vmatpush.bf16.msra.mxu0 %v3596
    %5503 = vmatpush.bf16.msra.mxu0 %v3591
    %5504 = vmatpush.bf16.msra.mxu0 %v3586
    %5505 = vmatpush.bf16.msra.mxu0 %v3581
    %5506 = vmatpush.bf16.msra.mxu0 %v3576
    %5507 = vmatmul.bf16.gmra.mxu0 %v919
    %v5508 = vpop.f32.mrf.mxu0
    %v5509 = vadd.f32 %v5496, %v5508
    %v5510 = vpop.f32.mrf.mxu0
    %5511 = vdwg.mxu0
    %5512 = vmatpush.bf16.msra.mxu0 %v3651
    %5513 = vmatpush.bf16.msra.mxu0 %v3646
    %5514 = vmatpush.bf16.msra.mxu0 %v3641
    %5515 = vmatpush.bf16.msra.mxu0 %v3636
    %5516 = vmatpush.bf16.msra.mxu0 %v3631
    %5517 = vmatpush.bf16.msra.mxu0 %v3626
    %5518 = vmatpush.bf16.msra.mxu0 %v3621
    %5519 = vmatpush.bf16.msra.mxu0 %v3616
    %5520 = vmatmul.bf16.gmra.mxu0 %v920
    %v5521 = vpop.f32.mrf.mxu0
    %v5522 = vadd.f32 %v5509, %v5521
    %v5523 = vpop.f32.mrf.mxu0
    %5524 = vdwg.mxu0
    %5525 = vmatpush.bf16.msra.mxu0 %v3691
    %5526 = vmatpush.bf16.msra.mxu0 %v3686
    %5527 = vmatpush.bf16.msra.mxu0 %v3681
    %5528 = vmatpush.bf16.msra.mxu0 %v3676
    %5529 = vmatpush.bf16.msra.mxu0 %v3671
    %5530 = vmatpush.bf16.msra.mxu0 %v3666
    %5531 = vmatpush.bf16.msra.mxu0 %v3661
    %5532 = vmatpush.bf16.msra.mxu0 %v3656
    %5533 = vmatmul.bf16.gmra.mxu0 %v921
    %v5534 = vpop.f32.mrf.mxu0
    %v5535 = vadd.f32 %v5522, %v5534
    %v5536 = vpop.f32.mrf.mxu0
    %5537 = vdwg.mxu0
    %5538 = vmatpush.bf16.msra.mxu0 %v3731
    %5539 = vmatpush.bf16.msra.mxu0 %v3726
    %5540 = vmatpush.bf16.msra.mxu0 %v3721
    %5541 = vmatpush.bf16.msra.mxu0 %v3716
    %5542 = vmatpush.bf16.msra.mxu0 %v3711
    %5543 = vmatpush.bf16.msra.mxu0 %v3706
    %5544 = vmatpush.bf16.msra.mxu0 %v3701
    %5545 = vmatpush.bf16.msra.mxu0 %v3696
    %5546 = vmatmul.bf16.gmra.mxu0 %v922
    %v5547 = vpop.f32.mrf.mxu0
    %v5548 = vadd.f32 %v5535, %v5547
    %v5549 = vpop.f32.mrf.mxu0
    %5550 = vdwg.mxu0
    %5551 = vmatpush.bf16.msra.mxu0 %v3771
    %5552 = vmatpush.bf16.msra.mxu0 %v3766
    %5553 = vmatpush.bf16.msra.mxu0 %v3761
    %5554 = vmatpush.bf16.msra.mxu0 %v3756
    %5555 = vmatpush.bf16.msra.mxu0 %v3751
    %5556 = vmatpush.bf16.msra.mxu0 %v3746
    %5557 = vmatpush.bf16.msra.mxu0 %v3741
    %5558 = vmatpush.bf16.msra.mxu0 %v3736
    %5559 = vmatmul.bf16.gmra.mxu0 %v923
    %v5560 = vpop.f32.mrf.mxu0
    %v5561 = vadd.f32 %v5548, %v5560
    %v5562 = vpop.f32.mrf.mxu0
    %5563 = vdwg.mxu0
    %5564 = vmatpush.bf16.msra.mxu0 %v3811
    %5565 = vmatpush.bf16.msra.mxu0 %v3806
    %5566 = vmatpush.bf16.msra.mxu0 %v3801
    %5567 = vmatpush.bf16.msra.mxu0 %v3796
    %5568 = vmatpush.bf16.msra.mxu0 %v3791
    %5569 = vmatpush.bf16.msra.mxu0 %v3786
    %5570 = vmatpush.bf16.msra.mxu0 %v3781
    %5571 = vmatpush.bf16.msra.mxu0 %v3776
    %5572 = vmatmul.bf16.gmra.mxu0 %v924
    %v5573 = vpop.f32.mrf.mxu0
    %v5574 = vadd.f32 %v5561, %v5573
    %v5575 = vpop.f32.mrf.mxu0
    %5576 = vdwg.mxu0
    %5577 = vmatpush.bf16.msra.mxu0 %v3851
    %5578 = vmatpush.bf16.msra.mxu0 %v3846
    %5579 = vmatpush.bf16.msra.mxu0 %v3841
    %5580 = vmatpush.bf16.msra.mxu0 %v3836
    %5581 = vmatpush.bf16.msra.mxu0 %v3831
    %5582 = vmatpush.bf16.msra.mxu0 %v3826
    %5583 = vmatpush.bf16.msra.mxu0 %v3821
    %5584 = vmatpush.bf16.msra.mxu0 %v3816
    %5585 = vmatmul.bf16.gmra.mxu0 %v925
    %v5586 = vpop.f32.mrf.mxu0
    %v5587 = vadd.f32 %v5574, %v5586
    %v5588 = vpop.f32.mrf.mxu0
    %5589 = vdwg.mxu0
    %5590 = vmatpush.bf16.msra.mxu0 %v3891
    %5591 = vmatpush.bf16.msra.mxu0 %v3886
    %5592 = vmatpush.bf16.msra.mxu0 %v3881
    %5593 = vmatpush.bf16.msra.mxu0 %v3876
    %5594 = vmatpush.bf16.msra.mxu0 %v3871
    %5595 = vmatpush.bf16.msra.mxu0 %v3866
    %5596 = vmatpush.bf16.msra.mxu0 %v3861
    %5597 = vmatpush.bf16.msra.mxu0 %v3856
    %5598 = vmatmul.bf16.gmra.mxu0 %v926
    %v5599 = vpop.f32.mrf.mxu0
    %v5600 = vadd.f32 %v5587, %v5599
    %v5601 = vpop.f32.mrf.mxu0
    %5602 = vdwg.mxu0
    %5603 = vmatpush.bf16.msra.mxu0 %v3931
    %5604 = vmatpush.bf16.msra.mxu0 %v3926
    %5605 = vmatpush.bf16.msra.mxu0 %v3921
    %5606 = vmatpush.bf16.msra.mxu0 %v3916
    %5607 = vmatpush.bf16.msra.mxu0 %v3911
    %5608 = vmatpush.bf16.msra.mxu0 %v3906
    %5609 = vmatpush.bf16.msra.mxu0 %v3901
    %5610 = vmatpush.bf16.msra.mxu0 %v3896
    %5611 = vmatmul.bf16.gmra.mxu0 %v929
    %v5612 = vpop.f32.mrf.mxu0
    %v5613 = vadd.f32 %v5600, %v5612
    %v5614 = vpop.f32.mrf.mxu0
    %5615 = vdwg.mxu0
    %5616 = vmatpush.bf16.msra.mxu0 %v3971
    %5617 = vmatpush.bf16.msra.mxu0 %v3966
    %5618 = vmatpush.bf16.msra.mxu0 %v3961
    %5619 = vmatpush.bf16.msra.mxu0 %v3956
    %5620 = vmatpush.bf16.msra.mxu0 %v3951
    %5621 = vmatpush.bf16.msra.mxu0 %v3946
    %5622 = vmatpush.bf16.msra.mxu0 %v3941
    %5623 = vmatpush.bf16.msra.mxu0 %v3936
    %5624 = vmatmul.bf16.gmra.mxu0 %v930
    %v5625 = vpop.f32.mrf.mxu0
    %v5626 = vadd.f32 %v5613, %v5625
    %v5627 = vpop.f32.mrf.mxu0
    %5628 = vdwg.mxu0
    %5629 = vmatpush.bf16.msra.mxu0 %v3292
    %5630 = vmatpush.bf16.msra.mxu0 %v3287
    %5631 = vmatpush.bf16.msra.mxu0 %v3282
    %5632 = vmatpush.bf16.msra.mxu0 %v3277
    %5633 = vmatpush.bf16.msra.mxu0 %v3272
    %5634 = vmatpush.bf16.msra.mxu0 %v3267
    %5635 = vmatpush.bf16.msra.mxu0 %v3262
    %5636 = vmatpush.bf16.msra.mxu0 %v3257
    %5637 = vmatmul.bf16.gmra.mxu0 %v909
    %v5638 = vpop.f32.mrf.mxu0
    %v5639 = vadd.f32 %v901, %v5638
    %v5640 = vpop.f32.mrf.mxu0
    %5641 = vdwg.mxu0
    %5642 = vmatpush.bf16.msra.mxu0 %v3332
    %5643 = vmatpush.bf16.msra.mxu0 %v3327
    %5644 = vmatpush.bf16.msra.mxu0 %v3322
    %5645 = vmatpush.bf16.msra.mxu0 %v3317
    %5646 = vmatpush.bf16.msra.mxu0 %v3312
    %5647 = vmatpush.bf16.msra.mxu0 %v3307
    %5648 = vmatpush.bf16.msra.mxu0 %v3302
    %5649 = vmatpush.bf16.msra.mxu0 %v3297
    %5650 = vmatmul.bf16.gmra.mxu0 %v910
    %v5651 = vpop.f32.mrf.mxu0
    %v5652 = vadd.f32 %v5639, %v5651
    %v5653 = vpop.f32.mrf.mxu0
    %5654 = vdwg.mxu0
    %5655 = vmatpush.bf16.msra.mxu0 %v3372
    %5656 = vmatpush.bf16.msra.mxu0 %v3367
    %5657 = vmatpush.bf16.msra.mxu0 %v3362
    %5658 = vmatpush.bf16.msra.mxu0 %v3357
    %5659 = vmatpush.bf16.msra.mxu0 %v3352
    %5660 = vmatpush.bf16.msra.mxu0 %v3347
    %5661 = vmatpush.bf16.msra.mxu0 %v3342
    %5662 = vmatpush.bf16.msra.mxu0 %v3337
    %5663 = vmatmul.bf16.gmra.mxu0 %v911
    %v5664 = vpop.f32.mrf.mxu0
    %v5665 = vadd.f32 %v5652, %v5664
    %v5666 = vpop.f32.mrf.mxu0
    %5667 = vdwg.mxu0
    %5668 = vmatpush.bf16.msra.mxu0 %v3412
    %5669 = vmatpush.bf16.msra.mxu0 %v3407
    %5670 = vmatpush.bf16.msra.mxu0 %v3402
    %5671 = vmatpush.bf16.msra.mxu0 %v3397
    %5672 = vmatpush.bf16.msra.mxu0 %v3392
    %5673 = vmatpush.bf16.msra.mxu0 %v3387
    %5674 = vmatpush.bf16.msra.mxu0 %v3382
    %5675 = vmatpush.bf16.msra.mxu0 %v3377
    %5676 = vmatmul.bf16.gmra.mxu0 %v912
    %v5677 = vpop.f32.mrf.mxu0
    %v5678 = vadd.f32 %v5665, %v5677
    %v5679 = vpop.f32.mrf.mxu0
    %5680 = vdwg.mxu0
    %5681 = vmatpush.bf16.msra.mxu0 %v3452
    %5682 = vmatpush.bf16.msra.mxu0 %v3447
    %5683 = vmatpush.bf16.msra.mxu0 %v3442
    %5684 = vmatpush.bf16.msra.mxu0 %v3437
    %5685 = vmatpush.bf16.msra.mxu0 %v3432
    %5686 = vmatpush.bf16.msra.mxu0 %v3427
    %5687 = vmatpush.bf16.msra.mxu0 %v3422
    %5688 = vmatpush.bf16.msra.mxu0 %v3417
    %5689 = vmatmul.bf16.gmra.mxu0 %v913
    %v5690 = vpop.f32.mrf.mxu0
    %v5691 = vadd.f32 %v5678, %v5690
    %v5692 = vpop.f32.mrf.mxu0
    %5693 = vdwg.mxu0
    %5694 = vmatpush.bf16.msra.mxu0 %v3492
    %5695 = vmatpush.bf16.msra.mxu0 %v3487
    %5696 = vmatpush.bf16.msra.mxu0 %v3482
    %5697 = vmatpush.bf16.msra.mxu0 %v3477
    %5698 = vmatpush.bf16.msra.mxu0 %v3472
    %5699 = vmatpush.bf16.msra.mxu0 %v3467
    %5700 = vmatpush.bf16.msra.mxu0 %v3462
    %5701 = vmatpush.bf16.msra.mxu0 %v3457
    %5702 = vmatmul.bf16.gmra.mxu0 %v914
    %v5703 = vpop.f32.mrf.mxu0
    %v5704 = vadd.f32 %v5691, %v5703
    %v5705 = vpop.f32.mrf.mxu0
    %5706 = vdwg.mxu0
    %5707 = vmatpush.bf16.msra.mxu0 %v3532
    %5708 = vmatpush.bf16.msra.mxu0 %v3527
    %5709 = vmatpush.bf16.msra.mxu0 %v3522
    %5710 = vmatpush.bf16.msra.mxu0 %v3517
    %5711 = vmatpush.bf16.msra.mxu0 %v3512
    %5712 = vmatpush.bf16.msra.mxu0 %v3507
    %5713 = vmatpush.bf16.msra.mxu0 %v3502
    %5714 = vmatpush.bf16.msra.mxu0 %v3497
    %5715 = vmatmul.bf16.gmra.mxu0 %v915
    %v5716 = vpop.f32.mrf.mxu0
    %v5717 = vadd.f32 %v5704, %v5716
    %v5718 = vpop.f32.mrf.mxu0
    %5719 = vdwg.mxu0
    %5720 = vmatpush.bf16.msra.mxu0 %v3572
    %5721 = vmatpush.bf16.msra.mxu0 %v3567
    %5722 = vmatpush.bf16.msra.mxu0 %v3562
    %5723 = vmatpush.bf16.msra.mxu0 %v3557
    %5724 = vmatpush.bf16.msra.mxu0 %v3552
    %5725 = vmatpush.bf16.msra.mxu0 %v3547
    %5726 = vmatpush.bf16.msra.mxu0 %v3542
    %5727 = vmatpush.bf16.msra.mxu0 %v3537
    %5728 = vmatmul.bf16.gmra.mxu0 %v916
    %v5729 = vpop.f32.mrf.mxu0
    %v5730 = vadd.f32 %v5717, %v5729
    %v5731 = vpop.f32.mrf.mxu0
    %5732 = vdwg.mxu0
    %5733 = vmatpush.bf16.msra.mxu0 %v3612
    %5734 = vmatpush.bf16.msra.mxu0 %v3607
    %5735 = vmatpush.bf16.msra.mxu0 %v3602
    %5736 = vmatpush.bf16.msra.mxu0 %v3597
    %5737 = vmatpush.bf16.msra.mxu0 %v3592
    %5738 = vmatpush.bf16.msra.mxu0 %v3587
    %5739 = vmatpush.bf16.msra.mxu0 %v3582
    %5740 = vmatpush.bf16.msra.mxu0 %v3577
    %5741 = vmatmul.bf16.gmra.mxu0 %v919
    %v5742 = vpop.f32.mrf.mxu0
    %v5743 = vadd.f32 %v5730, %v5742
    %v5744 = vpop.f32.mrf.mxu0
    %5745 = vdwg.mxu0
    %5746 = vmatpush.bf16.msra.mxu0 %v3652
    %5747 = vmatpush.bf16.msra.mxu0 %v3647
    %5748 = vmatpush.bf16.msra.mxu0 %v3642
    %5749 = vmatpush.bf16.msra.mxu0 %v3637
    %5750 = vmatpush.bf16.msra.mxu0 %v3632
    %5751 = vmatpush.bf16.msra.mxu0 %v3627
    %5752 = vmatpush.bf16.msra.mxu0 %v3622
    %5753 = vmatpush.bf16.msra.mxu0 %v3617
    %5754 = vmatmul.bf16.gmra.mxu0 %v920
    %v5755 = vpop.f32.mrf.mxu0
    %v5756 = vadd.f32 %v5743, %v5755
    %v5757 = vpop.f32.mrf.mxu0
    %5758 = vdwg.mxu0
    %5759 = vmatpush.bf16.msra.mxu0 %v3692
    %5760 = vmatpush.bf16.msra.mxu0 %v3687
    %5761 = vmatpush.bf16.msra.mxu0 %v3682
    %5762 = vmatpush.bf16.msra.mxu0 %v3677
    %5763 = vmatpush.bf16.msra.mxu0 %v3672
    %5764 = vmatpush.bf16.msra.mxu0 %v3667
    %5765 = vmatpush.bf16.msra.mxu0 %v3662
    %5766 = vmatpush.bf16.msra.mxu0 %v3657
    %5767 = vmatmul.bf16.gmra.mxu0 %v921
    %v5768 = vpop.f32.mrf.mxu0
    %v5769 = vadd.f32 %v5756, %v5768
    %v5770 = vpop.f32.mrf.mxu0
    %5771 = vdwg.mxu0
    %5772 = vmatpush.bf16.msra.mxu0 %v3732
    %5773 = vmatpush.bf16.msra.mxu0 %v3727
    %5774 = vmatpush.bf16.msra.mxu0 %v3722
    %5775 = vmatpush.bf16.msra.mxu0 %v3717
    %5776 = vmatpush.bf16.msra.mxu0 %v3712
    %5777 = vmatpush.bf16.msra.mxu0 %v3707
    %5778 = vmatpush.bf16.msra.mxu0 %v3702
    %5779 = vmatpush.bf16.msra.mxu0 %v3697
    %5780 = vmatmul.bf16.gmra.mxu0 %v922
    %v5781 = vpop.f32.mrf.mxu0
    %v5782 = vadd.f32 %v5769, %v5781
    %v5783 = vpop.f32.mrf.mxu0
    %5784 = vdwg.mxu0
    %5785 = vmatpush.bf16.msra.mxu0 %v3772
    %5786 = vmatpush.bf16.msra.mxu0 %v3767
    %5787 = vmatpush.bf16.msra.mxu0 %v3762
    %5788 = vmatpush.bf16.msra.mxu0 %v3757
    %5789 = vmatpush.bf16.msra.mxu0 %v3752
    %5790 = vmatpush.bf16.msra.mxu0 %v3747
    %5791 = vmatpush.bf16.msra.mxu0 %v3742
    %5792 = vmatpush.bf16.msra.mxu0 %v3737
    %5793 = vmatmul.bf16.gmra.mxu0 %v923
    %v5794 = vpop.f32.mrf.mxu0
    %v5795 = vadd.f32 %v5782, %v5794
    %v5796 = vpop.f32.mrf.mxu0
    %5797 = vdwg.mxu0
    %5798 = vmatpush.bf16.msra.mxu0 %v3812
    %5799 = vmatpush.bf16.msra.mxu0 %v3807
    %5800 = vmatpush.bf16.msra.mxu0 %v3802
    %5801 = vmatpush.bf16.msra.mxu0 %v3797
    %5802 = vmatpush.bf16.msra.mxu0 %v3792
    %5803 = vmatpush.bf16.msra.mxu0 %v3787
    %5804 = vmatpush.bf16.msra.mxu0 %v3782
    %5805 = vmatpush.bf16.msra.mxu0 %v3777
    %5806 = vmatmul.bf16.gmra.mxu0 %v924
    %v5807 = vpop.f32.mrf.mxu0
    %v5808 = vadd.f32 %v5795, %v5807
    %v5809 = vpop.f32.mrf.mxu0
    %5810 = vdwg.mxu0
    %5811 = vmatpush.bf16.msra.mxu0 %v3852
    %5812 = vmatpush.bf16.msra.mxu0 %v3847
    %5813 = vmatpush.bf16.msra.mxu0 %v3842
    %5814 = vmatpush.bf16.msra.mxu0 %v3837
    %5815 = vmatpush.bf16.msra.mxu0 %v3832
    %5816 = vmatpush.bf16.msra.mxu0 %v3827
    %5817 = vmatpush.bf16.msra.mxu0 %v3822
    %5818 = vmatpush.bf16.msra.mxu0 %v3817
    %5819 = vmatmul.bf16.gmra.mxu0 %v925
    %v5820 = vpop.f32.mrf.mxu0
    %v5821 = vadd.f32 %v5808, %v5820
    %v5822 = vpop.f32.mrf.mxu0
    %5823 = vdwg.mxu0
    %5824 = vmatpush.bf16.msra.mxu0 %v3892
    %5825 = vmatpush.bf16.msra.mxu0 %v3887
    %5826 = vmatpush.bf16.msra.mxu0 %v3882
    %5827 = vmatpush.bf16.msra.mxu0 %v3877
    %5828 = vmatpush.bf16.msra.mxu0 %v3872
    %5829 = vmatpush.bf16.msra.mxu0 %v3867
    %5830 = vmatpush.bf16.msra.mxu0 %v3862
    %5831 = vmatpush.bf16.msra.mxu0 %v3857
    %5832 = vmatmul.bf16.gmra.mxu0 %v926
    %v5833 = vpop.f32.mrf.mxu0
    %v5834 = vadd.f32 %v5821, %v5833
    %v5835 = vpop.f32.mrf.mxu0
    %5836 = vdwg.mxu0
    %5837 = vmatpush.bf16.msra.mxu0 %v3932
    %5838 = vmatpush.bf16.msra.mxu0 %v3927
    %5839 = vmatpush.bf16.msra.mxu0 %v3922
    %5840 = vmatpush.bf16.msra.mxu0 %v3917
    %5841 = vmatpush.bf16.msra.mxu0 %v3912
    %5842 = vmatpush.bf16.msra.mxu0 %v3907
    %5843 = vmatpush.bf16.msra.mxu0 %v3902
    %5844 = vmatpush.bf16.msra.mxu0 %v3897
    %5845 = vmatmul.bf16.gmra.mxu0 %v929
    %v5846 = vpop.f32.mrf.mxu0
    %v5847 = vadd.f32 %v5834, %v5846
    %v5848 = vpop.f32.mrf.mxu0
    %5849 = vdwg.mxu0
    %5850 = vmatpush.bf16.msra.mxu0 %v3972
    %5851 = vmatpush.bf16.msra.mxu0 %v3967
    %5852 = vmatpush.bf16.msra.mxu0 %v3962
    %5853 = vmatpush.bf16.msra.mxu0 %v3957
    %5854 = vmatpush.bf16.msra.mxu0 %v3952
    %5855 = vmatpush.bf16.msra.mxu0 %v3947
    %5856 = vmatpush.bf16.msra.mxu0 %v3942
    %5857 = vmatpush.bf16.msra.mxu0 %v3937
    %5858 = vmatmul.bf16.gmra.mxu0 %v930
    %v5859 = vpop.f32.mrf.mxu0
    %v5860 = vadd.f32 %v5847, %v5859
    %v5861 = vpop.f32.mrf.mxu0
    %5862 = vdwg.mxu0
    %v5863 = vpack.c.bf16 %v4924, %v4924
    %v5864 = vpack.c.bf16 %v5158, %v5158
    %v5865 = vpack.c.bf16 %v5392, %v5392
    %v5866 = vpack.c.bf16 %v5626, %v5626
    %v5867 = vpack.c.bf16 %v5860, %v5860
    %v5868 = vld [vmem:[%s3] sm:$0xf]
    %v5869 = vld [vmem:[%s3 + $0x4] sm:$0xf]
    %v5870 = vld [vmem:[%s3 + $0x8] sm:$0xf]
    %v5871 = vld [vmem:[%s3 + $0xc] sm:$0xf]
    %v5872 = vld [vmem:[%s3 + $0x10] sm:$0xf]
    %v5873 = vld [vmem:[%s3 + $0x14] sm:$0xf]
    %v5874 = vld [vmem:[%s3 + $0x18] sm:$0xf]
    %v5875 = vld [vmem:[%s3 + $0x1c] sm:$0xf]
    %v5876 = vld [vmem:[%s3 + $0x20] sm:$0xf]
    %v5877 = vld [vmem:[%s3 + $0x24] sm:$0xf]
    %v5878 = vld [vmem:[%s3 + $0x28] sm:$0xf]
    %v5879 = vld [vmem:[%s3 + $0x2c] sm:$0xf]
    %v5880 = vld [vmem:[%s3 + $0x30] sm:$0xf]
    %v5881 = vld [vmem:[%s3 + $0x34] sm:$0xf]
    %v5882 = vld [vmem:[%s3 + $0x38] sm:$0xf]
    %v5883 = vld [vmem:[%s3 + $0x3c] sm:$0xf]
    %v5884 = vld [vmem:[%s3 + $0x40] sm:$0xf]
    %v5885 = vld [vmem:[%s3 + $0x44] sm:$0xf]
    %v5886 = vld [vmem:[%s3 + $0x48] sm:$0xf]
    %v5887 = vld [vmem:[%s3 + $0x4c] sm:$0xf]
    %v5888 = vld [vmem:[%s3 + $0x50] sm:$0xf]
    %v5889 = vld [vmem:[%s3 + $0x54] sm:$0xf]
    %v5890 = vld [vmem:[%s3 + $0x58] sm:$0xf]
    %v5891 = vld [vmem:[%s3 + $0x5c] sm:$0xf]
    %v5892 = vld [vmem:[%s3 + $0x60] sm:$0xf]
    %v5893 = vld [vmem:[%s3 + $0x64] sm:$0xf]
    %v5894 = vld [vmem:[%s3 + $0x68] sm:$0xf]
    %v5895 = vld [vmem:[%s3 + $0x6c] sm:$0xf]
    %v5896 = vld [vmem:[%s3 + $0x70] sm:$0xf]
    %v5897 = vld [vmem:[%s3 + $0x74] sm:$0xf]
    %v5898 = vld [vmem:[%s3 + $0x78] sm:$0xf]
    %v5899 = vld [vmem:[%s3 + $0x7c] sm:$0xf]
    %v5900 = vld [vmem:[%s3 + $0x80] sm:$0xf]
    %v5901 = vld [vmem:[%s3 + $0x84] sm:$0xf]
    %v5902 = vld [vmem:[%s3 + $0x88] sm:$0xf]
    %v5903 = vld [vmem:[%s3 + $0x8c] sm:$0xf]
    %v5904 = vld [vmem:[%s3 + $0x90] sm:$0xf]
    %v5905 = vld [vmem:[%s3 + $0x94] sm:$0xf]
    %v5906 = vld [vmem:[%s3 + $0x98] sm:$0xf]
    %v5907 = vld [vmem:[%s3 + $0x9c] sm:$0xf]
    %v5908 = vld [vmem:[%s3 + $0xa0] sm:$0xf]
    %v5909 = vld [vmem:[%s3 + $0xa4] sm:$0xf]
    %v5910 = vld [vmem:[%s3 + $0xa8] sm:$0xf]
    %v5911 = vld [vmem:[%s3 + $0xac] sm:$0xf]
    %v5912 = vld [vmem:[%s3 + $0xb0] sm:$0xf]
    %v5913 = vld [vmem:[%s3 + $0xb4] sm:$0xf]
    %v5914 = vld [vmem:[%s3 + $0xb8] sm:$0xf]
    %v5915 = vld [vmem:[%s3 + $0xbc] sm:$0xf]
    %v5916 = vld [vmem:[%s3 + $0xc0] sm:$0xf]
    %v5917 = vld [vmem:[%s3 + $0xc4] sm:$0xf]
    %v5918 = vld [vmem:[%s3 + $0xc8] sm:$0xf]
    %v5919 = vld [vmem:[%s3 + $0xcc] sm:$0xf]
    %v5920 = vld [vmem:[%s3 + $0xd0] sm:$0xf]
    %v5921 = vld [vmem:[%s3 + $0xd4] sm:$0xf]
    %v5922 = vld [vmem:[%s3 + $0xd8] sm:$0xf]
    %v5923 = vld [vmem:[%s3 + $0xdc] sm:$0xf]
    %v5924 = vld [vmem:[%s3 + $0xe0] sm:$0xf]
    %v5925 = vld [vmem:[%s3 + $0xe4] sm:$0xf]
    %v5926 = vld [vmem:[%s3 + $0xe8] sm:$0xf]
    %v5927 = vld [vmem:[%s3 + $0xec] sm:$0xf]
    %v5928 = vld [vmem:[%s3 + $0xf0] sm:$0xf]
    %v5929 = vld [vmem:[%s3 + $0xf4] sm:$0xf]
    %v5930 = vld [vmem:[%s3 + $0xf8] sm:$0xf]
    %v5931 = vld [vmem:[%s3 + $0xfc] sm:$0xf]
    %v5932 = vld [vmem:[%s3 + $0x100] sm:$0xf]
    %v5933 = vld [vmem:[%s3 + $0x104] sm:$0xf]
    %v5934 = vld [vmem:[%s3 + $0x108] sm:$0xf]
    %v5935 = vld [vmem:[%s3 + $0x10c] sm:$0xf]
    %v5936 = vld [vmem:[%s3 + $0x110] sm:$0xf]
    %v5937 = vld [vmem:[%s3 + $0x114] sm:$0xf]
    %v5938 = vld [vmem:[%s3 + $0x118] sm:$0xf]
    %v5939 = vld [vmem:[%s3 + $0x11c] sm:$0xf]
    %v5940 = vld [vmem:[%s3 + $0x120] sm:$0xf]
    %v5941 = vld [vmem:[%s3 + $0x124] sm:$0xf]
    %v5942 = vld [vmem:[%s3 + $0x128] sm:$0xf]
    %v5943 = vld [vmem:[%s4] sm:$0x1]
    %v5945 = vperm.slane %v5943, 0
    %v6022 = vunpack.c.l.b16 %v5868
    %v6023 = vunpack.c.l.b16 %v5869
    %v6024 = vunpack.c.l.b16 %v5870
    %v6025 = vunpack.c.l.b16 %v5871
    %v6026 = vunpack.c.l.b16 %v5872
    %v6027 = vunpack.c.l.b16 %v5873
    %v6028 = vunpack.c.l.b16 %v5874
    %v6029 = vunpack.c.l.b16 %v5875
    %v6030 = vunpack.c.l.b16 %v5876
    %v6031 = vunpack.c.l.b16 %v5877
    %v6032 = vunpack.c.l.b16 %v5878
    %v6033 = vunpack.c.l.b16 %v5879
    %v6034 = vunpack.c.l.b16 %v5880
    %v6035 = vunpack.c.l.b16 %v5881
    %v6036 = vunpack.c.l.b16 %v5882
    %v6037 = vunpack.c.l.b16 %v5883
    %v6038 = vunpack.c.l.b16 %v5884
    %v6039 = vunpack.c.l.b16 %v5885
    %v6040 = vunpack.c.l.b16 %v5886
    %v6041 = vunpack.c.l.b16 %v5887
    %v6042 = vunpack.c.l.b16 %v5888
    %v6043 = vunpack.c.l.b16 %v5889
    %v6044 = vunpack.c.l.b16 %v5890
    %v6045 = vunpack.c.l.b16 %v5891
    %v6046 = vunpack.c.l.b16 %v5892
    %v6047 = vunpack.c.l.b16 %v5893
    %v6048 = vunpack.c.l.b16 %v5894
    %v6049 = vunpack.c.l.b16 %v5895
    %v6050 = vunpack.c.l.b16 %v5896
    %v6051 = vunpack.c.l.b16 %v5897
    %v6052 = vunpack.c.l.b16 %v5898
    %v6053 = vunpack.c.l.b16 %v5899
    %v6054 = vunpack.c.l.b16 %v5900
    %v6055 = vunpack.c.l.b16 %v5901
    %v6056 = vunpack.c.l.b16 %v5902
    %v6057 = vunpack.c.l.b16 %v5903
    %v6058 = vunpack.c.l.b16 %v5904
    %v6059 = vunpack.c.l.b16 %v5905
    %v6060 = vunpack.c.l.b16 %v5906
    %v6061 = vunpack.c.l.b16 %v5907
    %v6062 = vunpack.c.l.b16 %v5908
    %v6063 = vunpack.c.l.b16 %v5909
    %v6064 = vunpack.c.l.b16 %v5910
    %v6065 = vunpack.c.l.b16 %v5911
    %v6066 = vunpack.c.l.b16 %v5912
    %v6067 = vunpack.c.l.b16 %v5913
    %v6068 = vunpack.c.l.b16 %v5914
    %v6069 = vunpack.c.l.b16 %v5915
    %v6070 = vunpack.c.l.b16 %v5916
    %v6071 = vunpack.c.l.b16 %v5917
    %v6072 = vunpack.c.l.b16 %v5918
    %v6073 = vunpack.c.l.b16 %v5919
    %v6074 = vunpack.c.l.b16 %v5920
    %v6075 = vunpack.c.l.b16 %v5921
    %v6076 = vunpack.c.l.b16 %v5922
    %v6077 = vunpack.c.l.b16 %v5923
    %v6078 = vunpack.c.l.b16 %v5924
    %v6079 = vunpack.c.l.b16 %v5925
    %v6080 = vunpack.c.l.b16 %v5926
    %v6081 = vunpack.c.l.b16 %v5927
    %v6082 = vunpack.c.l.b16 %v5928
    %v6083 = vunpack.c.l.b16 %v5929
    %v6084 = vunpack.c.l.b16 %v5930
    %v6085 = vunpack.c.l.b16 %v5931
    %v6086 = vunpack.c.l.b16 %v5932
    %v6087 = vunpack.c.l.b16 %v5933
    %v6088 = vunpack.c.l.b16 %v5934
    %v6089 = vunpack.c.l.b16 %v5935
    %v6090 = vunpack.c.l.b16 %v5936
    %v6091 = vunpack.c.l.b16 %v5937
    %v6092 = vunpack.c.l.b16 %v5938
    %v6093 = vunpack.c.l.b16 %v5939
    %v6094 = vunpack.c.l.b16 %v5940
    %v6095 = vunpack.c.l.b16 %v5941
    %v6096 = vunpack.c.l.b16 %v5942
    %v6097 = vpack.c.b16 %v6023, %v6022
    %v6098 = vpack.c.b16 %v6025, %v6024
    %v6099 = vpack.c.b16 %v6027, %v6026
    %v6100 = vpack.c.b16 %v6029, %v6028
    %v6101 = vpack.c.b16 %v6031, %v6030
    %v6102 = vpack.c.b16 %v6033, %v6032
    %v6103 = vpack.c.b16 %v6035, %v6034
    %v6104 = vpack.c.b16 %v6037, %v6036
    %v6105 = vpack.c.b16 %v6039, %v6038
    %v6106 = vpack.c.b16 %v6041, %v6040
    %v6107 = vpack.c.b16 %v6043, %v6042
    %v6108 = vpack.c.b16 %v6045, %v6044
    %v6109 = vpack.c.b16 %v6047, %v6046
    %v6110 = vpack.c.b16 %v6049, %v6048
    %v6111 = vpack.c.b16 %v6051, %v6050
    %v6112 = vpack.c.b16 %v6053, %v6052
    %v6113 = vpack.c.b16 %v6055, %v6054
    %v6114 = vpack.c.b16 %v6057, %v6056
    %v6115 = vpack.c.b16 %v6059, %v6058
    %v6116 = vpack.c.b16 %v6061, %v6060
    %v6117 = vpack.c.b16 %v6063, %v6062
    %v6118 = vpack.c.b16 %v6065, %v6064
    %v6119 = vpack.c.b16 %v6067, %v6066
    %v6120 = vpack.c.b16 %v6069, %v6068
    %v6121 = vpack.c.b16 %v6071, %v6070
    %v6122 = vpack.c.b16 %v6073, %v6072
    %v6123 = vpack.c.b16 %v6075, %v6074
    %v6124 = vpack.c.b16 %v6077, %v6076
    %v6125 = vpack.c.b16 %v6079, %v6078
    %v6126 = vpack.c.b16 %v6081, %v6080
    %v6127 = vpack.c.b16 %v6083, %v6082
    %v6128 = vpack.c.b16 %v6085, %v6084
    %v6129 = vpack.c.b16 %v6087, %v6086
    %v6130 = vpack.c.b16 %v6089, %v6088
    %v6131 = vpack.c.b16 %v6091, %v6090
    %v6132 = vpack.c.b16 %v6093, %v6092
    %v6133 = vpack.c.b16 %v6095, %v6094
    %v6134 = vpack.c.b16 %v6096, %v6096
    %vm6172 = vcmask 719872
    %v6174 = vsel %vm6172, %v5867, 0
    %vm6176 = vcmask 1043456
    %v6178 = vsel %vm6176, %v6134, 0
    %6180 = vmatpush.bf16.msra.mxu0 %v6104
    %6181 = vmatpush.bf16.msra.mxu0 %v6103
    %6182 = vmatpush.bf16.msra.mxu0 %v6102
    %6183 = vmatpush.bf16.msra.mxu0 %v6101
    %6184 = vmatpush.bf16.msra.mxu0 %v6100
    %6185 = vmatpush.bf16.msra.mxu0 %v6099
    %6186 = vmatpush.bf16.msra.mxu0 %v6098
    %6187 = vmatpush.bf16.msra.mxu0 %v6097
    %6188 = vmatmul.bf16.gmra.mxu0 %v5863
    %v6189 = vpop.f32.mrf.mxu0
    %v6190 = vadd.f32 %v5945, %v6189
    %v6191 = vpop.f32.mrf.mxu0
    %6192 = vdwg.mxu0
    %6193 = vmatpush.bf16.msra.mxu0 %v6112
    %6194 = vmatpush.bf16.msra.mxu0 %v6111
    %6195 = vmatpush.bf16.msra.mxu0 %v6110
    %6196 = vmatpush.bf16.msra.mxu0 %v6109
    %6197 = vmatpush.bf16.msra.mxu0 %v6108
    %6198 = vmatpush.bf16.msra.mxu0 %v6107
    %6199 = vmatpush.bf16.msra.mxu0 %v6106
    %6200 = vmatpush.bf16.msra.mxu0 %v6105
    %6201 = vmatmul.bf16.gmra.mxu0 %v5864
    %v6202 = vpop.f32.mrf.mxu0
    %v6203 = vadd.f32 %v6190, %v6202
    %v6204 = vpop.f32.mrf.mxu0
    %6205 = vdwg.mxu0
    %6206 = vmatpush.bf16.msra.mxu0 %v6120
    %6207 = vmatpush.bf16.msra.mxu0 %v6119
    %6208 = vmatpush.bf16.msra.mxu0 %v6118
    %6209 = vmatpush.bf16.msra.mxu0 %v6117
    %6210 = vmatpush.bf16.msra.mxu0 %v6116
    %6211 = vmatpush.bf16.msra.mxu0 %v6115
    %6212 = vmatpush.bf16.msra.mxu0 %v6114
    %6213 = vmatpush.bf16.msra.mxu0 %v6113
    %6214 = vmatmul.bf16.gmra.mxu0 %v5865
    %v6215 = vpop.f32.mrf.mxu0
    %v6216 = vadd.f32 %v6203, %v6215
    %v6217 = vpop.f32.mrf.mxu0
    %6218 = vdwg.mxu0
    %6219 = vmatpush.bf16.msra.mxu0 %v6128
    %6220 = vmatpush.bf16.msra.mxu0 %v6127
    %6221 = vmatpush.bf16.msra.mxu0 %v6126
    %6222 = vmatpush.bf16.msra.mxu0 %v6125
    %6223 = vmatpush.bf16.msra.mxu0 %v6124
    %6224 = vmatpush.bf16.msra.mxu0 %v6123
    %6225 = vmatpush.bf16.msra.mxu0 %v6122
    %6226 = vmatpush.bf16.msra.mxu0 %v6121
    %6227 = vmatmul.bf16.gmra.mxu0 %v5866
    %v6228 = vpop.f32.mrf.mxu0
    %v6229 = vadd.f32 %v6216, %v6228
    %v6230 = vpop.f32.mrf.mxu0
    %6231 = vdwg.mxu0
    %6232 = vmatpush.bf16.msra.mxu0 0
    %6233 = vmatpush.bf16.msra.mxu0 0
    %6234 = vmatpush.bf16.msra.mxu0 %v6178
    %6235 = vmatpush.bf16.msra.mxu0 %v6133
    %6236 = vmatpush.bf16.msra.mxu0 %v6132
    %6237 = vmatpush.bf16.msra.mxu0 %v6131
    %6238 = vmatpush.bf16.msra.mxu0 %v6130
    %6239 = vmatpush.bf16.msra.mxu0 %v6129
    %6240 = vmatmul.bf16.gmra.mxu0 %v6174
    %v6241 = vpop.f32.mrf.mxu0
    %v6242 = vadd.f32 %v6229, %v6241
    %v6243 = vpop.f32.mrf.mxu0
    %6244 = vdwg.mxu0
    %v6245 = vpack.c.bf16 %v6242, %v6242
    %v6246 = vld [vmem:[%s5] sm:$0xf]
    %v6247 = vld [vmem:[%s5 + $0x4] sm:$0xf]
    %v6248 = vld [vmem:[%s5 + $0x8] sm:$0xf]
    %v6249 = vld [vmem:[%s5 + $0xc] sm:$0xf]
    %v6250 = vld [vmem:[%s5 + $0x10] sm:$0xf]
    %v6251 = vld [vmem:[%s5 + $0x14] sm:$0xf]
    %v6252 = vld [vmem:[%s5 + $0x18] sm:$0xf]
    %v6253 = vld [vmem:[%s5 + $0x1c] sm:$0xf]
    %v6254 = vld [vmem:[%s5 + $0x20] sm:$0xf]
    %v6255 = vld [vmem:[%s5 + $0x24] sm:$0xf]
    %v6256 = vld [vmem:[%s5 + $0x28] sm:$0xf]
    %v6257 = vld [vmem:[%s5 + $0x2c] sm:$0xf]
    %v6258 = vld [vmem:[%s5 + $0x30] sm:$0xf]
    %v6259 = vld [vmem:[%s5 + $0x34] sm:$0xf]
    %v6260 = vld [vmem:[%s5 + $0x38] sm:$0xf]
    %v6261 = vld [vmem:[%s6] sm:$0x1]
    %v6263 = vperm.slane %v6261, 0
    %v6280 = vunpack.c.l.b16 %v6246
    %v6281 = vunpack.c.l.b16 %v6247
    %v6282 = vunpack.c.l.b16 %v6248
    %v6283 = vunpack.c.l.b16 %v6249
    %v6284 = vunpack.c.l.b16 %v6250
    %v6285 = vunpack.c.l.b16 %v6251
    %v6286 = vunpack.c.l.b16 %v6252
    %v6287 = vunpack.c.l.b16 %v6253
    %v6288 = vunpack.c.l.b16 %v6254
    %v6289 = vunpack.c.l.b16 %v6255
    %v6290 = vunpack.c.l.b16 %v6256
    %v6291 = vunpack.c.l.b16 %v6257
    %v6292 = vunpack.c.l.b16 %v6258
    %v6293 = vunpack.c.l.b16 %v6259
    %v6294 = vunpack.c.l.b16 %v6260
    %v6295 = vpack.c.b16 %v6281, %v6280
    %v6296 = vpack.c.b16 %v6283, %v6282
    %v6297 = vpack.c.b16 %v6285, %v6284
    %v6298 = vpack.c.b16 %v6287, %v6286
    %v6299 = vpack.c.b16 %v6289, %v6288
    %v6300 = vpack.c.b16 %v6291, %v6290
    %v6301 = vpack.c.b16 %v6293, %v6292
    %v6302 = vpack.c.b16 %v6294, %v6294
    %vm6310 = vcmask 982016
    %v6312 = vsel %vm6310, %v6245, 0
    %v6315 = vsel %vm6176, %v6302, 0
    %6317 = vmatpush.bf16.msra.mxu0 %v6315
    %6318 = vmatpush.bf16.msra.mxu0 %v6301
    %6319 = vmatpush.bf16.msra.mxu0 %v6300
    %6320 = vmatpush.bf16.msra.mxu0 %v6299
    %6321 = vmatpush.bf16.msra.mxu0 %v6298
    %6322 = vmatpush.bf16.msra.mxu0 %v6297
    %6323 = vmatpush.bf16.msra.mxu0 %v6296
    %6324 = vmatpush.bf16.msra.mxu0 %v6295
    %6325 = vmatmul.bf16.gmra.mxu0 %v6312
    %v6326 = vpop.f32.mrf.mxu0
    %v6327 = vadd.f32 %v6263, %v6326
    %v6328 = vpop.f32.mrf.mxu0
    %6329 = vdwg.mxu0
    %6330 = vst [vmem:[#allocation2] sm:$0x3] %v6327
    // Predicated region
    $region30: #{forward.5} parent=1 // pred_check
      _
    $region31: #{forward.5} parent=1 // pred_check_branch
      %6332 = sbr.rel (0) target = $region33
    $region32: #{forward.5} parent=1 // pred_region
      %6334 = vsyncadd [#allocation3], 0
      %s6336 = sshll.u32 [#allocation2], 4
      %s6337 = int_to_ptr.vmem [resolvable:$true] %s6336
      %s6338 = sshll.u32 %s7, 4
      %s6339 = int_to_ptr.hbm [resolvable:$true] %s6338
      %6341 = dma.vmem_to_hbm [thread:$0]  %s6337, 32, %s6339, [#allocation3]
    $region33: #{forward.5} parent=1 // pred_fallthru
      _
    // Predicated region
    $region34: #{forward.5} parent=1 // pred_check
      _
    $region35: #{forward.5} parent=1 // pred_check_branch
      %6343 = sbr.rel (0) target = $region37
    $region36: #{forward.5} parent=1 // pred_region
      %6345 = dma.done [#allocation3], 32
    $region37: #{forward.5} parent=1 // pred_fallthru
      _
    %6346 = vsyncpa [#allocation3], 1

</llo_original>
